<compile_context>
chip_gen: v5e
topology: v5e:2x2
jax: 0.10.0
libtpu: 0.0.40
codegen_flags: <defaults>
</compile_context>

<pallas_src>
import functools

import jax
import jax.numpy as jnp
import numpy as np
from jax.experimental import pallas as pl
from jax.experimental.pallas import tpu as pltpu

LANES = 128          # lane width: channel / K padding target
_CONV_TB_CAP = 8     # max images per conv-kernel grid step
_MLP_TB_CAP = 128    # max rows per MLP-kernel grid step


# ----------------------------------------------------------------------------
# Batch-tile selection helpers
# ----------------------------------------------------------------------------
def _pick_conv_tile(b, cap=_CONV_TB_CAP):
    """Largest divisor of b that is <= cap and leaves >= 2 grid steps (v7x: 2 TCs)."""
    cap = min(cap, max(1, b // 2))
    for t in range(min(cap, b), 0, -1):
        if b % t == 0:
            return t
    return 1


def _pick_mlp_tile(b, cap=_MLP_TB_CAP):
    """8-aligned divisor of b giving >= 2 grid steps; tiny batches run as one block."""
    limit = min(cap, b // 2)
    for t in range(limit - limit % 8, 0, -8):
        if b % t == 0:
            return t
    return b


# ----------------------------------------------------------------------------
# Kernel 1: conv1 + pool + conv2 + pool (biases + ReLU fused), per batch tile
# ----------------------------------------------------------------------------
def _fused_features_kernel(h, w, xc_ref, w1_ref, b1_ref, w2_ref, b2_ref,
                           o_ref, pad1_ref, col2_ref, hp_ref):
    """Fused features stage.

    xc_ref  : (TB, h*w, K1)           conv1 im2col (built in wrapper), bf16
    w1_ref  : (K1, C)                 conv1 weights, rows (ky,kx,cin)+zero pad, bf16
    b1_ref  : (1, C) f32
    w2_ref  : (9*C, C)                conv2 im2col weights, rows (ky,kx,cin_pad), bf16
    b2_ref  : (1, C) f32
    o_ref   : (TB, (h//4)*(w//4), C)  pooled conv2 features, rows (ho,wo), bf16
    pad1_ref: (TB, h//2+2, w//2+16, C) bf16 halo-padded pooled conv1 activations
              (interior stored at sublane offset 8 -> tile-aligned store; taps read
               at offsets 7/8/9 which Mosaic handles as shifted loads)
    col2_ref: (TB*(h//2)*(w//2), 9*C) bf16 conv2 im2col scratch
    hp_ref  : (TB*(h//2)*w, C) f32    H-pooled scratch used for the stride-2 W max-pool
    """
    TB = xc_ref.shape[0]
    C = o_ref.shape[-1]
    h2, w2 = h // 2, w // 2
    h4, w4 = h // 4, w // 4

    # ---- conv1: ONE MXU pass (K = 9*Cin zero-padded); no per-tap accumulator RMW.
    acc1 = jnp.dot(xc_ref[...].reshape(TB * h * w, xc_ref.shape[-1]), w1_ref[...],
                   preferred_element_type=jnp.float32)               # (TB*h*w, C) f32

    # ---- 2x2 max-pool BEFORE bias+ReLU (per-channel bias + monotone ReLU commute
    #      with max): H-pool via an aligned split, W-pool via stride-2 sublane loads.
    a = acc1.reshape(TB * h2, 2, w, C)
    hp_ref[...] = jnp.maximum(a[:, 0], a[:, 1]).reshape(TB * h2 * w, C)
    p0 = hp_ref[pl.ds(0, TB * h2 * w2, stride=2), :]
    p1 = hp_ref[pl.ds(1, TB * h2 * w2, stride=2), :]
    act1 = jnp.maximum(jnp.maximum(p0, p1) + b1_ref[...], 0.0)       # (TB*h2*w2, C)
    act1 = act1.astype(jnp.bfloat16)

    # ---- halo pad in VMEM (replaces the XLA pad + HBM round trip between convs).
    #      Zero every step (scratch persists across steps; cheap: a few hundred vst).
    pad1_ref[...] = jnp.zeros(pad1_ref.shape, pad1_ref.dtype)
    pad1_ref[:, 1:h2 + 1, 8:8 + w2, :] = act1.reshape(TB, h2, w2, C)

    # ---- conv2: build the (TB*h2*w2, 9*C) im2col in VMEM, then ONE K = 9*C matmul
    #      (the MXU accumulates over K internally -> no f32 accumulator traffic).
    for t in range(9):
        ky, kx = t // 3, t % 3
        tap = pad1_ref[:, ky:ky + h2, 7 + kx:7 + kx + w2, :]
        col2_ref[:, t * C:(t + 1) * C] = tap.reshape(TB * h2 * w2, C)
    acc2 = jnp.dot(col2_ref[...], w2_ref[...],
                   preferred_element_type=jnp.float32)               # (TB*h2*w2, C) f32

    # ---- pool2 (again before bias+ReLU) + epilogue.
    a = acc2.reshape(TB * h4, 2, w2, C)
    hp_ref[0:TB * h4 * w2, :] = jnp.maximum(a[:, 0], a[:, 1]).reshape(TB * h4 * w2, C)
    q0 = hp_ref[pl.ds(0, TB * h4 * w4, stride=2), :]
    q1 = hp_ref[pl.ds(1, TB * h4 * w4, stride=2), :]
    act2 = jnp.maximum(jnp.maximum(q0, q1) + b2_ref[...], 0.0)
    o_ref[...] = act2.reshape(TB, h4 * w4, C).astype(o_ref.dtype)


# ----------------------------------------------------------------------------
# Kernel 2: fc1 + bias + ReLU + fc2 + bias (fc2 N zero-padded to 128 lanes)
# ----------------------------------------------------------------------------
def _mlp_head_kernel(x_ref, w1_ref, b1_ref, w2_ref, b2_ref, o_ref):
    hdd = jnp.dot(x_ref[...], w1_ref[...], preferred_element_type=jnp.float32)
    hdd = jnp.maximum(hdd + b1_ref[...], 0.0)
    # TODO(synk): nn.Dropout not implemented (module default p=0.0 -> identity).
    out = jnp.dot(hdd.astype(jnp.bfloat16), w2_ref[...],
                  preferred_element_type=jnp.float32)
    o_ref[...] = out + b2_ref[...]


# ----------------------------------------------------------------------------
# pallas_call wrappers
# ----------------------------------------------------------------------------
def fused_conv_features(x_col, w1p, b1p, w2p, b2p, *, h, w):
    """x_col: (B, h*w, K1) bf16 conv1 im2col.  Returns (B, (h//4)*(w//4), 128) bf16."""
    B = x_col.shape[0]
    k1 = x_col.shape[-1]
    C = w1p.shape[-1]
    h4w4 = (h // 4) * (w // 4)
    tb = _pick_conv_tile(B)
    kernel = functools.partial(_fused_features_kernel, h, w)
    return pl.pallas_call(
        kernel,
        out_shape=jax.ShapeDtypeStruct((B, h4w4, C), jnp.bfloat16),
        grid=(B // tb,),
        in_specs=[
            pl.BlockSpec((tb, h * w, k1), lambda i: (i, 0, 0)),   # streams over batch
            pl.BlockSpec((k1, C), lambda i: (0, 0)),              # resident weights
            pl.BlockSpec((1, C), lambda i: (0, 0)),
            pl.BlockSpec((9 * C, C), lambda i: (0, 0)),
            pl.BlockSpec((1, C), lambda i: (0, 0)),
        ],
        out_specs=pl.BlockSpec((tb, h4w4, C), lambda i: (i, 0, 0)),
        scratch_shapes=[
            pltpu.VMEM((tb, h // 2 + 2, w // 2 + 16, C), jnp.bfloat16),   # halo buffer
            pltpu.VMEM((tb * (h // 2) * (w // 2), 9 * C), jnp.bfloat16),  # conv2 im2col
            pltpu.VMEM((tb * (h // 2) * w, C), jnp.float32),              # H-pool scratch
        ],
        compiler_params=pltpu.CompilerParams(
            dimension_semantics=("parallel",),
            vmem_limit_bytes=48 * 1024 * 1024),
    )(x_col, w1p, b1p, w2p, b2p)


def mlp_head(x, w1, b1, w2, b2):
    """x: (B, K) bf16.  Returns (B, Npad=128) f32 lane-padded logits."""
    B, K = x.shape
    Hdn = w1.shape[-1]
    Npad = w2.shape[-1]
    tb = _pick_mlp_tile(B)
    return pl.pallas_call(
        _mlp_head_kernel,
        out_shape=jax.ShapeDtypeStruct((B, Npad), jnp.float32),
        grid=(B // tb,),
        in_specs=[
            pl.BlockSpec((tb, K), lambda i: (i, 0)),       # streams over batch
            pl.BlockSpec((K, Hdn), lambda i: (0, 0)),      # resident (2 MiB bf16)
            pl.BlockSpec((1, Hdn), lambda i: (0, 0)),
            pl.BlockSpec((Hdn, Npad), lambda i: (0, 0)),
            pl.BlockSpec((1, Npad), lambda i: (0, 0)),
        ],
        out_specs=pl.BlockSpec((tb, Npad), lambda i: (i, 0)),
        compiler_params=pltpu.CompilerParams(
            dimension_semantics=("parallel",)),
    )(x, w1, b1, w2, b2)


# ----------------------------------------------------------------------------
# One-time packing / input layout prep (transposes, padding, casts hoisted out)
# ----------------------------------------------------------------------------
def _conv1_im2col(x_nchw, k1_pad):
    """(B, Cin, H, W) f32 -> (B, H*W, k1_pad) bf16 im2col, cols ordered (ky, kx, cin)."""
    B, Cin, H, W = x_nchw.shape
    assert 9 * Cin <= k1_pad
    x = jnp.transpose(x_nchw, (0, 2, 3, 1))                        # NHWC
    xp = jnp.pad(x, ((0, 0), (1, 1), (1, 1), (0, 0)))
    taps = [xp[:, ky:ky + H, kx:kx + W, :] for ky in range(3) for kx in range(3)]
    col = jnp.concatenate(taps, axis=-1).reshape(B, H * W, 9 * Cin)
    col = jnp.pad(col, ((0, 0), (0, 0), (0, k1_pad - 9 * Cin)))
    return col.astype(jnp.bfloat16)


def pack_params(params, *, num_classes, pooled_hw):
    ho, wo = pooled_hw                                   # post-conv2-pool spatial (8, 8)
    c1 = params["w1"].shape[0]                           # 32
    c2 = params["w2"].shape[0]                           # 64
    cin = params["w1"].shape[1]                          # 3

    # conv1: (Cout,Cin,3,3) -> (9*Cin padded to 128, 128) im2col weights, bf16.
    w1 = jnp.transpose(params["w1"], (2, 3, 1, 0)).reshape(9 * cin, c1)
    w1 = jnp.pad(w1, ((0, LANES - 9 * cin), (0, LANES - c1))).astype(jnp.bfloat16)
    b1 = jnp.pad(params["b1"], (0, LANES - c1)).reshape(1, LANES).astype(jnp.float32)

    # conv2: (Cout,Cin,3,3) -> (9*128, 128) im2col weights (Cin/Cout zero-padded).
    w2 = jnp.transpose(params["w2"], (2, 3, 1, 0))                 # (3,3,Cin,Cout)
    w2 = jnp.pad(w2, ((0, 0), (0, 0), (0, LANES - w2.shape[2]), (0, LANES - c2)))
    w2 = w2.reshape(9 * LANES, LANES).astype(jnp.bfloat16)
    b2 = jnp.pad(params["b2"], (0, LANES - c2)).reshape(1, LANES).astype(jnp.float32)

    # fc1: PyTorch flattens NCHW (c, h, w); our features are (h, w, c_pad128).
    hdn = params["fc1_w"].shape[0]                       # 128
    f1 = params["fc1_w"].reshape(hdn, c2, ho, wo)        # (out, c, h, w)
    f1 = jnp.transpose(f1, (2, 3, 1, 0))                 # (h, w, c, out)
    f1 = jnp.pad(f1, ((0, 0), (0, 0), (0, LANES - c2), (0, 0)))
    f1 = f1.reshape(ho * wo * LANES, hdn).astype(jnp.bfloat16)
    fb1 = params["fc1_b"].reshape(1, hdn).astype(jnp.float32)

    # fc2: transpose once and zero-pad N (=num_classes) to 128 lanes.
    f2 = jnp.pad(params["fc2_w"].T, ((0, 0), (0, LANES - num_classes)))
    f2 = f2.astype(jnp.bfloat16)
    fb2 = jnp.pad(params["fc2_b"], (0, LANES - num_classes)).reshape(1, LANES)
    fb2 = fb2.astype(jnp.float32)

    return {"cw1": w1, "cb1": b1, "cw2": w2, "cb2": b2,
            "fw1": f1, "fb1": fb1, "fw2": f2, "fb2": fb2}


# ----------------------------------------------------------------------------
# Forward pass
# ----------------------------------------------------------------------------
def cnn_baseline_forward(x_nchw, packed, *, num_classes):
    """Forward of CNNBaseline (CIFAR branch). x_nchw: (B, 3, 32, 32) f32."""
    B, _, H, W = x_nchw.shape
    assert H % 4 == 0 and W % 4 == 0 and W % 8 == 0, "CIFAR branch (32x32) only"
    # TODO(synk): MNIST branch (input_channels=1, 28x28 -> 64*7*7) not implemented.

    x_col = _conv1_im2col(x_nchw, LANES)                           # (B, H*W, 128) bf16
    feats = fused_conv_features(x_col, packed["cw1"], packed["cb1"],
                                packed["cw2"], packed["cb2"], h=H, w=W)
    feats = feats.reshape(B, (H // 4) * (W // 4) * LANES)          # free metadata reshape
    logits = mlp_head(feats, packed["fw1"], packed["fb1"],
                      packed["fw2"], packed["fb2"])                # (B, 128) f32
    return logits[:, :num_classes]


# ----------------------------------------------------------------------------
# Deterministic parameter init + pure-JAX reference
# ----------------------------------------------------------------------------
def init_params(key, input_channels, num_classes, flatten_size):
    ks = jax.random.split(key, 8)
    s = 0.05
    return {
        "w1": s * jax.random.normal(ks[0], (32, input_channels, 3, 3), jnp.float32),
        "b1": s * jax.random.normal(ks[1], (32,), jnp.float32),
        "w2": s * jax.random.normal(ks[2], (64, 32, 3, 3), jnp.float32),
        "b2": s * jax.random.normal(ks[3], (64,), jnp.float32),
        "fc1_w": s * jax.random.normal(ks[4], (128, flatten_size), jnp.float32),
        "fc1_b": s * jax.random.normal(ks[5], (128,), jnp.float32),
        "fc2_w": s * jax.random.normal(ks[6], (num_classes, 128), jnp.float32),
        "fc2_b": s * jax.random.normal(ks[7], (num_classes,), jnp.float32),
    }


def reference_forward(x_nchw, params):
    hp = jax.lax.Precision.HIGHEST

    def conv(x, w, b):
        y = jax.lax.conv_general_dilated(
            x, w, window_strides=(1, 1), padding="SAME",
            dimension_numbers=("NCHW", "OIHW", "NCHW"), precision=hp)
        return jnp.maximum(y + b[None, :, None, None], 0.0)

    def pool(x):
        return jax.lax.reduce_window(
            x, -jnp.inf, jax.lax.max, (1, 1, 2, 2), (1, 1, 2, 2), "VALID")

    x = pool(conv(x_nchw, params["w1"], params["b1"]))
    x = pool(conv(x, params["w2"], params["b2"]))
    x = x.reshape(x.shape[0], -1)
    x = jnp.maximum(x @ params["fc1_w"].T + params["fc1_b"], 0.0)
    return x @ params["fc2_w"].T + params["fc2_b"]


# ----------------------------------------------------------------------------
if __name__ == "__main__":
    key = jax.random.PRNGKey(0)
    k_x, k_p = jax.random.split(key)

    B, C_IN, H, W = 2, 3, 32, 32          # CIFAR branch -> flatten = 64*8*8 = 4096
    NUM_CLASSES = 10
    FLATTEN = 64 * 8 * 8

    x = jax.random.normal(k_x, (B, C_IN, H, W), jnp.float32)
    params = init_params(k_p, C_IN, NUM_CLASSES, FLATTEN)
    packed = pack_params(params, num_classes=NUM_CLASSES,
                         pooled_hw=(H // 4, W // 4))

    fwd = jax.jit(functools.partial(cnn_baseline_forward,
                                    num_classes=NUM_CLASSES))
    out = jax.block_until_ready(fwd(x, packed))
    assert out.shape == (B, NUM_CLASSES), out.shape

    ref = jax.block_until_ready(reference_forward(x, params))
    # bf16 operands / bf16 inter-stage activations vs f32 reference.
    np.testing.assert_allclose(np.asarray(out), np.asarray(ref),
                               rtol=2e-2, atol=2e-2)

    print("KERNEL_OK")
</pallas_src>

<mosaic_0001>
module attributes {stable_mosaic.version = 11 : i64} {
  func.func @_fused_features_kernel(%arg0: i32, %arg1: memref<1x1024x128xbf16, #tpu.memory_space<vmem>>, %arg2: memref<128x128xbf16, #tpu.memory_space<vmem>>, %arg3: memref<1x128xf32, #tpu.memory_space<vmem>>, %arg4: memref<1152x128xbf16, #tpu.memory_space<vmem>>, %arg5: memref<1x128xf32, #tpu.memory_space<vmem>>, %arg6: memref<1x64x128xbf16, #tpu.memory_space<vmem>>, %arg7: memref<1x18x32x128xbf16, #tpu.memory_space<vmem>>, %arg8: memref<256x1152xbf16, #tpu.memory_space<vmem>>, %arg9: memref<512x128xf32, #tpu.memory_space<vmem>>) attributes {dimension_semantics = [#tpu.dimension_semantics<parallel>], iteration_bounds = array<i64: 2>, scalar_prefetch = 0 : i64, scratch_operands = 3 : i64, tpu.core_type = #tpu.core_type<tc>, window_params = [{transform_indices = @transform_0, window_bounds = array<i64: 1, 1024, 128>}, {pipeline_mode = #tpu.pipeline_mode<synchronous>, transform_indices = @transform_1, window_bounds = array<i64: 128, 128>}, {pipeline_mode = #tpu.pipeline_mode<synchronous>, transform_indices = @transform_2, window_bounds = array<i64: 1, 128>}, {pipeline_mode = #tpu.pipeline_mode<synchronous>, transform_indices = @transform_3, window_bounds = array<i64: 1152, 128>}, {pipeline_mode = #tpu.pipeline_mode<synchronous>, transform_indices = @transform_4, window_bounds = array<i64: 1, 128>}, {transform_indices = @transform_5, window_bounds = array<i64: 1, 64, 128>}]} {
    %c0 = arith.constant 0 : index
    %c0_0 = arith.constant 0 : index
    %c0_1 = arith.constant 0 : index
    %0 = vector.load %arg1[%c0, %c0_0, %c0_1] : memref<1x1024x128xbf16, #tpu.memory_space<vmem>>, vector<1x1024x128xbf16>
    %1 = vector.shape_cast %0 : vector<1x1024x128xbf16> to vector<1024x128xbf16>
    %c0_2 = arith.constant 0 : index
    %c0_3 = arith.constant 0 : index
    %2 = vector.load %arg2[%c0_2, %c0_3] : memref<128x128xbf16, #tpu.memory_space<vmem>>, vector<128x128xbf16>
    %cst = arith.constant dense<0.000000e+00> : vector<1024x128xf32>
    %3 = tpu.matmul %1, %2, %cst {dimension_numbers = #tpu.dot_dimension_numbers<[1], [0], [0], [1], [0, 0, 1, 1], [], []>} : vector<1024x128xbf16>, vector<128x128xbf16>, vector<1024x128xf32> -> vector<1024x128xf32>
    %4 = vector.shape_cast %3 : vector<1024x128xf32> to vector<16x2x32x128xf32>
    %5 = vector.extract_strided_slice %4 {offsets = [0, 0, 0, 0], sizes = [16, 1, 32, 128], strides = [1, 1, 1, 1]} : vector<16x2x32x128xf32> to vector<16x1x32x128xf32>
    %6 = vector.shape_cast %5 : vector<16x1x32x128xf32> to vector<16x32x128xf32>
    %7 = vector.extract_strided_slice %4 {offsets = [0, 1, 0, 0], sizes = [16, 1, 32, 128], strides = [1, 1, 1, 1]} : vector<16x2x32x128xf32> to vector<16x1x32x128xf32>
    %8 = vector.shape_cast %7 : vector<16x1x32x128xf32> to vector<16x32x128xf32>
    %9 = arith.maximumf %6, %8 : vector<16x32x128xf32>
    %10 = vector.shape_cast %9 : vector<16x32x128xf32> to vector<512x128xf32>
    %c0_4 = arith.constant 0 : index
    %c0_5 = arith.constant 0 : index
    %11 = vector.load %arg9[%c0_4, %c0_5] : memref<512x128xf32, #tpu.memory_space<vmem>>, vector<512x128xf32>
    tpu.vector_store %arg9[%c0_4, %c0_5], %10 {strides = array<i32>} : memref<512x128xf32, #tpu.memory_space<vmem>>, vector<512x128xf32>,
    %c0_6 = arith.constant 0 : index
    %c0_7 = arith.constant 0 : index
    %12 = tpu.strided_load %arg9[%c0_6, %c0_7] {strides = array<i32: 2, 1>} : memref<512x128xf32, #tpu.memory_space<vmem>>, vector<256x128xf32>
    %c1 = arith.constant 1 : index
    %c0_8 = arith.constant 0 : index
    %13 = tpu.strided_load %arg9[%c1, %c0_8] {strides = array<i32: 2, 1>} : memref<512x128xf32, #tpu.memory_space<vmem>>, vector<256x128xf32>
    %14 = arith.maximumf %12, %13 : vector<256x128xf32>
    %c0_9 = arith.constant 0 : index
    %c0_10 = arith.constant 0 : index
    %15 = vector.load %arg3[%c0_9, %c0_10] : memref<1x128xf32, #tpu.memory_space<vmem>>, vector<1x128xf32>
    %16 = vector.broadcast %15 : vector<1x128xf32> to vector<256x128xf32>
    %17 = arith.addf %14, %16 : vector<256x128xf32>
    %cst_11 = arith.constant 0.000000e+00 : f32
    %18 = vector.broadcast %cst_11 : f32 to vector<256x128xf32>
    %19 = arith.maximumf %17, %18 : vector<256x128xf32>
    %20 = arith.truncf %19 : vector<256x128xf32> to vector<256x128xbf16>
    %cst_12 = arith.constant 0.000000e+00 : bf16
    %21 = vector.broadcast %cst_12 : bf16 to vector<1x18x32x128xbf16>
    %c0_13 = arith.constant 0 : index
    %c0_14 = arith.constant 0 : index
    %c0_15 = arith.constant 0 : index
    %c0_16 = arith.constant 0 : index
    %22 = vector.load %arg7[%c0_13, %c0_14, %c0_15, %c0_16] : memref<1x18x32x128xbf16, #tpu.memory_space<vmem>>, vector<1x18x32x128xbf16>
    tpu.vector_store %arg7[%c0_13, %c0_14, %c0_15, %c0_16], %21 {strides = array<i32>} : memref<1x18x32x128xbf16, #tpu.memory_space<vmem>>, vector<1x18x32x128xbf16>,
    %23 = vector.shape_cast %20 : vector<256x128xbf16> to vector<1x16x16x128xbf16>
    %c0_17 = arith.constant 0 : index
    %c1_18 = arith.constant 1 : index
    %c8 = arith.constant 8 : index
    %c0_19 = arith.constant 0 : index
    %24 = vector.load %arg7[%c0_17, %c1_18, %c8, %c0_19] : memref<1x18x32x128xbf16, #tpu.memory_space<vmem>>, vector<1x16x16x128xbf16>
    tpu.vector_store %arg7[%c0_17, %c1_18, %c8, %c0_19], %23 {strides = array<i32>} : memref<1x18x32x128xbf16, #tpu.memory_space<vmem>>, vector<1x16x16x128xbf16>,
    %c0_20 = arith.constant 0 : index
    %c0_21 = arith.constant 0 : index
    %c7 = arith.constant 7 : index
    %c0_22 = arith.constant 0 : index
    %25 = vector.load %arg7[%c0_20, %c0_21, %c7, %c0_22] : memref<1x18x32x128xbf16, #tpu.memory_space<vmem>>, vector<1x16x16x128xbf16>
    %26 = vector.shape_cast %25 : vector<1x16x16x128xbf16> to vector<256x128xbf16>
    %c0_23 = arith.constant 0 : index
    %c0_24 = arith.constant 0 : index
    %27 = vector.load %arg8[%c0_23, %c0_24] : memref<256x1152xbf16, #tpu.memory_space<vmem>>, vector<256x128xbf16>
    tpu.vector_store %arg8[%c0_23, %c0_24], %26 {strides = array<i32>} : memref<256x1152xbf16, #tpu.memory_space<vmem>>, vector<256x128xbf16>,
    %c0_25 = arith.constant 0 : index
    %c0_26 = arith.constant 0 : index
    %c8_27 = arith.constant 8 : index
    %c0_28 = arith.constant 0 : index
    %28 = vector.load %arg7[%c0_25, %c0_26, %c8_27, %c0_28] : memref<1x18x32x128xbf16, #tpu.memory_space<vmem>>, vector<1x16x16x128xbf16>
    %29 = vector.shape_cast %28 : vector<1x16x16x128xbf16> to vector<256x128xbf16>
    %c0_29 = arith.constant 0 : index
    %c128 = arith.constant 128 : index
    %30 = vector.load %arg8[%c0_29, %c128] : memref<256x1152xbf16, #tpu.memory_space<vmem>>, vector<256x128xbf16>
    tpu.vector_store %arg8[%c0_29, %c128], %29 {strides = array<i32>} : memref<256x1152xbf16, #tpu.memory_space<vmem>>, vector<256x128xbf16>,
    %c0_30 = arith.constant 0 : index
    %c0_31 = arith.constant 0 : index
    %c9 = arith.constant 9 : index
    %c0_32 = arith.constant 0 : index
    %31 = vector.load %arg7[%c0_30, %c0_31, %c9, %c0_32] : memref<1x18x32x128xbf16, #tpu.memory_space<vmem>>, vector<1x16x16x128xbf16>
    %32 = vector.shape_cast %31 : vector<1x16x16x128xbf16> to vector<256x128xbf16>
    %c0_33 = arith.constant 0 : index
    %c256 = arith.constant 256 : index
    %33 = vector.load %arg8[%c0_33, %c256] : memref<256x1152xbf16, #tpu.memory_space<vmem>>, vector<256x128xbf16>
    tpu.vector_store %arg8[%c0_33, %c256], %32 {strides = array<i32>} : memref<256x1152xbf16, #tpu.memory_space<vmem>>, vector<256x128xbf16>,
    %c0_34 = arith.constant 0 : index
    %c1_35 = arith.constant 1 : index
    %c7_36 = arith.constant 7 : index
    %c0_37 = arith.constant 0 : index
    %34 = vector.load %arg7[%c0_34, %c1_35, %c7_36, %c0_37] : memref<1x18x32x128xbf16, #tpu.memory_space<vmem>>, vector<1x16x16x128xbf16>
    %35 = vector.shape_cast %34 : vector<1x16x16x128xbf16> to vector<256x128xbf16>
    %c0_38 = arith.constant 0 : index
    %c384 = arith.constant 384 : index
    %36 = vector.load %arg8[%c0_38, %c384] : memref<256x1152xbf16, #tpu.memory_space<vmem>>, vector<256x128xbf16>
    tpu.vector_store %arg8[%c0_38, %c384], %35 {strides = array<i32>} : memref<256x1152xbf16, #tpu.memory_space<vmem>>, vector<256x128xbf16>,
    %c0_39 = arith.constant 0 : index
    %c1_40 = arith.constant 1 : index
    %c8_41 = arith.constant 8 : index
    %c0_42 = arith.constant 0 : index
    %37 = vector.load %arg7[%c0_39, %c1_40, %c8_41, %c0_42] : memref<1x18x32x128xbf16, #tpu.memory_space<vmem>>, vector<1x16x16x128xbf16>
    %38 = vector.shape_cast %37 : vector<1x16x16x128xbf16> to vector<256x128xbf16>
    %c0_43 = arith.constant 0 : index
    %c512 = arith.constant 512 : index
    %39 = vector.load %arg8[%c0_43, %c512] : memref<256x1152xbf16, #tpu.memory_space<vmem>>, vector<256x128xbf16>
    tpu.vector_store %arg8[%c0_43, %c512], %38 {strides = array<i32>} : memref<256x1152xbf16, #tpu.memory_space<vmem>>, vector<256x128xbf16>,
    %c0_44 = arith.constant 0 : index
    %c1_45 = arith.constant 1 : index
    %c9_46 = arith.constant 9 : index
    %c0_47 = arith.constant 0 : index
    %40 = vector.load %arg7[%c0_44, %c1_45, %c9_46, %c0_47] : memref<1x18x32x128xbf16, #tpu.memory_space<vmem>>, vector<1x16x16x128xbf16>
    %41 = vector.shape_cast %40 : vector<1x16x16x128xbf16> to vector<256x128xbf16>
    %c0_48 = arith.constant 0 : index
    %c640 = arith.constant 640 : index
    %42 = vector.load %arg8[%c0_48, %c640] : memref<256x1152xbf16, #tpu.memory_space<vmem>>, vector<256x128xbf16>
    tpu.vector_store %arg8[%c0_48, %c640], %41 {strides = array<i32>} : memref<256x1152xbf16, #tpu.memory_space<vmem>>, vector<256x128xbf16>,
    %c0_49 = arith.constant 0 : index
    %c2 = arith.constant 2 : index
    %c7_50 = arith.constant 7 : index
    %c0_51 = arith.constant 0 : index
    %43 = vector.load %arg7[%c0_49, %c2, %c7_50, %c0_51] : memref<1x18x32x128xbf16, #tpu.memory_space<vmem>>, vector<1x16x16x128xbf16>
    %44 = vector.shape_cast %43 : vector<1x16x16x128xbf16> to vector<256x128xbf16>
    %c0_52 = arith.constant 0 : index
    %c768 = arith.constant 768 : index
    %45 = vector.load %arg8[%c0_52, %c768] : memref<256x1152xbf16, #tpu.memory_space<vmem>>, vector<256x128xbf16>
    tpu.vector_store %arg8[%c0_52, %c768], %44 {strides = array<i32>} : memref<256x1152xbf16, #tpu.memory_space<vmem>>, vector<256x128xbf16>,
    %c0_53 = arith.constant 0 : index
    %c2_54 = arith.constant 2 : index
    %c8_55 = arith.constant 8 : index
    %c0_56 = arith.constant 0 : index
    %46 = vector.load %arg7[%c0_53, %c2_54, %c8_55, %c0_56] : memref<1x18x32x128xbf16, #tpu.memory_space<vmem>>, vector<1x16x16x128xbf16>
    %47 = vector.shape_cast %46 : vector<1x16x16x128xbf16> to vector<256x128xbf16>
    %c0_57 = arith.constant 0 : index
    %c896 = arith.constant 896 : index
    %48 = vector.load %arg8[%c0_57, %c896] : memref<256x1152xbf16, #tpu.memory_space<vmem>>, vector<256x128xbf16>
    tpu.vector_store %arg8[%c0_57, %c896], %47 {strides = array<i32>} : memref<256x1152xbf16, #tpu.memory_space<vmem>>, vector<256x128xbf16>,
    %c0_58 = arith.constant 0 : index
    %c2_59 = arith.constant 2 : index
    %c9_60 = arith.constant 9 : index
    %c0_61 = arith.constant 0 : index
    %49 = vector.load %arg7[%c0_58, %c2_59, %c9_60, %c0_61] : memref<1x18x32x128xbf16, #tpu.memory_space<vmem>>, vector<1x16x16x128xbf16>
    %50 = vector.shape_cast %49 : vector<1x16x16x128xbf16> to vector<256x128xbf16>
    %c0_62 = arith.constant 0 : index
    %c1024 = arith.constant 1024 : index
    %51 = vector.load %arg8[%c0_62, %c1024] : memref<256x1152xbf16, #tpu.memory_space<vmem>>, vector<256x128xbf16>
    tpu.vector_store %arg8[%c0_62, %c1024], %50 {strides = array<i32>} : memref<256x1152xbf16, #tpu.memory_space<vmem>>, vector<256x128xbf16>,
    %c0_63 = arith.constant 0 : index
    %c0_64 = arith.constant 0 : index
    %52 = vector.load %arg8[%c0_63, %c0_64] : memref<256x1152xbf16, #tpu.memory_space<vmem>>, vector<256x1152xbf16>
    %c0_65 = arith.constant 0 : index
    %c0_66 = arith.constant 0 : index
    %53 = vector.load %arg4[%c0_65, %c0_66] : memref<1152x128xbf16, #tpu.memory_space<vmem>>, vector<1152x128xbf16>
    %cst_67 = arith.constant dense<0.000000e+00> : vector<256x128xf32>
    %54 = tpu.matmul %52, %53, %cst_67 {dimension_numbers = #tpu.dot_dimension_numbers<[1], [0], [0], [1], [0, 0, 1, 1], [], []>} : vector<256x1152xbf16>, vector<1152x128xbf16>, vector<256x128xf32> -> vector<256x128xf32>
    %55 = vector.shape_cast %54 : vector<256x128xf32> to vector<8x2x16x128xf32>
    %56 = vector.extract_strided_slice %55 {offsets = [0, 0, 0, 0], sizes = [8, 1, 16, 128], strides = [1, 1, 1, 1]} : vector<8x2x16x128xf32> to vector<8x1x16x128xf32>
    %57 = vector.shape_cast %56 : vector<8x1x16x128xf32> to vector<8x16x128xf32>
    %58 = vector.extract_strided_slice %55 {offsets = [0, 1, 0, 0], sizes = [8, 1, 16, 128], strides = [1, 1, 1, 1]} : vector<8x2x16x128xf32> to vector<8x1x16x128xf32>
    %59 = vector.shape_cast %58 : vector<8x1x16x128xf32> to vector<8x16x128xf32>
    %60 = arith.maximumf %57, %59 : vector<8x16x128xf32>
    %61 = vector.shape_cast %60 : vector<8x16x128xf32> to vector<128x128xf32>
    %c0_68 = arith.constant 0 : index
    %c0_69 = arith.constant 0 : index
    %62 = vector.load %arg9[%c0_68, %c0_69] : memref<512x128xf32, #tpu.memory_space<vmem>>, vector<128x128xf32>
    tpu.vector_store %arg9[%c0_68, %c0_69], %61 {strides = array<i32>} : memref<512x128xf32, #tpu.memory_space<vmem>>, vector<128x128xf32>,
    %c0_70 = arith.constant 0 : index
    %c0_71 = arith.constant 0 : index
    %63 = tpu.strided_load %arg9[%c0_70, %c0_71] {strides = array<i32: 2, 1>} : memref<512x128xf32, #tpu.memory_space<vmem>>, vector<64x128xf32>
    %c1_72 = arith.constant 1 : index
    %c0_73 = arith.constant 0 : index
    %64 = tpu.strided_load %arg9[%c1_72, %c0_73] {strides = array<i32: 2, 1>} : memref<512x128xf32, #tpu.memory_space<vmem>>, vector<64x128xf32>
    %65 = arith.maximumf %63, %64 : vector<64x128xf32>
    %c0_74 = arith.constant 0 : index
    %c0_75 = arith.constant 0 : index
    %66 = vector.load %arg5[%c0_74, %c0_75] : memref<1x128xf32, #tpu.memory_space<vmem>>, vector<1x128xf32>
    %67 = vector.broadcast %66 : vector<1x128xf32> to vector<64x128xf32>
    %68 = arith.addf %65, %67 : vector<64x128xf32>
    %cst_76 = arith.constant 0.000000e+00 : f32
    %69 = vector.broadcast %cst_76 : f32 to vector<64x128xf32>
    %70 = arith.maximumf %68, %69 : vector<64x128xf32>
    %71 = vector.shape_cast %70 : vector<64x128xf32> to vector<1x64x128xf32>
    %72 = arith.truncf %71 : vector<1x64x128xf32> to vector<1x64x128xbf16>
    %c0_77 = arith.constant 0 : index
    %c0_78 = arith.constant 0 : index
    %c0_79 = arith.constant 0 : index
    %73 = vector.load %arg6[%c0_77, %c0_78, %c0_79] : memref<1x64x128xbf16, #tpu.memory_space<vmem>>, vector<1x64x128xbf16>
    tpu.vector_store %arg6[%c0_77, %c0_78, %c0_79], %72 {strides = array<i32>} : memref<1x64x128xbf16, #tpu.memory_space<vmem>>, vector<1x64x128xbf16>,
    return
  }
  func.func @transform_0(%arg0: i32) -> (i32, i32, i32) {
    %c0_i32 = arith.constant 0 : i32
    %c0_i32_0 = arith.constant 0 : i32
    %c0_i32_1 = arith.constant 0 : i32
    return %arg0, %c0_i32, %c0_i32_0 : i32, i32, i32
  }
  func.func @transform_1(%arg0: i32) -> (i32, i32) {
    %c0_i32 = arith.constant 0 : i32
    %c0_i32_0 = arith.constant 0 : i32
    %c0_i32_1 = arith.constant 0 : i32
    return %c0_i32, %c0_i32_0 : i32, i32
  }
  func.func @transform_2(%arg0: i32) -> (i32, i32) {
    %c0_i32 = arith.constant 0 : i32
    %c0_i32_0 = arith.constant 0 : i32
    %c0_i32_1 = arith.constant 0 : i32
    return %c0_i32, %c0_i32_0 : i32, i32
  }
  func.func @transform_3(%arg0: i32) -> (i32, i32) {
    %c0_i32 = arith.constant 0 : i32
    %c0_i32_0 = arith.constant 0 : i32
    %c0_i32_1 = arith.constant 0 : i32
    return %c0_i32, %c0_i32_0 : i32, i32
  }
  func.func @transform_4(%arg0: i32) -> (i32, i32) {
    %c0_i32 = arith.constant 0 : i32
    %c0_i32_0 = arith.constant 0 : i32
    %c0_i32_1 = arith.constant 0 : i32
    return %c0_i32, %c0_i32_0 : i32, i32
  }
  func.func @transform_5(%arg0: i32) -> (i32, i32, i32) {
    %c0_i32 = arith.constant 0 : i32
    %c0_i32_0 = arith.constant 0 : i32
    %c0_i32_1 = arith.constant 0 : i32
    return %arg0, %c0_i32, %c0_i32_0 : i32, i32, i32
  }
}

module attributes {stable_mosaic.version = 11 : i64} {
  func.func @_mlp_head_kernel(%arg0: i32, %arg1: memref<2x8192xbf16, #tpu.memory_space<vmem>>, %arg2: memref<8192x128xbf16, #tpu.memory_space<vmem>>, %arg3: memref<1x128xf32, #tpu.memory_space<vmem>>, %arg4: memref<128x128xbf16, #tpu.memory_space<vmem>>, %arg5: memref<1x128xf32, #tpu.memory_space<vmem>>, %arg6: memref<2x128xf32, #tpu.memory_space<vmem>>) attributes {dimension_semantics = [#tpu.dimension_semantics<parallel>], iteration_bounds = array<i64: 1>, scalar_prefetch = 0 : i64, scratch_operands = 0 : i64, tpu.core_type = #tpu.core_type<tc>, window_params = [{transform_indices = @transform_0, window_bounds = array<i64: 2, 8192>}, {pipeline_mode = #tpu.pipeline_mode<synchronous>, transform_indices = @transform_1, window_bounds = array<i64: 8192, 128>}, {pipeline_mode = #tpu.pipeline_mode<synchronous>, transform_indices = @transform_2, window_bounds = array<i64: 1, 128>}, {pipeline_mode = #tpu.pipeline_mode<synchronous>, transform_indices = @transform_3, window_bounds = array<i64: 128, 128>}, {pipeline_mode = #tpu.pipeline_mode<synchronous>, transform_indices = @transform_4, window_bounds = array<i64: 1, 128>}, {transform_indices = @transform_5, window_bounds = array<i64: 2, 128>}]} {
    %c0 = arith.constant 0 : index
    %c0_0 = arith.constant 0 : index
    %0 = vector.load %arg1[%c0, %c0_0] : memref<2x8192xbf16, #tpu.memory_space<vmem>>, vector<2x8192xbf16>
    %c0_1 = arith.constant 0 : index
    %c0_2 = arith.constant 0 : index
    %1 = vector.load %arg2[%c0_1, %c0_2] : memref<8192x128xbf16, #tpu.memory_space<vmem>>, vector<8192x128xbf16>
    %cst = arith.constant dense<0.000000e+00> : vector<2x128xf32>
    %2 = tpu.matmul %0, %1, %cst {dimension_numbers = #tpu.dot_dimension_numbers<[1], [0], [0], [1], [0, 0, 1, 1], [], []>} : vector<2x8192xbf16>, vector<8192x128xbf16>, vector<2x128xf32> -> vector<2x128xf32>
    %c0_3 = arith.constant 0 : index
    %c0_4 = arith.constant 0 : index
    %3 = vector.load %arg3[%c0_3, %c0_4] : memref<1x128xf32, #tpu.memory_space<vmem>>, vector<1x128xf32>
    %4 = vector.broadcast %3 : vector<1x128xf32> to vector<2x128xf32>
    %5 = arith.addf %2, %4 : vector<2x128xf32>
    %cst_5 = arith.constant 0.000000e+00 : f32
    %6 = vector.broadcast %cst_5 : f32 to vector<2x128xf32>
    %7 = arith.maximumf %5, %6 : vector<2x128xf32>
    %8 = arith.truncf %7 : vector<2x128xf32> to vector<2x128xbf16>
    %c0_6 = arith.constant 0 : index
    %c0_7 = arith.constant 0 : index
    %9 = vector.load %arg4[%c0_6, %c0_7] : memref<128x128xbf16, #tpu.memory_space<vmem>>, vector<128x128xbf16>
    %cst_8 = arith.constant dense<0.000000e+00> : vector<2x128xf32>
    %10 = tpu.matmul %8, %9, %cst_8 {dimension_numbers = #tpu.dot_dimension_numbers<[1], [0], [0], [1], [0, 0, 1, 1], [], []>} : vector<2x128xbf16>, vector<128x128xbf16>, vector<2x128xf32> -> vector<2x128xf32>
    %c0_9 = arith.constant 0 : index
    %c0_10 = arith.constant 0 : index
    %11 = vector.load %arg5[%c0_9, %c0_10] : memref<1x128xf32, #tpu.memory_space<vmem>>, vector<1x128xf32>
    %12 = vector.broadcast %11 : vector<1x128xf32> to vector<2x128xf32>
    %13 = arith.addf %10, %12 : vector<2x128xf32>
    %c0_11 = arith.constant 0 : index
    %c0_12 = arith.constant 0 : index
    %14 = vector.load %arg6[%c0_11, %c0_12] : memref<2x128xf32, #tpu.memory_space<vmem>>, vector<2x128xf32>
    tpu.vector_store %arg6[%c0_11, %c0_12], %13 {strides = array<i32>} : memref<2x128xf32, #tpu.memory_space<vmem>>, vector<2x128xf32>,
    return
  }
  func.func @transform_0(%arg0: i32) -> (i32, i32) {
    %c0_i32 = arith.constant 0 : i32
    %c0_i32_0 = arith.constant 0 : i32
    return %arg0, %c0_i32 : i32, i32
  }
  func.func @transform_1(%arg0: i32) -> (i32, i32) {
    %c0_i32 = arith.constant 0 : i32
    %c0_i32_0 = arith.constant 0 : i32
    %c0_i32_1 = arith.constant 0 : i32
    return %c0_i32, %c0_i32_0 : i32, i32
  }
  func.func @transform_2(%arg0: i32) -> (i32, i32) {
    %c0_i32 = arith.constant 0 : i32
    %c0_i32_0 = arith.constant 0 : i32
    %c0_i32_1 = arith.constant 0 : i32
    return %c0_i32, %c0_i32_0 : i32, i32
  }
  func.func @transform_3(%arg0: i32) -> (i32, i32) {
    %c0_i32 = arith.constant 0 : i32
    %c0_i32_0 = arith.constant 0 : i32
    %c0_i32_1 = arith.constant 0 : i32
    return %c0_i32, %c0_i32_0 : i32, i32
  }
  func.func @transform_4(%arg0: i32) -> (i32, i32) {
    %c0_i32 = arith.constant 0 : i32
    %c0_i32_0 = arith.constant 0 : i32
    %c0_i32_1 = arith.constant 0 : i32
    return %c0_i32, %c0_i32_0 : i32, i32
  }
  func.func @transform_5(%arg0: i32) -> (i32, i32) {
    %c0_i32 = arith.constant 0 : i32
    %c0_i32_0 = arith.constant 0 : i32
    return %arg0, %c0_i32 : i32, i32
  }
}

</mosaic_0001>

<llo_original>
// kernel: cnn_baseline_forward.3
$region0: #{cnn_baseline_forward.3}
  #allocation0 [shape = 'u32[]', space=smem, size = 0x4, offset = 0x4, fixed_abs, tag = 'smem constant byte address 0x4 - core index']
  #allocation1 [shape = 'u32[72,128]{1,0:T(1,128)}', space=vmem, size = 0x9000, scoped, tag = 'internal scratch']
  %s0 = inlined_call_operand.vmem [shape: bf16[2,8192], index: 0, kind: input, shape index: {}]
  %s1 = inlined_call_operand.vmem [shape: bf16[8192,128], index: 1, kind: input, shape index: {}]
  %s2 = inlined_call_operand.vmem [shape: f32[1,128], index: 2, kind: input, shape index: {}]
  %s3 = inlined_call_operand.vmem [shape: bf16[128,128], index: 3, kind: input, shape index: {}]
  %s4 = inlined_call_operand.vmem [shape: f32[1,128], index: 4, kind: input, shape index: {}]
  %s5 = inlined_call_operand.hbm [shape: f32[2,128], index: 5, kind: output, shape index: {}]
  %s6 = sld [smem:[#allocation0]]
  $region30: #{cnn_baseline_forward.3} parent=0
    _
  %s8 = ssub.s32 1, %s6
  %s9 = scalar_select 0, %s8, %s6
  $region1: #{cnn_baseline_forward.3} parent=0
    #allocation2 [shape = 'u8[1024]{0}', space=vmem, size = 0x400, scoped, tag = 'output window, operand 0, single buffered']
    #allocation3 [shape = 's32[1]{0}', space=sflag, size = 0x4, scoped, tag = 'scoped memory for cnn_baseline_forward.3']
    %10 = vsyncpa [#allocation3], 0
    // Predicated region
    $region2: #{cnn_baseline_forward.3} parent=1 // pred_check
      _
    $region3: #{cnn_baseline_forward.3} parent=1 // pred_check_branch
      %12 = sbr.rel (0) target = $region5
    $region4: #{cnn_baseline_forward.3} parent=1 // pred_region
      _
    $region5: #{cnn_baseline_forward.3} parent=1 // pred_fallthru
      _
    // Predicated region
    $region6: #{cnn_baseline_forward.3} parent=1 // pred_check
      _
    $region7: #{cnn_baseline_forward.3} parent=1 // pred_check_branch
      %14 = sbr.rel (0) target = $region9
    $region8: #{cnn_baseline_forward.3} parent=1 // pred_region
      _
    $region9: #{cnn_baseline_forward.3} parent=1 // pred_fallthru
      _
    // Predicated region
    $region10: #{cnn_baseline_forward.3} parent=1 // pred_check
      _
    $region11: #{cnn_baseline_forward.3} parent=1 // pred_check_branch
      %16 = sbr.rel (0) target = $region13
    $region12: #{cnn_baseline_forward.3} parent=1 // pred_region
      _
    $region13: #{cnn_baseline_forward.3} parent=1 // pred_fallthru
      _
    // Predicated region
    $region14: #{cnn_baseline_forward.3} parent=1 // pred_check
      _
    $region15: #{cnn_baseline_forward.3} parent=1 // pred_check_branch
      %18 = sbr.rel (0) target = $region17
    $region16: #{cnn_baseline_forward.3} parent=1 // pred_region
      _
    $region17: #{cnn_baseline_forward.3} parent=1 // pred_fallthru
      _
    // Predicated region
    $region18: #{cnn_baseline_forward.3} parent=1 // pred_check
      _
    $region19: #{cnn_baseline_forward.3} parent=1 // pred_check_branch
      %20 = sbr.rel (0) target = $region21
    $region20: #{cnn_baseline_forward.3} parent=1 // pred_region
      _
    $region21: #{cnn_baseline_forward.3} parent=1 // pred_fallthru
      _
    %v21 = vld [vmem:[%s0] sm:$0xff]
    %v22 = vld [vmem:[%s0 + $0x8] sm:$0xff]
    %v23 = vld [vmem:[%s0 + $0x10] sm:$0xff]
    %v24 = vld [vmem:[%s0 + $0x18] sm:$0xff]
    %v25 = vld [vmem:[%s0 + $0x20] sm:$0xff]
    %v26 = vld [vmem:[%s0 + $0x28] sm:$0xff]
    %v27 = vld [vmem:[%s0 + $0x30] sm:$0xff]
    %v28 = vld [vmem:[%s0 + $0x38] sm:$0xff]
    %v29 = vld [vmem:[%s1] sm:$0xf]
    %v30 = vld [vmem:[%s1 + $0x4] sm:$0xf]
    %v31 = vld [vmem:[%s1 + $0x8] sm:$0xf]
    %v32 = vld [vmem:[%s1 + $0xc] sm:$0xf]
    %v33 = vld [vmem:[%s1 + $0x10] sm:$0xf]
    %v34 = vld [vmem:[%s1 + $0x14] sm:$0xf]
    %v35 = vld [vmem:[%s1 + $0x18] sm:$0xf]
    %v36 = vld [vmem:[%s1 + $0x1c] sm:$0xf]
    %v37 = vld [vmem:[%s1 + $0x20] sm:$0xf]
    %v38 = vld [vmem:[%s1 + $0x24] sm:$0xf]
    %v39 = vld [vmem:[%s1 + $0x28] sm:$0xf]
    %v40 = vld [vmem:[%s1 + $0x2c] sm:$0xf]
    %v41 = vld [vmem:[%s1 + $0x30] sm:$0xf]
    %v42 = vld [vmem:[%s1 + $0x34] sm:$0xf]
    %v43 = vld [vmem:[%s1 + $0x38] sm:$0xf]
    %v44 = vld [vmem:[%s1 + $0x3c] sm:$0xf]
    %v45 = vld [vmem:[%s1 + $0x40] sm:$0xf]
    %v46 = vld [vmem:[%s1 + $0x44] sm:$0xf]
    %v47 = vld [vmem:[%s1 + $0x48] sm:$0xf]
    %v48 = vld [vmem:[%s1 + $0x4c] sm:$0xf]
    %v49 = vld [vmem:[%s1 + $0x50] sm:$0xf]
    %v50 = vld [vmem:[%s1 + $0x54] sm:$0xf]
    %v51 = vld [vmem:[%s1 + $0x58] sm:$0xf]
    %v52 = vld [vmem:[%s1 + $0x5c] sm:$0xf]
    %v53 = vld [vmem:[%s1 + $0x60] sm:$0xf]
    %v54 = vld [vmem:[%s1 + $0x64] sm:$0xf]
    %v55 = vld [vmem:[%s1 + $0x68] sm:$0xf]
    %v56 = vld [vmem:[%s1 + $0x6c] sm:$0xf]
    %v57 = vld [vmem:[%s1 + $0x70] sm:$0xf]
    %v58 = vld [vmem:[%s1 + $0x74] sm:$0xf]
    %v59 = vld [vmem:[%s1 + $0x78] sm:$0xf]
    %v60 = vld [vmem:[%s1 + $0x7c] sm:$0xf]
    %v61 = vld [vmem:[%s1 + $0x80] sm:$0xf]
    %v62 = vld [vmem:[%s1 + $0x84] sm:$0xf]
    %v63 = vld [vmem:[%s1 + $0x88] sm:$0xf]
    %v64 = vld [vmem:[%s1 + $0x8c] sm:$0xf]
    %v65 = vld [vmem:[%s1 + $0x90] sm:$0xf]
    %v66 = vld [vmem:[%s1 + $0x94] sm:$0xf]
    %v67 = vld [vmem:[%s1 + $0x98] sm:$0xf]
    %v68 = vld [vmem:[%s1 + $0x9c] sm:$0xf]
    %v69 = vld [vmem:[%s1 + $0xa0] sm:$0xf]
    %v70 = vld [vmem:[%s1 + $0xa4] sm:$0xf]
    %v71 = vld [vmem:[%s1 + $0xa8] sm:$0xf]
    %v72 = vld [vmem:[%s1 + $0xac] sm:$0xf]
    %v73 = vld [vmem:[%s1 + $0xb0] sm:$0xf]
    %v74 = vld [vmem:[%s1 + $0xb4] sm:$0xf]
    %v75 = vld [vmem:[%s1 + $0xb8] sm:$0xf]
    %v76 = vld [vmem:[%s1 + $0xbc] sm:$0xf]
    %v77 = vld [vmem:[%s1 + $0xc0] sm:$0xf]
    %v78 = vld [vmem:[%s1 + $0xc4] sm:$0xf]
    %v79 = vld [vmem:[%s1 + $0xc8] sm:$0xf]
    %v80 = vld [vmem:[%s1 + $0xcc] sm:$0xf]
    %v81 = vld [vmem:[%s1 + $0xd0] sm:$0xf]
    %v82 = vld [vmem:[%s1 + $0xd4] sm:$0xf]
    %v83 = vld [vmem:[%s1 + $0xd8] sm:$0xf]
    %v84 = vld [vmem:[%s1 + $0xdc] sm:$0xf]
    %v85 = vld [vmem:[%s1 + $0xe0] sm:$0xf]
    %v86 = vld [vmem:[%s1 + $0xe4] sm:$0xf]
    %v87 = vld [vmem:[%s1 + $0xe8] sm:$0xf]
    %v88 = vld [vmem:[%s1 + $0xec] sm:$0xf]
    %v89 = vld [vmem:[%s1 + $0xf0] sm:$0xf]
    %v90 = vld [vmem:[%s1 + $0xf4] sm:$0xf]
    %v91 = vld [vmem:[%s1 + $0xf8] sm:$0xf]
    %v92 = vld [vmem:[%s1 + $0xfc] sm:$0xf]
    %v93 = vld [vmem:[%s1 + $0x100] sm:$0xf]
    %v94 = vld [vmem:[%s1 + $0x104] sm:$0xf]
    %v95 = vld [vmem:[%s1 + $0x108] sm:$0xf]
    %v96 = vld [vmem:[%s1 + $0x10c] sm:$0xf]
    %v97 = vld [vmem:[%s1 + $0x110] sm:$0xf]
    %v98 = vld [vmem:[%s1 + $0x114] sm:$0xf]
    %v99 = vld [vmem:[%s1 + $0x118] sm:$0xf]
    %v100 = vld [vmem:[%s1 + $0x11c] sm:$0xf]
    %v101 = vld [vmem:[%s1 + $0x120] sm:$0xf]
    %v102 = vld [vmem:[%s1 + $0x124] sm:$0xf]
    %v103 = vld [vmem:[%s1 + $0x128] sm:$0xf]
    %v104 = vld [vmem:[%s1 + $0x12c] sm:$0xf]
    %v105 = vld [vmem:[%s1 + $0x130] sm:$0xf]
    %v106 = vld [vmem:[%s1 + $0x134] sm:$0xf]
    %v107 = vld [vmem:[%s1 + $0x138] sm:$0xf]
    %v108 = vld [vmem:[%s1 + $0x13c] sm:$0xf]
    %v109 = vld [vmem:[%s1 + $0x140] sm:$0xf]
    %v110 = vld [vmem:[%s1 + $0x144] sm:$0xf]
    %v111 = vld [vmem:[%s1 + $0x148] sm:$0xf]
    %v112 = vld [vmem:[%s1 + $0x14c] sm:$0xf]
    %v113 = vld [vmem:[%s1 + $0x150] sm:$0xf]
    %v114 = vld [vmem:[%s1 + $0x154] sm:$0xf]
    %v115 = vld [vmem:[%s1 + $0x158] sm:$0xf]
    %v116 = vld [vmem:[%s1 + $0x15c] sm:$0xf]
    %v117 = vld [vmem:[%s1 + $0x160] sm:$0xf]
    %v118 = vld [vmem:[%s1 + $0x164] sm:$0xf]
    %v119 = vld [vmem:[%s1 + $0x168] sm:$0xf]
    %v120 = vld [vmem:[%s1 + $0x16c] sm:$0xf]
    %v121 = vld [vmem:[%s1 + $0x170] sm:$0xf]
    %v122 = vld [vmem:[%s1 + $0x174] sm:$0xf]
    %v123 = vld [vmem:[%s1 + $0x178] sm:$0xf]
    %v124 = vld [vmem:[%s1 + $0x17c] sm:$0xf]
    %v125 = vld [vmem:[%s1 + $0x180] sm:$0xf]
    %v126 = vld [vmem:[%s1 + $0x184] sm:$0xf]
    %v127 = vld [vmem:[%s1 + $0x188] sm:$0xf]
    %v128 = vld [vmem:[%s1 + $0x18c] sm:$0xf]
    %v129 = vld [vmem:[%s1 + $0x190] sm:$0xf]
    %v130 = vld [vmem:[%s1 + $0x194] sm:$0xf]
    %v131 = vld [vmem:[%s1 + $0x198] sm:$0xf]
    %v132 = vld [vmem:[%s1 + $0x19c] sm:$0xf]
    %v133 = vld [vmem:[%s1 + $0x1a0] sm:$0xf]
    %v134 = vld [vmem:[%s1 + $0x1a4] sm:$0xf]
    %v135 = vld [vmem:[%s1 + $0x1a8] sm:$0xf]
    %v136 = vld [vmem:[%s1 + $0x1ac] sm:$0xf]
    %v137 = vld [vmem:[%s1 + $0x1b0] sm:$0xf]
    %v138 = vld [vmem:[%s1 + $0x1b4] sm:$0xf]
    %v139 = vld [vmem:[%s1 + $0x1b8] sm:$0xf]
    %v140 = vld [vmem:[%s1 + $0x1bc] sm:$0xf]
    %v141 = vld [vmem:[%s1 + $0x1c0] sm:$0xf]
    %v142 = vld [vmem:[%s1 + $0x1c4] sm:$0xf]
    %v143 = vld [vmem:[%s1 + $0x1c8] sm:$0xf]
    %v144 = vld [vmem:[%s1 + $0x1cc] sm:$0xf]
    %v145 = vld [vmem:[%s1 + $0x1d0] sm:$0xf]
    %v146 = vld [vmem:[%s1 + $0x1d4] sm:$0xf]
    %v147 = vld [vmem:[%s1 + $0x1d8] sm:$0xf]
    %v148 = vld [vmem:[%s1 + $0x1dc] sm:$0xf]
    %v149 = vld [vmem:[%s1 + $0x1e0] sm:$0xf]
    %v150 = vld [vmem:[%s1 + $0x1e4] sm:$0xf]
    %v151 = vld [vmem:[%s1 + $0x1e8] sm:$0xf]
    %v152 = vld [vmem:[%s1 + $0x1ec] sm:$0xf]
    %v153 = vld [vmem:[%s1 + $0x1f0] sm:$0xf]
    %v154 = vld [vmem:[%s1 + $0x1f4] sm:$0xf]
    %v155 = vld [vmem:[%s1 + $0x1f8] sm:$0xf]
    %v156 = vld [vmem:[%s1 + $0x1fc] sm:$0xf]
    %v157 = vld [vmem:[%s1 + $0x200] sm:$0xf]
    %v158 = vld [vmem:[%s1 + $0x204] sm:$0xf]
    %v159 = vld [vmem:[%s1 + $0x208] sm:$0xf]
    %v160 = vld [vmem:[%s1 + $0x20c] sm:$0xf]
    %v161 = vld [vmem:[%s1 + $0x210] sm:$0xf]
    %v162 = vld [vmem:[%s1 + $0x214] sm:$0xf]
    %v163 = vld [vmem:[%s1 + $0x218] sm:$0xf]
    %v164 = vld [vmem:[%s1 + $0x21c] sm:$0xf]
    %v165 = vld [vmem:[%s1 + $0x220] sm:$0xf]
    %v166 = vld [vmem:[%s1 + $0x224] sm:$0xf]
    %v167 = vld [vmem:[%s1 + $0x228] sm:$0xf]
    %v168 = vld [vmem:[%s1 + $0x22c] sm:$0xf]
    %v169 = vld [vmem:[%s1 + $0x230] sm:$0xf]
    %v170 = vld [vmem:[%s1 + $0x234] sm:$0xf]
    %v171 = vld [vmem:[%s1 + $0x238] sm:$0xf]
    %v172 = vld [vmem:[%s1 + $0x23c] sm:$0xf]
    %v173 = vld [vmem:[%s1 + $0x240] sm:$0xf]
    %v174 = vld [vmem:[%s1 + $0x244] sm:$0xf]
    %v175 = vld [vmem:[%s1 + $0x248] sm:$0xf]
    %v176 = vld [vmem:[%s1 + $0x24c] sm:$0xf]
    %v177 = vld [vmem:[%s1 + $0x250] sm:$0xf]
    %v178 = vld [vmem:[%s1 + $0x254] sm:$0xf]
    %v179 = vld [vmem:[%s1 + $0x258] sm:$0xf]
    %v180 = vld [vmem:[%s1 + $0x25c] sm:$0xf]
    %v181 = vld [vmem:[%s1 + $0x260] sm:$0xf]
    %v182 = vld [vmem:[%s1 + $0x264] sm:$0xf]
    %v183 = vld [vmem:[%s1 + $0x268] sm:$0xf]
    %v184 = vld [vmem:[%s1 + $0x26c] sm:$0xf]
    %v185 = vld [vmem:[%s1 + $0x270] sm:$0xf]
    %v186 = vld [vmem:[%s1 + $0x274] sm:$0xf]
    %v187 = vld [vmem:[%s1 + $0x278] sm:$0xf]
    %v188 = vld [vmem:[%s1 + $0x27c] sm:$0xf]
    %v189 = vld [vmem:[%s1 + $0x280] sm:$0xf]
    %v190 = vld [vmem:[%s1 + $0x284] sm:$0xf]
    %v191 = vld [vmem:[%s1 + $0x288] sm:$0xf]
    %v192 = vld [vmem:[%s1 + $0x28c] sm:$0xf]
    %v193 = vld [vmem:[%s1 + $0x290] sm:$0xf]
    %v194 = vld [vmem:[%s1 + $0x294] sm:$0xf]
    %v195 = vld [vmem:[%s1 + $0x298] sm:$0xf]
    %v196 = vld [vmem:[%s1 + $0x29c] sm:$0xf]
    %v197 = vld [vmem:[%s1 + $0x2a0] sm:$0xf]
    %v198 = vld [vmem:[%s1 + $0x2a4] sm:$0xf]
    %v199 = vld [vmem:[%s1 + $0x2a8] sm:$0xf]
    %v200 = vld [vmem:[%s1 + $0x2ac] sm:$0xf]
    %v201 = vld [vmem:[%s1 + $0x2b0] sm:$0xf]
    %v202 = vld [vmem:[%s1 + $0x2b4] sm:$0xf]
    %v203 = vld [vmem:[%s1 + $0x2b8] sm:$0xf]
    %v204 = vld [vmem:[%s1 + $0x2bc] sm:$0xf]
    %v205 = vld [vmem:[%s1 + $0x2c0] sm:$0xf]
    %v206 = vld [vmem:[%s1 + $0x2c4] sm:$0xf]
    %v207 = vld [vmem:[%s1 + $0x2c8] sm:$0xf]
    %v208 = vld [vmem:[%s1 + $0x2cc] sm:$0xf]
    %v209 = vld [vmem:[%s1 + $0x2d0] sm:$0xf]
    %v210 = vld [vmem:[%s1 + $0x2d4] sm:$0xf]
    %v211 = vld [vmem:[%s1 + $0x2d8] sm:$0xf]
    %v212 = vld [vmem:[%s1 + $0x2dc] sm:$0xf]
    %v213 = vld [vmem:[%s1 + $0x2e0] sm:$0xf]
    %v214 = vld [vmem:[%s1 + $0x2e4] sm:$0xf]
    %v215 = vld [vmem:[%s1 + $0x2e8] sm:$0xf]
    %v216 = vld [vmem:[%s1 + $0x2ec] sm:$0xf]
    %v217 = vld [vmem:[%s1 + $0x2f0] sm:$0xf]
    %v218 = vld [vmem:[%s1 + $0x2f4] sm:$0xf]
    %v219 = vld [vmem:[%s1 + $0x2f8] sm:$0xf]
    %v220 = vld [vmem:[%s1 + $0x2fc] sm:$0xf]
    %v221 = vld [vmem:[%s1 + $0x300] sm:$0xf]
    %v222 = vld [vmem:[%s1 + $0x304] sm:$0xf]
    %v223 = vld [vmem:[%s1 + $0x308] sm:$0xf]
    %v224 = vld [vmem:[%s1 + $0x30c] sm:$0xf]
    %v225 = vld [vmem:[%s1 + $0x310] sm:$0xf]
    %v226 = vld [vmem:[%s1 + $0x314] sm:$0xf]
    %v227 = vld [vmem:[%s1 + $0x318] sm:$0xf]
    %v228 = vld [vmem:[%s1 + $0x31c] sm:$0xf]
    %v229 = vld [vmem:[%s1 + $0x320] sm:$0xf]
    %v230 = vld [vmem:[%s1 + $0x324] sm:$0xf]
    %v231 = vld [vmem:[%s1 + $0x328] sm:$0xf]
    %v232 = vld [vmem:[%s1 + $0x32c] sm:$0xf]
    %v233 = vld [vmem:[%s1 + $0x330] sm:$0xf]
    %v234 = vld [vmem:[%s1 + $0x334] sm:$0xf]
    %v235 = vld [vmem:[%s1 + $0x338] sm:$0xf]
    %v236 = vld [vmem:[%s1 + $0x33c] sm:$0xf]
    %v237 = vld [vmem:[%s1 + $0x340] sm:$0xf]
    %v238 = vld [vmem:[%s1 + $0x344] sm:$0xf]
    %v239 = vld [vmem:[%s1 + $0x348] sm:$0xf]
    %v240 = vld [vmem:[%s1 + $0x34c] sm:$0xf]
    %v241 = vld [vmem:[%s1 + $0x350] sm:$0xf]
    %v242 = vld [vmem:[%s1 + $0x354] sm:$0xf]
    %v243 = vld [vmem:[%s1 + $0x358] sm:$0xf]
    %v244 = vld [vmem:[%s1 + $0x35c] sm:$0xf]
    %v245 = vld [vmem:[%s1 + $0x360] sm:$0xf]
    %v246 = vld [vmem:[%s1 + $0x364] sm:$0xf]
    %v247 = vld [vmem:[%s1 + $0x368] sm:$0xf]
    %v248 = vld [vmem:[%s1 + $0x36c] sm:$0xf]
    %v249 = vld [vmem:[%s1 + $0x370] sm:$0xf]
    %v250 = vld [vmem:[%s1 + $0x374] sm:$0xf]
    %v251 = vld [vmem:[%s1 + $0x378] sm:$0xf]
    %v252 = vld [vmem:[%s1 + $0x37c] sm:$0xf]
    %v253 = vld [vmem:[%s1 + $0x380] sm:$0xf]
    %v254 = vld [vmem:[%s1 + $0x384] sm:$0xf]
    %v255 = vld [vmem:[%s1 + $0x388] sm:$0xf]
    %v256 = vld [vmem:[%s1 + $0x38c] sm:$0xf]
    %v257 = vld [vmem:[%s1 + $0x390] sm:$0xf]
    %v258 = vld [vmem:[%s1 + $0x394] sm:$0xf]
    %v259 = vld [vmem:[%s1 + $0x398] sm:$0xf]
    %v260 = vld [vmem:[%s1 + $0x39c] sm:$0xf]
    %v261 = vld [vmem:[%s1 + $0x3a0] sm:$0xf]
    %v262 = vld [vmem:[%s1 + $0x3a4] sm:$0xf]
    %v263 = vld [vmem:[%s1 + $0x3a8] sm:$0xf]
    %v264 = vld [vmem:[%s1 + $0x3ac] sm:$0xf]
    %v265 = vld [vmem:[%s1 + $0x3b0] sm:$0xf]
    %v266 = vld [vmem:[%s1 + $0x3b4] sm:$0xf]
    %v267 = vld [vmem:[%s1 + $0x3b8] sm:$0xf]
    %v268 = vld [vmem:[%s1 + $0x3bc] sm:$0xf]
    %v269 = vld [vmem:[%s1 + $0x3c0] sm:$0xf]
    %v270 = vld [vmem:[%s1 + $0x3c4] sm:$0xf]
    %v271 = vld [vmem:[%s1 + $0x3c8] sm:$0xf]
    %v272 = vld [vmem:[%s1 + $0x3cc] sm:$0xf]
    %v273 = vld [vmem:[%s1 + $0x3d0] sm:$0xf]
    %v274 = vld [vmem:[%s1 + $0x3d4] sm:$0xf]
    %v275 = vld [vmem:[%s1 + $0x3d8] sm:$0xf]
    %v276 = vld [vmem:[%s1 + $0x3dc] sm:$0xf]
    %v277 = vld [vmem:[%s1 + $0x3e0] sm:$0xf]
    %v278 = vld [vmem:[%s1 + $0x3e4] sm:$0xf]
    %v279 = vld [vmem:[%s1 + $0x3e8] sm:$0xf]
    %v280 = vld [vmem:[%s1 + $0x3ec] sm:$0xf]
    %v281 = vld [vmem:[%s1 + $0x3f0] sm:$0xf]
    %v282 = vld [vmem:[%s1 + $0x3f4] sm:$0xf]
    %v283 = vld [vmem:[%s1 + $0x3f8] sm:$0xf]
    %v284 = vld [vmem:[%s1 + $0x3fc] sm:$0xf]
    %v285 = vld [vmem:[%s1 + $0x400] sm:$0xf]
    %v286 = vld [vmem:[%s1 + $0x404] sm:$0xf]
    %v287 = vld [vmem:[%s1 + $0x408] sm:$0xf]
    %v288 = vld [vmem:[%s1 + $0x40c] sm:$0xf]
    %v289 = vld [vmem:[%s1 + $0x410] sm:$0xf]
    %v290 = vld [vmem:[%s1 + $0x414] sm:$0xf]
    %v291 = vld [vmem:[%s1 + $0x418] sm:$0xf]
    %v292 = vld [vmem:[%s1 + $0x41c] sm:$0xf]
    %v293 = vld [vmem:[%s1 + $0x420] sm:$0xf]
    %v294 = vld [vmem:[%s1 + $0x424] sm:$0xf]
    %v295 = vld [vmem:[%s1 + $0x428] sm:$0xf]
    %v296 = vld [vmem:[%s1 + $0x42c] sm:$0xf]
    %v297 = vld [vmem:[%s1 + $0x430] sm:$0xf]
    %v298 = vld [vmem:[%s1 + $0x434] sm:$0xf]
    %v299 = vld [vmem:[%s1 + $0x438] sm:$0xf]
    %v300 = vld [vmem:[%s1 + $0x43c] sm:$0xf]
    %v301 = vld [vmem:[%s1 + $0x440] sm:$0xf]
    %v302 = vld [vmem:[%s1 + $0x444] sm:$0xf]
    %v303 = vld [vmem:[%s1 + $0x448] sm:$0xf]
    %v304 = vld [vmem:[%s1 + $0x44c] sm:$0xf]
    %v305 = vld [vmem:[%s1 + $0x450] sm:$0xf]
    %v306 = vld [vmem:[%s1 + $0x454] sm:$0xf]
    %v307 = vld [vmem:[%s1 + $0x458] sm:$0xf]
    %v308 = vld [vmem:[%s1 + $0x45c] sm:$0xf]
    %v309 = vld [vmem:[%s1 + $0x460] sm:$0xf]
    %v310 = vld [vmem:[%s1 + $0x464] sm:$0xf]
    %v311 = vld [vmem:[%s1 + $0x468] sm:$0xf]
    %v312 = vld [vmem:[%s1 + $0x46c] sm:$0xf]
    %v313 = vld [vmem:[%s1 + $0x470] sm:$0xf]
    %v314 = vld [vmem:[%s1 + $0x474] sm:$0xf]
    %v315 = vld [vmem:[%s1 + $0x478] sm:$0xf]
    %v316 = vld [vmem:[%s1 + $0x47c] sm:$0xf]
    %v317 = vld [vmem:[%s1 + $0x480] sm:$0xf]
    %v318 = vld [vmem:[%s1 + $0x484] sm:$0xf]
    %v319 = vld [vmem:[%s1 + $0x488] sm:$0xf]
    %v320 = vld [vmem:[%s1 + $0x48c] sm:$0xf]
    %v321 = vld [vmem:[%s1 + $0x490] sm:$0xf]
    %v322 = vld [vmem:[%s1 + $0x494] sm:$0xf]
    %v323 = vld [vmem:[%s1 + $0x498] sm:$0xf]
    %v324 = vld [vmem:[%s1 + $0x49c] sm:$0xf]
    %v325 = vld [vmem:[%s1 + $0x4a0] sm:$0xf]
    %v326 = vld [vmem:[%s1 + $0x4a4] sm:$0xf]
    %v327 = vld [vmem:[%s1 + $0x4a8] sm:$0xf]
    %v328 = vld [vmem:[%s1 + $0x4ac] sm:$0xf]
    %v329 = vld [vmem:[%s1 + $0x4b0] sm:$0xf]
    %v330 = vld [vmem:[%s1 + $0x4b4] sm:$0xf]
    %v331 = vld [vmem:[%s1 + $0x4b8] sm:$0xf]
    %v332 = vld [vmem:[%s1 + $0x4bc] sm:$0xf]
    %v333 = vld [vmem:[%s1 + $0x4c0] sm:$0xf]
    %v334 = vld [vmem:[%s1 + $0x4c4] sm:$0xf]
    %v335 = vld [vmem:[%s1 + $0x4c8] sm:$0xf]
    %v336 = vld [vmem:[%s1 + $0x4cc] sm:$0xf]
    %v337 = vld [vmem:[%s1 + $0x4d0] sm:$0xf]
    %v338 = vld [vmem:[%s1 + $0x4d4] sm:$0xf]
    %v339 = vld [vmem:[%s1 + $0x4d8] sm:$0xf]
    %v340 = vld [vmem:[%s1 + $0x4dc] sm:$0xf]
    %v341 = vld [vmem:[%s1 + $0x4e0] sm:$0xf]
    %v342 = vld [vmem:[%s1 + $0x4e4] sm:$0xf]
    %v343 = vld [vmem:[%s1 + $0x4e8] sm:$0xf]
    %v344 = vld [vmem:[%s1 + $0x4ec] sm:$0xf]
    %v345 = vld [vmem:[%s1 + $0x4f0] sm:$0xf]
    %v346 = vld [vmem:[%s1 + $0x4f4] sm:$0xf]
    %v347 = vld [vmem:[%s1 + $0x4f8] sm:$0xf]
    %v348 = vld [vmem:[%s1 + $0x4fc] sm:$0xf]
    %v349 = vld [vmem:[%s1 + $0x500] sm:$0xf]
    %v350 = vld [vmem:[%s1 + $0x504] sm:$0xf]
    %v351 = vld [vmem:[%s1 + $0x508] sm:$0xf]
    %v352 = vld [vmem:[%s1 + $0x50c] sm:$0xf]
    %v353 = vld [vmem:[%s1 + $0x510] sm:$0xf]
    %v354 = vld [vmem:[%s1 + $0x514] sm:$0xf]
    %v355 = vld [vmem:[%s1 + $0x518] sm:$0xf]
    %v356 = vld [vmem:[%s1 + $0x51c] sm:$0xf]
    %v357 = vld [vmem:[%s1 + $0x520] sm:$0xf]
    %v358 = vld [vmem:[%s1 + $0x524] sm:$0xf]
    %v359 = vld [vmem:[%s1 + $0x528] sm:$0xf]
    %v360 = vld [vmem:[%s1 + $0x52c] sm:$0xf]
    %v361 = vld [vmem:[%s1 + $0x530] sm:$0xf]
    %v362 = vld [vmem:[%s1 + $0x534] sm:$0xf]
    %v363 = vld [vmem:[%s1 + $0x538] sm:$0xf]
    %v364 = vld [vmem:[%s1 + $0x53c] sm:$0xf]
    %v365 = vld [vmem:[%s1 + $0x540] sm:$0xf]
    %v366 = vld [vmem:[%s1 + $0x544] sm:$0xf]
    %v367 = vld [vmem:[%s1 + $0x548] sm:$0xf]
    %v368 = vld [vmem:[%s1 + $0x54c] sm:$0xf]
    %v369 = vld [vmem:[%s1 + $0x550] sm:$0xf]
    %v370 = vld [vmem:[%s1 + $0x554] sm:$0xf]
    %v371 = vld [vmem:[%s1 + $0x558] sm:$0xf]
    %v372 = vld [vmem:[%s1 + $0x55c] sm:$0xf]
    %v373 = vld [vmem:[%s1 + $0x560] sm:$0xf]
    %v374 = vld [vmem:[%s1 + $0x564] sm:$0xf]
    %v375 = vld [vmem:[%s1 + $0x568] sm:$0xf]
    %v376 = vld [vmem:[%s1 + $0x56c] sm:$0xf]
    %v377 = vld [vmem:[%s1 + $0x570] sm:$0xf]
    %v378 = vld [vmem:[%s1 + $0x574] sm:$0xf]
    %v379 = vld [vmem:[%s1 + $0x578] sm:$0xf]
    %v380 = vld [vmem:[%s1 + $0x57c] sm:$0xf]
    %v381 = vld [vmem:[%s1 + $0x580] sm:$0xf]
    %v382 = vld [vmem:[%s1 + $0x584] sm:$0xf]
    %v383 = vld [vmem:[%s1 + $0x588] sm:$0xf]
    %v384 = vld [vmem:[%s1 + $0x58c] sm:$0xf]
    %v385 = vld [vmem:[%s1 + $0x590] sm:$0xf]
    %v386 = vld [vmem:[%s1 + $0x594] sm:$0xf]
    %v387 = vld [vmem:[%s1 + $0x598] sm:$0xf]
    %v388 = vld [vmem:[%s1 + $0x59c] sm:$0xf]
    %v389 = vld [vmem:[%s1 + $0x5a0] sm:$0xf]
    %v390 = vld [vmem:[%s1 + $0x5a4] sm:$0xf]
    %v391 = vld [vmem:[%s1 + $0x5a8] sm:$0xf]
    %v392 = vld [vmem:[%s1 + $0x5ac] sm:$0xf]
    %v393 = vld [vmem:[%s1 + $0x5b0] sm:$0xf]
    %v394 = vld [vmem:[%s1 + $0x5b4] sm:$0xf]
    %v395 = vld [vmem:[%s1 + $0x5b8] sm:$0xf]
    %v396 = vld [vmem:[%s1 + $0x5bc] sm:$0xf]
    %v397 = vld [vmem:[%s1 + $0x5c0] sm:$0xf]
    %v398 = vld [vmem:[%s1 + $0x5c4] sm:$0xf]
    %v399 = vld [vmem:[%s1 + $0x5c8] sm:$0xf]
    %v400 = vld [vmem:[%s1 + $0x5cc] sm:$0xf]
    %v401 = vld [vmem:[%s1 + $0x5d0] sm:$0xf]
    %v402 = vld [vmem:[%s1 + $0x5d4] sm:$0xf]
    %v403 = vld [vmem:[%s1 + $0x5d8] sm:$0xf]
    %v404 = vld [vmem:[%s1 + $0x5dc] sm:$0xf]
    %v405 = vld [vmem:[%s1 + $0x5e0] sm:$0xf]
    %v406 = vld [vmem:[%s1 + $0x5e4] sm:$0xf]
    %v407 = vld [vmem:[%s1 + $0x5e8] sm:$0xf]
    %v408 = vld [vmem:[%s1 + $0x5ec] sm:$0xf]
    %v409 = vld [vmem:[%s1 + $0x5f0] sm:$0xf]
    %v410 = vld [vmem:[%s1 + $0x5f4] sm:$0xf]
    %v411 = vld [vmem:[%s1 + $0x5f8] sm:$0xf]
    %v412 = vld [vmem:[%s1 + $0x5fc] sm:$0xf]
    %v413 = vld [vmem:[%s1 + $0x600] sm:$0xf]
    %v414 = vld [vmem:[%s1 + $0x604] sm:$0xf]
    %v415 = vld [vmem:[%s1 + $0x608] sm:$0xf]
    %v416 = vld [vmem:[%s1 + $0x60c] sm:$0xf]
    %v417 = vld [vmem:[%s1 + $0x610] sm:$0xf]
    %v418 = vld [vmem:[%s1 + $0x614] sm:$0xf]
    %v419 = vld [vmem:[%s1 + $0x618] sm:$0xf]
    %v420 = vld [vmem:[%s1 + $0x61c] sm:$0xf]
    %v421 = vld [vmem:[%s1 + $0x620] sm:$0xf]
    %v422 = vld [vmem:[%s1 + $0x624] sm:$0xf]
    %v423 = vld [vmem:[%s1 + $0x628] sm:$0xf]
    %v424 = vld [vmem:[%s1 + $0x62c] sm:$0xf]
    %v425 = vld [vmem:[%s1 + $0x630] sm:$0xf]
    %v426 = vld [vmem:[%s1 + $0x634] sm:$0xf]
    %v427 = vld [vmem:[%s1 + $0x638] sm:$0xf]
    %v428 = vld [vmem:[%s1 + $0x63c] sm:$0xf]
    %v429 = vld [vmem:[%s1 + $0x640] sm:$0xf]
    %v430 = vld [vmem:[%s1 + $0x644] sm:$0xf]
    %v431 = vld [vmem:[%s1 + $0x648] sm:$0xf]
    %v432 = vld [vmem:[%s1 + $0x64c] sm:$0xf]
    %v433 = vld [vmem:[%s1 + $0x650] sm:$0xf]
    %v434 = vld [vmem:[%s1 + $0x654] sm:$0xf]
    %v435 = vld [vmem:[%s1 + $0x658] sm:$0xf]
    %v436 = vld [vmem:[%s1 + $0x65c] sm:$0xf]
    %v437 = vld [vmem:[%s1 + $0x660] sm:$0xf]
    %v438 = vld [vmem:[%s1 + $0x664] sm:$0xf]
    %v439 = vld [vmem:[%s1 + $0x668] sm:$0xf]
    %v440 = vld [vmem:[%s1 + $0x66c] sm:$0xf]
    %v441 = vld [vmem:[%s1 + $0x670] sm:$0xf]
    %v442 = vld [vmem:[%s1 + $0x674] sm:$0xf]
    %v443 = vld [vmem:[%s1 + $0x678] sm:$0xf]
    %v444 = vld [vmem:[%s1 + $0x67c] sm:$0xf]
    %v445 = vld [vmem:[%s1 + $0x680] sm:$0xf]
    %v446 = vld [vmem:[%s1 + $0x684] sm:$0xf]
    %v447 = vld [vmem:[%s1 + $0x688] sm:$0xf]
    %v448 = vld [vmem:[%s1 + $0x68c] sm:$0xf]
    %v449 = vld [vmem:[%s1 + $0x690] sm:$0xf]
    %v450 = vld [vmem:[%s1 + $0x694] sm:$0xf]
    %v451 = vld [vmem:[%s1 + $0x698] sm:$0xf]
    %v452 = vld [vmem:[%s1 + $0x69c] sm:$0xf]
    %v453 = vld [vmem:[%s1 + $0x6a0] sm:$0xf]
    %v454 = vld [vmem:[%s1 + $0x6a4] sm:$0xf]
    %v455 = vld [vmem:[%s1 + $0x6a8] sm:$0xf]
    %v456 = vld [vmem:[%s1 + $0x6ac] sm:$0xf]
    %v457 = vld [vmem:[%s1 + $0x6b0] sm:$0xf]
    %v458 = vld [vmem:[%s1 + $0x6b4] sm:$0xf]
    %v459 = vld [vmem:[%s1 + $0x6b8] sm:$0xf]
    %v460 = vld [vmem:[%s1 + $0x6bc] sm:$0xf]
    %v461 = vld [vmem:[%s1 + $0x6c0] sm:$0xf]
    %v462 = vld [vmem:[%s1 + $0x6c4] sm:$0xf]
    %v463 = vld [vmem:[%s1 + $0x6c8] sm:$0xf]
    %v464 = vld [vmem:[%s1 + $0x6cc] sm:$0xf]
    %v465 = vld [vmem:[%s1 + $0x6d0] sm:$0xf]
    %v466 = vld [vmem:[%s1 + $0x6d4] sm:$0xf]
    %v467 = vld [vmem:[%s1 + $0x6d8] sm:$0xf]
    %v468 = vld [vmem:[%s1 + $0x6dc] sm:$0xf]
    %v469 = vld [vmem:[%s1 + $0x6e0] sm:$0xf]
    %v470 = vld [vmem:[%s1 + $0x6e4] sm:$0xf]
    %v471 = vld [vmem:[%s1 + $0x6e8] sm:$0xf]
    %v472 = vld [vmem:[%s1 + $0x6ec] sm:$0xf]
    %v473 = vld [vmem:[%s1 + $0x6f0] sm:$0xf]
    %v474 = vld [vmem:[%s1 + $0x6f4] sm:$0xf]
    %v475 = vld [vmem:[%s1 + $0x6f8] sm:$0xf]
    %v476 = vld [vmem:[%s1 + $0x6fc] sm:$0xf]
    %v477 = vld [vmem:[%s1 + $0x700] sm:$0xf]
    %v478 = vld [vmem:[%s1 + $0x704] sm:$0xf]
    %v479 = vld [vmem:[%s1 + $0x708] sm:$0xf]
    %v480 = vld [vmem:[%s1 + $0x70c] sm:$0xf]
    %v481 = vld [vmem:[%s1 + $0x710] sm:$0xf]
    %v482 = vld [vmem:[%s1 + $0x714] sm:$0xf]
    %v483 = vld [vmem:[%s1 + $0x718] sm:$0xf]
    %v484 = vld [vmem:[%s1 + $0x71c] sm:$0xf]
    %v485 = vld [vmem:[%s1 + $0x720] sm:$0xf]
    %v486 = vld [vmem:[%s1 + $0x724] sm:$0xf]
    %v487 = vld [vmem:[%s1 + $0x728] sm:$0xf]
    %v488 = vld [vmem:[%s1 + $0x72c] sm:$0xf]
    %v489 = vld [vmem:[%s1 + $0x730] sm:$0xf]
    %v490 = vld [vmem:[%s1 + $0x734] sm:$0xf]
    %v491 = vld [vmem:[%s1 + $0x738] sm:$0xf]
    %v492 = vld [vmem:[%s1 + $0x73c] sm:$0xf]
    %v493 = vld [vmem:[%s1 + $0x740] sm:$0xf]
    %v494 = vld [vmem:[%s1 + $0x744] sm:$0xf]
    %v495 = vld [vmem:[%s1 + $0x748] sm:$0xf]
    %v496 = vld [vmem:[%s1 + $0x74c] sm:$0xf]
    %v497 = vld [vmem:[%s1 + $0x750] sm:$0xf]
    %v498 = vld [vmem:[%s1 + $0x754] sm:$0xf]
    %v499 = vld [vmem:[%s1 + $0x758] sm:$0xf]
    %v500 = vld [vmem:[%s1 + $0x75c] sm:$0xf]
    %v501 = vld [vmem:[%s1 + $0x760] sm:$0xf]
    %v502 = vld [vmem:[%s1 + $0x764] sm:$0xf]
    %v503 = vld [vmem:[%s1 + $0x768] sm:$0xf]
    %v504 = vld [vmem:[%s1 + $0x76c] sm:$0xf]
    %v505 = vld [vmem:[%s1 + $0x770] sm:$0xf]
    %v506 = vld [vmem:[%s1 + $0x774] sm:$0xf]
    %v507 = vld [vmem:[%s1 + $0x778] sm:$0xf]
    %v508 = vld [vmem:[%s1 + $0x77c] sm:$0xf]
    %v509 = vld [vmem:[%s1 + $0x780] sm:$0xf]
    %v510 = vld [vmem:[%s1 + $0x784] sm:$0xf]
    %v511 = vld [vmem:[%s1 + $0x788] sm:$0xf]
    %v512 = vld [vmem:[%s1 + $0x78c] sm:$0xf]
    %v513 = vld [vmem:[%s1 + $0x790] sm:$0xf]
    %v514 = vld [vmem:[%s1 + $0x794] sm:$0xf]
    %v515 = vld [vmem:[%s1 + $0x798] sm:$0xf]
    %v516 = vld [vmem:[%s1 + $0x79c] sm:$0xf]
    %v517 = vld [vmem:[%s1 + $0x7a0] sm:$0xf]
    %v518 = vld [vmem:[%s1 + $0x7a4] sm:$0xf]
    %v519 = vld [vmem:[%s1 + $0x7a8] sm:$0xf]
    %v520 = vld [vmem:[%s1 + $0x7ac] sm:$0xf]
    %v521 = vld [vmem:[%s1 + $0x7b0] sm:$0xf]
    %v522 = vld [vmem:[%s1 + $0x7b4] sm:$0xf]
    %v523 = vld [vmem:[%s1 + $0x7b8] sm:$0xf]
    %v524 = vld [vmem:[%s1 + $0x7bc] sm:$0xf]
    %v525 = vld [vmem:[%s1 + $0x7c0] sm:$0xf]
    %v526 = vld [vmem:[%s1 + $0x7c4] sm:$0xf]
    %v527 = vld [vmem:[%s1 + $0x7c8] sm:$0xf]
    %v528 = vld [vmem:[%s1 + $0x7cc] sm:$0xf]
    %v529 = vld [vmem:[%s1 + $0x7d0] sm:$0xf]
    %v530 = vld [vmem:[%s1 + $0x7d4] sm:$0xf]
    %v531 = vld [vmem:[%s1 + $0x7d8] sm:$0xf]
    %v532 = vld [vmem:[%s1 + $0x7dc] sm:$0xf]
    %v533 = vld [vmem:[%s1 + $0x7e0] sm:$0xf]
    %v534 = vld [vmem:[%s1 + $0x7e4] sm:$0xf]
    %v535 = vld [vmem:[%s1 + $0x7e8] sm:$0xf]
    %v536 = vld [vmem:[%s1 + $0x7ec] sm:$0xf]
    %v537 = vld [vmem:[%s1 + $0x7f0] sm:$0xf]
    %v538 = vld [vmem:[%s1 + $0x7f4] sm:$0xf]
    %v539 = vld [vmem:[%s1 + $0x7f8] sm:$0xf]
    %v540 = vld [vmem:[%s1 + $0x7fc] sm:$0xf]
    %v541 = vld [vmem:[%s1 + $0x800] sm:$0xf]
    %v542 = vld [vmem:[%s1 + $0x804] sm:$0xf]
    %v543 = vld [vmem:[%s1 + $0x808] sm:$0xf]
    %v544 = vld [vmem:[%s1 + $0x80c] sm:$0xf]
    %v545 = vld [vmem:[%s1 + $0x810] sm:$0xf]
    %v546 = vld [vmem:[%s1 + $0x814] sm:$0xf]
    %v547 = vld [vmem:[%s1 + $0x818] sm:$0xf]
    %v548 = vld [vmem:[%s1 + $0x81c] sm:$0xf]
    %v549 = vld [vmem:[%s1 + $0x820] sm:$0xf]
    %v550 = vld [vmem:[%s1 + $0x824] sm:$0xf]
    %v551 = vld [vmem:[%s1 + $0x828] sm:$0xf]
    %v552 = vld [vmem:[%s1 + $0x82c] sm:$0xf]
    %v553 = vld [vmem:[%s1 + $0x830] sm:$0xf]
    %v554 = vld [vmem:[%s1 + $0x834] sm:$0xf]
    %v555 = vld [vmem:[%s1 + $0x838] sm:$0xf]
    %v556 = vld [vmem:[%s1 + $0x83c] sm:$0xf]
    %v557 = vld [vmem:[%s1 + $0x840] sm:$0xf]
    %v558 = vld [vmem:[%s1 + $0x844] sm:$0xf]
    %v559 = vld [vmem:[%s1 + $0x848] sm:$0xf]
    %v560 = vld [vmem:[%s1 + $0x84c] sm:$0xf]
    %v561 = vld [vmem:[%s1 + $0x850] sm:$0xf]
    %v562 = vld [vmem:[%s1 + $0x854] sm:$0xf]
    %v563 = vld [vmem:[%s1 + $0x858] sm:$0xf]
    %v564 = vld [vmem:[%s1 + $0x85c] sm:$0xf]
    %v565 = vld [vmem:[%s1 + $0x860] sm:$0xf]
    %v566 = vld [vmem:[%s1 + $0x864] sm:$0xf]
    %v567 = vld [vmem:[%s1 + $0x868] sm:$0xf]
    %v568 = vld [vmem:[%s1 + $0x86c] sm:$0xf]
    %v569 = vld [vmem:[%s1 + $0x870] sm:$0xf]
    %v570 = vld [vmem:[%s1 + $0x874] sm:$0xf]
    %v571 = vld [vmem:[%s1 + $0x878] sm:$0xf]
    %v572 = vld [vmem:[%s1 + $0x87c] sm:$0xf]
    %v573 = vld [vmem:[%s1 + $0x880] sm:$0xf]
    %v574 = vld [vmem:[%s1 + $0x884] sm:$0xf]
    %v575 = vld [vmem:[%s1 + $0x888] sm:$0xf]
    %v576 = vld [vmem:[%s1 + $0x88c] sm:$0xf]
    %v577 = vld [vmem:[%s1 + $0x890] sm:$0xf]
    %v578 = vld [vmem:[%s1 + $0x894] sm:$0xf]
    %v579 = vld [vmem:[%s1 + $0x898] sm:$0xf]
    %v580 = vld [vmem:[%s1 + $0x89c] sm:$0xf]
    %v581 = vld [vmem:[%s1 + $0x8a0] sm:$0xf]
    %v582 = vld [vmem:[%s1 + $0x8a4] sm:$0xf]
    %v583 = vld [vmem:[%s1 + $0x8a8] sm:$0xf]
    %v584 = vld [vmem:[%s1 + $0x8ac] sm:$0xf]
    %v585 = vld [vmem:[%s1 + $0x8b0] sm:$0xf]
    %v586 = vld [vmem:[%s1 + $0x8b4] sm:$0xf]
    %v587 = vld [vmem:[%s1 + $0x8b8] sm:$0xf]
    %v588 = vld [vmem:[%s1 + $0x8bc] sm:$0xf]
    %v589 = vld [vmem:[%s1 + $0x8c0] sm:$0xf]
    %v590 = vld [vmem:[%s1 + $0x8c4] sm:$0xf]
    %v591 = vld [vmem:[%s1 + $0x8c8] sm:$0xf]
    %v592 = vld [vmem:[%s1 + $0x8cc] sm:$0xf]
    %v593 = vld [vmem:[%s1 + $0x8d0] sm:$0xf]
    %v594 = vld [vmem:[%s1 + $0x8d4] sm:$0xf]
    %v595 = vld [vmem:[%s1 + $0x8d8] sm:$0xf]
    %v596 = vld [vmem:[%s1 + $0x8dc] sm:$0xf]
    %v597 = vld [vmem:[%s1 + $0x8e0] sm:$0xf]
    %v598 = vld [vmem:[%s1 + $0x8e4] sm:$0xf]
    %v599 = vld [vmem:[%s1 + $0x8e8] sm:$0xf]
    %v600 = vld [vmem:[%s1 + $0x8ec] sm:$0xf]
    %v601 = vld [vmem:[%s1 + $0x8f0] sm:$0xf]
    %v602 = vld [vmem:[%s1 + $0x8f4] sm:$0xf]
    %v603 = vld [vmem:[%s1 + $0x8f8] sm:$0xf]
    %v604 = vld [vmem:[%s1 + $0x8fc] sm:$0xf]
    %v605 = vld [vmem:[%s1 + $0x900] sm:$0xf]
    %v606 = vld [vmem:[%s1 + $0x904] sm:$0xf]
    %v607 = vld [vmem:[%s1 + $0x908] sm:$0xf]
    %v608 = vld [vmem:[%s1 + $0x90c] sm:$0xf]
    %v609 = vld [vmem:[%s1 + $0x910] sm:$0xf]
    %v610 = vld [vmem:[%s1 + $0x914] sm:$0xf]
    %v611 = vld [vmem:[%s1 + $0x918] sm:$0xf]
    %v612 = vld [vmem:[%s1 + $0x91c] sm:$0xf]
    %v613 = vld [vmem:[%s1 + $0x920] sm:$0xf]
    %v614 = vld [vmem:[%s1 + $0x924] sm:$0xf]
    %v615 = vld [vmem:[%s1 + $0x928] sm:$0xf]
    %v616 = vld [vmem:[%s1 + $0x92c] sm:$0xf]
    %v617 = vld [vmem:[%s1 + $0x930] sm:$0xf]
    %v618 = vld [vmem:[%s1 + $0x934] sm:$0xf]
    %v619 = vld [vmem:[%s1 + $0x938] sm:$0xf]
    %v620 = vld [vmem:[%s1 + $0x93c] sm:$0xf]
    %v621 = vld [vmem:[%s1 + $0x940] sm:$0xf]
    %v622 = vld [vmem:[%s1 + $0x944] sm:$0xf]
    %v623 = vld [vmem:[%s1 + $0x948] sm:$0xf]
    %v624 = vld [vmem:[%s1 + $0x94c] sm:$0xf]
    %v625 = vld [vmem:[%s1 + $0x950] sm:$0xf]
    %v626 = vld [vmem:[%s1 + $0x954] sm:$0xf]
    %v627 = vld [vmem:[%s1 + $0x958] sm:$0xf]
    %v628 = vld [vmem:[%s1 + $0x95c] sm:$0xf]
    %v629 = vld [vmem:[%s1 + $0x960] sm:$0xf]
    %v630 = vld [vmem:[%s1 + $0x964] sm:$0xf]
    %v631 = vld [vmem:[%s1 + $0x968] sm:$0xf]
    %v632 = vld [vmem:[%s1 + $0x96c] sm:$0xf]
    %v633 = vld [vmem:[%s1 + $0x970] sm:$0xf]
    %v634 = vld [vmem:[%s1 + $0x974] sm:$0xf]
    %v635 = vld [vmem:[%s1 + $0x978] sm:$0xf]
    %v636 = vld [vmem:[%s1 + $0x97c] sm:$0xf]
    %v637 = vld [vmem:[%s1 + $0x980] sm:$0xf]
    %v638 = vld [vmem:[%s1 + $0x984] sm:$0xf]
    %v639 = vld [vmem:[%s1 + $0x988] sm:$0xf]
    %v640 = vld [vmem:[%s1 + $0x98c] sm:$0xf]
    %v641 = vld [vmem:[%s1 + $0x990] sm:$0xf]
    %v642 = vld [vmem:[%s1 + $0x994] sm:$0xf]
    %v643 = vld [vmem:[%s1 + $0x998] sm:$0xf]
    %v644 = vld [vmem:[%s1 + $0x99c] sm:$0xf]
    %v645 = vld [vmem:[%s1 + $0x9a0] sm:$0xf]
    %v646 = vld [vmem:[%s1 + $0x9a4] sm:$0xf]
    %v647 = vld [vmem:[%s1 + $0x9a8] sm:$0xf]
    %v648 = vld [vmem:[%s1 + $0x9ac] sm:$0xf]
    %v649 = vld [vmem:[%s1 + $0x9b0] sm:$0xf]
    %v650 = vld [vmem:[%s1 + $0x9b4] sm:$0xf]
    %v651 = vld [vmem:[%s1 + $0x9b8] sm:$0xf]
    %v652 = vld [vmem:[%s1 + $0x9bc] sm:$0xf]
    %v653 = vld [vmem:[%s1 + $0x9c0] sm:$0xf]
    %v654 = vld [vmem:[%s1 + $0x9c4] sm:$0xf]
    %v655 = vld [vmem:[%s1 + $0x9c8] sm:$0xf]
    %v656 = vld [vmem:[%s1 + $0x9cc] sm:$0xf]
    %v657 = vld [vmem:[%s1 + $0x9d0] sm:$0xf]
    %v658 = vld [vmem:[%s1 + $0x9d4] sm:$0xf]
    %v659 = vld [vmem:[%s1 + $0x9d8] sm:$0xf]
    %v660 = vld [vmem:[%s1 + $0x9dc] sm:$0xf]
    %v661 = vld [vmem:[%s1 + $0x9e0] sm:$0xf]
    %v662 = vld [vmem:[%s1 + $0x9e4] sm:$0xf]
    %v663 = vld [vmem:[%s1 + $0x9e8] sm:$0xf]
    %v664 = vld [vmem:[%s1 + $0x9ec] sm:$0xf]
    %v665 = vld [vmem:[%s1 + $0x9f0] sm:$0xf]
    %v666 = vld [vmem:[%s1 + $0x9f4] sm:$0xf]
    %v667 = vld [vmem:[%s1 + $0x9f8] sm:$0xf]
    %v668 = vld [vmem:[%s1 + $0x9fc] sm:$0xf]
    %v669 = vld [vmem:[%s1 + $0xa00] sm:$0xf]
    %v670 = vld [vmem:[%s1 + $0xa04] sm:$0xf]
    %v671 = vld [vmem:[%s1 + $0xa08] sm:$0xf]
    %v672 = vld [vmem:[%s1 + $0xa0c] sm:$0xf]
    %v673 = vld [vmem:[%s1 + $0xa10] sm:$0xf]
    %v674 = vld [vmem:[%s1 + $0xa14] sm:$0xf]
    %v675 = vld [vmem:[%s1 + $0xa18] sm:$0xf]
    %v676 = vld [vmem:[%s1 + $0xa1c] sm:$0xf]
    %v677 = vld [vmem:[%s1 + $0xa20] sm:$0xf]
    %v678 = vld [vmem:[%s1 + $0xa24] sm:$0xf]
    %v679 = vld [vmem:[%s1 + $0xa28] sm:$0xf]
    %v680 = vld [vmem:[%s1 + $0xa2c] sm:$0xf]
    %v681 = vld [vmem:[%s1 + $0xa30] sm:$0xf]
    %v682 = vld [vmem:[%s1 + $0xa34] sm:$0xf]
    %v683 = vld [vmem:[%s1 + $0xa38] sm:$0xf]
    %v684 = vld [vmem:[%s1 + $0xa3c] sm:$0xf]
    %v685 = vld [vmem:[%s1 + $0xa40] sm:$0xf]
    %v686 = vld [vmem:[%s1 + $0xa44] sm:$0xf]
    %v687 = vld [vmem:[%s1 + $0xa48] sm:$0xf]
    %v688 = vld [vmem:[%s1 + $0xa4c] sm:$0xf]
    %v689 = vld [vmem:[%s1 + $0xa50] sm:$0xf]
    %v690 = vld [vmem:[%s1 + $0xa54] sm:$0xf]
    %v691 = vld [vmem:[%s1 + $0xa58] sm:$0xf]
    %v692 = vld [vmem:[%s1 + $0xa5c] sm:$0xf]
    %v693 = vld [vmem:[%s1 + $0xa60] sm:$0xf]
    %v694 = vld [vmem:[%s1 + $0xa64] sm:$0xf]
    %v695 = vld [vmem:[%s1 + $0xa68] sm:$0xf]
    %v696 = vld [vmem:[%s1 + $0xa6c] sm:$0xf]
    %v697 = vld [vmem:[%s1 + $0xa70] sm:$0xf]
    %v698 = vld [vmem:[%s1 + $0xa74] sm:$0xf]
    %v699 = vld [vmem:[%s1 + $0xa78] sm:$0xf]
    %v700 = vld [vmem:[%s1 + $0xa7c] sm:$0xf]
    %v701 = vld [vmem:[%s1 + $0xa80] sm:$0xf]
    %v702 = vld [vmem:[%s1 + $0xa84] sm:$0xf]
    %v703 = vld [vmem:[%s1 + $0xa88] sm:$0xf]
    %v704 = vld [vmem:[%s1 + $0xa8c] sm:$0xf]
    %v705 = vld [vmem:[%s1 + $0xa90] sm:$0xf]
    %v706 = vld [vmem:[%s1 + $0xa94] sm:$0xf]
    %v707 = vld [vmem:[%s1 + $0xa98] sm:$0xf]
    %v708 = vld [vmem:[%s1 + $0xa9c] sm:$0xf]
    %v709 = vld [vmem:[%s1 + $0xaa0] sm:$0xf]
    %v710 = vld [vmem:[%s1 + $0xaa4] sm:$0xf]
    %v711 = vld [vmem:[%s1 + $0xaa8] sm:$0xf]
    %v712 = vld [vmem:[%s1 + $0xaac] sm:$0xf]
    %v713 = vld [vmem:[%s1 + $0xab0] sm:$0xf]
    %v714 = vld [vmem:[%s1 + $0xab4] sm:$0xf]
    %v715 = vld [vmem:[%s1 + $0xab8] sm:$0xf]
    %v716 = vld [vmem:[%s1 + $0xabc] sm:$0xf]
    %v717 = vld [vmem:[%s1 + $0xac0] sm:$0xf]
    %v718 = vld [vmem:[%s1 + $0xac4] sm:$0xf]
    %v719 = vld [vmem:[%s1 + $0xac8] sm:$0xf]
    %v720 = vld [vmem:[%s1 + $0xacc] sm:$0xf]
    %v721 = vld [vmem:[%s1 + $0xad0] sm:$0xf]
    %v722 = vld [vmem:[%s1 + $0xad4] sm:$0xf]
    %v723 = vld [vmem:[%s1 + $0xad8] sm:$0xf]
    %v724 = vld [vmem:[%s1 + $0xadc] sm:$0xf]
    %v725 = vld [vmem:[%s1 + $0xae0] sm:$0xf]
    %v726 = vld [vmem:[%s1 + $0xae4] sm:$0xf]
    %v727 = vld [vmem:[%s1 + $0xae8] sm:$0xf]
    %v728 = vld [vmem:[%s1 + $0xaec] sm:$0xf]
    %v729 = vld [vmem:[%s1 + $0xaf0] sm:$0xf]
    %v730 = vld [vmem:[%s1 + $0xaf4] sm:$0xf]
    %v731 = vld [vmem:[%s1 + $0xaf8] sm:$0xf]
    %v732 = vld [vmem:[%s1 + $0xafc] sm:$0xf]
    %v733 = vld [vmem:[%s1 + $0xb00] sm:$0xf]
    %v734 = vld [vmem:[%s1 + $0xb04] sm:$0xf]
    %v735 = vld [vmem:[%s1 + $0xb08] sm:$0xf]
    %v736 = vld [vmem:[%s1 + $0xb0c] sm:$0xf]
    %v737 = vld [vmem:[%s1 + $0xb10] sm:$0xf]
    %v738 = vld [vmem:[%s1 + $0xb14] sm:$0xf]
    %v739 = vld [vmem:[%s1 + $0xb18] sm:$0xf]
    %v740 = vld [vmem:[%s1 + $0xb1c] sm:$0xf]
    %v741 = vld [vmem:[%s1 + $0xb20] sm:$0xf]
    %v742 = vld [vmem:[%s1 + $0xb24] sm:$0xf]
    %v743 = vld [vmem:[%s1 + $0xb28] sm:$0xf]
    %v744 = vld [vmem:[%s1 + $0xb2c] sm:$0xf]
    %v745 = vld [vmem:[%s1 + $0xb30] sm:$0xf]
    %v746 = vld [vmem:[%s1 + $0xb34] sm:$0xf]
    %v747 = vld [vmem:[%s1 + $0xb38] sm:$0xf]
    %v748 = vld [vmem:[%s1 + $0xb3c] sm:$0xf]
    %v749 = vld [vmem:[%s1 + $0xb40] sm:$0xf]
    %v750 = vld [vmem:[%s1 + $0xb44] sm:$0xf]
    %v751 = vld [vmem:[%s1 + $0xb48] sm:$0xf]
    %v752 = vld [vmem:[%s1 + $0xb4c] sm:$0xf]
    %v753 = vld [vmem:[%s1 + $0xb50] sm:$0xf]
    %v754 = vld [vmem:[%s1 + $0xb54] sm:$0xf]
    %v755 = vld [vmem:[%s1 + $0xb58] sm:$0xf]
    %v756 = vld [vmem:[%s1 + $0xb5c] sm:$0xf]
    %v757 = vld [vmem:[%s1 + $0xb60] sm:$0xf]
    %v758 = vld [vmem:[%s1 + $0xb64] sm:$0xf]
    %v759 = vld [vmem:[%s1 + $0xb68] sm:$0xf]
    %v760 = vld [vmem:[%s1 + $0xb6c] sm:$0xf]
    %v761 = vld [vmem:[%s1 + $0xb70] sm:$0xf]
    %v762 = vld [vmem:[%s1 + $0xb74] sm:$0xf]
    %v763 = vld [vmem:[%s1 + $0xb78] sm:$0xf]
    %v764 = vld [vmem:[%s1 + $0xb7c] sm:$0xf]
    %v765 = vld [vmem:[%s1 + $0xb80] sm:$0xf]
    %v766 = vld [vmem:[%s1 + $0xb84] sm:$0xf]
    %v767 = vld [vmem:[%s1 + $0xb88] sm:$0xf]
    %v768 = vld [vmem:[%s1 + $0xb8c] sm:$0xf]
    %v769 = vld [vmem:[%s1 + $0xb90] sm:$0xf]
    %v770 = vld [vmem:[%s1 + $0xb94] sm:$0xf]
    %v771 = vld [vmem:[%s1 + $0xb98] sm:$0xf]
    %v772 = vld [vmem:[%s1 + $0xb9c] sm:$0xf]
    %v773 = vld [vmem:[%s1 + $0xba0] sm:$0xf]
    %v774 = vld [vmem:[%s1 + $0xba4] sm:$0xf]
    %v775 = vld [vmem:[%s1 + $0xba8] sm:$0xf]
    %v776 = vld [vmem:[%s1 + $0xbac] sm:$0xf]
    %v777 = vld [vmem:[%s1 + $0xbb0] sm:$0xf]
    %v778 = vld [vmem:[%s1 + $0xbb4] sm:$0xf]
    %v779 = vld [vmem:[%s1 + $0xbb8] sm:$0xf]
    %v780 = vld [vmem:[%s1 + $0xbbc] sm:$0xf]
    %v781 = vld [vmem:[%s1 + $0xbc0] sm:$0xf]
    %v782 = vld [vmem:[%s1 + $0xbc4] sm:$0xf]
    %v783 = vld [vmem:[%s1 + $0xbc8] sm:$0xf]
    %v784 = vld [vmem:[%s1 + $0xbcc] sm:$0xf]
    %v785 = vld [vmem:[%s1 + $0xbd0] sm:$0xf]
    %v786 = vld [vmem:[%s1 + $0xbd4] sm:$0xf]
    %v787 = vld [vmem:[%s1 + $0xbd8] sm:$0xf]
    %v788 = vld [vmem:[%s1 + $0xbdc] sm:$0xf]
    %v789 = vld [vmem:[%s1 + $0xbe0] sm:$0xf]
    %v790 = vld [vmem:[%s1 + $0xbe4] sm:$0xf]
    %v791 = vld [vmem:[%s1 + $0xbe8] sm:$0xf]
    %v792 = vld [vmem:[%s1 + $0xbec] sm:$0xf]
    %v793 = vld [vmem:[%s1 + $0xbf0] sm:$0xf]
    %v794 = vld [vmem:[%s1 + $0xbf4] sm:$0xf]
    %v795 = vld [vmem:[%s1 + $0xbf8] sm:$0xf]
    %v796 = vld [vmem:[%s1 + $0xbfc] sm:$0xf]
    %v797 = vld [vmem:[%s1 + $0xc00] sm:$0xf]
    %v798 = vld [vmem:[%s1 + $0xc04] sm:$0xf]
    %v799 = vld [vmem:[%s1 + $0xc08] sm:$0xf]
    %v800 = vld [vmem:[%s1 + $0xc0c] sm:$0xf]
    %v801 = vld [vmem:[%s1 + $0xc10] sm:$0xf]
    %v802 = vld [vmem:[%s1 + $0xc14] sm:$0xf]
    %v803 = vld [vmem:[%s1 + $0xc18] sm:$0xf]
    %v804 = vld [vmem:[%s1 + $0xc1c] sm:$0xf]
    %v805 = vld [vmem:[%s1 + $0xc20] sm:$0xf]
    %v806 = vld [vmem:[%s1 + $0xc24] sm:$0xf]
    %v807 = vld [vmem:[%s1 + $0xc28] sm:$0xf]
    %v808 = vld [vmem:[%s1 + $0xc2c] sm:$0xf]
    %v809 = vld [vmem:[%s1 + $0xc30] sm:$0xf]
    %v810 = vld [vmem:[%s1 + $0xc34] sm:$0xf]
    %v811 = vld [vmem:[%s1 + $0xc38] sm:$0xf]
    %v812 = vld [vmem:[%s1 + $0xc3c] sm:$0xf]
    %v813 = vld [vmem:[%s1 + $0xc40] sm:$0xf]
    %v814 = vld [vmem:[%s1 + $0xc44] sm:$0xf]
    %v815 = vld [vmem:[%s1 + $0xc48] sm:$0xf]
    %v816 = vld [vmem:[%s1 + $0xc4c] sm:$0xf]
    %v817 = vld [vmem:[%s1 + $0xc50] sm:$0xf]
    %v818 = vld [vmem:[%s1 + $0xc54] sm:$0xf]
    %v819 = vld [vmem:[%s1 + $0xc58] sm:$0xf]
    %v820 = vld [vmem:[%s1 + $0xc5c] sm:$0xf]
    %v821 = vld [vmem:[%s1 + $0xc60] sm:$0xf]
    %v822 = vld [vmem:[%s1 + $0xc64] sm:$0xf]
    %v823 = vld [vmem:[%s1 + $0xc68] sm:$0xf]
    %v824 = vld [vmem:[%s1 + $0xc6c] sm:$0xf]
    %v825 = vld [vmem:[%s1 + $0xc70] sm:$0xf]
    %v826 = vld [vmem:[%s1 + $0xc74] sm:$0xf]
    %v827 = vld [vmem:[%s1 + $0xc78] sm:$0xf]
    %v828 = vld [vmem:[%s1 + $0xc7c] sm:$0xf]
    %v829 = vld [vmem:[%s1 + $0xc80] sm:$0xf]
    %v830 = vld [vmem:[%s1 + $0xc84] sm:$0xf]
    %v831 = vld [vmem:[%s1 + $0xc88] sm:$0xf]
    %v832 = vld [vmem:[%s1 + $0xc8c] sm:$0xf]
    %v833 = vld [vmem:[%s1 + $0xc90] sm:$0xf]
    %v834 = vld [vmem:[%s1 + $0xc94] sm:$0xf]
    %v835 = vld [vmem:[%s1 + $0xc98] sm:$0xf]
    %v836 = vld [vmem:[%s1 + $0xc9c] sm:$0xf]
    %v837 = vld [vmem:[%s1 + $0xca0] sm:$0xf]
    %v838 = vld [vmem:[%s1 + $0xca4] sm:$0xf]
    %v839 = vld [vmem:[%s1 + $0xca8] sm:$0xf]
    %v840 = vld [vmem:[%s1 + $0xcac] sm:$0xf]
    %v841 = vld [vmem:[%s1 + $0xcb0] sm:$0xf]
    %v842 = vld [vmem:[%s1 + $0xcb4] sm:$0xf]
    %v843 = vld [vmem:[%s1 + $0xcb8] sm:$0xf]
    %v844 = vld [vmem:[%s1 + $0xcbc] sm:$0xf]
    %v845 = vld [vmem:[%s1 + $0xcc0] sm:$0xf]
    %v846 = vld [vmem:[%s1 + $0xcc4] sm:$0xf]
    %v847 = vld [vmem:[%s1 + $0xcc8] sm:$0xf]
    %v848 = vld [vmem:[%s1 + $0xccc] sm:$0xf]
    %v849 = vld [vmem:[%s1 + $0xcd0] sm:$0xf]
    %v850 = vld [vmem:[%s1 + $0xcd4] sm:$0xf]
    %v851 = vld [vmem:[%s1 + $0xcd8] sm:$0xf]
    %v852 = vld [vmem:[%s1 + $0xcdc] sm:$0xf]
    %v853 = vld [vmem:[%s1 + $0xce0] sm:$0xf]
    %v854 = vld [vmem:[%s1 + $0xce4] sm:$0xf]
    %v855 = vld [vmem:[%s1 + $0xce8] sm:$0xf]
    %v856 = vld [vmem:[%s1 + $0xcec] sm:$0xf]
    %v857 = vld [vmem:[%s1 + $0xcf0] sm:$0xf]
    %v858 = vld [vmem:[%s1 + $0xcf4] sm:$0xf]
    %v859 = vld [vmem:[%s1 + $0xcf8] sm:$0xf]
    %v860 = vld [vmem:[%s1 + $0xcfc] sm:$0xf]
    %v861 = vld [vmem:[%s1 + $0xd00] sm:$0xf]
    %v862 = vld [vmem:[%s1 + $0xd04] sm:$0xf]
    %v863 = vld [vmem:[%s1 + $0xd08] sm:$0xf]
    %v864 = vld [vmem:[%s1 + $0xd0c] sm:$0xf]
    %v865 = vld [vmem:[%s1 + $0xd10] sm:$0xf]
    %v866 = vld [vmem:[%s1 + $0xd14] sm:$0xf]
    %v867 = vld [vmem:[%s1 + $0xd18] sm:$0xf]
    %v868 = vld [vmem:[%s1 + $0xd1c] sm:$0xf]
    %v869 = vld [vmem:[%s1 + $0xd20] sm:$0xf]
    %v870 = vld [vmem:[%s1 + $0xd24] sm:$0xf]
    %v871 = vld [vmem:[%s1 + $0xd28] sm:$0xf]
    %v872 = vld [vmem:[%s1 + $0xd2c] sm:$0xf]
    %v873 = vld [vmem:[%s1 + $0xd30] sm:$0xf]
    %v874 = vld [vmem:[%s1 + $0xd34] sm:$0xf]
    %v875 = vld [vmem:[%s1 + $0xd38] sm:$0xf]
    %v876 = vld [vmem:[%s1 + $0xd3c] sm:$0xf]
    %v877 = vld [vmem:[%s1 + $0xd40] sm:$0xf]
    %v878 = vld [vmem:[%s1 + $0xd44] sm:$0xf]
    %v879 = vld [vmem:[%s1 + $0xd48] sm:$0xf]
    %v880 = vld [vmem:[%s1 + $0xd4c] sm:$0xf]
    %v881 = vld [vmem:[%s1 + $0xd50] sm:$0xf]
    %v882 = vld [vmem:[%s1 + $0xd54] sm:$0xf]
    %v883 = vld [vmem:[%s1 + $0xd58] sm:$0xf]
    %v884 = vld [vmem:[%s1 + $0xd5c] sm:$0xf]
    %v885 = vld [vmem:[%s1 + $0xd60] sm:$0xf]
    %v886 = vld [vmem:[%s1 + $0xd64] sm:$0xf]
    %v887 = vld [vmem:[%s1 + $0xd68] sm:$0xf]
    %v888 = vld [vmem:[%s1 + $0xd6c] sm:$0xf]
    %v889 = vld [vmem:[%s1 + $0xd70] sm:$0xf]
    %v890 = vld [vmem:[%s1 + $0xd74] sm:$0xf]
    %v891 = vld [vmem:[%s1 + $0xd78] sm:$0xf]
    %v892 = vld [vmem:[%s1 + $0xd7c] sm:$0xf]
    %v893 = vld [vmem:[%s1 + $0xd80] sm:$0xf]
    %v894 = vld [vmem:[%s1 + $0xd84] sm:$0xf]
    %v895 = vld [vmem:[%s1 + $0xd88] sm:$0xf]
    %v896 = vld [vmem:[%s1 + $0xd8c] sm:$0xf]
    %v897 = vld [vmem:[%s1 + $0xd90] sm:$0xf]
    %v898 = vld [vmem:[%s1 + $0xd94] sm:$0xf]
    %v899 = vld [vmem:[%s1 + $0xd98] sm:$0xf]
    %v900 = vld [vmem:[%s1 + $0xd9c] sm:$0xf]
    %v901 = vld [vmem:[%s1 + $0xda0] sm:$0xf]
    %v902 = vld [vmem:[%s1 + $0xda4] sm:$0xf]
    %v903 = vld [vmem:[%s1 + $0xda8] sm:$0xf]
    %v904 = vld [vmem:[%s1 + $0xdac] sm:$0xf]
    %v905 = vld [vmem:[%s1 + $0xdb0] sm:$0xf]
    %v906 = vld [vmem:[%s1 + $0xdb4] sm:$0xf]
    %v907 = vld [vmem:[%s1 + $0xdb8] sm:$0xf]
    %v908 = vld [vmem:[%s1 + $0xdbc] sm:$0xf]
    %v909 = vld [vmem:[%s1 + $0xdc0] sm:$0xf]
    %v910 = vld [vmem:[%s1 + $0xdc4] sm:$0xf]
    %v911 = vld [vmem:[%s1 + $0xdc8] sm:$0xf]
    %v912 = vld [vmem:[%s1 + $0xdcc] sm:$0xf]
    %v913 = vld [vmem:[%s1 + $0xdd0] sm:$0xf]
    %v914 = vld [vmem:[%s1 + $0xdd4] sm:$0xf]
    %v915 = vld [vmem:[%s1 + $0xdd8] sm:$0xf]
    %v916 = vld [vmem:[%s1 + $0xddc] sm:$0xf]
    %v917 = vld [vmem:[%s1 + $0xde0] sm:$0xf]
    %v918 = vld [vmem:[%s1 + $0xde4] sm:$0xf]
    %v919 = vld [vmem:[%s1 + $0xde8] sm:$0xf]
    %v920 = vld [vmem:[%s1 + $0xdec] sm:$0xf]
    %v921 = vld [vmem:[%s1 + $0xdf0] sm:$0xf]
    %v922 = vld [vmem:[%s1 + $0xdf4] sm:$0xf]
    %v923 = vld [vmem:[%s1 + $0xdf8] sm:$0xf]
    %v924 = vld [vmem:[%s1 + $0xdfc] sm:$0xf]
    %v925 = vld [vmem:[%s1 + $0xe00] sm:$0xf]
    %v926 = vld [vmem:[%s1 + $0xe04] sm:$0xf]
    %v927 = vld [vmem:[%s1 + $0xe08] sm:$0xf]
    %v928 = vld [vmem:[%s1 + $0xe0c] sm:$0xf]
    %v929 = vld [vmem:[%s1 + $0xe10] sm:$0xf]
    %v930 = vld [vmem:[%s1 + $0xe14] sm:$0xf]
    %v931 = vld [vmem:[%s1 + $0xe18] sm:$0xf]
    %v932 = vld [vmem:[%s1 + $0xe1c] sm:$0xf]
    %v933 = vld [vmem:[%s1 + $0xe20] sm:$0xf]
    %v934 = vld [vmem:[%s1 + $0xe24] sm:$0xf]
    %v935 = vld [vmem:[%s1 + $0xe28] sm:$0xf]
    %v936 = vld [vmem:[%s1 + $0xe2c] sm:$0xf]
    %v937 = vld [vmem:[%s1 + $0xe30] sm:$0xf]
    %v938 = vld [vmem:[%s1 + $0xe34] sm:$0xf]
    %v939 = vld [vmem:[%s1 + $0xe38] sm:$0xf]
    %v940 = vld [vmem:[%s1 + $0xe3c] sm:$0xf]
    %v941 = vld [vmem:[%s1 + $0xe40] sm:$0xf]
    %v942 = vld [vmem:[%s1 + $0xe44] sm:$0xf]
    %v943 = vld [vmem:[%s1 + $0xe48] sm:$0xf]
    %v944 = vld [vmem:[%s1 + $0xe4c] sm:$0xf]
    %v945 = vld [vmem:[%s1 + $0xe50] sm:$0xf]
    %v946 = vld [vmem:[%s1 + $0xe54] sm:$0xf]
    %v947 = vld [vmem:[%s1 + $0xe58] sm:$0xf]
    %v948 = vld [vmem:[%s1 + $0xe5c] sm:$0xf]
    %v949 = vld [vmem:[%s1 + $0xe60] sm:$0xf]
    %v950 = vld [vmem:[%s1 + $0xe64] sm:$0xf]
    %v951 = vld [vmem:[%s1 + $0xe68] sm:$0xf]
    %v952 = vld [vmem:[%s1 + $0xe6c] sm:$0xf]
    %v953 = vld [vmem:[%s1 + $0xe70] sm:$0xf]
    %v954 = vld [vmem:[%s1 + $0xe74] sm:$0xf]
    %v955 = vld [vmem:[%s1 + $0xe78] sm:$0xf]
    %v956 = vld [vmem:[%s1 + $0xe7c] sm:$0xf]
    %v957 = vld [vmem:[%s1 + $0xe80] sm:$0xf]
    %v958 = vld [vmem:[%s1 + $0xe84] sm:$0xf]
    %v959 = vld [vmem:[%s1 + $0xe88] sm:$0xf]
    %v960 = vld [vmem:[%s1 + $0xe8c] sm:$0xf]
    %v961 = vld [vmem:[%s1 + $0xe90] sm:$0xf]
    %v962 = vld [vmem:[%s1 + $0xe94] sm:$0xf]
    %v963 = vld [vmem:[%s1 + $0xe98] sm:$0xf]
    %v964 = vld [vmem:[%s1 + $0xe9c] sm:$0xf]
    %v965 = vld [vmem:[%s1 + $0xea0] sm:$0xf]
    %v966 = vld [vmem:[%s1 + $0xea4] sm:$0xf]
    %v967 = vld [vmem:[%s1 + $0xea8] sm:$0xf]
    %v968 = vld [vmem:[%s1 + $0xeac] sm:$0xf]
    %v969 = vld [vmem:[%s1 + $0xeb0] sm:$0xf]
    %v970 = vld [vmem:[%s1 + $0xeb4] sm:$0xf]
    %v971 = vld [vmem:[%s1 + $0xeb8] sm:$0xf]
    %v972 = vld [vmem:[%s1 + $0xebc] sm:$0xf]
    %v973 = vld [vmem:[%s1 + $0xec0] sm:$0xf]
    %v974 = vld [vmem:[%s1 + $0xec4] sm:$0xf]
    %v975 = vld [vmem:[%s1 + $0xec8] sm:$0xf]
    %v976 = vld [vmem:[%s1 + $0xecc] sm:$0xf]
    %v977 = vld [vmem:[%s1 + $0xed0] sm:$0xf]
    %v978 = vld [vmem:[%s1 + $0xed4] sm:$0xf]
    %v979 = vld [vmem:[%s1 + $0xed8] sm:$0xf]
    %v980 = vld [vmem:[%s1 + $0xedc] sm:$0xf]
    %v981 = vld [vmem:[%s1 + $0xee0] sm:$0xf]
    %v982 = vld [vmem:[%s1 + $0xee4] sm:$0xf]
    %v983 = vld [vmem:[%s1 + $0xee8] sm:$0xf]
    %v984 = vld [vmem:[%s1 + $0xeec] sm:$0xf]
    %v985 = vld [vmem:[%s1 + $0xef0] sm:$0xf]
    %v986 = vld [vmem:[%s1 + $0xef4] sm:$0xf]
    %v987 = vld [vmem:[%s1 + $0xef8] sm:$0xf]
    %v988 = vld [vmem:[%s1 + $0xefc] sm:$0xf]
    %v989 = vld [vmem:[%s1 + $0xf00] sm:$0xf]
    %v990 = vld [vmem:[%s1 + $0xf04] sm:$0xf]
    %v991 = vld [vmem:[%s1 + $0xf08] sm:$0xf]
    %v992 = vld [vmem:[%s1 + $0xf0c] sm:$0xf]
    %v993 = vld [vmem:[%s1 + $0xf10] sm:$0xf]
    %v994 = vld [vmem:[%s1 + $0xf14] sm:$0xf]
    %v995 = vld [vmem:[%s1 + $0xf18] sm:$0xf]
    %v996 = vld [vmem:[%s1 + $0xf1c] sm:$0xf]
    %v997 = vld [vmem:[%s1 + $0xf20] sm:$0xf]
    %v998 = vld [vmem:[%s1 + $0xf24] sm:$0xf]
    %v999 = vld [vmem:[%s1 + $0xf28] sm:$0xf]
    %v1000 = vld [vmem:[%s1 + $0xf2c] sm:$0xf]
    %v1001 = vld [vmem:[%s1 + $0xf30] sm:$0xf]
    %v1002 = vld [vmem:[%s1 + $0xf34] sm:$0xf]
    %v1003 = vld [vmem:[%s1 + $0xf38] sm:$0xf]
    %v1004 = vld [vmem:[%s1 + $0xf3c] sm:$0xf]
    %v1005 = vld [vmem:[%s1 + $0xf40] sm:$0xf]
    %v1006 = vld [vmem:[%s1 + $0xf44] sm:$0xf]
    %v1007 = vld [vmem:[%s1 + $0xf48] sm:$0xf]
    %v1008 = vld [vmem:[%s1 + $0xf4c] sm:$0xf]
    %v1009 = vld [vmem:[%s1 + $0xf50] sm:$0xf]
    %v1010 = vld [vmem:[%s1 + $0xf54] sm:$0xf]
    %v1011 = vld [vmem:[%s1 + $0xf58] sm:$0xf]
    %v1012 = vld [vmem:[%s1 + $0xf5c] sm:$0xf]
    %v1013 = vld [vmem:[%s1 + $0xf60] sm:$0xf]
    %v1014 = vld [vmem:[%s1 + $0xf64] sm:$0xf]
    %v1015 = vld [vmem:[%s1 + $0xf68] sm:$0xf]
    %v1016 = vld [vmem:[%s1 + $0xf6c] sm:$0xf]
    %v1017 = vld [vmem:[%s1 + $0xf70] sm:$0xf]
    %v1018 = vld [vmem:[%s1 + $0xf74] sm:$0xf]
    %v1019 = vld [vmem:[%s1 + $0xf78] sm:$0xf]
    %v1020 = vld [vmem:[%s1 + $0xf7c] sm:$0xf]
    %v1021 = vld [vmem:[%s1 + $0xf80] sm:$0xf]
    %v1022 = vld [vmem:[%s1 + $0xf84] sm:$0xf]
    %v1023 = vld [vmem:[%s1 + $0xf88] sm:$0xf]
    %v1024 = vld [vmem:[%s1 + $0xf8c] sm:$0xf]
    %v1025 = vld [vmem:[%s1 + $0xf90] sm:$0xf]
    %v1026 = vld [vmem:[%s1 + $0xf94] sm:$0xf]
    %v1027 = vld [vmem:[%s1 + $0xf98] sm:$0xf]
    %v1028 = vld [vmem:[%s1 + $0xf9c] sm:$0xf]
    %v1029 = vld [vmem:[%s1 + $0xfa0] sm:$0xf]
    %v1030 = vld [vmem:[%s1 + $0xfa4] sm:$0xf]
    %v1031 = vld [vmem:[%s1 + $0xfa8] sm:$0xf]
    %v1032 = vld [vmem:[%s1 + $0xfac] sm:$0xf]
    %v1033 = vld [vmem:[%s1 + $0xfb0] sm:$0xf]
    %v1034 = vld [vmem:[%s1 + $0xfb4] sm:$0xf]
    %v1035 = vld [vmem:[%s1 + $0xfb8] sm:$0xf]
    %v1036 = vld [vmem:[%s1 + $0xfbc] sm:$0xf]
    %v1037 = vld [vmem:[%s1 + $0xfc0] sm:$0xf]
    %v1038 = vld [vmem:[%s1 + $0xfc4] sm:$0xf]
    %v1039 = vld [vmem:[%s1 + $0xfc8] sm:$0xf]
    %v1040 = vld [vmem:[%s1 + $0xfcc] sm:$0xf]
    %v1041 = vld [vmem:[%s1 + $0xfd0] sm:$0xf]
    %v1042 = vld [vmem:[%s1 + $0xfd4] sm:$0xf]
    %v1043 = vld [vmem:[%s1 + $0xfd8] sm:$0xf]
    %v1044 = vld [vmem:[%s1 + $0xfdc] sm:$0xf]
    %v1045 = vld [vmem:[%s1 + $0xfe0] sm:$0xf]
    %v1046 = vld [vmem:[%s1 + $0xfe4] sm:$0xf]
    %v1047 = vld [vmem:[%s1 + $0xfe8] sm:$0xf]
    %v1048 = vld [vmem:[%s1 + $0xfec] sm:$0xf]
    %v1049 = vld [vmem:[%s1 + $0xff0] sm:$0xf]
    %v1050 = vld [vmem:[%s1 + $0xff4] sm:$0xf]
    %v1051 = vld [vmem:[%s1 + $0xff8] sm:$0xf]
    %v1052 = vld [vmem:[%s1 + $0xffc] sm:$0xf]
    %v1053 = vld [vmem:[%s2] sm:$0x1]
    %v1055 = vperm.slane %v1053, 0
    %1058 = vst [vmem:[#allocation1] ss:$9 sm:$0xff] %v21
    %v1059 = vld [vmem:[#allocation1] sm:$0xff]
    %v1060 = vld [vmem:[#allocation1 + $0x9] sm:$0xff]
    %v1061 = vld [vmem:[#allocation1 + $0x12] sm:$0xff]
    %v1062 = vld [vmem:[#allocation1 + $0x1b] sm:$0xff]
    %v1063 = vld [vmem:[#allocation1 + $0x24] sm:$0xff]
    %v1064 = vld [vmem:[#allocation1 + $0x2d] sm:$0xff]
    %v1065 = vld [vmem:[#allocation1 + $0x36] sm:$0xff]
    %v1066 = vld [vmem:[#allocation1 + $0x3f] sm:$0xff]
    %1068 = vst [vmem:[#allocation1] ss:$9 sm:$0xff] %v22
    %v1069 = vld [vmem:[#allocation1] sm:$0xff]
    %v1070 = vld [vmem:[#allocation1 + $0x9] sm:$0xff]
    %v1071 = vld [vmem:[#allocation1 + $0x12] sm:$0xff]
    %v1072 = vld [vmem:[#allocation1 + $0x1b] sm:$0xff]
    %v1073 = vld [vmem:[#allocation1 + $0x24] sm:$0xff]
    %v1074 = vld [vmem:[#allocation1 + $0x2d] sm:$0xff]
    %v1075 = vld [vmem:[#allocation1 + $0x36] sm:$0xff]
    %v1076 = vld [vmem:[#allocation1 + $0x3f] sm:$0xff]
    %1078 = vst [vmem:[#allocation1] ss:$9 sm:$0xff] %v23
    %v1079 = vld [vmem:[#allocation1] sm:$0xff]
    %v1080 = vld [vmem:[#allocation1 + $0x9] sm:$0xff]
    %v1081 = vld [vmem:[#allocation1 + $0x12] sm:$0xff]
    %v1082 = vld [vmem:[#allocation1 + $0x1b] sm:$0xff]
    %v1083 = vld [vmem:[#allocation1 + $0x24] sm:$0xff]
    %v1084 = vld [vmem:[#allocation1 + $0x2d] sm:$0xff]
    %v1085 = vld [vmem:[#allocation1 + $0x36] sm:$0xff]
    %v1086 = vld [vmem:[#allocation1 + $0x3f] sm:$0xff]
    %1088 = vst [vmem:[#allocation1] ss:$9 sm:$0xff] %v24
    %v1089 = vld [vmem:[#allocation1] sm:$0xff]
    %v1090 = vld [vmem:[#allocation1 + $0x9] sm:$0xff]
    %v1091 = vld [vmem:[#allocation1 + $0x12] sm:$0xff]
    %v1092 = vld [vmem:[#allocation1 + $0x1b] sm:$0xff]
    %v1093 = vld [vmem:[#allocation1 + $0x24] sm:$0xff]
    %v1094 = vld [vmem:[#allocation1 + $0x2d] sm:$0xff]
    %v1095 = vld [vmem:[#allocation1 + $0x36] sm:$0xff]
    %v1096 = vld [vmem:[#allocation1 + $0x3f] sm:$0xff]
    %1098 = vst [vmem:[#allocation1] ss:$9 sm:$0xff] %v25
    %v1099 = vld [vmem:[#allocation1] sm:$0xff]
    %v1100 = vld [vmem:[#allocation1 + $0x9] sm:$0xff]
    %v1101 = vld [vmem:[#allocation1 + $0x12] sm:$0xff]
    %v1102 = vld [vmem:[#allocation1 + $0x1b] sm:$0xff]
    %v1103 = vld [vmem:[#allocation1 + $0x24] sm:$0xff]
    %v1104 = vld [vmem:[#allocation1 + $0x2d] sm:$0xff]
    %v1105 = vld [vmem:[#allocation1 + $0x36] sm:$0xff]
    %v1106 = vld [vmem:[#allocation1 + $0x3f] sm:$0xff]
    %1108 = vst [vmem:[#allocation1] ss:$9 sm:$0xff] %v26
    %v1109 = vld [vmem:[#allocation1] sm:$0xff]
    %v1110 = vld [vmem:[#allocation1 + $0x9] sm:$0xff]
    %v1111 = vld [vmem:[#allocation1 + $0x12] sm:$0xff]
    %v1112 = vld [vmem:[#allocation1 + $0x1b] sm:$0xff]
    %v1113 = vld [vmem:[#allocation1 + $0x24] sm:$0xff]
    %v1114 = vld [vmem:[#allocation1 + $0x2d] sm:$0xff]
    %v1115 = vld [vmem:[#allocation1 + $0x36] sm:$0xff]
    %v1116 = vld [vmem:[#allocation1 + $0x3f] sm:$0xff]
    %1118 = vst [vmem:[#allocation1] ss:$9 sm:$0xff] %v27
    %v1119 = vld [vmem:[#allocation1] sm:$0xff]
    %v1120 = vld [vmem:[#allocation1 + $0x9] sm:$0xff]
    %v1121 = vld [vmem:[#allocation1 + $0x12] sm:$0xff]
    %v1122 = vld [vmem:[#allocation1 + $0x1b] sm:$0xff]
    %v1123 = vld [vmem:[#allocation1 + $0x24] sm:$0xff]
    %v1124 = vld [vmem:[#allocation1 + $0x2d] sm:$0xff]
    %v1125 = vld [vmem:[#allocation1 + $0x36] sm:$0xff]
    %v1126 = vld [vmem:[#allocation1 + $0x3f] sm:$0xff]
    %1128 = vst [vmem:[#allocation1] ss:$9 sm:$0xff] %v28
    %v1129 = vld [vmem:[#allocation1] sm:$0xff]
    %v1130 = vld [vmem:[#allocation1 + $0x9] sm:$0xff]
    %v1131 = vld [vmem:[#allocation1 + $0x12] sm:$0xff]
    %v1132 = vld [vmem:[#allocation1 + $0x1b] sm:$0xff]
    %v1133 = vld [vmem:[#allocation1 + $0x24] sm:$0xff]
    %v1134 = vld [vmem:[#allocation1 + $0x2d] sm:$0xff]
    %v1135 = vld [vmem:[#allocation1 + $0x36] sm:$0xff]
    %v1136 = vld [vmem:[#allocation1 + $0x3f] sm:$0xff]
    %v2225 = vunpack.c.l.b16 %v29
    %v2226 = vunpack.c.l.b16 %v30
    %v2227 = vunpack.c.l.b16 %v31
    %v2228 = vunpack.c.l.b16 %v32
    %v2229 = vunpack.c.l.b16 %v33
    %v2230 = vunpack.c.l.b16 %v34
    %v2231 = vunpack.c.l.b16 %v35
    %v2232 = vunpack.c.l.b16 %v36
    %v2233 = vunpack.c.l.b16 %v37
    %v2234 = vunpack.c.l.b16 %v38
    %v2235 = vunpack.c.l.b16 %v39
    %v2236 = vunpack.c.l.b16 %v40
    %v2237 = vunpack.c.l.b16 %v41
    %v2238 = vunpack.c.l.b16 %v42
    %v2239 = vunpack.c.l.b16 %v43
    %v2240 = vunpack.c.l.b16 %v44
    %v2241 = vunpack.c.l.b16 %v45
    %v2242 = vunpack.c.l.b16 %v46
    %v2243 = vunpack.c.l.b16 %v47
    %v2244 = vunpack.c.l.b16 %v48
    %v2245 = vunpack.c.l.b16 %v49
    %v2246 = vunpack.c.l.b16 %v50
    %v2247 = vunpack.c.l.b16 %v51
    %v2248 = vunpack.c.l.b16 %v52
    %v2249 = vunpack.c.l.b16 %v53
    %v2250 = vunpack.c.l.b16 %v54
    %v2251 = vunpack.c.l.b16 %v55
    %v2252 = vunpack.c.l.b16 %v56
    %v2253 = vunpack.c.l.b16 %v57
    %v2254 = vunpack.c.l.b16 %v58
    %v2255 = vunpack.c.l.b16 %v59
    %v2256 = vunpack.c.l.b16 %v60
    %v2257 = vunpack.c.l.b16 %v61
    %v2258 = vunpack.c.l.b16 %v62
    %v2259 = vunpack.c.l.b16 %v63
    %v2260 = vunpack.c.l.b16 %v64
    %v2261 = vunpack.c.l.b16 %v65
    %v2262 = vunpack.c.l.b16 %v66
    %v2263 = vunpack.c.l.b16 %v67
    %v2264 = vunpack.c.l.b16 %v68
    %v2265 = vunpack.c.l.b16 %v69
    %v2266 = vunpack.c.l.b16 %v70
    %v2267 = vunpack.c.l.b16 %v71
    %v2268 = vunpack.c.l.b16 %v72
    %v2269 = vunpack.c.l.b16 %v73
    %v2270 = vunpack.c.l.b16 %v74
    %v2271 = vunpack.c.l.b16 %v75
    %v2272 = vunpack.c.l.b16 %v76
    %v2273 = vunpack.c.l.b16 %v77
    %v2274 = vunpack.c.l.b16 %v78
    %v2275 = vunpack.c.l.b16 %v79
    %v2276 = vunpack.c.l.b16 %v80
    %v2277 = vunpack.c.l.b16 %v81
    %v2278 = vunpack.c.l.b16 %v82
    %v2279 = vunpack.c.l.b16 %v83
    %v2280 = vunpack.c.l.b16 %v84
    %v2281 = vunpack.c.l.b16 %v85
    %v2282 = vunpack.c.l.b16 %v86
    %v2283 = vunpack.c.l.b16 %v87
    %v2284 = vunpack.c.l.b16 %v88
    %v2285 = vunpack.c.l.b16 %v89
    %v2286 = vunpack.c.l.b16 %v90
    %v2287 = vunpack.c.l.b16 %v91
    %v2288 = vunpack.c.l.b16 %v92
    %v2289 = vunpack.c.l.b16 %v93
    %v2290 = vunpack.c.l.b16 %v94
    %v2291 = vunpack.c.l.b16 %v95
    %v2292 = vunpack.c.l.b16 %v96
    %v2293 = vunpack.c.l.b16 %v97
    %v2294 = vunpack.c.l.b16 %v98
    %v2295 = vunpack.c.l.b16 %v99
    %v2296 = vunpack.c.l.b16 %v100
    %v2297 = vunpack.c.l.b16 %v101
    %v2298 = vunpack.c.l.b16 %v102
    %v2299 = vunpack.c.l.b16 %v103
    %v2300 = vunpack.c.l.b16 %v104
    %v2301 = vunpack.c.l.b16 %v105
    %v2302 = vunpack.c.l.b16 %v106
    %v2303 = vunpack.c.l.b16 %v107
    %v2304 = vunpack.c.l.b16 %v108
    %v2305 = vunpack.c.l.b16 %v109
    %v2306 = vunpack.c.l.b16 %v110
    %v2307 = vunpack.c.l.b16 %v111
    %v2308 = vunpack.c.l.b16 %v112
    %v2309 = vunpack.c.l.b16 %v113
    %v2310 = vunpack.c.l.b16 %v114
    %v2311 = vunpack.c.l.b16 %v115
    %v2312 = vunpack.c.l.b16 %v116
    %v2313 = vunpack.c.l.b16 %v117
    %v2314 = vunpack.c.l.b16 %v118
    %v2315 = vunpack.c.l.b16 %v119
    %v2316 = vunpack.c.l.b16 %v120
    %v2317 = vunpack.c.l.b16 %v121
    %v2318 = vunpack.c.l.b16 %v122
    %v2319 = vunpack.c.l.b16 %v123
    %v2320 = vunpack.c.l.b16 %v124
    %v2321 = vunpack.c.l.b16 %v125
    %v2322 = vunpack.c.l.b16 %v126
    %v2323 = vunpack.c.l.b16 %v127
    %v2324 = vunpack.c.l.b16 %v128
    %v2325 = vunpack.c.l.b16 %v129
    %v2326 = vunpack.c.l.b16 %v130
    %v2327 = vunpack.c.l.b16 %v131
    %v2328 = vunpack.c.l.b16 %v132
    %v2329 = vunpack.c.l.b16 %v133
    %v2330 = vunpack.c.l.b16 %v134
    %v2331 = vunpack.c.l.b16 %v135
    %v2332 = vunpack.c.l.b16 %v136
    %v2333 = vunpack.c.l.b16 %v137
    %v2334 = vunpack.c.l.b16 %v138
    %v2335 = vunpack.c.l.b16 %v139
    %v2336 = vunpack.c.l.b16 %v140
    %v2337 = vunpack.c.l.b16 %v141
    %v2338 = vunpack.c.l.b16 %v142
    %v2339 = vunpack.c.l.b16 %v143
    %v2340 = vunpack.c.l.b16 %v144
    %v2341 = vunpack.c.l.b16 %v145
    %v2342 = vunpack.c.l.b16 %v146
    %v2343 = vunpack.c.l.b16 %v147
    %v2344 = vunpack.c.l.b16 %v148
    %v2345 = vunpack.c.l.b16 %v149
    %v2346 = vunpack.c.l.b16 %v150
    %v2347 = vunpack.c.l.b16 %v151
    %v2348 = vunpack.c.l.b16 %v152
    %v2349 = vunpack.c.l.b16 %v153
    %v2350 = vunpack.c.l.b16 %v154
    %v2351 = vunpack.c.l.b16 %v155
    %v2352 = vunpack.c.l.b16 %v156
    %v2353 = vunpack.c.l.b16 %v157
    %v2354 = vunpack.c.l.b16 %v158
    %v2355 = vunpack.c.l.b16 %v159
    %v2356 = vunpack.c.l.b16 %v160
    %v2357 = vunpack.c.l.b16 %v161
    %v2358 = vunpack.c.l.b16 %v162
    %v2359 = vunpack.c.l.b16 %v163
    %v2360 = vunpack.c.l.b16 %v164
    %v2361 = vunpack.c.l.b16 %v165
    %v2362 = vunpack.c.l.b16 %v166
    %v2363 = vunpack.c.l.b16 %v167
    %v2364 = vunpack.c.l.b16 %v168
    %v2365 = vunpack.c.l.b16 %v169
    %v2366 = vunpack.c.l.b16 %v170
    %v2367 = vunpack.c.l.b16 %v171
    %v2368 = vunpack.c.l.b16 %v172
    %v2369 = vunpack.c.l.b16 %v173
    %v2370 = vunpack.c.l.b16 %v174
    %v2371 = vunpack.c.l.b16 %v175
    %v2372 = vunpack.c.l.b16 %v176
    %v2373 = vunpack.c.l.b16 %v177
    %v2374 = vunpack.c.l.b16 %v178
    %v2375 = vunpack.c.l.b16 %v179
    %v2376 = vunpack.c.l.b16 %v180
    %v2377 = vunpack.c.l.b16 %v181
    %v2378 = vunpack.c.l.b16 %v182
    %v2379 = vunpack.c.l.b16 %v183
    %v2380 = vunpack.c.l.b16 %v184
    %v2381 = vunpack.c.l.b16 %v185
    %v2382 = vunpack.c.l.b16 %v186
    %v2383 = vunpack.c.l.b16 %v187
    %v2384 = vunpack.c.l.b16 %v188
    %v2385 = vunpack.c.l.b16 %v189
    %v2386 = vunpack.c.l.b16 %v190
    %v2387 = vunpack.c.l.b16 %v191
    %v2388 = vunpack.c.l.b16 %v192
    %v2389 = vunpack.c.l.b16 %v193
    %v2390 = vunpack.c.l.b16 %v194
    %v2391 = vunpack.c.l.b16 %v195
    %v2392 = vunpack.c.l.b16 %v196
    %v2393 = vunpack.c.l.b16 %v197
    %v2394 = vunpack.c.l.b16 %v198
    %v2395 = vunpack.c.l.b16 %v199
    %v2396 = vunpack.c.l.b16 %v200
    %v2397 = vunpack.c.l.b16 %v201
    %v2398 = vunpack.c.l.b16 %v202
    %v2399 = vunpack.c.l.b16 %v203
    %v2400 = vunpack.c.l.b16 %v204
    %v2401 = vunpack.c.l.b16 %v205
    %v2402 = vunpack.c.l.b16 %v206
    %v2403 = vunpack.c.l.b16 %v207
    %v2404 = vunpack.c.l.b16 %v208
    %v2405 = vunpack.c.l.b16 %v209
    %v2406 = vunpack.c.l.b16 %v210
    %v2407 = vunpack.c.l.b16 %v211
    %v2408 = vunpack.c.l.b16 %v212
    %v2409 = vunpack.c.l.b16 %v213
    %v2410 = vunpack.c.l.b16 %v214
    %v2411 = vunpack.c.l.b16 %v215
    %v2412 = vunpack.c.l.b16 %v216
    %v2413 = vunpack.c.l.b16 %v217
    %v2414 = vunpack.c.l.b16 %v218
    %v2415 = vunpack.c.l.b16 %v219
    %v2416 = vunpack.c.l.b16 %v220
    %v2417 = vunpack.c.l.b16 %v221
    %v2418 = vunpack.c.l.b16 %v222
    %v2419 = vunpack.c.l.b16 %v223
    %v2420 = vunpack.c.l.b16 %v224
    %v2421 = vunpack.c.l.b16 %v225
    %v2422 = vunpack.c.l.b16 %v226
    %v2423 = vunpack.c.l.b16 %v227
    %v2424 = vunpack.c.l.b16 %v228
    %v2425 = vunpack.c.l.b16 %v229
    %v2426 = vunpack.c.l.b16 %v230
    %v2427 = vunpack.c.l.b16 %v231
    %v2428 = vunpack.c.l.b16 %v232
    %v2429 = vunpack.c.l.b16 %v233
    %v2430 = vunpack.c.l.b16 %v234
    %v2431 = vunpack.c.l.b16 %v235
    %v2432 = vunpack.c.l.b16 %v236
    %v2433 = vunpack.c.l.b16 %v237
    %v2434 = vunpack.c.l.b16 %v238
    %v2435 = vunpack.c.l.b16 %v239
    %v2436 = vunpack.c.l.b16 %v240
    %v2437 = vunpack.c.l.b16 %v241
    %v2438 = vunpack.c.l.b16 %v242
    %v2439 = vunpack.c.l.b16 %v243
    %v2440 = vunpack.c.l.b16 %v244
    %v2441 = vunpack.c.l.b16 %v245
    %v2442 = vunpack.c.l.b16 %v246
    %v2443 = vunpack.c.l.b16 %v247
    %v2444 = vunpack.c.l.b16 %v248
    %v2445 = vunpack.c.l.b16 %v249
    %v2446 = vunpack.c.l.b16 %v250
    %v2447 = vunpack.c.l.b16 %v251
    %v2448 = vunpack.c.l.b16 %v252
    %v2449 = vunpack.c.l.b16 %v253
    %v2450 = vunpack.c.l.b16 %v254
    %v2451 = vunpack.c.l.b16 %v255
    %v2452 = vunpack.c.l.b16 %v256
    %v2453 = vunpack.c.l.b16 %v257
    %v2454 = vunpack.c.l.b16 %v258
    %v2455 = vunpack.c.l.b16 %v259
    %v2456 = vunpack.c.l.b16 %v260
    %v2457 = vunpack.c.l.b16 %v261
    %v2458 = vunpack.c.l.b16 %v262
    %v2459 = vunpack.c.l.b16 %v263
    %v2460 = vunpack.c.l.b16 %v264
    %v2461 = vunpack.c.l.b16 %v265
    %v2462 = vunpack.c.l.b16 %v266
    %v2463 = vunpack.c.l.b16 %v267
    %v2464 = vunpack.c.l.b16 %v268
    %v2465 = vunpack.c.l.b16 %v269
    %v2466 = vunpack.c.l.b16 %v270
    %v2467 = vunpack.c.l.b16 %v271
    %v2468 = vunpack.c.l.b16 %v272
    %v2469 = vunpack.c.l.b16 %v273
    %v2470 = vunpack.c.l.b16 %v274
    %v2471 = vunpack.c.l.b16 %v275
    %v2472 = vunpack.c.l.b16 %v276
    %v2473 = vunpack.c.l.b16 %v277
    %v2474 = vunpack.c.l.b16 %v278
    %v2475 = vunpack.c.l.b16 %v279
    %v2476 = vunpack.c.l.b16 %v280
    %v2477 = vunpack.c.l.b16 %v281
    %v2478 = vunpack.c.l.b16 %v282
    %v2479 = vunpack.c.l.b16 %v283
    %v2480 = vunpack.c.l.b16 %v284
    %v2481 = vunpack.c.l.b16 %v285
    %v2482 = vunpack.c.l.b16 %v286
    %v2483 = vunpack.c.l.b16 %v287
    %v2484 = vunpack.c.l.b16 %v288
    %v2485 = vunpack.c.l.b16 %v289
    %v2486 = vunpack.c.l.b16 %v290
    %v2487 = vunpack.c.l.b16 %v291
    %v2488 = vunpack.c.l.b16 %v292
    %v2489 = vunpack.c.l.b16 %v293
    %v2490 = vunpack.c.l.b16 %v294
    %v2491 = vunpack.c.l.b16 %v295
    %v2492 = vunpack.c.l.b16 %v296
    %v2493 = vunpack.c.l.b16 %v297
    %v2494 = vunpack.c.l.b16 %v298
    %v2495 = vunpack.c.l.b16 %v299
    %v2496 = vunpack.c.l.b16 %v300
    %v2497 = vunpack.c.l.b16 %v301
    %v2498 = vunpack.c.l.b16 %v302
    %v2499 = vunpack.c.l.b16 %v303
    %v2500 = vunpack.c.l.b16 %v304
    %v2501 = vunpack.c.l.b16 %v305
    %v2502 = vunpack.c.l.b16 %v306
    %v2503 = vunpack.c.l.b16 %v307
    %v2504 = vunpack.c.l.b16 %v308
    %v2505 = vunpack.c.l.b16 %v309
    %v2506 = vunpack.c.l.b16 %v310
    %v2507 = vunpack.c.l.b16 %v311
    %v2508 = vunpack.c.l.b16 %v312
    %v2509 = vunpack.c.l.b16 %v313
    %v2510 = vunpack.c.l.b16 %v314
    %v2511 = vunpack.c.l.b16 %v315
    %v2512 = vunpack.c.l.b16 %v316
    %v2513 = vunpack.c.l.b16 %v317
    %v2514 = vunpack.c.l.b16 %v318
    %v2515 = vunpack.c.l.b16 %v319
    %v2516 = vunpack.c.l.b16 %v320
    %v2517 = vunpack.c.l.b16 %v321
    %v2518 = vunpack.c.l.b16 %v322
    %v2519 = vunpack.c.l.b16 %v323
    %v2520 = vunpack.c.l.b16 %v324
    %v2521 = vunpack.c.l.b16 %v325
    %v2522 = vunpack.c.l.b16 %v326
    %v2523 = vunpack.c.l.b16 %v327
    %v2524 = vunpack.c.l.b16 %v328
    %v2525 = vunpack.c.l.b16 %v329
    %v2526 = vunpack.c.l.b16 %v330
    %v2527 = vunpack.c.l.b16 %v331
    %v2528 = vunpack.c.l.b16 %v332
    %v2529 = vunpack.c.l.b16 %v333
    %v2530 = vunpack.c.l.b16 %v334
    %v2531 = vunpack.c.l.b16 %v335
    %v2532 = vunpack.c.l.b16 %v336
    %v2533 = vunpack.c.l.b16 %v337
    %v2534 = vunpack.c.l.b16 %v338
    %v2535 = vunpack.c.l.b16 %v339
    %v2536 = vunpack.c.l.b16 %v340
    %v2537 = vunpack.c.l.b16 %v341
    %v2538 = vunpack.c.l.b16 %v342
    %v2539 = vunpack.c.l.b16 %v343
    %v2540 = vunpack.c.l.b16 %v344
    %v2541 = vunpack.c.l.b16 %v345
    %v2542 = vunpack.c.l.b16 %v346
    %v2543 = vunpack.c.l.b16 %v347
    %v2544 = vunpack.c.l.b16 %v348
    %v2545 = vunpack.c.l.b16 %v349
    %v2546 = vunpack.c.l.b16 %v350
    %v2547 = vunpack.c.l.b16 %v351
    %v2548 = vunpack.c.l.b16 %v352
    %v2549 = vunpack.c.l.b16 %v353
    %v2550 = vunpack.c.l.b16 %v354
    %v2551 = vunpack.c.l.b16 %v355
    %v2552 = vunpack.c.l.b16 %v356
    %v2553 = vunpack.c.l.b16 %v357
    %v2554 = vunpack.c.l.b16 %v358
    %v2555 = vunpack.c.l.b16 %v359
    %v2556 = vunpack.c.l.b16 %v360
    %v2557 = vunpack.c.l.b16 %v361
    %v2558 = vunpack.c.l.b16 %v362
    %v2559 = vunpack.c.l.b16 %v363
    %v2560 = vunpack.c.l.b16 %v364
    %v2561 = vunpack.c.l.b16 %v365
    %v2562 = vunpack.c.l.b16 %v366
    %v2563 = vunpack.c.l.b16 %v367
    %v2564 = vunpack.c.l.b16 %v368
    %v2565 = vunpack.c.l.b16 %v369
    %v2566 = vunpack.c.l.b16 %v370
    %v2567 = vunpack.c.l.b16 %v371
    %v2568 = vunpack.c.l.b16 %v372
    %v2569 = vunpack.c.l.b16 %v373
    %v2570 = vunpack.c.l.b16 %v374
    %v2571 = vunpack.c.l.b16 %v375
    %v2572 = vunpack.c.l.b16 %v376
    %v2573 = vunpack.c.l.b16 %v377
    %v2574 = vunpack.c.l.b16 %v378
    %v2575 = vunpack.c.l.b16 %v379
    %v2576 = vunpack.c.l.b16 %v380
    %v2577 = vunpack.c.l.b16 %v381
    %v2578 = vunpack.c.l.b16 %v382
    %v2579 = vunpack.c.l.b16 %v383
    %v2580 = vunpack.c.l.b16 %v384
    %v2581 = vunpack.c.l.b16 %v385
    %v2582 = vunpack.c.l.b16 %v386
    %v2583 = vunpack.c.l.b16 %v387
    %v2584 = vunpack.c.l.b16 %v388
    %v2585 = vunpack.c.l.b16 %v389
    %v2586 = vunpack.c.l.b16 %v390
    %v2587 = vunpack.c.l.b16 %v391
    %v2588 = vunpack.c.l.b16 %v392
    %v2589 = vunpack.c.l.b16 %v393
    %v2590 = vunpack.c.l.b16 %v394
    %v2591 = vunpack.c.l.b16 %v395
    %v2592 = vunpack.c.l.b16 %v396
    %v2593 = vunpack.c.l.b16 %v397
    %v2594 = vunpack.c.l.b16 %v398
    %v2595 = vunpack.c.l.b16 %v399
    %v2596 = vunpack.c.l.b16 %v400
    %v2597 = vunpack.c.l.b16 %v401
    %v2598 = vunpack.c.l.b16 %v402
    %v2599 = vunpack.c.l.b16 %v403
    %v2600 = vunpack.c.l.b16 %v404
    %v2601 = vunpack.c.l.b16 %v405
    %v2602 = vunpack.c.l.b16 %v406
    %v2603 = vunpack.c.l.b16 %v407
    %v2604 = vunpack.c.l.b16 %v408
    %v2605 = vunpack.c.l.b16 %v409
    %v2606 = vunpack.c.l.b16 %v410
    %v2607 = vunpack.c.l.b16 %v411
    %v2608 = vunpack.c.l.b16 %v412
    %v2609 = vunpack.c.l.b16 %v413
    %v2610 = vunpack.c.l.b16 %v414
    %v2611 = vunpack.c.l.b16 %v415
    %v2612 = vunpack.c.l.b16 %v416
    %v2613 = vunpack.c.l.b16 %v417
    %v2614 = vunpack.c.l.b16 %v418
    %v2615 = vunpack.c.l.b16 %v419
    %v2616 = vunpack.c.l.b16 %v420
    %v2617 = vunpack.c.l.b16 %v421
    %v2618 = vunpack.c.l.b16 %v422
    %v2619 = vunpack.c.l.b16 %v423
    %v2620 = vunpack.c.l.b16 %v424
    %v2621 = vunpack.c.l.b16 %v425
    %v2622 = vunpack.c.l.b16 %v426
    %v2623 = vunpack.c.l.b16 %v427
    %v2624 = vunpack.c.l.b16 %v428
    %v2625 = vunpack.c.l.b16 %v429
    %v2626 = vunpack.c.l.b16 %v430
    %v2627 = vunpack.c.l.b16 %v431
    %v2628 = vunpack.c.l.b16 %v432
    %v2629 = vunpack.c.l.b16 %v433
    %v2630 = vunpack.c.l.b16 %v434
    %v2631 = vunpack.c.l.b16 %v435
    %v2632 = vunpack.c.l.b16 %v436
    %v2633 = vunpack.c.l.b16 %v437
    %v2634 = vunpack.c.l.b16 %v438
    %v2635 = vunpack.c.l.b16 %v439
    %v2636 = vunpack.c.l.b16 %v440
    %v2637 = vunpack.c.l.b16 %v441
    %v2638 = vunpack.c.l.b16 %v442
    %v2639 = vunpack.c.l.b16 %v443
    %v2640 = vunpack.c.l.b16 %v444
    %v2641 = vunpack.c.l.b16 %v445
    %v2642 = vunpack.c.l.b16 %v446
    %v2643 = vunpack.c.l.b16 %v447
    %v2644 = vunpack.c.l.b16 %v448
    %v2645 = vunpack.c.l.b16 %v449
    %v2646 = vunpack.c.l.b16 %v450
    %v2647 = vunpack.c.l.b16 %v451
    %v2648 = vunpack.c.l.b16 %v452
    %v2649 = vunpack.c.l.b16 %v453
    %v2650 = vunpack.c.l.b16 %v454
    %v2651 = vunpack.c.l.b16 %v455
    %v2652 = vunpack.c.l.b16 %v456
    %v2653 = vunpack.c.l.b16 %v457
    %v2654 = vunpack.c.l.b16 %v458
    %v2655 = vunpack.c.l.b16 %v459
    %v2656 = vunpack.c.l.b16 %v460
    %v2657 = vunpack.c.l.b16 %v461
    %v2658 = vunpack.c.l.b16 %v462
    %v2659 = vunpack.c.l.b16 %v463
    %v2660 = vunpack.c.l.b16 %v464
    %v2661 = vunpack.c.l.b16 %v465
    %v2662 = vunpack.c.l.b16 %v466
    %v2663 = vunpack.c.l.b16 %v467
    %v2664 = vunpack.c.l.b16 %v468
    %v2665 = vunpack.c.l.b16 %v469
    %v2666 = vunpack.c.l.b16 %v470
    %v2667 = vunpack.c.l.b16 %v471
    %v2668 = vunpack.c.l.b16 %v472
    %v2669 = vunpack.c.l.b16 %v473
    %v2670 = vunpack.c.l.b16 %v474
    %v2671 = vunpack.c.l.b16 %v475
    %v2672 = vunpack.c.l.b16 %v476
    %v2673 = vunpack.c.l.b16 %v477
    %v2674 = vunpack.c.l.b16 %v478
    %v2675 = vunpack.c.l.b16 %v479
    %v2676 = vunpack.c.l.b16 %v480
    %v2677 = vunpack.c.l.b16 %v481
    %v2678 = vunpack.c.l.b16 %v482
    %v2679 = vunpack.c.l.b16 %v483
    %v2680 = vunpack.c.l.b16 %v484
    %v2681 = vunpack.c.l.b16 %v485
    %v2682 = vunpack.c.l.b16 %v486
    %v2683 = vunpack.c.l.b16 %v487
    %v2684 = vunpack.c.l.b16 %v488
    %v2685 = vunpack.c.l.b16 %v489
    %v2686 = vunpack.c.l.b16 %v490
    %v2687 = vunpack.c.l.b16 %v491
    %v2688 = vunpack.c.l.b16 %v492
    %v2689 = vunpack.c.l.b16 %v493
    %v2690 = vunpack.c.l.b16 %v494
    %v2691 = vunpack.c.l.b16 %v495
    %v2692 = vunpack.c.l.b16 %v496
    %v2693 = vunpack.c.l.b16 %v497
    %v2694 = vunpack.c.l.b16 %v498
    %v2695 = vunpack.c.l.b16 %v499
    %v2696 = vunpack.c.l.b16 %v500
    %v2697 = vunpack.c.l.b16 %v501
    %v2698 = vunpack.c.l.b16 %v502
    %v2699 = vunpack.c.l.b16 %v503
    %v2700 = vunpack.c.l.b16 %v504
    %v2701 = vunpack.c.l.b16 %v505
    %v2702 = vunpack.c.l.b16 %v506
    %v2703 = vunpack.c.l.b16 %v507
    %v2704 = vunpack.c.l.b16 %v508
    %v2705 = vunpack.c.l.b16 %v509
    %v2706 = vunpack.c.l.b16 %v510
    %v2707 = vunpack.c.l.b16 %v511
    %v2708 = vunpack.c.l.b16 %v512
    %v2709 = vunpack.c.l.b16 %v513
    %v2710 = vunpack.c.l.b16 %v514
    %v2711 = vunpack.c.l.b16 %v515
    %v2712 = vunpack.c.l.b16 %v516
    %v2713 = vunpack.c.l.b16 %v517
    %v2714 = vunpack.c.l.b16 %v518
    %v2715 = vunpack.c.l.b16 %v519
    %v2716 = vunpack.c.l.b16 %v520
    %v2717 = vunpack.c.l.b16 %v521
    %v2718 = vunpack.c.l.b16 %v522
    %v2719 = vunpack.c.l.b16 %v523
    %v2720 = vunpack.c.l.b16 %v524
    %v2721 = vunpack.c.l.b16 %v525
    %v2722 = vunpack.c.l.b16 %v526
    %v2723 = vunpack.c.l.b16 %v527
    %v2724 = vunpack.c.l.b16 %v528
    %v2725 = vunpack.c.l.b16 %v529
    %v2726 = vunpack.c.l.b16 %v530
    %v2727 = vunpack.c.l.b16 %v531
    %v2728 = vunpack.c.l.b16 %v532
    %v2729 = vunpack.c.l.b16 %v533
    %v2730 = vunpack.c.l.b16 %v534
    %v2731 = vunpack.c.l.b16 %v535
    %v2732 = vunpack.c.l.b16 %v536
    %v2733 = vunpack.c.l.b16 %v537
    %v2734 = vunpack.c.l.b16 %v538
    %v2735 = vunpack.c.l.b16 %v539
    %v2736 = vunpack.c.l.b16 %v540
    %v2737 = vunpack.c.l.b16 %v541
    %v2738 = vunpack.c.l.b16 %v542
    %v2739 = vunpack.c.l.b16 %v543
    %v2740 = vunpack.c.l.b16 %v544
    %v2741 = vunpack.c.l.b16 %v545
    %v2742 = vunpack.c.l.b16 %v546
    %v2743 = vunpack.c.l.b16 %v547
    %v2744 = vunpack.c.l.b16 %v548
    %v2745 = vunpack.c.l.b16 %v549
    %v2746 = vunpack.c.l.b16 %v550
    %v2747 = vunpack.c.l.b16 %v551
    %v2748 = vunpack.c.l.b16 %v552
    %v2749 = vunpack.c.l.b16 %v553
    %v2750 = vunpack.c.l.b16 %v554
    %v2751 = vunpack.c.l.b16 %v555
    %v2752 = vunpack.c.l.b16 %v556
    %v2753 = vunpack.c.l.b16 %v557
    %v2754 = vunpack.c.l.b16 %v558
    %v2755 = vunpack.c.l.b16 %v559
    %v2756 = vunpack.c.l.b16 %v560
    %v2757 = vunpack.c.l.b16 %v561
    %v2758 = vunpack.c.l.b16 %v562
    %v2759 = vunpack.c.l.b16 %v563
    %v2760 = vunpack.c.l.b16 %v564
    %v2761 = vunpack.c.l.b16 %v565
    %v2762 = vunpack.c.l.b16 %v566
    %v2763 = vunpack.c.l.b16 %v567
    %v2764 = vunpack.c.l.b16 %v568
    %v2765 = vunpack.c.l.b16 %v569
    %v2766 = vunpack.c.l.b16 %v570
    %v2767 = vunpack.c.l.b16 %v571
    %v2768 = vunpack.c.l.b16 %v572
    %v2769 = vunpack.c.l.b16 %v573
    %v2770 = vunpack.c.l.b16 %v574
    %v2771 = vunpack.c.l.b16 %v575
    %v2772 = vunpack.c.l.b16 %v576
    %v2773 = vunpack.c.l.b16 %v577
    %v2774 = vunpack.c.l.b16 %v578
    %v2775 = vunpack.c.l.b16 %v579
    %v2776 = vunpack.c.l.b16 %v580
    %v2777 = vunpack.c.l.b16 %v581
    %v2778 = vunpack.c.l.b16 %v582
    %v2779 = vunpack.c.l.b16 %v583
    %v2780 = vunpack.c.l.b16 %v584
    %v2781 = vunpack.c.l.b16 %v585
    %v2782 = vunpack.c.l.b16 %v586
    %v2783 = vunpack.c.l.b16 %v587
    %v2784 = vunpack.c.l.b16 %v588
    %v2785 = vunpack.c.l.b16 %v589
    %v2786 = vunpack.c.l.b16 %v590
    %v2787 = vunpack.c.l.b16 %v591
    %v2788 = vunpack.c.l.b16 %v592
    %v2789 = vunpack.c.l.b16 %v593
    %v2790 = vunpack.c.l.b16 %v594
    %v2791 = vunpack.c.l.b16 %v595
    %v2792 = vunpack.c.l.b16 %v596
    %v2793 = vunpack.c.l.b16 %v597
    %v2794 = vunpack.c.l.b16 %v598
    %v2795 = vunpack.c.l.b16 %v599
    %v2796 = vunpack.c.l.b16 %v600
    %v2797 = vunpack.c.l.b16 %v601
    %v2798 = vunpack.c.l.b16 %v602
    %v2799 = vunpack.c.l.b16 %v603
    %v2800 = vunpack.c.l.b16 %v604
    %v2801 = vunpack.c.l.b16 %v605
    %v2802 = vunpack.c.l.b16 %v606
    %v2803 = vunpack.c.l.b16 %v607
    %v2804 = vunpack.c.l.b16 %v608
    %v2805 = vunpack.c.l.b16 %v609
    %v2806 = vunpack.c.l.b16 %v610
    %v2807 = vunpack.c.l.b16 %v611
    %v2808 = vunpack.c.l.b16 %v612
    %v2809 = vunpack.c.l.b16 %v613
    %v2810 = vunpack.c.l.b16 %v614
    %v2811 = vunpack.c.l.b16 %v615
    %v2812 = vunpack.c.l.b16 %v616
    %v2813 = vunpack.c.l.b16 %v617
    %v2814 = vunpack.c.l.b16 %v618
    %v2815 = vunpack.c.l.b16 %v619
    %v2816 = vunpack.c.l.b16 %v620
    %v2817 = vunpack.c.l.b16 %v621
    %v2818 = vunpack.c.l.b16 %v622
    %v2819 = vunpack.c.l.b16 %v623
    %v2820 = vunpack.c.l.b16 %v624
    %v2821 = vunpack.c.l.b16 %v625
    %v2822 = vunpack.c.l.b16 %v626
    %v2823 = vunpack.c.l.b16 %v627
    %v2824 = vunpack.c.l.b16 %v628
    %v2825 = vunpack.c.l.b16 %v629
    %v2826 = vunpack.c.l.b16 %v630
    %v2827 = vunpack.c.l.b16 %v631
    %v2828 = vunpack.c.l.b16 %v632
    %v2829 = vunpack.c.l.b16 %v633
    %v2830 = vunpack.c.l.b16 %v634
    %v2831 = vunpack.c.l.b16 %v635
    %v2832 = vunpack.c.l.b16 %v636
    %v2833 = vunpack.c.l.b16 %v637
    %v2834 = vunpack.c.l.b16 %v638
    %v2835 = vunpack.c.l.b16 %v639
    %v2836 = vunpack.c.l.b16 %v640
    %v2837 = vunpack.c.l.b16 %v641
    %v2838 = vunpack.c.l.b16 %v642
    %v2839 = vunpack.c.l.b16 %v643
    %v2840 = vunpack.c.l.b16 %v644
    %v2841 = vunpack.c.l.b16 %v645
    %v2842 = vunpack.c.l.b16 %v646
    %v2843 = vunpack.c.l.b16 %v647
    %v2844 = vunpack.c.l.b16 %v648
    %v2845 = vunpack.c.l.b16 %v649
    %v2846 = vunpack.c.l.b16 %v650
    %v2847 = vunpack.c.l.b16 %v651
    %v2848 = vunpack.c.l.b16 %v652
    %v2849 = vunpack.c.l.b16 %v653
    %v2850 = vunpack.c.l.b16 %v654
    %v2851 = vunpack.c.l.b16 %v655
    %v2852 = vunpack.c.l.b16 %v656
    %v2853 = vunpack.c.l.b16 %v657
    %v2854 = vunpack.c.l.b16 %v658
    %v2855 = vunpack.c.l.b16 %v659
    %v2856 = vunpack.c.l.b16 %v660
    %v2857 = vunpack.c.l.b16 %v661
    %v2858 = vunpack.c.l.b16 %v662
    %v2859 = vunpack.c.l.b16 %v663
    %v2860 = vunpack.c.l.b16 %v664
    %v2861 = vunpack.c.l.b16 %v665
    %v2862 = vunpack.c.l.b16 %v666
    %v2863 = vunpack.c.l.b16 %v667
    %v2864 = vunpack.c.l.b16 %v668
    %v2865 = vunpack.c.l.b16 %v669
    %v2866 = vunpack.c.l.b16 %v670
    %v2867 = vunpack.c.l.b16 %v671
    %v2868 = vunpack.c.l.b16 %v672
    %v2869 = vunpack.c.l.b16 %v673
    %v2870 = vunpack.c.l.b16 %v674
    %v2871 = vunpack.c.l.b16 %v675
    %v2872 = vunpack.c.l.b16 %v676
    %v2873 = vunpack.c.l.b16 %v677
    %v2874 = vunpack.c.l.b16 %v678
    %v2875 = vunpack.c.l.b16 %v679
    %v2876 = vunpack.c.l.b16 %v680
    %v2877 = vunpack.c.l.b16 %v681
    %v2878 = vunpack.c.l.b16 %v682
    %v2879 = vunpack.c.l.b16 %v683
    %v2880 = vunpack.c.l.b16 %v684
    %v2881 = vunpack.c.l.b16 %v685
    %v2882 = vunpack.c.l.b16 %v686
    %v2883 = vunpack.c.l.b16 %v687
    %v2884 = vunpack.c.l.b16 %v688
    %v2885 = vunpack.c.l.b16 %v689
    %v2886 = vunpack.c.l.b16 %v690
    %v2887 = vunpack.c.l.b16 %v691
    %v2888 = vunpack.c.l.b16 %v692
    %v2889 = vunpack.c.l.b16 %v693
    %v2890 = vunpack.c.l.b16 %v694
    %v2891 = vunpack.c.l.b16 %v695
    %v2892 = vunpack.c.l.b16 %v696
    %v2893 = vunpack.c.l.b16 %v697
    %v2894 = vunpack.c.l.b16 %v698
    %v2895 = vunpack.c.l.b16 %v699
    %v2896 = vunpack.c.l.b16 %v700
    %v2897 = vunpack.c.l.b16 %v701
    %v2898 = vunpack.c.l.b16 %v702
    %v2899 = vunpack.c.l.b16 %v703
    %v2900 = vunpack.c.l.b16 %v704
    %v2901 = vunpack.c.l.b16 %v705
    %v2902 = vunpack.c.l.b16 %v706
    %v2903 = vunpack.c.l.b16 %v707
    %v2904 = vunpack.c.l.b16 %v708
    %v2905 = vunpack.c.l.b16 %v709
    %v2906 = vunpack.c.l.b16 %v710
    %v2907 = vunpack.c.l.b16 %v711
    %v2908 = vunpack.c.l.b16 %v712
    %v2909 = vunpack.c.l.b16 %v713
    %v2910 = vunpack.c.l.b16 %v714
    %v2911 = vunpack.c.l.b16 %v715
    %v2912 = vunpack.c.l.b16 %v716
    %v2913 = vunpack.c.l.b16 %v717
    %v2914 = vunpack.c.l.b16 %v718
    %v2915 = vunpack.c.l.b16 %v719
    %v2916 = vunpack.c.l.b16 %v720
    %v2917 = vunpack.c.l.b16 %v721
    %v2918 = vunpack.c.l.b16 %v722
    %v2919 = vunpack.c.l.b16 %v723
    %v2920 = vunpack.c.l.b16 %v724
    %v2921 = vunpack.c.l.b16 %v725
    %v2922 = vunpack.c.l.b16 %v726
    %v2923 = vunpack.c.l.b16 %v727
    %v2924 = vunpack.c.l.b16 %v728
    %v2925 = vunpack.c.l.b16 %v729
    %v2926 = vunpack.c.l.b16 %v730
    %v2927 = vunpack.c.l.b16 %v731
    %v2928 = vunpack.c.l.b16 %v732
    %v2929 = vunpack.c.l.b16 %v733
    %v2930 = vunpack.c.l.b16 %v734
    %v2931 = vunpack.c.l.b16 %v735
    %v2932 = vunpack.c.l.b16 %v736
    %v2933 = vunpack.c.l.b16 %v737
    %v2934 = vunpack.c.l.b16 %v738
    %v2935 = vunpack.c.l.b16 %v739
    %v2936 = vunpack.c.l.b16 %v740
    %v2937 = vunpack.c.l.b16 %v741
    %v2938 = vunpack.c.l.b16 %v742
    %v2939 = vunpack.c.l.b16 %v743
    %v2940 = vunpack.c.l.b16 %v744
    %v2941 = vunpack.c.l.b16 %v745
    %v2942 = vunpack.c.l.b16 %v746
    %v2943 = vunpack.c.l.b16 %v747
    %v2944 = vunpack.c.l.b16 %v748
    %v2945 = vunpack.c.l.b16 %v749
    %v2946 = vunpack.c.l.b16 %v750
    %v2947 = vunpack.c.l.b16 %v751
    %v2948 = vunpack.c.l.b16 %v752
    %v2949 = vunpack.c.l.b16 %v753
    %v2950 = vunpack.c.l.b16 %v754
    %v2951 = vunpack.c.l.b16 %v755
    %v2952 = vunpack.c.l.b16 %v756
    %v2953 = vunpack.c.l.b16 %v757
    %v2954 = vunpack.c.l.b16 %v758
    %v2955 = vunpack.c.l.b16 %v759
    %v2956 = vunpack.c.l.b16 %v760
    %v2957 = vunpack.c.l.b16 %v761
    %v2958 = vunpack.c.l.b16 %v762
    %v2959 = vunpack.c.l.b16 %v763
    %v2960 = vunpack.c.l.b16 %v764
    %v2961 = vunpack.c.l.b16 %v765
    %v2962 = vunpack.c.l.b16 %v766
    %v2963 = vunpack.c.l.b16 %v767
    %v2964 = vunpack.c.l.b16 %v768
    %v2965 = vunpack.c.l.b16 %v769
    %v2966 = vunpack.c.l.b16 %v770
    %v2967 = vunpack.c.l.b16 %v771
    %v2968 = vunpack.c.l.b16 %v772
    %v2969 = vunpack.c.l.b16 %v773
    %v2970 = vunpack.c.l.b16 %v774
    %v2971 = vunpack.c.l.b16 %v775
    %v2972 = vunpack.c.l.b16 %v776
    %v2973 = vunpack.c.l.b16 %v777
    %v2974 = vunpack.c.l.b16 %v778
    %v2975 = vunpack.c.l.b16 %v779
    %v2976 = vunpack.c.l.b16 %v780
    %v2977 = vunpack.c.l.b16 %v781
    %v2978 = vunpack.c.l.b16 %v782
    %v2979 = vunpack.c.l.b16 %v783
    %v2980 = vunpack.c.l.b16 %v784
    %v2981 = vunpack.c.l.b16 %v785
    %v2982 = vunpack.c.l.b16 %v786
    %v2983 = vunpack.c.l.b16 %v787
    %v2984 = vunpack.c.l.b16 %v788
    %v2985 = vunpack.c.l.b16 %v789
    %v2986 = vunpack.c.l.b16 %v790
    %v2987 = vunpack.c.l.b16 %v791
    %v2988 = vunpack.c.l.b16 %v792
    %v2989 = vunpack.c.l.b16 %v793
    %v2990 = vunpack.c.l.b16 %v794
    %v2991 = vunpack.c.l.b16 %v795
    %v2992 = vunpack.c.l.b16 %v796
    %v2993 = vunpack.c.l.b16 %v797
    %v2994 = vunpack.c.l.b16 %v798
    %v2995 = vunpack.c.l.b16 %v799
    %v2996 = vunpack.c.l.b16 %v800
    %v2997 = vunpack.c.l.b16 %v801
    %v2998 = vunpack.c.l.b16 %v802
    %v2999 = vunpack.c.l.b16 %v803
    %v3000 = vunpack.c.l.b16 %v804
    %v3001 = vunpack.c.l.b16 %v805
    %v3002 = vunpack.c.l.b16 %v806
    %v3003 = vunpack.c.l.b16 %v807
    %v3004 = vunpack.c.l.b16 %v808
    %v3005 = vunpack.c.l.b16 %v809
    %v3006 = vunpack.c.l.b16 %v810
    %v3007 = vunpack.c.l.b16 %v811
    %v3008 = vunpack.c.l.b16 %v812
    %v3009 = vunpack.c.l.b16 %v813
    %v3010 = vunpack.c.l.b16 %v814
    %v3011 = vunpack.c.l.b16 %v815
    %v3012 = vunpack.c.l.b16 %v816
    %v3013 = vunpack.c.l.b16 %v817
    %v3014 = vunpack.c.l.b16 %v818
    %v3015 = vunpack.c.l.b16 %v819
    %v3016 = vunpack.c.l.b16 %v820
    %v3017 = vunpack.c.l.b16 %v821
    %v3018 = vunpack.c.l.b16 %v822
    %v3019 = vunpack.c.l.b16 %v823
    %v3020 = vunpack.c.l.b16 %v824
    %v3021 = vunpack.c.l.b16 %v825
    %v3022 = vunpack.c.l.b16 %v826
    %v3023 = vunpack.c.l.b16 %v827
    %v3024 = vunpack.c.l.b16 %v828
    %v3025 = vunpack.c.l.b16 %v829
    %v3026 = vunpack.c.l.b16 %v830
    %v3027 = vunpack.c.l.b16 %v831
    %v3028 = vunpack.c.l.b16 %v832
    %v3029 = vunpack.c.l.b16 %v833
    %v3030 = vunpack.c.l.b16 %v834
    %v3031 = vunpack.c.l.b16 %v835
    %v3032 = vunpack.c.l.b16 %v836
    %v3033 = vunpack.c.l.b16 %v837
    %v3034 = vunpack.c.l.b16 %v838
    %v3035 = vunpack.c.l.b16 %v839
    %v3036 = vunpack.c.l.b16 %v840
    %v3037 = vunpack.c.l.b16 %v841
    %v3038 = vunpack.c.l.b16 %v842
    %v3039 = vunpack.c.l.b16 %v843
    %v3040 = vunpack.c.l.b16 %v844
    %v3041 = vunpack.c.l.b16 %v845
    %v3042 = vunpack.c.l.b16 %v846
    %v3043 = vunpack.c.l.b16 %v847
    %v3044 = vunpack.c.l.b16 %v848
    %v3045 = vunpack.c.l.b16 %v849
    %v3046 = vunpack.c.l.b16 %v850
    %v3047 = vunpack.c.l.b16 %v851
    %v3048 = vunpack.c.l.b16 %v852
    %v3049 = vunpack.c.l.b16 %v853
    %v3050 = vunpack.c.l.b16 %v854
    %v3051 = vunpack.c.l.b16 %v855
    %v3052 = vunpack.c.l.b16 %v856
    %v3053 = vunpack.c.l.b16 %v857
    %v3054 = vunpack.c.l.b16 %v858
    %v3055 = vunpack.c.l.b16 %v859
    %v3056 = vunpack.c.l.b16 %v860
    %v3057 = vunpack.c.l.b16 %v861
    %v3058 = vunpack.c.l.b16 %v862
    %v3059 = vunpack.c.l.b16 %v863
    %v3060 = vunpack.c.l.b16 %v864
    %v3061 = vunpack.c.l.b16 %v865
    %v3062 = vunpack.c.l.b16 %v866
    %v3063 = vunpack.c.l.b16 %v867
    %v3064 = vunpack.c.l.b16 %v868
    %v3065 = vunpack.c.l.b16 %v869
    %v3066 = vunpack.c.l.b16 %v870
    %v3067 = vunpack.c.l.b16 %v871
    %v3068 = vunpack.c.l.b16 %v872
    %v3069 = vunpack.c.l.b16 %v873
    %v3070 = vunpack.c.l.b16 %v874
    %v3071 = vunpack.c.l.b16 %v875
    %v3072 = vunpack.c.l.b16 %v876
    %v3073 = vunpack.c.l.b16 %v877
    %v3074 = vunpack.c.l.b16 %v878
    %v3075 = vunpack.c.l.b16 %v879
    %v3076 = vunpack.c.l.b16 %v880
    %v3077 = vunpack.c.l.b16 %v881
    %v3078 = vunpack.c.l.b16 %v882
    %v3079 = vunpack.c.l.b16 %v883
    %v3080 = vunpack.c.l.b16 %v884
    %v3081 = vunpack.c.l.b16 %v885
    %v3082 = vunpack.c.l.b16 %v886
    %v3083 = vunpack.c.l.b16 %v887
    %v3084 = vunpack.c.l.b16 %v888
    %v3085 = vunpack.c.l.b16 %v889
    %v3086 = vunpack.c.l.b16 %v890
    %v3087 = vunpack.c.l.b16 %v891
    %v3088 = vunpack.c.l.b16 %v892
    %v3089 = vunpack.c.l.b16 %v893
    %v3090 = vunpack.c.l.b16 %v894
    %v3091 = vunpack.c.l.b16 %v895
    %v3092 = vunpack.c.l.b16 %v896
    %v3093 = vunpack.c.l.b16 %v897
    %v3094 = vunpack.c.l.b16 %v898
    %v3095 = vunpack.c.l.b16 %v899
    %v3096 = vunpack.c.l.b16 %v900
    %v3097 = vunpack.c.l.b16 %v901
    %v3098 = vunpack.c.l.b16 %v902
    %v3099 = vunpack.c.l.b16 %v903
    %v3100 = vunpack.c.l.b16 %v904
    %v3101 = vunpack.c.l.b16 %v905
    %v3102 = vunpack.c.l.b16 %v906
    %v3103 = vunpack.c.l.b16 %v907
    %v3104 = vunpack.c.l.b16 %v908
    %v3105 = vunpack.c.l.b16 %v909
    %v3106 = vunpack.c.l.b16 %v910
    %v3107 = vunpack.c.l.b16 %v911
    %v3108 = vunpack.c.l.b16 %v912
    %v3109 = vunpack.c.l.b16 %v913
    %v3110 = vunpack.c.l.b16 %v914
    %v3111 = vunpack.c.l.b16 %v915
    %v3112 = vunpack.c.l.b16 %v916
    %v3113 = vunpack.c.l.b16 %v917
    %v3114 = vunpack.c.l.b16 %v918
    %v3115 = vunpack.c.l.b16 %v919
    %v3116 = vunpack.c.l.b16 %v920
    %v3117 = vunpack.c.l.b16 %v921
    %v3118 = vunpack.c.l.b16 %v922
    %v3119 = vunpack.c.l.b16 %v923
    %v3120 = vunpack.c.l.b16 %v924
    %v3121 = vunpack.c.l.b16 %v925
    %v3122 = vunpack.c.l.b16 %v926
    %v3123 = vunpack.c.l.b16 %v927
    %v3124 = vunpack.c.l.b16 %v928
    %v3125 = vunpack.c.l.b16 %v929
    %v3126 = vunpack.c.l.b16 %v930
    %v3127 = vunpack.c.l.b16 %v931
    %v3128 = vunpack.c.l.b16 %v932
    %v3129 = vunpack.c.l.b16 %v933
    %v3130 = vunpack.c.l.b16 %v934
    %v3131 = vunpack.c.l.b16 %v935
    %v3132 = vunpack.c.l.b16 %v936
    %v3133 = vunpack.c.l.b16 %v937
    %v3134 = vunpack.c.l.b16 %v938
    %v3135 = vunpack.c.l.b16 %v939
    %v3136 = vunpack.c.l.b16 %v940
    %v3137 = vunpack.c.l.b16 %v941
    %v3138 = vunpack.c.l.b16 %v942
    %v3139 = vunpack.c.l.b16 %v943
    %v3140 = vunpack.c.l.b16 %v944
    %v3141 = vunpack.c.l.b16 %v945
    %v3142 = vunpack.c.l.b16 %v946
    %v3143 = vunpack.c.l.b16 %v947
    %v3144 = vunpack.c.l.b16 %v948
    %v3145 = vunpack.c.l.b16 %v949
    %v3146 = vunpack.c.l.b16 %v950
    %v3147 = vunpack.c.l.b16 %v951
    %v3148 = vunpack.c.l.b16 %v952
    %v3149 = vunpack.c.l.b16 %v953
    %v3150 = vunpack.c.l.b16 %v954
    %v3151 = vunpack.c.l.b16 %v955
    %v3152 = vunpack.c.l.b16 %v956
    %v3153 = vunpack.c.l.b16 %v957
    %v3154 = vunpack.c.l.b16 %v958
    %v3155 = vunpack.c.l.b16 %v959
    %v3156 = vunpack.c.l.b16 %v960
    %v3157 = vunpack.c.l.b16 %v961
    %v3158 = vunpack.c.l.b16 %v962
    %v3159 = vunpack.c.l.b16 %v963
    %v3160 = vunpack.c.l.b16 %v964
    %v3161 = vunpack.c.l.b16 %v965
    %v3162 = vunpack.c.l.b16 %v966
    %v3163 = vunpack.c.l.b16 %v967
    %v3164 = vunpack.c.l.b16 %v968
    %v3165 = vunpack.c.l.b16 %v969
    %v3166 = vunpack.c.l.b16 %v970
    %v3167 = vunpack.c.l.b16 %v971
    %v3168 = vunpack.c.l.b16 %v972
    %v3169 = vunpack.c.l.b16 %v973
    %v3170 = vunpack.c.l.b16 %v974
    %v3171 = vunpack.c.l.b16 %v975
    %v3172 = vunpack.c.l.b16 %v976
    %v3173 = vunpack.c.l.b16 %v977
    %v3174 = vunpack.c.l.b16 %v978
    %v3175 = vunpack.c.l.b16 %v979
    %v3176 = vunpack.c.l.b16 %v980
    %v3177 = vunpack.c.l.b16 %v981
    %v3178 = vunpack.c.l.b16 %v982
    %v3179 = vunpack.c.l.b16 %v983
    %v3180 = vunpack.c.l.b16 %v984
    %v3181 = vunpack.c.l.b16 %v985
    %v3182 = vunpack.c.l.b16 %v986
    %v3183 = vunpack.c.l.b16 %v987
    %v3184 = vunpack.c.l.b16 %v988
    %v3185 = vunpack.c.l.b16 %v989
    %v3186 = vunpack.c.l.b16 %v990
    %v3187 = vunpack.c.l.b16 %v991
    %v3188 = vunpack.c.l.b16 %v992
    %v3189 = vunpack.c.l.b16 %v993
    %v3190 = vunpack.c.l.b16 %v994
    %v3191 = vunpack.c.l.b16 %v995
    %v3192 = vunpack.c.l.b16 %v996
    %v3193 = vunpack.c.l.b16 %v997
    %v3194 = vunpack.c.l.b16 %v998
    %v3195 = vunpack.c.l.b16 %v999
    %v3196 = vunpack.c.l.b16 %v1000
    %v3197 = vunpack.c.l.b16 %v1001
    %v3198 = vunpack.c.l.b16 %v1002
    %v3199 = vunpack.c.l.b16 %v1003
    %v3200 = vunpack.c.l.b16 %v1004
    %v3201 = vunpack.c.l.b16 %v1005
    %v3202 = vunpack.c.l.b16 %v1006
    %v3203 = vunpack.c.l.b16 %v1007
    %v3204 = vunpack.c.l.b16 %v1008
    %v3205 = vunpack.c.l.b16 %v1009
    %v3206 = vunpack.c.l.b16 %v1010
    %v3207 = vunpack.c.l.b16 %v1011
    %v3208 = vunpack.c.l.b16 %v1012
    %v3209 = vunpack.c.l.b16 %v1013
    %v3210 = vunpack.c.l.b16 %v1014
    %v3211 = vunpack.c.l.b16 %v1015
    %v3212 = vunpack.c.l.b16 %v1016
    %v3213 = vunpack.c.l.b16 %v1017
    %v3214 = vunpack.c.l.b16 %v1018
    %v3215 = vunpack.c.l.b16 %v1019
    %v3216 = vunpack.c.l.b16 %v1020
    %v3217 = vunpack.c.l.b16 %v1021
    %v3218 = vunpack.c.l.b16 %v1022
    %v3219 = vunpack.c.l.b16 %v1023
    %v3220 = vunpack.c.l.b16 %v1024
    %v3221 = vunpack.c.l.b16 %v1025
    %v3222 = vunpack.c.l.b16 %v1026
    %v3223 = vunpack.c.l.b16 %v1027
    %v3224 = vunpack.c.l.b16 %v1028
    %v3225 = vunpack.c.l.b16 %v1029
    %v3226 = vunpack.c.l.b16 %v1030
    %v3227 = vunpack.c.l.b16 %v1031
    %v3228 = vunpack.c.l.b16 %v1032
    %v3229 = vunpack.c.l.b16 %v1033
    %v3230 = vunpack.c.l.b16 %v1034
    %v3231 = vunpack.c.l.b16 %v1035
    %v3232 = vunpack.c.l.b16 %v1036
    %v3233 = vunpack.c.l.b16 %v1037
    %v3234 = vunpack.c.l.b16 %v1038
    %v3235 = vunpack.c.l.b16 %v1039
    %v3236 = vunpack.c.l.b16 %v1040
    %v3237 = vunpack.c.l.b16 %v1041
    %v3238 = vunpack.c.l.b16 %v1042
    %v3239 = vunpack.c.l.b16 %v1043
    %v3240 = vunpack.c.l.b16 %v1044
    %v3241 = vunpack.c.l.b16 %v1045
    %v3242 = vunpack.c.l.b16 %v1046
    %v3243 = vunpack.c.l.b16 %v1047
    %v3244 = vunpack.c.l.b16 %v1048
    %v3245 = vunpack.c.l.b16 %v1049
    %v3246 = vunpack.c.l.b16 %v1050
    %v3247 = vunpack.c.l.b16 %v1051
    %v3248 = vunpack.c.l.b16 %v1052
    %v3249 = vpack.c.b16 %v2226, %v2225
    %v3250 = vpack.c.b16 %v2228, %v2227
    %v3251 = vpack.c.b16 %v2230, %v2229
    %v3252 = vpack.c.b16 %v2232, %v2231
    %v3253 = vpack.c.b16 %v2234, %v2233
    %v3254 = vpack.c.b16 %v2236, %v2235
    %v3255 = vpack.c.b16 %v2238, %v2237
    %v3256 = vpack.c.b16 %v2240, %v2239
    %v3257 = vpack.c.b16 %v2242, %v2241
    %v3258 = vpack.c.b16 %v2244, %v2243
    %v3259 = vpack.c.b16 %v2246, %v2245
    %v3260 = vpack.c.b16 %v2248, %v2247
    %v3261 = vpack.c.b16 %v2250, %v2249
    %v3262 = vpack.c.b16 %v2252, %v2251
    %v3263 = vpack.c.b16 %v2254, %v2253
    %v3264 = vpack.c.b16 %v2256, %v2255
    %v3265 = vpack.c.b16 %v2258, %v2257
    %v3266 = vpack.c.b16 %v2260, %v2259
    %v3267 = vpack.c.b16 %v2262, %v2261
    %v3268 = vpack.c.b16 %v2264, %v2263
    %v3269 = vpack.c.b16 %v2266, %v2265
    %v3270 = vpack.c.b16 %v2268, %v2267
    %v3271 = vpack.c.b16 %v2270, %v2269
    %v3272 = vpack.c.b16 %v2272, %v2271
    %v3273 = vpack.c.b16 %v2274, %v2273
    %v3274 = vpack.c.b16 %v2276, %v2275
    %v3275 = vpack.c.b16 %v2278, %v2277
    %v3276 = vpack.c.b16 %v2280, %v2279
    %v3277 = vpack.c.b16 %v2282, %v2281
    %v3278 = vpack.c.b16 %v2284, %v2283
    %v3279 = vpack.c.b16 %v2286, %v2285
    %v3280 = vpack.c.b16 %v2288, %v2287
    %v3281 = vpack.c.b16 %v2290, %v2289
    %v3282 = vpack.c.b16 %v2292, %v2291
    %v3283 = vpack.c.b16 %v2294, %v2293
    %v3284 = vpack.c.b16 %v2296, %v2295
    %v3285 = vpack.c.b16 %v2298, %v2297
    %v3286 = vpack.c.b16 %v2300, %v2299
    %v3287 = vpack.c.b16 %v2302, %v2301
    %v3288 = vpack.c.b16 %v2304, %v2303
    %v3289 = vpack.c.b16 %v2306, %v2305
    %v3290 = vpack.c.b16 %v2308, %v2307
    %v3291 = vpack.c.b16 %v2310, %v2309
    %v3292 = vpack.c.b16 %v2312, %v2311
    %v3293 = vpack.c.b16 %v2314, %v2313
    %v3294 = vpack.c.b16 %v2316, %v2315
    %v3295 = vpack.c.b16 %v2318, %v2317
    %v3296 = vpack.c.b16 %v2320, %v2319
    %v3297 = vpack.c.b16 %v2322, %v2321
    %v3298 = vpack.c.b16 %v2324, %v2323
    %v3299 = vpack.c.b16 %v2326, %v2325
    %v3300 = vpack.c.b16 %v2328, %v2327
    %v3301 = vpack.c.b16 %v2330, %v2329
    %v3302 = vpack.c.b16 %v2332, %v2331
    %v3303 = vpack.c.b16 %v2334, %v2333
    %v3304 = vpack.c.b16 %v2336, %v2335
    %v3305 = vpack.c.b16 %v2338, %v2337
    %v3306 = vpack.c.b16 %v2340, %v2339
    %v3307 = vpack.c.b16 %v2342, %v2341
    %v3308 = vpack.c.b16 %v2344, %v2343
    %v3309 = vpack.c.b16 %v2346, %v2345
    %v3310 = vpack.c.b16 %v2348, %v2347
    %v3311 = vpack.c.b16 %v2350, %v2349
    %v3312 = vpack.c.b16 %v2352, %v2351
    %v3313 = vpack.c.b16 %v2354, %v2353
    %v3314 = vpack.c.b16 %v2356, %v2355
    %v3315 = vpack.c.b16 %v2358, %v2357
    %v3316 = vpack.c.b16 %v2360, %v2359
    %v3317 = vpack.c.b16 %v2362, %v2361
    %v3318 = vpack.c.b16 %v2364, %v2363
    %v3319 = vpack.c.b16 %v2366, %v2365
    %v3320 = vpack.c.b16 %v2368, %v2367
    %v3321 = vpack.c.b16 %v2370, %v2369
    %v3322 = vpack.c.b16 %v2372, %v2371
    %v3323 = vpack.c.b16 %v2374, %v2373
    %v3324 = vpack.c.b16 %v2376, %v2375
    %v3325 = vpack.c.b16 %v2378, %v2377
    %v3326 = vpack.c.b16 %v2380, %v2379
    %v3327 = vpack.c.b16 %v2382, %v2381
    %v3328 = vpack.c.b16 %v2384, %v2383
    %v3329 = vpack.c.b16 %v2386, %v2385
    %v3330 = vpack.c.b16 %v2388, %v2387
    %v3331 = vpack.c.b16 %v2390, %v2389
    %v3332 = vpack.c.b16 %v2392, %v2391
    %v3333 = vpack.c.b16 %v2394, %v2393
    %v3334 = vpack.c.b16 %v2396, %v2395
    %v3335 = vpack.c.b16 %v2398, %v2397
    %v3336 = vpack.c.b16 %v2400, %v2399
    %v3337 = vpack.c.b16 %v2402, %v2401
    %v3338 = vpack.c.b16 %v2404, %v2403
    %v3339 = vpack.c.b16 %v2406, %v2405
    %v3340 = vpack.c.b16 %v2408, %v2407
    %v3341 = vpack.c.b16 %v2410, %v2409
    %v3342 = vpack.c.b16 %v2412, %v2411
    %v3343 = vpack.c.b16 %v2414, %v2413
    %v3344 = vpack.c.b16 %v2416, %v2415
    %v3345 = vpack.c.b16 %v2418, %v2417
    %v3346 = vpack.c.b16 %v2420, %v2419
    %v3347 = vpack.c.b16 %v2422, %v2421
    %v3348 = vpack.c.b16 %v2424, %v2423
    %v3349 = vpack.c.b16 %v2426, %v2425
    %v3350 = vpack.c.b16 %v2428, %v2427
    %v3351 = vpack.c.b16 %v2430, %v2429
    %v3352 = vpack.c.b16 %v2432, %v2431
    %v3353 = vpack.c.b16 %v2434, %v2433
    %v3354 = vpack.c.b16 %v2436, %v2435
    %v3355 = vpack.c.b16 %v2438, %v2437
    %v3356 = vpack.c.b16 %v2440, %v2439
    %v3357 = vpack.c.b16 %v2442, %v2441
    %v3358 = vpack.c.b16 %v2444, %v2443
    %v3359 = vpack.c.b16 %v2446, %v2445
    %v3360 = vpack.c.b16 %v2448, %v2447
    %v3361 = vpack.c.b16 %v2450, %v2449
    %v3362 = vpack.c.b16 %v2452, %v2451
    %v3363 = vpack.c.b16 %v2454, %v2453
    %v3364 = vpack.c.b16 %v2456, %v2455
    %v3365 = vpack.c.b16 %v2458, %v2457
    %v3366 = vpack.c.b16 %v2460, %v2459
    %v3367 = vpack.c.b16 %v2462, %v2461
    %v3368 = vpack.c.b16 %v2464, %v2463
    %v3369 = vpack.c.b16 %v2466, %v2465
    %v3370 = vpack.c.b16 %v2468, %v2467
    %v3371 = vpack.c.b16 %v2470, %v2469
    %v3372 = vpack.c.b16 %v2472, %v2471
    %v3373 = vpack.c.b16 %v2474, %v2473
    %v3374 = vpack.c.b16 %v2476, %v2475
    %v3375 = vpack.c.b16 %v2478, %v2477
    %v3376 = vpack.c.b16 %v2480, %v2479
    %v3377 = vpack.c.b16 %v2482, %v2481
    %v3378 = vpack.c.b16 %v2484, %v2483
    %v3379 = vpack.c.b16 %v2486, %v2485
    %v3380 = vpack.c.b16 %v2488, %v2487
    %v3381 = vpack.c.b16 %v2490, %v2489
    %v3382 = vpack.c.b16 %v2492, %v2491
    %v3383 = vpack.c.b16 %v2494, %v2493
    %v3384 = vpack.c.b16 %v2496, %v2495
    %v3385 = vpack.c.b16 %v2498, %v2497
    %v3386 = vpack.c.b16 %v2500, %v2499
    %v3387 = vpack.c.b16 %v2502, %v2501
    %v3388 = vpack.c.b16 %v2504, %v2503
    %v3389 = vpack.c.b16 %v2506, %v2505
    %v3390 = vpack.c.b16 %v2508, %v2507
    %v3391 = vpack.c.b16 %v2510, %v2509
    %v3392 = vpack.c.b16 %v2512, %v2511
    %v3393 = vpack.c.b16 %v2514, %v2513
    %v3394 = vpack.c.b16 %v2516, %v2515
    %v3395 = vpack.c.b16 %v2518, %v2517
    %v3396 = vpack.c.b16 %v2520, %v2519
    %v3397 = vpack.c.b16 %v2522, %v2521
    %v3398 = vpack.c.b16 %v2524, %v2523
    %v3399 = vpack.c.b16 %v2526, %v2525
    %v3400 = vpack.c.b16 %v2528, %v2527
    %v3401 = vpack.c.b16 %v2530, %v2529
    %v3402 = vpack.c.b16 %v2532, %v2531
    %v3403 = vpack.c.b16 %v2534, %v2533
    %v3404 = vpack.c.b16 %v2536, %v2535
    %v3405 = vpack.c.b16 %v2538, %v2537
    %v3406 = vpack.c.b16 %v2540, %v2539
    %v3407 = vpack.c.b16 %v2542, %v2541
    %v3408 = vpack.c.b16 %v2544, %v2543
    %v3409 = vpack.c.b16 %v2546, %v2545
    %v3410 = vpack.c.b16 %v2548, %v2547
    %v3411 = vpack.c.b16 %v2550, %v2549
    %v3412 = vpack.c.b16 %v2552, %v2551
    %v3413 = vpack.c.b16 %v2554, %v2553
    %v3414 = vpack.c.b16 %v2556, %v2555
    %v3415 = vpack.c.b16 %v2558, %v2557
    %v3416 = vpack.c.b16 %v2560, %v2559
    %v3417 = vpack.c.b16 %v2562, %v2561
    %v3418 = vpack.c.b16 %v2564, %v2563
    %v3419 = vpack.c.b16 %v2566, %v2565
    %v3420 = vpack.c.b16 %v2568, %v2567
    %v3421 = vpack.c.b16 %v2570, %v2569
    %v3422 = vpack.c.b16 %v2572, %v2571
    %v3423 = vpack.c.b16 %v2574, %v2573
    %v3424 = vpack.c.b16 %v2576, %v2575
    %v3425 = vpack.c.b16 %v2578, %v2577
    %v3426 = vpack.c.b16 %v2580, %v2579
    %v3427 = vpack.c.b16 %v2582, %v2581
    %v3428 = vpack.c.b16 %v2584, %v2583
    %v3429 = vpack.c.b16 %v2586, %v2585
    %v3430 = vpack.c.b16 %v2588, %v2587
    %v3431 = vpack.c.b16 %v2590, %v2589
    %v3432 = vpack.c.b16 %v2592, %v2591
    %v3433 = vpack.c.b16 %v2594, %v2593
    %v3434 = vpack.c.b16 %v2596, %v2595
    %v3435 = vpack.c.b16 %v2598, %v2597
    %v3436 = vpack.c.b16 %v2600, %v2599
    %v3437 = vpack.c.b16 %v2602, %v2601
    %v3438 = vpack.c.b16 %v2604, %v2603
    %v3439 = vpack.c.b16 %v2606, %v2605
    %v3440 = vpack.c.b16 %v2608, %v2607
    %v3441 = vpack.c.b16 %v2610, %v2609
    %v3442 = vpack.c.b16 %v2612, %v2611
    %v3443 = vpack.c.b16 %v2614, %v2613
    %v3444 = vpack.c.b16 %v2616, %v2615
    %v3445 = vpack.c.b16 %v2618, %v2617
    %v3446 = vpack.c.b16 %v2620, %v2619
    %v3447 = vpack.c.b16 %v2622, %v2621
    %v3448 = vpack.c.b16 %v2624, %v2623
    %v3449 = vpack.c.b16 %v2626, %v2625
    %v3450 = vpack.c.b16 %v2628, %v2627
    %v3451 = vpack.c.b16 %v2630, %v2629
    %v3452 = vpack.c.b16 %v2632, %v2631
    %v3453 = vpack.c.b16 %v2634, %v2633
    %v3454 = vpack.c.b16 %v2636, %v2635
    %v3455 = vpack.c.b16 %v2638, %v2637
    %v3456 = vpack.c.b16 %v2640, %v2639
    %v3457 = vpack.c.b16 %v2642, %v2641
    %v3458 = vpack.c.b16 %v2644, %v2643
    %v3459 = vpack.c.b16 %v2646, %v2645
    %v3460 = vpack.c.b16 %v2648, %v2647
    %v3461 = vpack.c.b16 %v2650, %v2649
    %v3462 = vpack.c.b16 %v2652, %v2651
    %v3463 = vpack.c.b16 %v2654, %v2653
    %v3464 = vpack.c.b16 %v2656, %v2655
    %v3465 = vpack.c.b16 %v2658, %v2657
    %v3466 = vpack.c.b16 %v2660, %v2659
    %v3467 = vpack.c.b16 %v2662, %v2661
    %v3468 = vpack.c.b16 %v2664, %v2663
    %v3469 = vpack.c.b16 %v2666, %v2665
    %v3470 = vpack.c.b16 %v2668, %v2667
    %v3471 = vpack.c.b16 %v2670, %v2669
    %v3472 = vpack.c.b16 %v2672, %v2671
    %v3473 = vpack.c.b16 %v2674, %v2673
    %v3474 = vpack.c.b16 %v2676, %v2675
    %v3475 = vpack.c.b16 %v2678, %v2677
    %v3476 = vpack.c.b16 %v2680, %v2679
    %v3477 = vpack.c.b16 %v2682, %v2681
    %v3478 = vpack.c.b16 %v2684, %v2683
    %v3479 = vpack.c.b16 %v2686, %v2685
    %v3480 = vpack.c.b16 %v2688, %v2687
    %v3481 = vpack.c.b16 %v2690, %v2689
    %v3482 = vpack.c.b16 %v2692, %v2691
    %v3483 = vpack.c.b16 %v2694, %v2693
    %v3484 = vpack.c.b16 %v2696, %v2695
    %v3485 = vpack.c.b16 %v2698, %v2697
    %v3486 = vpack.c.b16 %v2700, %v2699
    %v3487 = vpack.c.b16 %v2702, %v2701
    %v3488 = vpack.c.b16 %v2704, %v2703
    %v3489 = vpack.c.b16 %v2706, %v2705
    %v3490 = vpack.c.b16 %v2708, %v2707
    %v3491 = vpack.c.b16 %v2710, %v2709
    %v3492 = vpack.c.b16 %v2712, %v2711
    %v3493 = vpack.c.b16 %v2714, %v2713
    %v3494 = vpack.c.b16 %v2716, %v2715
    %v3495 = vpack.c.b16 %v2718, %v2717
    %v3496 = vpack.c.b16 %v2720, %v2719
    %v3497 = vpack.c.b16 %v2722, %v2721
    %v3498 = vpack.c.b16 %v2724, %v2723
    %v3499 = vpack.c.b16 %v2726, %v2725
    %v3500 = vpack.c.b16 %v2728, %v2727
    %v3501 = vpack.c.b16 %v2730, %v2729
    %v3502 = vpack.c.b16 %v2732, %v2731
    %v3503 = vpack.c.b16 %v2734, %v2733
    %v3504 = vpack.c.b16 %v2736, %v2735
    %v3505 = vpack.c.b16 %v2738, %v2737
    %v3506 = vpack.c.b16 %v2740, %v2739
    %v3507 = vpack.c.b16 %v2742, %v2741
    %v3508 = vpack.c.b16 %v2744, %v2743
    %v3509 = vpack.c.b16 %v2746, %v2745
    %v3510 = vpack.c.b16 %v2748, %v2747
    %v3511 = vpack.c.b16 %v2750, %v2749
    %v3512 = vpack.c.b16 %v2752, %v2751
    %v3513 = vpack.c.b16 %v2754, %v2753
    %v3514 = vpack.c.b16 %v2756, %v2755
    %v3515 = vpack.c.b16 %v2758, %v2757
    %v3516 = vpack.c.b16 %v2760, %v2759
    %v3517 = vpack.c.b16 %v2762, %v2761
    %v3518 = vpack.c.b16 %v2764, %v2763
    %v3519 = vpack.c.b16 %v2766, %v2765
    %v3520 = vpack.c.b16 %v2768, %v2767
    %v3521 = vpack.c.b16 %v2770, %v2769
    %v3522 = vpack.c.b16 %v2772, %v2771
    %v3523 = vpack.c.b16 %v2774, %v2773
    %v3524 = vpack.c.b16 %v2776, %v2775
    %v3525 = vpack.c.b16 %v2778, %v2777
    %v3526 = vpack.c.b16 %v2780, %v2779
    %v3527 = vpack.c.b16 %v2782, %v2781
    %v3528 = vpack.c.b16 %v2784, %v2783
    %v3529 = vpack.c.b16 %v2786, %v2785
    %v3530 = vpack.c.b16 %v2788, %v2787
    %v3531 = vpack.c.b16 %v2790, %v2789
    %v3532 = vpack.c.b16 %v2792, %v2791
    %v3533 = vpack.c.b16 %v2794, %v2793
    %v3534 = vpack.c.b16 %v2796, %v2795
    %v3535 = vpack.c.b16 %v2798, %v2797
    %v3536 = vpack.c.b16 %v2800, %v2799
    %v3537 = vpack.c.b16 %v2802, %v2801
    %v3538 = vpack.c.b16 %v2804, %v2803
    %v3539 = vpack.c.b16 %v2806, %v2805
    %v3540 = vpack.c.b16 %v2808, %v2807
    %v3541 = vpack.c.b16 %v2810, %v2809
    %v3542 = vpack.c.b16 %v2812, %v2811
    %v3543 = vpack.c.b16 %v2814, %v2813
    %v3544 = vpack.c.b16 %v2816, %v2815
    %v3545 = vpack.c.b16 %v2818, %v2817
    %v3546 = vpack.c.b16 %v2820, %v2819
    %v3547 = vpack.c.b16 %v2822, %v2821
    %v3548 = vpack.c.b16 %v2824, %v2823
    %v3549 = vpack.c.b16 %v2826, %v2825
    %v3550 = vpack.c.b16 %v2828, %v2827
    %v3551 = vpack.c.b16 %v2830, %v2829
    %v3552 = vpack.c.b16 %v2832, %v2831
    %v3553 = vpack.c.b16 %v2834, %v2833
    %v3554 = vpack.c.b16 %v2836, %v2835
    %v3555 = vpack.c.b16 %v2838, %v2837
    %v3556 = vpack.c.b16 %v2840, %v2839
    %v3557 = vpack.c.b16 %v2842, %v2841
    %v3558 = vpack.c.b16 %v2844, %v2843
    %v3559 = vpack.c.b16 %v2846, %v2845
    %v3560 = vpack.c.b16 %v2848, %v2847
    %v3561 = vpack.c.b16 %v2850, %v2849
    %v3562 = vpack.c.b16 %v2852, %v2851
    %v3563 = vpack.c.b16 %v2854, %v2853
    %v3564 = vpack.c.b16 %v2856, %v2855
    %v3565 = vpack.c.b16 %v2858, %v2857
    %v3566 = vpack.c.b16 %v2860, %v2859
    %v3567 = vpack.c.b16 %v2862, %v2861
    %v3568 = vpack.c.b16 %v2864, %v2863
    %v3569 = vpack.c.b16 %v2866, %v2865
    %v3570 = vpack.c.b16 %v2868, %v2867
    %v3571 = vpack.c.b16 %v2870, %v2869
    %v3572 = vpack.c.b16 %v2872, %v2871
    %v3573 = vpack.c.b16 %v2874, %v2873
    %v3574 = vpack.c.b16 %v2876, %v2875
    %v3575 = vpack.c.b16 %v2878, %v2877
    %v3576 = vpack.c.b16 %v2880, %v2879
    %v3577 = vpack.c.b16 %v2882, %v2881
    %v3578 = vpack.c.b16 %v2884, %v2883
    %v3579 = vpack.c.b16 %v2886, %v2885
    %v3580 = vpack.c.b16 %v2888, %v2887
    %v3581 = vpack.c.b16 %v2890, %v2889
    %v3582 = vpack.c.b16 %v2892, %v2891
    %v3583 = vpack.c.b16 %v2894, %v2893
    %v3584 = vpack.c.b16 %v2896, %v2895
    %v3585 = vpack.c.b16 %v2898, %v2897
    %v3586 = vpack.c.b16 %v2900, %v2899
    %v3587 = vpack.c.b16 %v2902, %v2901
    %v3588 = vpack.c.b16 %v2904, %v2903
    %v3589 = vpack.c.b16 %v2906, %v2905
    %v3590 = vpack.c.b16 %v2908, %v2907
    %v3591 = vpack.c.b16 %v2910, %v2909
    %v3592 = vpack.c.b16 %v2912, %v2911
    %v3593 = vpack.c.b16 %v2914, %v2913
    %v3594 = vpack.c.b16 %v2916, %v2915
    %v3595 = vpack.c.b16 %v2918, %v2917
    %v3596 = vpack.c.b16 %v2920, %v2919
    %v3597 = vpack.c.b16 %v2922, %v2921
    %v3598 = vpack.c.b16 %v2924, %v2923
    %v3599 = vpack.c.b16 %v2926, %v2925
    %v3600 = vpack.c.b16 %v2928, %v2927
    %v3601 = vpack.c.b16 %v2930, %v2929
    %v3602 = vpack.c.b16 %v2932, %v2931
    %v3603 = vpack.c.b16 %v2934, %v2933
    %v3604 = vpack.c.b16 %v2936, %v2935
    %v3605 = vpack.c.b16 %v2938, %v2937
    %v3606 = vpack.c.b16 %v2940, %v2939
    %v3607 = vpack.c.b16 %v2942, %v2941
    %v3608 = vpack.c.b16 %v2944, %v2943
    %v3609 = vpack.c.b16 %v2946, %v2945
    %v3610 = vpack.c.b16 %v2948, %v2947
    %v3611 = vpack.c.b16 %v2950, %v2949
    %v3612 = vpack.c.b16 %v2952, %v2951
    %v3613 = vpack.c.b16 %v2954, %v2953
    %v3614 = vpack.c.b16 %v2956, %v2955
    %v3615 = vpack.c.b16 %v2958, %v2957
    %v3616 = vpack.c.b16 %v2960, %v2959
    %v3617 = vpack.c.b16 %v2962, %v2961
    %v3618 = vpack.c.b16 %v2964, %v2963
    %v3619 = vpack.c.b16 %v2966, %v2965
    %v3620 = vpack.c.b16 %v2968, %v2967
    %v3621 = vpack.c.b16 %v2970, %v2969
    %v3622 = vpack.c.b16 %v2972, %v2971
    %v3623 = vpack.c.b16 %v2974, %v2973
    %v3624 = vpack.c.b16 %v2976, %v2975
    %v3625 = vpack.c.b16 %v2978, %v2977
    %v3626 = vpack.c.b16 %v2980, %v2979
    %v3627 = vpack.c.b16 %v2982, %v2981
    %v3628 = vpack.c.b16 %v2984, %v2983
    %v3629 = vpack.c.b16 %v2986, %v2985
    %v3630 = vpack.c.b16 %v2988, %v2987
    %v3631 = vpack.c.b16 %v2990, %v2989
    %v3632 = vpack.c.b16 %v2992, %v2991
    %v3633 = vpack.c.b16 %v2994, %v2993
    %v3634 = vpack.c.b16 %v2996, %v2995
    %v3635 = vpack.c.b16 %v2998, %v2997
    %v3636 = vpack.c.b16 %v3000, %v2999
    %v3637 = vpack.c.b16 %v3002, %v3001
    %v3638 = vpack.c.b16 %v3004, %v3003
    %v3639 = vpack.c.b16 %v3006, %v3005
    %v3640 = vpack.c.b16 %v3008, %v3007
    %v3641 = vpack.c.b16 %v3010, %v3009
    %v3642 = vpack.c.b16 %v3012, %v3011
    %v3643 = vpack.c.b16 %v3014, %v3013
    %v3644 = vpack.c.b16 %v3016, %v3015
    %v3645 = vpack.c.b16 %v3018, %v3017
    %v3646 = vpack.c.b16 %v3020, %v3019
    %v3647 = vpack.c.b16 %v3022, %v3021
    %v3648 = vpack.c.b16 %v3024, %v3023
    %v3649 = vpack.c.b16 %v3026, %v3025
    %v3650 = vpack.c.b16 %v3028, %v3027
    %v3651 = vpack.c.b16 %v3030, %v3029
    %v3652 = vpack.c.b16 %v3032, %v3031
    %v3653 = vpack.c.b16 %v3034, %v3033
    %v3654 = vpack.c.b16 %v3036, %v3035
    %v3655 = vpack.c.b16 %v3038, %v3037
    %v3656 = vpack.c.b16 %v3040, %v3039
    %v3657 = vpack.c.b16 %v3042, %v3041
    %v3658 = vpack.c.b16 %v3044, %v3043
    %v3659 = vpack.c.b16 %v3046, %v3045
    %v3660 = vpack.c.b16 %v3048, %v3047
    %v3661 = vpack.c.b16 %v3050, %v3049
    %v3662 = vpack.c.b16 %v3052, %v3051
    %v3663 = vpack.c.b16 %v3054, %v3053
    %v3664 = vpack.c.b16 %v3056, %v3055
    %v3665 = vpack.c.b16 %v3058, %v3057
    %v3666 = vpack.c.b16 %v3060, %v3059
    %v3667 = vpack.c.b16 %v3062, %v3061
    %v3668 = vpack.c.b16 %v3064, %v3063
    %v3669 = vpack.c.b16 %v3066, %v3065
    %v3670 = vpack.c.b16 %v3068, %v3067
    %v3671 = vpack.c.b16 %v3070, %v3069
    %v3672 = vpack.c.b16 %v3072, %v3071
    %v3673 = vpack.c.b16 %v3074, %v3073
    %v3674 = vpack.c.b16 %v3076, %v3075
    %v3675 = vpack.c.b16 %v3078, %v3077
    %v3676 = vpack.c.b16 %v3080, %v3079
    %v3677 = vpack.c.b16 %v3082, %v3081
    %v3678 = vpack.c.b16 %v3084, %v3083
    %v3679 = vpack.c.b16 %v3086, %v3085
    %v3680 = vpack.c.b16 %v3088, %v3087
    %v3681 = vpack.c.b16 %v3090, %v3089
    %v3682 = vpack.c.b16 %v3092, %v3091
    %v3683 = vpack.c.b16 %v3094, %v3093
    %v3684 = vpack.c.b16 %v3096, %v3095
    %v3685 = vpack.c.b16 %v3098, %v3097
    %v3686 = vpack.c.b16 %v3100, %v3099
    %v3687 = vpack.c.b16 %v3102, %v3101
    %v3688 = vpack.c.b16 %v3104, %v3103
    %v3689 = vpack.c.b16 %v3106, %v3105
    %v3690 = vpack.c.b16 %v3108, %v3107
    %v3691 = vpack.c.b16 %v3110, %v3109
    %v3692 = vpack.c.b16 %v3112, %v3111
    %v3693 = vpack.c.b16 %v3114, %v3113
    %v3694 = vpack.c.b16 %v3116, %v3115
    %v3695 = vpack.c.b16 %v3118, %v3117
    %v3696 = vpack.c.b16 %v3120, %v3119
    %v3697 = vpack.c.b16 %v3122, %v3121
    %v3698 = vpack.c.b16 %v3124, %v3123
    %v3699 = vpack.c.b16 %v3126, %v3125
    %v3700 = vpack.c.b16 %v3128, %v3127
    %v3701 = vpack.c.b16 %v3130, %v3129
    %v3702 = vpack.c.b16 %v3132, %v3131
    %v3703 = vpack.c.b16 %v3134, %v3133
    %v3704 = vpack.c.b16 %v3136, %v3135
    %v3705 = vpack.c.b16 %v3138, %v3137
    %v3706 = vpack.c.b16 %v3140, %v3139
    %v3707 = vpack.c.b16 %v3142, %v3141
    %v3708 = vpack.c.b16 %v3144, %v3143
    %v3709 = vpack.c.b16 %v3146, %v3145
    %v3710 = vpack.c.b16 %v3148, %v3147
    %v3711 = vpack.c.b16 %v3150, %v3149
    %v3712 = vpack.c.b16 %v3152, %v3151
    %v3713 = vpack.c.b16 %v3154, %v3153
    %v3714 = vpack.c.b16 %v3156, %v3155
    %v3715 = vpack.c.b16 %v3158, %v3157
    %v3716 = vpack.c.b16 %v3160, %v3159
    %v3717 = vpack.c.b16 %v3162, %v3161
    %v3718 = vpack.c.b16 %v3164, %v3163
    %v3719 = vpack.c.b16 %v3166, %v3165
    %v3720 = vpack.c.b16 %v3168, %v3167
    %v3721 = vpack.c.b16 %v3170, %v3169
    %v3722 = vpack.c.b16 %v3172, %v3171
    %v3723 = vpack.c.b16 %v3174, %v3173
    %v3724 = vpack.c.b16 %v3176, %v3175
    %v3725 = vpack.c.b16 %v3178, %v3177
    %v3726 = vpack.c.b16 %v3180, %v3179
    %v3727 = vpack.c.b16 %v3182, %v3181
    %v3728 = vpack.c.b16 %v3184, %v3183
    %v3729 = vpack.c.b16 %v3186, %v3185
    %v3730 = vpack.c.b16 %v3188, %v3187
    %v3731 = vpack.c.b16 %v3190, %v3189
    %v3732 = vpack.c.b16 %v3192, %v3191
    %v3733 = vpack.c.b16 %v3194, %v3193
    %v3734 = vpack.c.b16 %v3196, %v3195
    %v3735 = vpack.c.b16 %v3198, %v3197
    %v3736 = vpack.c.b16 %v3200, %v3199
    %v3737 = vpack.c.b16 %v3202, %v3201
    %v3738 = vpack.c.b16 %v3204, %v3203
    %v3739 = vpack.c.b16 %v3206, %v3205
    %v3740 = vpack.c.b16 %v3208, %v3207
    %v3741 = vpack.c.b16 %v3210, %v3209
    %v3742 = vpack.c.b16 %v3212, %v3211
    %v3743 = vpack.c.b16 %v3214, %v3213
    %v3744 = vpack.c.b16 %v3216, %v3215
    %v3745 = vpack.c.b16 %v3218, %v3217
    %v3746 = vpack.c.b16 %v3220, %v3219
    %v3747 = vpack.c.b16 %v3222, %v3221
    %v3748 = vpack.c.b16 %v3224, %v3223
    %v3749 = vpack.c.b16 %v3226, %v3225
    %v3750 = vpack.c.b16 %v3228, %v3227
    %v3751 = vpack.c.b16 %v3230, %v3229
    %v3752 = vpack.c.b16 %v3232, %v3231
    %v3753 = vpack.c.b16 %v3234, %v3233
    %v3754 = vpack.c.b16 %v3236, %v3235
    %v3755 = vpack.c.b16 %v3238, %v3237
    %v3756 = vpack.c.b16 %v3240, %v3239
    %v3757 = vpack.c.b16 %v3242, %v3241
    %v3758 = vpack.c.b16 %v3244, %v3243
    %v3759 = vpack.c.b16 %v3246, %v3245
    %v3760 = vpack.c.b16 %v3248, %v3247
    %4273 = vmatpush.bf16.msra.mxu0 %v3256
    %4274 = vmatpush.bf16.msra.mxu0 %v3255
    %4275 = vmatpush.bf16.msra.mxu0 %v3254
    %4276 = vmatpush.bf16.msra.mxu0 %v3253
    %4277 = vmatpush.bf16.msra.mxu0 %v3252
    %4278 = vmatpush.bf16.msra.mxu0 %v3251
    %4279 = vmatpush.bf16.msra.mxu0 %v3250
    %4280 = vmatpush.bf16.msra.mxu0 %v3249
    %4281 = vmatmul.bf16.gmra.mxu0 %v1059
    %v4282 = vpop.f32.mrf.mxu0
    %v4283 = vadd.f32 %v1055, %v4282
    %v4284 = vpop.f32.mrf.mxu0
    %4285 = vdwg.mxu0
    %4286 = vmatpush.bf16.msra.mxu0 %v3264
    %4287 = vmatpush.bf16.msra.mxu0 %v3263
    %4288 = vmatpush.bf16.msra.mxu0 %v3262
    %4289 = vmatpush.bf16.msra.mxu0 %v3261
    %4290 = vmatpush.bf16.msra.mxu0 %v3260
    %4291 = vmatpush.bf16.msra.mxu0 %v3259
    %4292 = vmatpush.bf16.msra.mxu0 %v3258
    %4293 = vmatpush.bf16.msra.mxu0 %v3257
    %4294 = vmatmul.bf16.gmra.mxu0 %v1060
    %v4295 = vpop.f32.mrf.mxu0
    %v4296 = vadd.f32 %v4283, %v4295
    %v4297 = vpop.f32.mrf.mxu0
    %4298 = vdwg.mxu0
    %4299 = vmatpush.bf16.msra.mxu0 %v3272
    %4300 = vmatpush.bf16.msra.mxu0 %v3271
    %4301 = vmatpush.bf16.msra.mxu0 %v3270
    %4302 = vmatpush.bf16.msra.mxu0 %v3269
    %4303 = vmatpush.bf16.msra.mxu0 %v3268
    %4304 = vmatpush.bf16.msra.mxu0 %v3267
    %4305 = vmatpush.bf16.msra.mxu0 %v3266
    %4306 = vmatpush.bf16.msra.mxu0 %v3265
    %4307 = vmatmul.bf16.gmra.mxu0 %v1061
    %v4308 = vpop.f32.mrf.mxu0
    %v4309 = vadd.f32 %v4296, %v4308
    %v4310 = vpop.f32.mrf.mxu0
    %4311 = vdwg.mxu0
    %4312 = vmatpush.bf16.msra.mxu0 %v3280
    %4313 = vmatpush.bf16.msra.mxu0 %v3279
    %4314 = vmatpush.bf16.msra.mxu0 %v3278
    %4315 = vmatpush.bf16.msra.mxu0 %v3277
    %4316 = vmatpush.bf16.msra.mxu0 %v3276
    %4317 = vmatpush.bf16.msra.mxu0 %v3275
    %4318 = vmatpush.bf16.msra.mxu0 %v3274
    %4319 = vmatpush.bf16.msra.mxu0 %v3273
    %4320 = vmatmul.bf16.gmra.mxu0 %v1062
    %v4321 = vpop.f32.mrf.mxu0
    %v4322 = vadd.f32 %v4309, %v4321
    %v4323 = vpop.f32.mrf.mxu0
    %4324 = vdwg.mxu0
    %4325 = vmatpush.bf16.msra.mxu0 %v3288
    %4326 = vmatpush.bf16.msra.mxu0 %v3287
    %4327 = vmatpush.bf16.msra.mxu0 %v3286
    %4328 = vmatpush.bf16.msra.mxu0 %v3285
    %4329 = vmatpush.bf16.msra.mxu0 %v3284
    %4330 = vmatpush.bf16.msra.mxu0 %v3283
    %4331 = vmatpush.bf16.msra.mxu0 %v3282
    %4332 = vmatpush.bf16.msra.mxu0 %v3281
    %4333 = vmatmul.bf16.gmra.mxu0 %v1063
    %v4334 = vpop.f32.mrf.mxu0
    %v4335 = vadd.f32 %v4322, %v4334
    %v4336 = vpop.f32.mrf.mxu0
    %4337 = vdwg.mxu0
    %4338 = vmatpush.bf16.msra.mxu0 %v3296
    %4339 = vmatpush.bf16.msra.mxu0 %v3295
    %4340 = vmatpush.bf16.msra.mxu0 %v3294
    %4341 = vmatpush.bf16.msra.mxu0 %v3293
    %4342 = vmatpush.bf16.msra.mxu0 %v3292
    %4343 = vmatpush.bf16.msra.mxu0 %v3291
    %4344 = vmatpush.bf16.msra.mxu0 %v3290
    %4345 = vmatpush.bf16.msra.mxu0 %v3289
    %4346 = vmatmul.bf16.gmra.mxu0 %v1064
    %v4347 = vpop.f32.mrf.mxu0
    %v4348 = vadd.f32 %v4335, %v4347
    %v4349 = vpop.f32.mrf.mxu0
    %4350 = vdwg.mxu0
    %4351 = vmatpush.bf16.msra.mxu0 %v3304
    %4352 = vmatpush.bf16.msra.mxu0 %v3303
    %4353 = vmatpush.bf16.msra.mxu0 %v3302
    %4354 = vmatpush.bf16.msra.mxu0 %v3301
    %4355 = vmatpush.bf16.msra.mxu0 %v3300
    %4356 = vmatpush.bf16.msra.mxu0 %v3299
    %4357 = vmatpush.bf16.msra.mxu0 %v3298
    %4358 = vmatpush.bf16.msra.mxu0 %v3297
    %4359 = vmatmul.bf16.gmra.mxu0 %v1065
    %v4360 = vpop.f32.mrf.mxu0
    %v4361 = vadd.f32 %v4348, %v4360
    %v4362 = vpop.f32.mrf.mxu0
    %4363 = vdwg.mxu0
    %4364 = vmatpush.bf16.msra.mxu0 %v3312
    %4365 = vmatpush.bf16.msra.mxu0 %v3311
    %4366 = vmatpush.bf16.msra.mxu0 %v3310
    %4367 = vmatpush.bf16.msra.mxu0 %v3309
    %4368 = vmatpush.bf16.msra.mxu0 %v3308
    %4369 = vmatpush.bf16.msra.mxu0 %v3307
    %4370 = vmatpush.bf16.msra.mxu0 %v3306
    %4371 = vmatpush.bf16.msra.mxu0 %v3305
    %4372 = vmatmul.bf16.gmra.mxu0 %v1066
    %v4373 = vpop.f32.mrf.mxu0
    %v4374 = vadd.f32 %v4361, %v4373
    %v4375 = vpop.f32.mrf.mxu0
    %4376 = vdwg.mxu0
    %4377 = vmatpush.bf16.msra.mxu0 %v3320
    %4378 = vmatpush.bf16.msra.mxu0 %v3319
    %4379 = vmatpush.bf16.msra.mxu0 %v3318
    %4380 = vmatpush.bf16.msra.mxu0 %v3317
    %4381 = vmatpush.bf16.msra.mxu0 %v3316
    %4382 = vmatpush.bf16.msra.mxu0 %v3315
    %4383 = vmatpush.bf16.msra.mxu0 %v3314
    %4384 = vmatpush.bf16.msra.mxu0 %v3313
    %4385 = vmatmul.bf16.gmra.mxu0 %v1069
    %v4386 = vpop.f32.mrf.mxu0
    %v4387 = vadd.f32 %v4374, %v4386
    %v4388 = vpop.f32.mrf.mxu0
    %4389 = vdwg.mxu0
    %4390 = vmatpush.bf16.msra.mxu0 %v3328
    %4391 = vmatpush.bf16.msra.mxu0 %v3327
    %4392 = vmatpush.bf16.msra.mxu0 %v3326
    %4393 = vmatpush.bf16.msra.mxu0 %v3325
    %4394 = vmatpush.bf16.msra.mxu0 %v3324
    %4395 = vmatpush.bf16.msra.mxu0 %v3323
    %4396 = vmatpush.bf16.msra.mxu0 %v3322
    %4397 = vmatpush.bf16.msra.mxu0 %v3321
    %4398 = vmatmul.bf16.gmra.mxu0 %v1070
    %v4399 = vpop.f32.mrf.mxu0
    %v4400 = vadd.f32 %v4387, %v4399
    %v4401 = vpop.f32.mrf.mxu0
    %4402 = vdwg.mxu0
    %4403 = vmatpush.bf16.msra.mxu0 %v3336
    %4404 = vmatpush.bf16.msra.mxu0 %v3335
    %4405 = vmatpush.bf16.msra.mxu0 %v3334
    %4406 = vmatpush.bf16.msra.mxu0 %v3333
    %4407 = vmatpush.bf16.msra.mxu0 %v3332
    %4408 = vmatpush.bf16.msra.mxu0 %v3331
    %4409 = vmatpush.bf16.msra.mxu0 %v3330
    %4410 = vmatpush.bf16.msra.mxu0 %v3329
    %4411 = vmatmul.bf16.gmra.mxu0 %v1071
    %v4412 = vpop.f32.mrf.mxu0
    %v4413 = vadd.f32 %v4400, %v4412
    %v4414 = vpop.f32.mrf.mxu0
    %4415 = vdwg.mxu0
    %4416 = vmatpush.bf16.msra.mxu0 %v3344
    %4417 = vmatpush.bf16.msra.mxu0 %v3343
    %4418 = vmatpush.bf16.msra.mxu0 %v3342
    %4419 = vmatpush.bf16.msra.mxu0 %v3341
    %4420 = vmatpush.bf16.msra.mxu0 %v3340
    %4421 = vmatpush.bf16.msra.mxu0 %v3339
    %4422 = vmatpush.bf16.msra.mxu0 %v3338
    %4423 = vmatpush.bf16.msra.mxu0 %v3337
    %4424 = vmatmul.bf16.gmra.mxu0 %v1072
    %v4425 = vpop.f32.mrf.mxu0
    %v4426 = vadd.f32 %v4413, %v4425
    %v4427 = vpop.f32.mrf.mxu0
    %4428 = vdwg.mxu0
    %4429 = vmatpush.bf16.msra.mxu0 %v3352
    %4430 = vmatpush.bf16.msra.mxu0 %v3351
    %4431 = vmatpush.bf16.msra.mxu0 %v3350
    %4432 = vmatpush.bf16.msra.mxu0 %v3349
    %4433 = vmatpush.bf16.msra.mxu0 %v3348
    %4434 = vmatpush.bf16.msra.mxu0 %v3347
    %4435 = vmatpush.bf16.msra.mxu0 %v3346
    %4436 = vmatpush.bf16.msra.mxu0 %v3345
    %4437 = vmatmul.bf16.gmra.mxu0 %v1073
    %v4438 = vpop.f32.mrf.mxu0
    %v4439 = vadd.f32 %v4426, %v4438
    %v4440 = vpop.f32.mrf.mxu0
    %4441 = vdwg.mxu0
    %4442 = vmatpush.bf16.msra.mxu0 %v3360
    %4443 = vmatpush.bf16.msra.mxu0 %v3359
    %4444 = vmatpush.bf16.msra.mxu0 %v3358
    %4445 = vmatpush.bf16.msra.mxu0 %v3357
    %4446 = vmatpush.bf16.msra.mxu0 %v3356
    %4447 = vmatpush.bf16.msra.mxu0 %v3355
    %4448 = vmatpush.bf16.msra.mxu0 %v3354
    %4449 = vmatpush.bf16.msra.mxu0 %v3353
    %4450 = vmatmul.bf16.gmra.mxu0 %v1074
    %v4451 = vpop.f32.mrf.mxu0
    %v4452 = vadd.f32 %v4439, %v4451
    %v4453 = vpop.f32.mrf.mxu0
    %4454 = vdwg.mxu0
    %4455 = vmatpush.bf16.msra.mxu0 %v3368
    %4456 = vmatpush.bf16.msra.mxu0 %v3367
    %4457 = vmatpush.bf16.msra.mxu0 %v3366
    %4458 = vmatpush.bf16.msra.mxu0 %v3365
    %4459 = vmatpush.bf16.msra.mxu0 %v3364
    %4460 = vmatpush.bf16.msra.mxu0 %v3363
    %4461 = vmatpush.bf16.msra.mxu0 %v3362
    %4462 = vmatpush.bf16.msra.mxu0 %v3361
    %4463 = vmatmul.bf16.gmra.mxu0 %v1075
    %v4464 = vpop.f32.mrf.mxu0
    %v4465 = vadd.f32 %v4452, %v4464
    %v4466 = vpop.f32.mrf.mxu0
    %4467 = vdwg.mxu0
    %4468 = vmatpush.bf16.msra.mxu0 %v3376
    %4469 = vmatpush.bf16.msra.mxu0 %v3375
    %4470 = vmatpush.bf16.msra.mxu0 %v3374
    %4471 = vmatpush.bf16.msra.mxu0 %v3373
    %4472 = vmatpush.bf16.msra.mxu0 %v3372
    %4473 = vmatpush.bf16.msra.mxu0 %v3371
    %4474 = vmatpush.bf16.msra.mxu0 %v3370
    %4475 = vmatpush.bf16.msra.mxu0 %v3369
    %4476 = vmatmul.bf16.gmra.mxu0 %v1076
    %v4477 = vpop.f32.mrf.mxu0
    %v4478 = vadd.f32 %v4465, %v4477
    %v4479 = vpop.f32.mrf.mxu0
    %4480 = vdwg.mxu0
    %4481 = vmatpush.bf16.msra.mxu0 %v3384
    %4482 = vmatpush.bf16.msra.mxu0 %v3383
    %4483 = vmatpush.bf16.msra.mxu0 %v3382
    %4484 = vmatpush.bf16.msra.mxu0 %v3381
    %4485 = vmatpush.bf16.msra.mxu0 %v3380
    %4486 = vmatpush.bf16.msra.mxu0 %v3379
    %4487 = vmatpush.bf16.msra.mxu0 %v3378
    %4488 = vmatpush.bf16.msra.mxu0 %v3377
    %4489 = vmatmul.bf16.gmra.mxu0 %v1079
    %v4490 = vpop.f32.mrf.mxu0
    %v4491 = vadd.f32 %v4478, %v4490
    %v4492 = vpop.f32.mrf.mxu0
    %4493 = vdwg.mxu0
    %4494 = vmatpush.bf16.msra.mxu0 %v3392
    %4495 = vmatpush.bf16.msra.mxu0 %v3391
    %4496 = vmatpush.bf16.msra.mxu0 %v3390
    %4497 = vmatpush.bf16.msra.mxu0 %v3389
    %4498 = vmatpush.bf16.msra.mxu0 %v3388
    %4499 = vmatpush.bf16.msra.mxu0 %v3387
    %4500 = vmatpush.bf16.msra.mxu0 %v3386
    %4501 = vmatpush.bf16.msra.mxu0 %v3385
    %4502 = vmatmul.bf16.gmra.mxu0 %v1080
    %v4503 = vpop.f32.mrf.mxu0
    %v4504 = vadd.f32 %v4491, %v4503
    %v4505 = vpop.f32.mrf.mxu0
    %4506 = vdwg.mxu0
    %4507 = vmatpush.bf16.msra.mxu0 %v3400
    %4508 = vmatpush.bf16.msra.mxu0 %v3399
    %4509 = vmatpush.bf16.msra.mxu0 %v3398
    %4510 = vmatpush.bf16.msra.mxu0 %v3397
    %4511 = vmatpush.bf16.msra.mxu0 %v3396
    %4512 = vmatpush.bf16.msra.mxu0 %v3395
    %4513 = vmatpush.bf16.msra.mxu0 %v3394
    %4514 = vmatpush.bf16.msra.mxu0 %v3393
    %4515 = vmatmul.bf16.gmra.mxu0 %v1081
    %v4516 = vpop.f32.mrf.mxu0
    %v4517 = vadd.f32 %v4504, %v4516
    %v4518 = vpop.f32.mrf.mxu0
    %4519 = vdwg.mxu0
    %4520 = vmatpush.bf16.msra.mxu0 %v3408
    %4521 = vmatpush.bf16.msra.mxu0 %v3407
    %4522 = vmatpush.bf16.msra.mxu0 %v3406
    %4523 = vmatpush.bf16.msra.mxu0 %v3405
    %4524 = vmatpush.bf16.msra.mxu0 %v3404
    %4525 = vmatpush.bf16.msra.mxu0 %v3403
    %4526 = vmatpush.bf16.msra.mxu0 %v3402
    %4527 = vmatpush.bf16.msra.mxu0 %v3401
    %4528 = vmatmul.bf16.gmra.mxu0 %v1082
    %v4529 = vpop.f32.mrf.mxu0
    %v4530 = vadd.f32 %v4517, %v4529
    %v4531 = vpop.f32.mrf.mxu0
    %4532 = vdwg.mxu0
    %4533 = vmatpush.bf16.msra.mxu0 %v3416
    %4534 = vmatpush.bf16.msra.mxu0 %v3415
    %4535 = vmatpush.bf16.msra.mxu0 %v3414
    %4536 = vmatpush.bf16.msra.mxu0 %v3413
    %4537 = vmatpush.bf16.msra.mxu0 %v3412
    %4538 = vmatpush.bf16.msra.mxu0 %v3411
    %4539 = vmatpush.bf16.msra.mxu0 %v3410
    %4540 = vmatpush.bf16.msra.mxu0 %v3409
    %4541 = vmatmul.bf16.gmra.mxu0 %v1083
    %v4542 = vpop.f32.mrf.mxu0
    %v4543 = vadd.f32 %v4530, %v4542
    %v4544 = vpop.f32.mrf.mxu0
    %4545 = vdwg.mxu0
    %4546 = vmatpush.bf16.msra.mxu0 %v3424
    %4547 = vmatpush.bf16.msra.mxu0 %v3423
    %4548 = vmatpush.bf16.msra.mxu0 %v3422
    %4549 = vmatpush.bf16.msra.mxu0 %v3421
    %4550 = vmatpush.bf16.msra.mxu0 %v3420
    %4551 = vmatpush.bf16.msra.mxu0 %v3419
    %4552 = vmatpush.bf16.msra.mxu0 %v3418
    %4553 = vmatpush.bf16.msra.mxu0 %v3417
    %4554 = vmatmul.bf16.gmra.mxu0 %v1084
    %v4555 = vpop.f32.mrf.mxu0
    %v4556 = vadd.f32 %v4543, %v4555
    %v4557 = vpop.f32.mrf.mxu0
    %4558 = vdwg.mxu0
    %4559 = vmatpush.bf16.msra.mxu0 %v3432
    %4560 = vmatpush.bf16.msra.mxu0 %v3431
    %4561 = vmatpush.bf16.msra.mxu0 %v3430
    %4562 = vmatpush.bf16.msra.mxu0 %v3429
    %4563 = vmatpush.bf16.msra.mxu0 %v3428
    %4564 = vmatpush.bf16.msra.mxu0 %v3427
    %4565 = vmatpush.bf16.msra.mxu0 %v3426
    %4566 = vmatpush.bf16.msra.mxu0 %v3425
    %4567 = vmatmul.bf16.gmra.mxu0 %v1085
    %v4568 = vpop.f32.mrf.mxu0
    %v4569 = vadd.f32 %v4556, %v4568
    %v4570 = vpop.f32.mrf.mxu0
    %4571 = vdwg.mxu0
    %4572 = vmatpush.bf16.msra.mxu0 %v3440
    %4573 = vmatpush.bf16.msra.mxu0 %v3439
    %4574 = vmatpush.bf16.msra.mxu0 %v3438
    %4575 = vmatpush.bf16.msra.mxu0 %v3437
    %4576 = vmatpush.bf16.msra.mxu0 %v3436
    %4577 = vmatpush.bf16.msra.mxu0 %v3435
    %4578 = vmatpush.bf16.msra.mxu0 %v3434
    %4579 = vmatpush.bf16.msra.mxu0 %v3433
    %4580 = vmatmul.bf16.gmra.mxu0 %v1086
    %v4581 = vpop.f32.mrf.mxu0
    %v4582 = vadd.f32 %v4569, %v4581
    %v4583 = vpop.f32.mrf.mxu0
    %4584 = vdwg.mxu0
    %4585 = vmatpush.bf16.msra.mxu0 %v3448
    %4586 = vmatpush.bf16.msra.mxu0 %v3447
    %4587 = vmatpush.bf16.msra.mxu0 %v3446
    %4588 = vmatpush.bf16.msra.mxu0 %v3445
    %4589 = vmatpush.bf16.msra.mxu0 %v3444
    %4590 = vmatpush.bf16.msra.mxu0 %v3443
    %4591 = vmatpush.bf16.msra.mxu0 %v3442
    %4592 = vmatpush.bf16.msra.mxu0 %v3441
    %4593 = vmatmul.bf16.gmra.mxu0 %v1089
    %v4594 = vpop.f32.mrf.mxu0
    %v4595 = vadd.f32 %v4582, %v4594
    %v4596 = vpop.f32.mrf.mxu0
    %4597 = vdwg.mxu0
    %4598 = vmatpush.bf16.msra.mxu0 %v3456
    %4599 = vmatpush.bf16.msra.mxu0 %v3455
    %4600 = vmatpush.bf16.msra.mxu0 %v3454
    %4601 = vmatpush.bf16.msra.mxu0 %v3453
    %4602 = vmatpush.bf16.msra.mxu0 %v3452
    %4603 = vmatpush.bf16.msra.mxu0 %v3451
    %4604 = vmatpush.bf16.msra.mxu0 %v3450
    %4605 = vmatpush.bf16.msra.mxu0 %v3449
    %4606 = vmatmul.bf16.gmra.mxu0 %v1090
    %v4607 = vpop.f32.mrf.mxu0
    %v4608 = vadd.f32 %v4595, %v4607
    %v4609 = vpop.f32.mrf.mxu0
    %4610 = vdwg.mxu0
    %4611 = vmatpush.bf16.msra.mxu0 %v3464
    %4612 = vmatpush.bf16.msra.mxu0 %v3463
    %4613 = vmatpush.bf16.msra.mxu0 %v3462
    %4614 = vmatpush.bf16.msra.mxu0 %v3461
    %4615 = vmatpush.bf16.msra.mxu0 %v3460
    %4616 = vmatpush.bf16.msra.mxu0 %v3459
    %4617 = vmatpush.bf16.msra.mxu0 %v3458
    %4618 = vmatpush.bf16.msra.mxu0 %v3457
    %4619 = vmatmul.bf16.gmra.mxu0 %v1091
    %v4620 = vpop.f32.mrf.mxu0
    %v4621 = vadd.f32 %v4608, %v4620
    %v4622 = vpop.f32.mrf.mxu0
    %4623 = vdwg.mxu0
    %4624 = vmatpush.bf16.msra.mxu0 %v3472
    %4625 = vmatpush.bf16.msra.mxu0 %v3471
    %4626 = vmatpush.bf16.msra.mxu0 %v3470
    %4627 = vmatpush.bf16.msra.mxu0 %v3469
    %4628 = vmatpush.bf16.msra.mxu0 %v3468
    %4629 = vmatpush.bf16.msra.mxu0 %v3467
    %4630 = vmatpush.bf16.msra.mxu0 %v3466
    %4631 = vmatpush.bf16.msra.mxu0 %v3465
    %4632 = vmatmul.bf16.gmra.mxu0 %v1092
    %v4633 = vpop.f32.mrf.mxu0
    %v4634 = vadd.f32 %v4621, %v4633
    %v4635 = vpop.f32.mrf.mxu0
    %4636 = vdwg.mxu0
    %4637 = vmatpush.bf16.msra.mxu0 %v3480
    %4638 = vmatpush.bf16.msra.mxu0 %v3479
    %4639 = vmatpush.bf16.msra.mxu0 %v3478
    %4640 = vmatpush.bf16.msra.mxu0 %v3477
    %4641 = vmatpush.bf16.msra.mxu0 %v3476
    %4642 = vmatpush.bf16.msra.mxu0 %v3475
    %4643 = vmatpush.bf16.msra.mxu0 %v3474
    %4644 = vmatpush.bf16.msra.mxu0 %v3473
    %4645 = vmatmul.bf16.gmra.mxu0 %v1093
    %v4646 = vpop.f32.mrf.mxu0
    %v4647 = vadd.f32 %v4634, %v4646
    %v4648 = vpop.f32.mrf.mxu0
    %4649 = vdwg.mxu0
    %4650 = vmatpush.bf16.msra.mxu0 %v3488
    %4651 = vmatpush.bf16.msra.mxu0 %v3487
    %4652 = vmatpush.bf16.msra.mxu0 %v3486
    %4653 = vmatpush.bf16.msra.mxu0 %v3485
    %4654 = vmatpush.bf16.msra.mxu0 %v3484
    %4655 = vmatpush.bf16.msra.mxu0 %v3483
    %4656 = vmatpush.bf16.msra.mxu0 %v3482
    %4657 = vmatpush.bf16.msra.mxu0 %v3481
    %4658 = vmatmul.bf16.gmra.mxu0 %v1094
    %v4659 = vpop.f32.mrf.mxu0
    %v4660 = vadd.f32 %v4647, %v4659
    %v4661 = vpop.f32.mrf.mxu0
    %4662 = vdwg.mxu0
    %4663 = vmatpush.bf16.msra.mxu0 %v3496
    %4664 = vmatpush.bf16.msra.mxu0 %v3495
    %4665 = vmatpush.bf16.msra.mxu0 %v3494
    %4666 = vmatpush.bf16.msra.mxu0 %v3493
    %4667 = vmatpush.bf16.msra.mxu0 %v3492
    %4668 = vmatpush.bf16.msra.mxu0 %v3491
    %4669 = vmatpush.bf16.msra.mxu0 %v3490
    %4670 = vmatpush.bf16.msra.mxu0 %v3489
    %4671 = vmatmul.bf16.gmra.mxu0 %v1095
    %v4672 = vpop.f32.mrf.mxu0
    %v4673 = vadd.f32 %v4660, %v4672
    %v4674 = vpop.f32.mrf.mxu0
    %4675 = vdwg.mxu0
    %4676 = vmatpush.bf16.msra.mxu0 %v3504
    %4677 = vmatpush.bf16.msra.mxu0 %v3503
    %4678 = vmatpush.bf16.msra.mxu0 %v3502
    %4679 = vmatpush.bf16.msra.mxu0 %v3501
    %4680 = vmatpush.bf16.msra.mxu0 %v3500
    %4681 = vmatpush.bf16.msra.mxu0 %v3499
    %4682 = vmatpush.bf16.msra.mxu0 %v3498
    %4683 = vmatpush.bf16.msra.mxu0 %v3497
    %4684 = vmatmul.bf16.gmra.mxu0 %v1096
    %v4685 = vpop.f32.mrf.mxu0
    %v4686 = vadd.f32 %v4673, %v4685
    %v4687 = vpop.f32.mrf.mxu0
    %4688 = vdwg.mxu0
    %4689 = vmatpush.bf16.msra.mxu0 %v3512
    %4690 = vmatpush.bf16.msra.mxu0 %v3511
    %4691 = vmatpush.bf16.msra.mxu0 %v3510
    %4692 = vmatpush.bf16.msra.mxu0 %v3509
    %4693 = vmatpush.bf16.msra.mxu0 %v3508
    %4694 = vmatpush.bf16.msra.mxu0 %v3507
    %4695 = vmatpush.bf16.msra.mxu0 %v3506
    %4696 = vmatpush.bf16.msra.mxu0 %v3505
    %4697 = vmatmul.bf16.gmra.mxu0 %v1099
    %v4698 = vpop.f32.mrf.mxu0
    %v4699 = vadd.f32 %v4686, %v4698
    %v4700 = vpop.f32.mrf.mxu0
    %4701 = vdwg.mxu0
    %4702 = vmatpush.bf16.msra.mxu0 %v3520
    %4703 = vmatpush.bf16.msra.mxu0 %v3519
    %4704 = vmatpush.bf16.msra.mxu0 %v3518
    %4705 = vmatpush.bf16.msra.mxu0 %v3517
    %4706 = vmatpush.bf16.msra.mxu0 %v3516
    %4707 = vmatpush.bf16.msra.mxu0 %v3515
    %4708 = vmatpush.bf16.msra.mxu0 %v3514
    %4709 = vmatpush.bf16.msra.mxu0 %v3513
    %4710 = vmatmul.bf16.gmra.mxu0 %v1100
    %v4711 = vpop.f32.mrf.mxu0
    %v4712 = vadd.f32 %v4699, %v4711
    %v4713 = vpop.f32.mrf.mxu0
    %4714 = vdwg.mxu0
    %4715 = vmatpush.bf16.msra.mxu0 %v3528
    %4716 = vmatpush.bf16.msra.mxu0 %v3527
    %4717 = vmatpush.bf16.msra.mxu0 %v3526
    %4718 = vmatpush.bf16.msra.mxu0 %v3525
    %4719 = vmatpush.bf16.msra.mxu0 %v3524
    %4720 = vmatpush.bf16.msra.mxu0 %v3523
    %4721 = vmatpush.bf16.msra.mxu0 %v3522
    %4722 = vmatpush.bf16.msra.mxu0 %v3521
    %4723 = vmatmul.bf16.gmra.mxu0 %v1101
    %v4724 = vpop.f32.mrf.mxu0
    %v4725 = vadd.f32 %v4712, %v4724
    %v4726 = vpop.f32.mrf.mxu0
    %4727 = vdwg.mxu0
    %4728 = vmatpush.bf16.msra.mxu0 %v3536
    %4729 = vmatpush.bf16.msra.mxu0 %v3535
    %4730 = vmatpush.bf16.msra.mxu0 %v3534
    %4731 = vmatpush.bf16.msra.mxu0 %v3533
    %4732 = vmatpush.bf16.msra.mxu0 %v3532
    %4733 = vmatpush.bf16.msra.mxu0 %v3531
    %4734 = vmatpush.bf16.msra.mxu0 %v3530
    %4735 = vmatpush.bf16.msra.mxu0 %v3529
    %4736 = vmatmul.bf16.gmra.mxu0 %v1102
    %v4737 = vpop.f32.mrf.mxu0
    %v4738 = vadd.f32 %v4725, %v4737
    %v4739 = vpop.f32.mrf.mxu0
    %4740 = vdwg.mxu0
    %4741 = vmatpush.bf16.msra.mxu0 %v3544
    %4742 = vmatpush.bf16.msra.mxu0 %v3543
    %4743 = vmatpush.bf16.msra.mxu0 %v3542
    %4744 = vmatpush.bf16.msra.mxu0 %v3541
    %4745 = vmatpush.bf16.msra.mxu0 %v3540
    %4746 = vmatpush.bf16.msra.mxu0 %v3539
    %4747 = vmatpush.bf16.msra.mxu0 %v3538
    %4748 = vmatpush.bf16.msra.mxu0 %v3537
    %4749 = vmatmul.bf16.gmra.mxu0 %v1103
    %v4750 = vpop.f32.mrf.mxu0
    %v4751 = vadd.f32 %v4738, %v4750
    %v4752 = vpop.f32.mrf.mxu0
    %4753 = vdwg.mxu0
    %4754 = vmatpush.bf16.msra.mxu0 %v3552
    %4755 = vmatpush.bf16.msra.mxu0 %v3551
    %4756 = vmatpush.bf16.msra.mxu0 %v3550
    %4757 = vmatpush.bf16.msra.mxu0 %v3549
    %4758 = vmatpush.bf16.msra.mxu0 %v3548
    %4759 = vmatpush.bf16.msra.mxu0 %v3547
    %4760 = vmatpush.bf16.msra.mxu0 %v3546
    %4761 = vmatpush.bf16.msra.mxu0 %v3545
    %4762 = vmatmul.bf16.gmra.mxu0 %v1104
    %v4763 = vpop.f32.mrf.mxu0
    %v4764 = vadd.f32 %v4751, %v4763
    %v4765 = vpop.f32.mrf.mxu0
    %4766 = vdwg.mxu0
    %4767 = vmatpush.bf16.msra.mxu0 %v3560
    %4768 = vmatpush.bf16.msra.mxu0 %v3559
    %4769 = vmatpush.bf16.msra.mxu0 %v3558
    %4770 = vmatpush.bf16.msra.mxu0 %v3557
    %4771 = vmatpush.bf16.msra.mxu0 %v3556
    %4772 = vmatpush.bf16.msra.mxu0 %v3555
    %4773 = vmatpush.bf16.msra.mxu0 %v3554
    %4774 = vmatpush.bf16.msra.mxu0 %v3553
    %4775 = vmatmul.bf16.gmra.mxu0 %v1105
    %v4776 = vpop.f32.mrf.mxu0
    %v4777 = vadd.f32 %v4764, %v4776
    %v4778 = vpop.f32.mrf.mxu0
    %4779 = vdwg.mxu0
    %4780 = vmatpush.bf16.msra.mxu0 %v3568
    %4781 = vmatpush.bf16.msra.mxu0 %v3567
    %4782 = vmatpush.bf16.msra.mxu0 %v3566
    %4783 = vmatpush.bf16.msra.mxu0 %v3565
    %4784 = vmatpush.bf16.msra.mxu0 %v3564
    %4785 = vmatpush.bf16.msra.mxu0 %v3563
    %4786 = vmatpush.bf16.msra.mxu0 %v3562
    %4787 = vmatpush.bf16.msra.mxu0 %v3561
    %4788 = vmatmul.bf16.gmra.mxu0 %v1106
    %v4789 = vpop.f32.mrf.mxu0
    %v4790 = vadd.f32 %v4777, %v4789
    %v4791 = vpop.f32.mrf.mxu0
    %4792 = vdwg.mxu0
    %4793 = vmatpush.bf16.msra.mxu0 %v3576
    %4794 = vmatpush.bf16.msra.mxu0 %v3575
    %4795 = vmatpush.bf16.msra.mxu0 %v3574
    %4796 = vmatpush.bf16.msra.mxu0 %v3573
    %4797 = vmatpush.bf16.msra.mxu0 %v3572
    %4798 = vmatpush.bf16.msra.mxu0 %v3571
    %4799 = vmatpush.bf16.msra.mxu0 %v3570
    %4800 = vmatpush.bf16.msra.mxu0 %v3569
    %4801 = vmatmul.bf16.gmra.mxu0 %v1109
    %v4802 = vpop.f32.mrf.mxu0
    %v4803 = vadd.f32 %v4790, %v4802
    %v4804 = vpop.f32.mrf.mxu0
    %4805 = vdwg.mxu0
    %4806 = vmatpush.bf16.msra.mxu0 %v3584
    %4807 = vmatpush.bf16.msra.mxu0 %v3583
    %4808 = vmatpush.bf16.msra.mxu0 %v3582
    %4809 = vmatpush.bf16.msra.mxu0 %v3581
    %4810 = vmatpush.bf16.msra.mxu0 %v3580
    %4811 = vmatpush.bf16.msra.mxu0 %v3579
    %4812 = vmatpush.bf16.msra.mxu0 %v3578
    %4813 = vmatpush.bf16.msra.mxu0 %v3577
    %4814 = vmatmul.bf16.gmra.mxu0 %v1110
    %v4815 = vpop.f32.mrf.mxu0
    %v4816 = vadd.f32 %v4803, %v4815
    %v4817 = vpop.f32.mrf.mxu0
    %4818 = vdwg.mxu0
    %4819 = vmatpush.bf16.msra.mxu0 %v3592
    %4820 = vmatpush.bf16.msra.mxu0 %v3591
    %4821 = vmatpush.bf16.msra.mxu0 %v3590
    %4822 = vmatpush.bf16.msra.mxu0 %v3589
    %4823 = vmatpush.bf16.msra.mxu0 %v3588
    %4824 = vmatpush.bf16.msra.mxu0 %v3587
    %4825 = vmatpush.bf16.msra.mxu0 %v3586
    %4826 = vmatpush.bf16.msra.mxu0 %v3585
    %4827 = vmatmul.bf16.gmra.mxu0 %v1111
    %v4828 = vpop.f32.mrf.mxu0
    %v4829 = vadd.f32 %v4816, %v4828
    %v4830 = vpop.f32.mrf.mxu0
    %4831 = vdwg.mxu0
    %4832 = vmatpush.bf16.msra.mxu0 %v3600
    %4833 = vmatpush.bf16.msra.mxu0 %v3599
    %4834 = vmatpush.bf16.msra.mxu0 %v3598
    %4835 = vmatpush.bf16.msra.mxu0 %v3597
    %4836 = vmatpush.bf16.msra.mxu0 %v3596
    %4837 = vmatpush.bf16.msra.mxu0 %v3595
    %4838 = vmatpush.bf16.msra.mxu0 %v3594
    %4839 = vmatpush.bf16.msra.mxu0 %v3593
    %4840 = vmatmul.bf16.gmra.mxu0 %v1112
    %v4841 = vpop.f32.mrf.mxu0
    %v4842 = vadd.f32 %v4829, %v4841
    %v4843 = vpop.f32.mrf.mxu0
    %4844 = vdwg.mxu0
    %4845 = vmatpush.bf16.msra.mxu0 %v3608
    %4846 = vmatpush.bf16.msra.mxu0 %v3607
    %4847 = vmatpush.bf16.msra.mxu0 %v3606
    %4848 = vmatpush.bf16.msra.mxu0 %v3605
    %4849 = vmatpush.bf16.msra.mxu0 %v3604
    %4850 = vmatpush.bf16.msra.mxu0 %v3603
    %4851 = vmatpush.bf16.msra.mxu0 %v3602
    %4852 = vmatpush.bf16.msra.mxu0 %v3601
    %4853 = vmatmul.bf16.gmra.mxu0 %v1113
    %v4854 = vpop.f32.mrf.mxu0
    %v4855 = vadd.f32 %v4842, %v4854
    %v4856 = vpop.f32.mrf.mxu0
    %4857 = vdwg.mxu0
    %4858 = vmatpush.bf16.msra.mxu0 %v3616
    %4859 = vmatpush.bf16.msra.mxu0 %v3615
    %4860 = vmatpush.bf16.msra.mxu0 %v3614
    %4861 = vmatpush.bf16.msra.mxu0 %v3613
    %4862 = vmatpush.bf16.msra.mxu0 %v3612
    %4863 = vmatpush.bf16.msra.mxu0 %v3611
    %4864 = vmatpush.bf16.msra.mxu0 %v3610
    %4865 = vmatpush.bf16.msra.mxu0 %v3609
    %4866 = vmatmul.bf16.gmra.mxu0 %v1114
    %v4867 = vpop.f32.mrf.mxu0
    %v4868 = vadd.f32 %v4855, %v4867
    %v4869 = vpop.f32.mrf.mxu0
    %4870 = vdwg.mxu0
    %4871 = vmatpush.bf16.msra.mxu0 %v3624
    %4872 = vmatpush.bf16.msra.mxu0 %v3623
    %4873 = vmatpush.bf16.msra.mxu0 %v3622
    %4874 = vmatpush.bf16.msra.mxu0 %v3621
    %4875 = vmatpush.bf16.msra.mxu0 %v3620
    %4876 = vmatpush.bf16.msra.mxu0 %v3619
    %4877 = vmatpush.bf16.msra.mxu0 %v3618
    %4878 = vmatpush.bf16.msra.mxu0 %v3617
    %4879 = vmatmul.bf16.gmra.mxu0 %v1115
    %v4880 = vpop.f32.mrf.mxu0
    %v4881 = vadd.f32 %v4868, %v4880
    %v4882 = vpop.f32.mrf.mxu0
    %4883 = vdwg.mxu0
    %4884 = vmatpush.bf16.msra.mxu0 %v3632
    %4885 = vmatpush.bf16.msra.mxu0 %v3631
    %4886 = vmatpush.bf16.msra.mxu0 %v3630
    %4887 = vmatpush.bf16.msra.mxu0 %v3629
    %4888 = vmatpush.bf16.msra.mxu0 %v3628
    %4889 = vmatpush.bf16.msra.mxu0 %v3627
    %4890 = vmatpush.bf16.msra.mxu0 %v3626
    %4891 = vmatpush.bf16.msra.mxu0 %v3625
    %4892 = vmatmul.bf16.gmra.mxu0 %v1116
    %v4893 = vpop.f32.mrf.mxu0
    %v4894 = vadd.f32 %v4881, %v4893
    %v4895 = vpop.f32.mrf.mxu0
    %4896 = vdwg.mxu0
    %4897 = vmatpush.bf16.msra.mxu0 %v3640
    %4898 = vmatpush.bf16.msra.mxu0 %v3639
    %4899 = vmatpush.bf16.msra.mxu0 %v3638
    %4900 = vmatpush.bf16.msra.mxu0 %v3637
    %4901 = vmatpush.bf16.msra.mxu0 %v3636
    %4902 = vmatpush.bf16.msra.mxu0 %v3635
    %4903 = vmatpush.bf16.msra.mxu0 %v3634
    %4904 = vmatpush.bf16.msra.mxu0 %v3633
    %4905 = vmatmul.bf16.gmra.mxu0 %v1119
    %v4906 = vpop.f32.mrf.mxu0
    %v4907 = vadd.f32 %v4894, %v4906
    %v4908 = vpop.f32.mrf.mxu0
    %4909 = vdwg.mxu0
    %4910 = vmatpush.bf16.msra.mxu0 %v3648
    %4911 = vmatpush.bf16.msra.mxu0 %v3647
    %4912 = vmatpush.bf16.msra.mxu0 %v3646
    %4913 = vmatpush.bf16.msra.mxu0 %v3645
    %4914 = vmatpush.bf16.msra.mxu0 %v3644
    %4915 = vmatpush.bf16.msra.mxu0 %v3643
    %4916 = vmatpush.bf16.msra.mxu0 %v3642
    %4917 = vmatpush.bf16.msra.mxu0 %v3641
    %4918 = vmatmul.bf16.gmra.mxu0 %v1120
    %v4919 = vpop.f32.mrf.mxu0
    %v4920 = vadd.f32 %v4907, %v4919
    %v4921 = vpop.f32.mrf.mxu0
    %4922 = vdwg.mxu0
    %4923 = vmatpush.bf16.msra.mxu0 %v3656
    %4924 = vmatpush.bf16.msra.mxu0 %v3655
    %4925 = vmatpush.bf16.msra.mxu0 %v3654
    %4926 = vmatpush.bf16.msra.mxu0 %v3653
    %4927 = vmatpush.bf16.msra.mxu0 %v3652
    %4928 = vmatpush.bf16.msra.mxu0 %v3651
    %4929 = vmatpush.bf16.msra.mxu0 %v3650
    %4930 = vmatpush.bf16.msra.mxu0 %v3649
    %4931 = vmatmul.bf16.gmra.mxu0 %v1121
    %v4932 = vpop.f32.mrf.mxu0
    %v4933 = vadd.f32 %v4920, %v4932
    %v4934 = vpop.f32.mrf.mxu0
    %4935 = vdwg.mxu0
    %4936 = vmatpush.bf16.msra.mxu0 %v3664
    %4937 = vmatpush.bf16.msra.mxu0 %v3663
    %4938 = vmatpush.bf16.msra.mxu0 %v3662
    %4939 = vmatpush.bf16.msra.mxu0 %v3661
    %4940 = vmatpush.bf16.msra.mxu0 %v3660
    %4941 = vmatpush.bf16.msra.mxu0 %v3659
    %4942 = vmatpush.bf16.msra.mxu0 %v3658
    %4943 = vmatpush.bf16.msra.mxu0 %v3657
    %4944 = vmatmul.bf16.gmra.mxu0 %v1122
    %v4945 = vpop.f32.mrf.mxu0
    %v4946 = vadd.f32 %v4933, %v4945
    %v4947 = vpop.f32.mrf.mxu0
    %4948 = vdwg.mxu0
    %4949 = vmatpush.bf16.msra.mxu0 %v3672
    %4950 = vmatpush.bf16.msra.mxu0 %v3671
    %4951 = vmatpush.bf16.msra.mxu0 %v3670
    %4952 = vmatpush.bf16.msra.mxu0 %v3669
    %4953 = vmatpush.bf16.msra.mxu0 %v3668
    %4954 = vmatpush.bf16.msra.mxu0 %v3667
    %4955 = vmatpush.bf16.msra.mxu0 %v3666
    %4956 = vmatpush.bf16.msra.mxu0 %v3665
    %4957 = vmatmul.bf16.gmra.mxu0 %v1123
    %v4958 = vpop.f32.mrf.mxu0
    %v4959 = vadd.f32 %v4946, %v4958
    %v4960 = vpop.f32.mrf.mxu0
    %4961 = vdwg.mxu0
    %4962 = vmatpush.bf16.msra.mxu0 %v3680
    %4963 = vmatpush.bf16.msra.mxu0 %v3679
    %4964 = vmatpush.bf16.msra.mxu0 %v3678
    %4965 = vmatpush.bf16.msra.mxu0 %v3677
    %4966 = vmatpush.bf16.msra.mxu0 %v3676
    %4967 = vmatpush.bf16.msra.mxu0 %v3675
    %4968 = vmatpush.bf16.msra.mxu0 %v3674
    %4969 = vmatpush.bf16.msra.mxu0 %v3673
    %4970 = vmatmul.bf16.gmra.mxu0 %v1124
    %v4971 = vpop.f32.mrf.mxu0
    %v4972 = vadd.f32 %v4959, %v4971
    %v4973 = vpop.f32.mrf.mxu0
    %4974 = vdwg.mxu0
    %4975 = vmatpush.bf16.msra.mxu0 %v3688
    %4976 = vmatpush.bf16.msra.mxu0 %v3687
    %4977 = vmatpush.bf16.msra.mxu0 %v3686
    %4978 = vmatpush.bf16.msra.mxu0 %v3685
    %4979 = vmatpush.bf16.msra.mxu0 %v3684
    %4980 = vmatpush.bf16.msra.mxu0 %v3683
    %4981 = vmatpush.bf16.msra.mxu0 %v3682
    %4982 = vmatpush.bf16.msra.mxu0 %v3681
    %4983 = vmatmul.bf16.gmra.mxu0 %v1125
    %v4984 = vpop.f32.mrf.mxu0
    %v4985 = vadd.f32 %v4972, %v4984
    %v4986 = vpop.f32.mrf.mxu0
    %4987 = vdwg.mxu0
    %4988 = vmatpush.bf16.msra.mxu0 %v3696
    %4989 = vmatpush.bf16.msra.mxu0 %v3695
    %4990 = vmatpush.bf16.msra.mxu0 %v3694
    %4991 = vmatpush.bf16.msra.mxu0 %v3693
    %4992 = vmatpush.bf16.msra.mxu0 %v3692
    %4993 = vmatpush.bf16.msra.mxu0 %v3691
    %4994 = vmatpush.bf16.msra.mxu0 %v3690
    %4995 = vmatpush.bf16.msra.mxu0 %v3689
    %4996 = vmatmul.bf16.gmra.mxu0 %v1126
    %v4997 = vpop.f32.mrf.mxu0
    %v4998 = vadd.f32 %v4985, %v4997
    %v4999 = vpop.f32.mrf.mxu0
    %5000 = vdwg.mxu0
    %5001 = vmatpush.bf16.msra.mxu0 %v3704
    %5002 = vmatpush.bf16.msra.mxu0 %v3703
    %5003 = vmatpush.bf16.msra.mxu0 %v3702
    %5004 = vmatpush.bf16.msra.mxu0 %v3701
    %5005 = vmatpush.bf16.msra.mxu0 %v3700
    %5006 = vmatpush.bf16.msra.mxu0 %v3699
    %5007 = vmatpush.bf16.msra.mxu0 %v3698
    %5008 = vmatpush.bf16.msra.mxu0 %v3697
    %5009 = vmatmul.bf16.gmra.mxu0 %v1129
    %v5010 = vpop.f32.mrf.mxu0
    %v5011 = vadd.f32 %v4998, %v5010
    %v5012 = vpop.f32.mrf.mxu0
    %5013 = vdwg.mxu0
    %5014 = vmatpush.bf16.msra.mxu0 %v3712
    %5015 = vmatpush.bf16.msra.mxu0 %v3711
    %5016 = vmatpush.bf16.msra.mxu0 %v3710
    %5017 = vmatpush.bf16.msra.mxu0 %v3709
    %5018 = vmatpush.bf16.msra.mxu0 %v3708
    %5019 = vmatpush.bf16.msra.mxu0 %v3707
    %5020 = vmatpush.bf16.msra.mxu0 %v3706
    %5021 = vmatpush.bf16.msra.mxu0 %v3705
    %5022 = vmatmul.bf16.gmra.mxu0 %v1130
    %v5023 = vpop.f32.mrf.mxu0
    %v5024 = vadd.f32 %v5011, %v5023
    %v5025 = vpop.f32.mrf.mxu0
    %5026 = vdwg.mxu0
    %5027 = vmatpush.bf16.msra.mxu0 %v3720
    %5028 = vmatpush.bf16.msra.mxu0 %v3719
    %5029 = vmatpush.bf16.msra.mxu0 %v3718
    %5030 = vmatpush.bf16.msra.mxu0 %v3717
    %5031 = vmatpush.bf16.msra.mxu0 %v3716
    %5032 = vmatpush.bf16.msra.mxu0 %v3715
    %5033 = vmatpush.bf16.msra.mxu0 %v3714
    %5034 = vmatpush.bf16.msra.mxu0 %v3713
    %5035 = vmatmul.bf16.gmra.mxu0 %v1131
    %v5036 = vpop.f32.mrf.mxu0
    %v5037 = vadd.f32 %v5024, %v5036
    %v5038 = vpop.f32.mrf.mxu0
    %5039 = vdwg.mxu0
    %5040 = vmatpush.bf16.msra.mxu0 %v3728
    %5041 = vmatpush.bf16.msra.mxu0 %v3727
    %5042 = vmatpush.bf16.msra.mxu0 %v3726
    %5043 = vmatpush.bf16.msra.mxu0 %v3725
    %5044 = vmatpush.bf16.msra.mxu0 %v3724
    %5045 = vmatpush.bf16.msra.mxu0 %v3723
    %5046 = vmatpush.bf16.msra.mxu0 %v3722
    %5047 = vmatpush.bf16.msra.mxu0 %v3721
    %5048 = vmatmul.bf16.gmra.mxu0 %v1132
    %v5049 = vpop.f32.mrf.mxu0
    %v5050 = vadd.f32 %v5037, %v5049
    %v5051 = vpop.f32.mrf.mxu0
    %5052 = vdwg.mxu0
    %5053 = vmatpush.bf16.msra.mxu0 %v3736
    %5054 = vmatpush.bf16.msra.mxu0 %v3735
    %5055 = vmatpush.bf16.msra.mxu0 %v3734
    %5056 = vmatpush.bf16.msra.mxu0 %v3733
    %5057 = vmatpush.bf16.msra.mxu0 %v3732
    %5058 = vmatpush.bf16.msra.mxu0 %v3731
    %5059 = vmatpush.bf16.msra.mxu0 %v3730
    %5060 = vmatpush.bf16.msra.mxu0 %v3729
    %5061 = vmatmul.bf16.gmra.mxu0 %v1133
    %v5062 = vpop.f32.mrf.mxu0
    %v5063 = vadd.f32 %v5050, %v5062
    %v5064 = vpop.f32.mrf.mxu0
    %5065 = vdwg.mxu0
    %5066 = vmatpush.bf16.msra.mxu0 %v3744
    %5067 = vmatpush.bf16.msra.mxu0 %v3743
    %5068 = vmatpush.bf16.msra.mxu0 %v3742
    %5069 = vmatpush.bf16.msra.mxu0 %v3741
    %5070 = vmatpush.bf16.msra.mxu0 %v3740
    %5071 = vmatpush.bf16.msra.mxu0 %v3739
    %5072 = vmatpush.bf16.msra.mxu0 %v3738
    %5073 = vmatpush.bf16.msra.mxu0 %v3737
    %5074 = vmatmul.bf16.gmra.mxu0 %v1134
    %v5075 = vpop.f32.mrf.mxu0
    %v5076 = vadd.f32 %v5063, %v5075
    %v5077 = vpop.f32.mrf.mxu0
    %5078 = vdwg.mxu0
    %5079 = vmatpush.bf16.msra.mxu0 %v3752
    %5080 = vmatpush.bf16.msra.mxu0 %v3751
    %5081 = vmatpush.bf16.msra.mxu0 %v3750
    %5082 = vmatpush.bf16.msra.mxu0 %v3749
    %5083 = vmatpush.bf16.msra.mxu0 %v3748
    %5084 = vmatpush.bf16.msra.mxu0 %v3747
    %5085 = vmatpush.bf16.msra.mxu0 %v3746
    %5086 = vmatpush.bf16.msra.mxu0 %v3745
    %5087 = vmatmul.bf16.gmra.mxu0 %v1135
    %v5088 = vpop.f32.mrf.mxu0
    %v5089 = vadd.f32 %v5076, %v5088
    %v5090 = vpop.f32.mrf.mxu0
    %5091 = vdwg.mxu0
    %5092 = vmatpush.bf16.msra.mxu0 %v3760
    %5093 = vmatpush.bf16.msra.mxu0 %v3759
    %5094 = vmatpush.bf16.msra.mxu0 %v3758
    %5095 = vmatpush.bf16.msra.mxu0 %v3757
    %5096 = vmatpush.bf16.msra.mxu0 %v3756
    %5097 = vmatpush.bf16.msra.mxu0 %v3755
    %5098 = vmatpush.bf16.msra.mxu0 %v3754
    %5099 = vmatpush.bf16.msra.mxu0 %v3753
    %5100 = vmatmul.bf16.gmra.mxu0 %v1136
    %v5101 = vpop.f32.mrf.mxu0
    %v5102 = vadd.f32 %v5089, %v5101
    %v5103 = vpop.f32.mrf.mxu0
    %5104 = vdwg.mxu0
    %v5105 = vmax.f32 %v5102, 0.0
    %v5106 = vpack.c.bf16 %v5105, %v5105
    %v5107 = vld [vmem:[%s3] sm:$0xf]
    %v5108 = vld [vmem:[%s3 + $0x4] sm:$0xf]
    %v5109 = vld [vmem:[%s3 + $0x8] sm:$0xf]
    %v5110 = vld [vmem:[%s3 + $0xc] sm:$0xf]
    %v5111 = vld [vmem:[%s3 + $0x10] sm:$0xf]
    %v5112 = vld [vmem:[%s3 + $0x14] sm:$0xf]
    %v5113 = vld [vmem:[%s3 + $0x18] sm:$0xf]
    %v5114 = vld [vmem:[%s3 + $0x1c] sm:$0xf]
    %v5115 = vld [vmem:[%s3 + $0x20] sm:$0xf]
    %v5116 = vld [vmem:[%s3 + $0x24] sm:$0xf]
    %v5117 = vld [vmem:[%s3 + $0x28] sm:$0xf]
    %v5118 = vld [vmem:[%s3 + $0x2c] sm:$0xf]
    %v5119 = vld [vmem:[%s3 + $0x30] sm:$0xf]
    %v5120 = vld [vmem:[%s3 + $0x34] sm:$0xf]
    %v5121 = vld [vmem:[%s3 + $0x38] sm:$0xf]
    %v5122 = vld [vmem:[%s3 + $0x3c] sm:$0xf]
    %v5123 = vld [vmem:[%s4] sm:$0x1]
    %v5125 = vperm.slane %v5123, 0
    %v5143 = vunpack.c.l.b16 %v5107
    %v5144 = vunpack.c.l.b16 %v5108
    %v5145 = vunpack.c.l.b16 %v5109
    %v5146 = vunpack.c.l.b16 %v5110
    %v5147 = vunpack.c.l.b16 %v5111
    %v5148 = vunpack.c.l.b16 %v5112
    %v5149 = vunpack.c.l.b16 %v5113
    %v5150 = vunpack.c.l.b16 %v5114
    %v5151 = vunpack.c.l.b16 %v5115
    %v5152 = vunpack.c.l.b16 %v5116
    %v5153 = vunpack.c.l.b16 %v5117
    %v5154 = vunpack.c.l.b16 %v5118
    %v5155 = vunpack.c.l.b16 %v5119
    %v5156 = vunpack.c.l.b16 %v5120
    %v5157 = vunpack.c.l.b16 %v5121
    %v5158 = vunpack.c.l.b16 %v5122
    %v5159 = vpack.c.b16 %v5144, %v5143
    %v5160 = vpack.c.b16 %v5146, %v5145
    %v5161 = vpack.c.b16 %v5148, %v5147
    %v5162 = vpack.c.b16 %v5150, %v5149
    %v5163 = vpack.c.b16 %v5152, %v5151
    %v5164 = vpack.c.b16 %v5154, %v5153
    %v5165 = vpack.c.b16 %v5156, %v5155
    %v5166 = vpack.c.b16 %v5158, %v5157
    %5175 = vmatpush.bf16.msra.mxu0 %v5166
    %5176 = vmatpush.bf16.msra.mxu0 %v5165
    %5177 = vmatpush.bf16.msra.mxu0 %v5164
    %5178 = vmatpush.bf16.msra.mxu0 %v5163
    %5179 = vmatpush.bf16.msra.mxu0 %v5162
    %5180 = vmatpush.bf16.msra.mxu0 %v5161
    %5181 = vmatpush.bf16.msra.mxu0 %v5160
    %5182 = vmatpush.bf16.msra.mxu0 %v5159
    %5183 = vmatmul.bf16.gmra.mxu0 %v5106
    %v5184 = vpop.f32.mrf.mxu0
    %v5185 = vadd.f32 %v5125, %v5184
    %v5186 = vpop.f32.mrf.mxu0
    %5187 = vdwg.mxu0
    %5188 = vst [vmem:[#allocation2] sm:$0x3] %v5185
    // Predicated region
    $region22: #{cnn_baseline_forward.3} parent=1 // pred_check
      _
    $region23: #{cnn_baseline_forward.3} parent=1 // pred_check_branch
      %5190 = sbr.rel (0) target = $region25
    $region24: #{cnn_baseline_forward.3} parent=1 // pred_region
      %5192 = vsyncadd [#allocation3], 0
      %s5194 = sshll.u32 [#allocation2], 4
      %s5195 = int_to_ptr.vmem [resolvable:$true] %s5194
      %s5196 = sshll.u32 %s5, 4
      %s5197 = int_to_ptr.hbm [resolvable:$true] %s5196
      %5199 = dma.vmem_to_hbm [thread:$0]  %s5195, 32, %s5197, [#allocation3]
    $region25: #{cnn_baseline_forward.3} parent=1 // pred_fallthru
      _
    // Predicated region
    $region26: #{cnn_baseline_forward.3} parent=1 // pred_check
      _
    $region27: #{cnn_baseline_forward.3} parent=1 // pred_check_branch
      %5201 = sbr.rel (0) target = $region29
    $region28: #{cnn_baseline_forward.3} parent=1 // pred_region
      %5203 = dma.done [#allocation3], 32
    $region29: #{cnn_baseline_forward.3} parent=1 // pred_fallthru
      _
    %5204 = vsyncpa [#allocation3], 1

// kernel: cnn_baseline_forward.2
$region0: #{cnn_baseline_forward.2}
  #allocation0 [shape = 'u32[]', space=smem, size = 0x4, offset = 0x4, fixed_abs, tag = 'smem constant byte address 0x4 - core index']
  #allocation1 [shape = 'u32[72,128]{1,0:T(1,128)}', space=vmem, size = 0x9000, scoped, tag = 'internal scratch']
  #allocation2 [shape = 'bf16[1,18,32,128]{3,2,1,0:T(8,128)(2,1)}', space=vmem, size = 0x24000, scoped, tag = 'scratch operand']
  #allocation3 [shape = 'bf16[256,1152]{1,0:T(8,128)(2,1)}', space=vmem, size = 0x90000, scoped, tag = 'scratch operand']
  #allocation4 [shape = 'f32[512,128]{1,0:T(8,128)}', space=vmem, size = 0x40000, scoped, tag = 'scratch operand']
  %s0 = inlined_call_operand.vmem [shape: bf16[2,1024,128], index: 0, kind: input, shape index: {}]
  %s1 = inlined_call_operand.vmem [shape: bf16[128,128], index: 1, kind: input, shape index: {}]
  %s2 = inlined_call_operand.vmem [shape: f32[1,128], index: 2, kind: input, shape index: {}]
  %s3 = inlined_call_operand.vmem [shape: bf16[1152,128], index: 3, kind: input, shape index: {}]
  %s4 = inlined_call_operand.vmem [shape: f32[1,128], index: 4, kind: input, shape index: {}]
  %s5 = inlined_call_operand.vmem [shape: bf16[2,64,128], index: 5, kind: output, shape index: {}]
  %s6 = sld [smem:[#allocation0]]
  $region53: #{cnn_baseline_forward.2} parent=0
    _
  %s8 = ssub.s32 1, %s6
  %s9 = scalar_select 0, %s8, %s6
  loop: start=0, step=1, limit=4
  $region2: #{cnn_baseline_forward.2} parent=0 // loop_pre_header
    _
  $region3: #{cnn_baseline_forward.2} parent=0 // loop_header
    %s11 = sphi 0, %s15
    %p12 = scmp.ge.s32.totalorder %s11, 4
    %s21 = sphi 0, %s23
    %s24 = sphi 0, %s21
    %s25 = sphi 0, %s24
    %s41 = sphi 0, %s25
    %s45 = sphi 0, %s45
    %s47 = sphi 0, %s45
    %s48 = sphi 0, %s47
    %s62 = sphi 0, %s48
    %s66 = sphi 0, %s66
    %s68 = sphi 0, %s66
    %s69 = sphi 0, %s68
    %s83 = sphi 0, %s69
    %s87 = sphi 0, %s87
    %s89 = sphi 0, %s87
    %s90 = sphi 0, %s89
    %s104 = sphi 0, %s90
    %s108 = sphi 0, %s108
    %s110 = sphi 0, %s108
    %s111 = sphi 0, %s110
    %s125 = sphi 0, %s111
    %s131 = sphi 0, %s133
    %s134 = sphi 0, %s131
    %s135 = sphi 0, %s134
    %s151 = sphi 0, %s135
  $region4: #{cnn_baseline_forward.2} parent=0 // loop_header_branch
    %14 = sbr.rel (%p12) target = $region8
  $region5: #{cnn_baseline_forward.2} parent=0 // loop_body
    %s16 = ssub.s32 %s11, 1
    %s17 = ssub.s32 %s11, 2
    %s18 = sadd.s32 %s11, 1
    %s19 = ssub.s32 %s11, %s18
    %p20 = scmp.eq.s32.totalorder %s19, 0
    %s22 = sadd.s32 %s21, 1
    %s23 = scalar_select %p20, %s21, %s22
    %p26 = pneg %p20
    %p27 = scmp.eq.s32.totalorder %s11, 1
    %p28 = por %p26, %p27
    %p29 = scmp.ne.s32.totalorder %s21, %s24
    %p30 = scmp.eq.s32.totalorder %s11, 0
    %p31 = por %p29, %p30
    %p32 = scmp.ne.s32.totalorder %s21, %s24
    %p33 = scmp.eq.s32.totalorder %s16, 1
    %p34 = por %p32, %p33
    %p35 = scmp.ne.s32.totalorder %s24, %s25
    %p36 = scmp.eq.s32.totalorder %s16, 0
    %p37 = por %p35, %p36
    %p38 = scmp.ne.s32.totalorder %s24, %s25
    %p39 = scmp.eq.s32.totalorder %s17, 1
    %p40 = por %p38, %p39
    %p42 = scmp.ne.s32.totalorder %s25, %s41
    %p43 = scmp.eq.s32.totalorder %s17, 0
    %p44 = por %p42, %p43
    %s46 = sadd.s32 %s45, 1
    %p49 = scmp.eq.s32.totalorder %s11, 1
    %p50 = scmp.ne.s32.totalorder %s45, %s47
    %p51 = scmp.eq.s32.totalorder %s11, 0
    %p52 = por %p50, %p51
    %p53 = scmp.ne.s32.totalorder %s45, %s47
    %p54 = scmp.eq.s32.totalorder %s16, 1
    %p55 = por %p53, %p54
    %p56 = scmp.ne.s32.totalorder %s47, %s48
    %p57 = scmp.eq.s32.totalorder %s16, 0
    %p58 = por %p56, %p57
    %p59 = scmp.ne.s32.totalorder %s47, %s48
    %p60 = scmp.eq.s32.totalorder %s17, 1
    %p61 = por %p59, %p60
    %p63 = scmp.ne.s32.totalorder %s48, %s62
    %p64 = scmp.eq.s32.totalorder %s17, 0
    %p65 = por %p63, %p64
    %s67 = sadd.s32 %s66, 1
    %p70 = scmp.eq.s32.totalorder %s11, 1
    %p71 = scmp.ne.s32.totalorder %s66, %s68
    %p72 = scmp.eq.s32.totalorder %s11, 0
    %p73 = por %p71, %p72
    %p74 = scmp.ne.s32.totalorder %s66, %s68
    %p75 = scmp.eq.s32.totalorder %s16, 1
    %p76 = por %p74, %p75
    %p77 = scmp.ne.s32.totalorder %s68, %s69
    %p78 = scmp.eq.s32.totalorder %s16, 0
    %p79 = por %p77, %p78
    %p80 = scmp.ne.s32.totalorder %s68, %s69
    %p81 = scmp.eq.s32.totalorder %s17, 1
    %p82 = por %p80, %p81
    %p84 = scmp.ne.s32.totalorder %s69, %s83
    %p85 = scmp.eq.s32.totalorder %s17, 0
    %p86 = por %p84, %p85
    %s88 = sadd.s32 %s87, 1
    %p91 = scmp.eq.s32.totalorder %s11, 1
    %p92 = scmp.ne.s32.totalorder %s87, %s89
    %p93 = scmp.eq.s32.totalorder %s11, 0
    %p94 = por %p92, %p93
    %p95 = scmp.ne.s32.totalorder %s87, %s89
    %p96 = scmp.eq.s32.totalorder %s16, 1
    %p97 = por %p95, %p96
    %p98 = scmp.ne.s32.totalorder %s89, %s90
    %p99 = scmp.eq.s32.totalorder %s16, 0
    %p100 = por %p98, %p99
    %p101 = scmp.ne.s32.totalorder %s89, %s90
    %p102 = scmp.eq.s32.totalorder %s17, 1
    %p103 = por %p101, %p102
    %p105 = scmp.ne.s32.totalorder %s90, %s104
    %p106 = scmp.eq.s32.totalorder %s17, 0
    %p107 = por %p105, %p106
    %s109 = sadd.s32 %s108, 1
    %p112 = scmp.eq.s32.totalorder %s11, 1
    %p113 = scmp.ne.s32.totalorder %s108, %s110
    %p114 = scmp.eq.s32.totalorder %s11, 0
    %p115 = por %p113, %p114
    %p116 = scmp.ne.s32.totalorder %s108, %s110
    %p117 = scmp.eq.s32.totalorder %s16, 1
    %p118 = por %p116, %p117
    %p119 = scmp.ne.s32.totalorder %s110, %s111
    %p120 = scmp.eq.s32.totalorder %s16, 0
    %p121 = por %p119, %p120
    %p122 = scmp.ne.s32.totalorder %s110, %s111
    %p123 = scmp.eq.s32.totalorder %s17, 1
    %p124 = por %p122, %p123
    %p126 = scmp.ne.s32.totalorder %s111, %s125
    %p127 = scmp.eq.s32.totalorder %s17, 0
    %p128 = por %p126, %p127
    %s129 = ssub.s32 %s11, %s18
    %p130 = scmp.eq.s32.totalorder %s129, 0
    %s132 = sadd.s32 %s131, 1
    %s133 = scalar_select %p130, %s131, %s132
    %p136 = pneg %p130
    %p137 = scmp.eq.s32.totalorder %s11, 1
    %p138 = por %p136, %p137
    %p139 = scmp.ne.s32.totalorder %s131, %s134
    %p140 = scmp.eq.s32.totalorder %s11, 0
    %p141 = por %p139, %p140
    %p142 = scmp.ne.s32.totalorder %s131, %s134
    %p143 = scmp.eq.s32.totalorder %s16, 1
    %p144 = por %p142, %p143
    %p145 = scmp.ne.s32.totalorder %s134, %s135
    %p146 = scmp.eq.s32.totalorder %s16, 0
    %p147 = por %p145, %p146
    %p148 = scmp.ne.s32.totalorder %s134, %s135
    %p149 = scmp.eq.s32.totalorder %s17, 1
    %p150 = por %p148, %p149
    %p152 = scmp.ne.s32.totalorder %s135, %s151
    %p153 = scmp.eq.s32.totalorder %s17, 0
    %p154 = por %p152, %p153
    %p155 = scmp.le.s32.totalorder 1, %s11
    %p156 = scmp.lt.s32.totalorder %s11, 3
    %p157 = pnand %p155, %p156
    %p158 = pneg %p157
    // Predicated region
    $region9: #{cnn_baseline_forward.2} parent=5 // pred_check
      _
    $region10: #{cnn_baseline_forward.2} parent=5 // pred_check_branch
      %160 = sbr.rel (%p157) target = $region12
    $region11: #{cnn_baseline_forward.2} parent=5 // pred_region
      %s161 = ssub.s32 %s11, 1
      // Predicated region
      $region13: #{cnn_baseline_forward.2} parent=11 // pred_check
        %p162 = pneg %p58
      $region14: #{cnn_baseline_forward.2} parent=11 // pred_check_branch
        %164 = sbr.rel (%p162) target = $region16
      $region15: #{cnn_baseline_forward.2} parent=11 // pred_region
        _
      $region16: #{cnn_baseline_forward.2} parent=11 // pred_fallthru
        _
      // Predicated region
      $region17: #{cnn_baseline_forward.2} parent=11 // pred_check
        %p165 = pneg %p79
      $region18: #{cnn_baseline_forward.2} parent=11 // pred_check_branch
        %167 = sbr.rel (%p165) target = $region20
      $region19: #{cnn_baseline_forward.2} parent=11 // pred_region
        _
      $region20: #{cnn_baseline_forward.2} parent=11 // pred_fallthru
        _
      // Predicated region
      $region21: #{cnn_baseline_forward.2} parent=11 // pred_check
        %p168 = pneg %p100
      $region22: #{cnn_baseline_forward.2} parent=11 // pred_check_branch
        %170 = sbr.rel (%p168) target = $region24
      $region23: #{cnn_baseline_forward.2} parent=11 // pred_region
        _
      $region24: #{cnn_baseline_forward.2} parent=11 // pred_fallthru
        _
      // Predicated region
      $region25: #{cnn_baseline_forward.2} parent=11 // pred_check
        %p171 = pneg %p121
      $region26: #{cnn_baseline_forward.2} parent=11 // pred_check_branch
        %173 = sbr.rel (%p171) target = $region28
      $region27: #{cnn_baseline_forward.2} parent=11 // pred_region
        _
      $region28: #{cnn_baseline_forward.2} parent=11 // pred_fallthru
        _
    $region12: #{cnn_baseline_forward.2} parent=5 // pred_fallthru
      _
    %p174 = scmp.lt.s32.totalorder %s11, 2
    // Predicated region
    $region29: #{cnn_baseline_forward.2} parent=5 // pred_check
      %p175 = pneg %p174
    $region30: #{cnn_baseline_forward.2} parent=5 // pred_check_branch
      %177 = sbr.rel (%p175) target = $region32
    $region31: #{cnn_baseline_forward.2} parent=5 // pred_region
      // Predicated region
      $region33: #{cnn_baseline_forward.2} parent=31 // pred_check
        %p178 = pneg %p31
      $region34: #{cnn_baseline_forward.2} parent=31 // pred_check_branch
        %180 = sbr.rel (%p178) target = $region36
      $region35: #{cnn_baseline_forward.2} parent=31 // pred_region
        %p181 = scmp.lt.s32.totalorder %s11, 1
        %s182 = scalar_select %p181, %s11, 1
        %s183 = smul.addr %s182, 128
        %s184 = smul.addr %s183, 4
        %s185 = scalar_lea.vmem %s0, %s184
      $region36: #{cnn_baseline_forward.2} parent=31 // pred_fallthru
        _
    $region32: #{cnn_baseline_forward.2} parent=5 // pred_fallthru
      _
    %p186 = scmp.le.s32.totalorder 1, %s11
    %p187 = scmp.lt.s32.totalorder %s11, 3
    %p188 = pnand %p186, %p187
    %p189 = pneg %p188
    // Predicated region
    $region37: #{cnn_baseline_forward.2} parent=5 // pred_check
      _
    $region38: #{cnn_baseline_forward.2} parent=5 // pred_check_branch
      %191 = sbr.rel (%p188) target = $region40
    $region39: #{cnn_baseline_forward.2} parent=5 // pred_region
      %s192 = ssub.s32 %s11, 1
      %p193 = scmp.lt.s32.totalorder %s16, 1
      %s194 = scalar_select %p193, %s16, 1
      %s195 = smul.addr %s194, 128
      %s196 = smul.addr %s195, 4
      %s197 = scalar_lea.vmem %s0, %s196
      %p198 = pneg %p37
      %p199 = pneg %p34
      %p200 = pneg %p58
      %p201 = pneg %p55
      %p202 = pneg %p79
      %p203 = pneg %p76
      %p204 = pneg %p100
      %p205 = pneg %p97
      %p206 = pneg %p121
      %p207 = pneg %p118
      %p208 = pneg %p147
      %p209 = pneg %p144
      %p210 = scmp.lt.s32.totalorder %s16, 1
      %s211 = scalar_select %p210, %s16, 1
      %s212 = smul.addr %s211, 8
      %s213 = smul.addr %s212, 4
      %s214 = scalar_lea.vmem %s5, %s213
      %p215 = scmp.lt.s32.totalorder %s16, 1
      %s216 = scalar_select %p215, %s16, 1
      %s217 = smul.addr %s216, 128
      %s218 = smul.addr %s217, 4
      %s219 = scalar_lea.vmem %s0, %s218
      %p220 = scmp.lt.s32.totalorder %s16, 1
      %s221 = scalar_select %p220, %s16, 1
      %s222 = smul.addr %s221, 8
      %s223 = smul.addr %s222, 4
      %s224 = scalar_lea.vmem %s5, %s223
      %v226 = vld [vmem:[%s219] sm:$0xf]
      %v227 = vld [vmem:[%s219 + $0x4] sm:$0xf]
      %v228 = vld [vmem:[%s219 + $0x8] sm:$0xf]
      %v229 = vld [vmem:[%s219 + $0xc] sm:$0xf]
      %v230 = vld [vmem:[%s219 + $0x10] sm:$0xf]
      %v231 = vld [vmem:[%s219 + $0x14] sm:$0xf]
      %v232 = vld [vmem:[%s219 + $0x18] sm:$0xf]
      %v233 = vld [vmem:[%s219 + $0x1c] sm:$0xf]
      %v234 = vld [vmem:[%s219 + $0x20] sm:$0xf]
      %v235 = vld [vmem:[%s219 + $0x24] sm:$0xf]
      %v236 = vld [vmem:[%s219 + $0x28] sm:$0xf]
      %v237 = vld [vmem:[%s219 + $0x2c] sm:$0xf]
      %v238 = vld [vmem:[%s219 + $0x30] sm:$0xf]
      %v239 = vld [vmem:[%s219 + $0x34] sm:$0xf]
      %v240 = vld [vmem:[%s219 + $0x38] sm:$0xf]
      %v241 = vld [vmem:[%s219 + $0x3c] sm:$0xf]
      %v242 = vld [vmem:[%s219 + $0x40] sm:$0xf]
      %v243 = vld [vmem:[%s219 + $0x44] sm:$0xf]
      %v244 = vld [vmem:[%s219 + $0x48] sm:$0xf]
      %v245 = vld [vmem:[%s219 + $0x4c] sm:$0xf]
      %v246 = vld [vmem:[%s219 + $0x50] sm:$0xf]
      %v247 = vld [vmem:[%s219 + $0x54] sm:$0xf]
      %v248 = vld [vmem:[%s219 + $0x58] sm:$0xf]
      %v249 = vld [vmem:[%s219 + $0x5c] sm:$0xf]
      %v250 = vld [vmem:[%s219 + $0x60] sm:$0xf]
      %v251 = vld [vmem:[%s219 + $0x64] sm:$0xf]
      %v252 = vld [vmem:[%s219 + $0x68] sm:$0xf]
      %v253 = vld [vmem:[%s219 + $0x6c] sm:$0xf]
      %v254 = vld [vmem:[%s219 + $0x70] sm:$0xf]
      %v255 = vld [vmem:[%s219 + $0x74] sm:$0xf]
      %v256 = vld [vmem:[%s219 + $0x78] sm:$0xf]
      %v257 = vld [vmem:[%s219 + $0x7c] sm:$0xf]
      %v258 = vld [vmem:[%s219 + $0x80] sm:$0xf]
      %v259 = vld [vmem:[%s219 + $0x84] sm:$0xf]
      %v260 = vld [vmem:[%s219 + $0x88] sm:$0xf]
      %v261 = vld [vmem:[%s219 + $0x8c] sm:$0xf]
      %v262 = vld [vmem:[%s219 + $0x90] sm:$0xf]
      %v263 = vld [vmem:[%s219 + $0x94] sm:$0xf]
      %v264 = vld [vmem:[%s219 + $0x98] sm:$0xf]
      %v265 = vld [vmem:[%s219 + $0x9c] sm:$0xf]
      %v266 = vld [vmem:[%s219 + $0xa0] sm:$0xf]
      %v267 = vld [vmem:[%s219 + $0xa4] sm:$0xf]
      %v268 = vld [vmem:[%s219 + $0xa8] sm:$0xf]
      %v269 = vld [vmem:[%s219 + $0xac] sm:$0xf]
      %v270 = vld [vmem:[%s219 + $0xb0] sm:$0xf]
      %v271 = vld [vmem:[%s219 + $0xb4] sm:$0xf]
      %v272 = vld [vmem:[%s219 + $0xb8] sm:$0xf]
      %v273 = vld [vmem:[%s219 + $0xbc] sm:$0xf]
      %v274 = vld [vmem:[%s219 + $0xc0] sm:$0xf]
      %v275 = vld [vmem:[%s219 + $0xc4] sm:$0xf]
      %v276 = vld [vmem:[%s219 + $0xc8] sm:$0xf]
      %v277 = vld [vmem:[%s219 + $0xcc] sm:$0xf]
      %v278 = vld [vmem:[%s219 + $0xd0] sm:$0xf]
      %v279 = vld [vmem:[%s219 + $0xd4] sm:$0xf]
      %v280 = vld [vmem:[%s219 + $0xd8] sm:$0xf]
      %v281 = vld [vmem:[%s219 + $0xdc] sm:$0xf]
      %v282 = vld [vmem:[%s219 + $0xe0] sm:$0xf]
      %v283 = vld [vmem:[%s219 + $0xe4] sm:$0xf]
      %v284 = vld [vmem:[%s219 + $0xe8] sm:$0xf]
      %v285 = vld [vmem:[%s219 + $0xec] sm:$0xf]
      %v286 = vld [vmem:[%s219 + $0xf0] sm:$0xf]
      %v287 = vld [vmem:[%s219 + $0xf4] sm:$0xf]
      %v288 = vld [vmem:[%s219 + $0xf8] sm:$0xf]
      %v289 = vld [vmem:[%s219 + $0xfc] sm:$0xf]
      %v290 = vld [vmem:[%s219 + $0x100] sm:$0xf]
      %v291 = vld [vmem:[%s219 + $0x104] sm:$0xf]
      %v292 = vld [vmem:[%s219 + $0x108] sm:$0xf]
      %v293 = vld [vmem:[%s219 + $0x10c] sm:$0xf]
      %v294 = vld [vmem:[%s219 + $0x110] sm:$0xf]
      %v295 = vld [vmem:[%s219 + $0x114] sm:$0xf]
      %v296 = vld [vmem:[%s219 + $0x118] sm:$0xf]
      %v297 = vld [vmem:[%s219 + $0x11c] sm:$0xf]
      %v298 = vld [vmem:[%s219 + $0x120] sm:$0xf]
      %v299 = vld [vmem:[%s219 + $0x124] sm:$0xf]
      %v300 = vld [vmem:[%s219 + $0x128] sm:$0xf]
      %v301 = vld [vmem:[%s219 + $0x12c] sm:$0xf]
      %v302 = vld [vmem:[%s219 + $0x130] sm:$0xf]
      %v303 = vld [vmem:[%s219 + $0x134] sm:$0xf]
      %v304 = vld [vmem:[%s219 + $0x138] sm:$0xf]
      %v305 = vld [vmem:[%s219 + $0x13c] sm:$0xf]
      %v306 = vld [vmem:[%s219 + $0x140] sm:$0xf]
      %v307 = vld [vmem:[%s219 + $0x144] sm:$0xf]
      %v308 = vld [vmem:[%s219 + $0x148] sm:$0xf]
      %v309 = vld [vmem:[%s219 + $0x14c] sm:$0xf]
      %v310 = vld [vmem:[%s219 + $0x150] sm:$0xf]
      %v311 = vld [vmem:[%s219 + $0x154] sm:$0xf]
      %v312 = vld [vmem:[%s219 + $0x158] sm:$0xf]
      %v313 = vld [vmem:[%s219 + $0x15c] sm:$0xf]
      %v314 = vld [vmem:[%s219 + $0x160] sm:$0xf]
      %v315 = vld [vmem:[%s219 + $0x164] sm:$0xf]
      %v316 = vld [vmem:[%s219 + $0x168] sm:$0xf]
      %v317 = vld [vmem:[%s219 + $0x16c] sm:$0xf]
      %v318 = vld [vmem:[%s219 + $0x170] sm:$0xf]
      %v319 = vld [vmem:[%s219 + $0x174] sm:$0xf]
      %v320 = vld [vmem:[%s219 + $0x178] sm:$0xf]
      %v321 = vld [vmem:[%s219 + $0x17c] sm:$0xf]
      %v322 = vld [vmem:[%s219 + $0x180] sm:$0xf]
      %v323 = vld [vmem:[%s219 + $0x184] sm:$0xf]
      %v324 = vld [vmem:[%s219 + $0x188] sm:$0xf]
      %v325 = vld [vmem:[%s219 + $0x18c] sm:$0xf]
      %v326 = vld [vmem:[%s219 + $0x190] sm:$0xf]
      %v327 = vld [vmem:[%s219 + $0x194] sm:$0xf]
      %v328 = vld [vmem:[%s219 + $0x198] sm:$0xf]
      %v329 = vld [vmem:[%s219 + $0x19c] sm:$0xf]
      %v330 = vld [vmem:[%s219 + $0x1a0] sm:$0xf]
      %v331 = vld [vmem:[%s219 + $0x1a4] sm:$0xf]
      %v332 = vld [vmem:[%s219 + $0x1a8] sm:$0xf]
      %v333 = vld [vmem:[%s219 + $0x1ac] sm:$0xf]
      %v334 = vld [vmem:[%s219 + $0x1b0] sm:$0xf]
      %v335 = vld [vmem:[%s219 + $0x1b4] sm:$0xf]
      %v336 = vld [vmem:[%s219 + $0x1b8] sm:$0xf]
      %v337 = vld [vmem:[%s219 + $0x1bc] sm:$0xf]
      %v338 = vld [vmem:[%s219 + $0x1c0] sm:$0xf]
      %v339 = vld [vmem:[%s219 + $0x1c4] sm:$0xf]
      %v340 = vld [vmem:[%s219 + $0x1c8] sm:$0xf]
      %v341 = vld [vmem:[%s219 + $0x1cc] sm:$0xf]
      %v342 = vld [vmem:[%s219 + $0x1d0] sm:$0xf]
      %v343 = vld [vmem:[%s219 + $0x1d4] sm:$0xf]
      %v344 = vld [vmem:[%s219 + $0x1d8] sm:$0xf]
      %v345 = vld [vmem:[%s219 + $0x1dc] sm:$0xf]
      %v346 = vld [vmem:[%s219 + $0x1e0] sm:$0xf]
      %v347 = vld [vmem:[%s219 + $0x1e4] sm:$0xf]
      %v348 = vld [vmem:[%s219 + $0x1e8] sm:$0xf]
      %v349 = vld [vmem:[%s219 + $0x1ec] sm:$0xf]
      %v350 = vld [vmem:[%s219 + $0x1f0] sm:$0xf]
      %v351 = vld [vmem:[%s219 + $0x1f4] sm:$0xf]
      %v352 = vld [vmem:[%s219 + $0x1f8] sm:$0xf]
      %v353 = vld [vmem:[%s219 + $0x1fc] sm:$0xf]
      %v354 = vld [vmem:[%s1] sm:$0xf]
      %v355 = vld [vmem:[%s1 + $0x4] sm:$0xf]
      %v356 = vld [vmem:[%s1 + $0x8] sm:$0xf]
      %v357 = vld [vmem:[%s1 + $0xc] sm:$0xf]
      %v358 = vld [vmem:[%s1 + $0x10] sm:$0xf]
      %v359 = vld [vmem:[%s1 + $0x14] sm:$0xf]
      %v360 = vld [vmem:[%s1 + $0x18] sm:$0xf]
      %v361 = vld [vmem:[%s1 + $0x1c] sm:$0xf]
      %v362 = vld [vmem:[%s1 + $0x20] sm:$0xf]
      %v363 = vld [vmem:[%s1 + $0x24] sm:$0xf]
      %v364 = vld [vmem:[%s1 + $0x28] sm:$0xf]
      %v365 = vld [vmem:[%s1 + $0x2c] sm:$0xf]
      %v366 = vld [vmem:[%s1 + $0x30] sm:$0xf]
      %v367 = vld [vmem:[%s1 + $0x34] sm:$0xf]
      %v368 = vld [vmem:[%s1 + $0x38] sm:$0xf]
      %v369 = vld [vmem:[%s1 + $0x3c] sm:$0xf]
      %v498 = vunpack.c.l.b16 %v226
      %v499 = vunpack.c.l.b16 %v227
      %v500 = vunpack.c.l.b16 %v228
      %v501 = vunpack.c.l.b16 %v229
      %v502 = vunpack.c.l.b16 %v230
      %v503 = vunpack.c.l.b16 %v231
      %v504 = vunpack.c.l.b16 %v232
      %v505 = vunpack.c.l.b16 %v233
      %v506 = vunpack.c.l.b16 %v234
      %v507 = vunpack.c.l.b16 %v235
      %v508 = vunpack.c.l.b16 %v236
      %v509 = vunpack.c.l.b16 %v237
      %v510 = vunpack.c.l.b16 %v238
      %v511 = vunpack.c.l.b16 %v239
      %v512 = vunpack.c.l.b16 %v240
      %v513 = vunpack.c.l.b16 %v241
      %v514 = vunpack.c.l.b16 %v242
      %v515 = vunpack.c.l.b16 %v243
      %v516 = vunpack.c.l.b16 %v244
      %v517 = vunpack.c.l.b16 %v245
      %v518 = vunpack.c.l.b16 %v246
      %v519 = vunpack.c.l.b16 %v247
      %v520 = vunpack.c.l.b16 %v248
      %v521 = vunpack.c.l.b16 %v249
      %v522 = vunpack.c.l.b16 %v250
      %v523 = vunpack.c.l.b16 %v251
      %v524 = vunpack.c.l.b16 %v252
      %v525 = vunpack.c.l.b16 %v253
      %v526 = vunpack.c.l.b16 %v254
      %v527 = vunpack.c.l.b16 %v255
      %v528 = vunpack.c.l.b16 %v256
      %v529 = vunpack.c.l.b16 %v257
      %v530 = vunpack.c.l.b16 %v258
      %v531 = vunpack.c.l.b16 %v259
      %v532 = vunpack.c.l.b16 %v260
      %v533 = vunpack.c.l.b16 %v261
      %v534 = vunpack.c.l.b16 %v262
      %v535 = vunpack.c.l.b16 %v263
      %v536 = vunpack.c.l.b16 %v264
      %v537 = vunpack.c.l.b16 %v265
      %v538 = vunpack.c.l.b16 %v266
      %v539 = vunpack.c.l.b16 %v267
      %v540 = vunpack.c.l.b16 %v268
      %v541 = vunpack.c.l.b16 %v269
      %v542 = vunpack.c.l.b16 %v270
      %v543 = vunpack.c.l.b16 %v271
      %v544 = vunpack.c.l.b16 %v272
      %v545 = vunpack.c.l.b16 %v273
      %v546 = vunpack.c.l.b16 %v274
      %v547 = vunpack.c.l.b16 %v275
      %v548 = vunpack.c.l.b16 %v276
      %v549 = vunpack.c.l.b16 %v277
      %v550 = vunpack.c.l.b16 %v278
      %v551 = vunpack.c.l.b16 %v279
      %v552 = vunpack.c.l.b16 %v280
      %v553 = vunpack.c.l.b16 %v281
      %v554 = vunpack.c.l.b16 %v282
      %v555 = vunpack.c.l.b16 %v283
      %v556 = vunpack.c.l.b16 %v284
      %v557 = vunpack.c.l.b16 %v285
      %v558 = vunpack.c.l.b16 %v286
      %v559 = vunpack.c.l.b16 %v287
      %v560 = vunpack.c.l.b16 %v288
      %v561 = vunpack.c.l.b16 %v289
      %v562 = vunpack.c.l.b16 %v290
      %v563 = vunpack.c.l.b16 %v291
      %v564 = vunpack.c.l.b16 %v292
      %v565 = vunpack.c.l.b16 %v293
      %v566 = vunpack.c.l.b16 %v294
      %v567 = vunpack.c.l.b16 %v295
      %v568 = vunpack.c.l.b16 %v296
      %v569 = vunpack.c.l.b16 %v297
      %v570 = vunpack.c.l.b16 %v298
      %v571 = vunpack.c.l.b16 %v299
      %v572 = vunpack.c.l.b16 %v300
      %v573 = vunpack.c.l.b16 %v301
      %v574 = vunpack.c.l.b16 %v302
      %v575 = vunpack.c.l.b16 %v303
      %v576 = vunpack.c.l.b16 %v304
      %v577 = vunpack.c.l.b16 %v305
      %v578 = vunpack.c.l.b16 %v306
      %v579 = vunpack.c.l.b16 %v307
      %v580 = vunpack.c.l.b16 %v308
      %v581 = vunpack.c.l.b16 %v309
      %v582 = vunpack.c.l.b16 %v310
      %v583 = vunpack.c.l.b16 %v311
      %v584 = vunpack.c.l.b16 %v312
      %v585 = vunpack.c.l.b16 %v313
      %v586 = vunpack.c.l.b16 %v314
      %v587 = vunpack.c.l.b16 %v315
      %v588 = vunpack.c.l.b16 %v316
      %v589 = vunpack.c.l.b16 %v317
      %v590 = vunpack.c.l.b16 %v318
      %v591 = vunpack.c.l.b16 %v319
      %v592 = vunpack.c.l.b16 %v320
      %v593 = vunpack.c.l.b16 %v321
      %v594 = vunpack.c.l.b16 %v322
      %v595 = vunpack.c.l.b16 %v323
      %v596 = vunpack.c.l.b16 %v324
      %v597 = vunpack.c.l.b16 %v325
      %v598 = vunpack.c.l.b16 %v326
      %v599 = vunpack.c.l.b16 %v327
      %v600 = vunpack.c.l.b16 %v328
      %v601 = vunpack.c.l.b16 %v329
      %v602 = vunpack.c.l.b16 %v330
      %v603 = vunpack.c.l.b16 %v331
      %v604 = vunpack.c.l.b16 %v332
      %v605 = vunpack.c.l.b16 %v333
      %v606 = vunpack.c.l.b16 %v334
      %v607 = vunpack.c.l.b16 %v335
      %v608 = vunpack.c.l.b16 %v336
      %v609 = vunpack.c.l.b16 %v337
      %v610 = vunpack.c.l.b16 %v338
      %v611 = vunpack.c.l.b16 %v339
      %v612 = vunpack.c.l.b16 %v340
      %v613 = vunpack.c.l.b16 %v341
      %v614 = vunpack.c.l.b16 %v342
      %v615 = vunpack.c.l.b16 %v343
      %v616 = vunpack.c.l.b16 %v344
      %v617 = vunpack.c.l.b16 %v345
      %v618 = vunpack.c.l.b16 %v346
      %v619 = vunpack.c.l.b16 %v347
      %v620 = vunpack.c.l.b16 %v348
      %v621 = vunpack.c.l.b16 %v349
      %v622 = vunpack.c.l.b16 %v350
      %v623 = vunpack.c.l.b16 %v351
      %v624 = vunpack.c.l.b16 %v352
      %v625 = vunpack.c.l.b16 %v353
      %v626 = vpack.c.b16 %v499, %v498
      %v627 = vpack.c.b16 %v501, %v500
      %v628 = vpack.c.b16 %v503, %v502
      %v629 = vpack.c.b16 %v505, %v504
      %v630 = vpack.c.b16 %v507, %v506
      %v631 = vpack.c.b16 %v509, %v508
      %v632 = vpack.c.b16 %v511, %v510
      %v633 = vpack.c.b16 %v513, %v512
      %v634 = vpack.c.b16 %v515, %v514
      %v635 = vpack.c.b16 %v517, %v516
      %v636 = vpack.c.b16 %v519, %v518
      %v637 = vpack.c.b16 %v521, %v520
      %v638 = vpack.c.b16 %v523, %v522
      %v639 = vpack.c.b16 %v525, %v524
      %v640 = vpack.c.b16 %v527, %v526
      %v641 = vpack.c.b16 %v529, %v528
      %v642 = vpack.c.b16 %v531, %v530
      %v643 = vpack.c.b16 %v533, %v532
      %v644 = vpack.c.b16 %v535, %v534
      %v645 = vpack.c.b16 %v537, %v536
      %v646 = vpack.c.b16 %v539, %v538
      %v647 = vpack.c.b16 %v541, %v540
      %v648 = vpack.c.b16 %v543, %v542
      %v649 = vpack.c.b16 %v545, %v544
      %v650 = vpack.c.b16 %v547, %v546
      %v651 = vpack.c.b16 %v549, %v548
      %v652 = vpack.c.b16 %v551, %v550
      %v653 = vpack.c.b16 %v553, %v552
      %v654 = vpack.c.b16 %v555, %v554
      %v655 = vpack.c.b16 %v557, %v556
      %v656 = vpack.c.b16 %v559, %v558
      %v657 = vpack.c.b16 %v561, %v560
      %v658 = vpack.c.b16 %v563, %v562
      %v659 = vpack.c.b16 %v565, %v564
      %v660 = vpack.c.b16 %v567, %v566
      %v661 = vpack.c.b16 %v569, %v568
      %v662 = vpack.c.b16 %v571, %v570
      %v663 = vpack.c.b16 %v573, %v572
      %v664 = vpack.c.b16 %v575, %v574
      %v665 = vpack.c.b16 %v577, %v576
      %v666 = vpack.c.b16 %v579, %v578
      %v667 = vpack.c.b16 %v581, %v580
      %v668 = vpack.c.b16 %v583, %v582
      %v669 = vpack.c.b16 %v585, %v584
      %v670 = vpack.c.b16 %v587, %v586
      %v671 = vpack.c.b16 %v589, %v588
      %v672 = vpack.c.b16 %v591, %v590
      %v673 = vpack.c.b16 %v593, %v592
      %v674 = vpack.c.b16 %v595, %v594
      %v675 = vpack.c.b16 %v597, %v596
      %v676 = vpack.c.b16 %v599, %v598
      %v677 = vpack.c.b16 %v601, %v600
      %v678 = vpack.c.b16 %v603, %v602
      %v679 = vpack.c.b16 %v605, %v604
      %v680 = vpack.c.b16 %v607, %v606
      %v681 = vpack.c.b16 %v609, %v608
      %v682 = vpack.c.b16 %v611, %v610
      %v683 = vpack.c.b16 %v613, %v612
      %v684 = vpack.c.b16 %v615, %v614
      %v685 = vpack.c.b16 %v617, %v616
      %v686 = vpack.c.b16 %v619, %v618
      %v687 = vpack.c.b16 %v621, %v620
      %v688 = vpack.c.b16 %v623, %v622
      %v689 = vpack.c.b16 %v625, %v624
      %v770 = vunpack.c.l.b16 %v354
      %v771 = vunpack.c.l.b16 %v355
      %v772 = vunpack.c.l.b16 %v356
      %v773 = vunpack.c.l.b16 %v357
      %v774 = vunpack.c.l.b16 %v358
      %v775 = vunpack.c.l.b16 %v359
      %v776 = vunpack.c.l.b16 %v360
      %v777 = vunpack.c.l.b16 %v361
      %v778 = vunpack.c.l.b16 %v362
      %v779 = vunpack.c.l.b16 %v363
      %v780 = vunpack.c.l.b16 %v364
      %v781 = vunpack.c.l.b16 %v365
      %v782 = vunpack.c.l.b16 %v366
      %v783 = vunpack.c.l.b16 %v367
      %v784 = vunpack.c.l.b16 %v368
      %v785 = vunpack.c.l.b16 %v369
      %v786 = vpack.c.b16 %v771, %v770
      %v787 = vpack.c.b16 %v773, %v772
      %v788 = vpack.c.b16 %v775, %v774
      %v789 = vpack.c.b16 %v777, %v776
      %v790 = vpack.c.b16 %v779, %v778
      %v791 = vpack.c.b16 %v781, %v780
      %v792 = vpack.c.b16 %v783, %v782
      %v793 = vpack.c.b16 %v785, %v784
      %802 = vmatpush.bf16.msra.mxu0 %v793
      %803 = vmatpush.bf16.msra.mxu0 %v792
      %804 = vmatpush.bf16.msra.mxu0 %v791
      %805 = vmatpush.bf16.msra.mxu0 %v790
      %806 = vmatpush.bf16.msra.mxu0 %v789
      %807 = vmatpush.bf16.msra.mxu0 %v788
      %808 = vmatpush.bf16.msra.mxu0 %v787
      %809 = vmatpush.bf16.msra.mxu0 %v786
      %810 = vmatmul.bf16.gmra.mxu0 %v626
      %v811 = vpop.f32.mrf.mxu0
      %v812 = vadd.f32 0.0, %v811
      %v813 = vpop.f32.mrf.mxu0
      %v814 = vadd.f32 0.0, %v813
      %815 = vmatmul.bf16.gmra.mxu0 %v627
      %v816 = vpop.f32.mrf.mxu0
      %v817 = vadd.f32 0.0, %v816
      %v818 = vpop.f32.mrf.mxu0
      %v819 = vadd.f32 0.0, %v818
      %820 = vmatmul.bf16.gmra.mxu0 %v628
      %v821 = vpop.f32.mrf.mxu0
      %v822 = vadd.f32 0.0, %v821
      %v823 = vpop.f32.mrf.mxu0
      %v824 = vadd.f32 0.0, %v823
      %825 = vmatmul.bf16.gmra.mxu0 %v629
      %v826 = vpop.f32.mrf.mxu0
      %v827 = vadd.f32 0.0, %v826
      %v828 = vpop.f32.mrf.mxu0
      %v829 = vadd.f32 0.0, %v828
      %830 = vmatmul.bf16.gmra.mxu0 %v630
      %v831 = vpop.f32.mrf.mxu0
      %v832 = vadd.f32 0.0, %v831
      %v833 = vpop.f32.mrf.mxu0
      %v834 = vadd.f32 0.0, %v833
      %835 = vmatmul.bf16.gmra.mxu0 %v631
      %v836 = vpop.f32.mrf.mxu0
      %v837 = vadd.f32 0.0, %v836
      %v838 = vpop.f32.mrf.mxu0
      %v839 = vadd.f32 0.0, %v838
      %840 = vmatmul.bf16.gmra.mxu0 %v632
      %v841 = vpop.f32.mrf.mxu0
      %v842 = vadd.f32 0.0, %v841
      %v843 = vpop.f32.mrf.mxu0
      %v844 = vadd.f32 0.0, %v843
      %845 = vmatmul.bf16.gmra.mxu0 %v633
      %v846 = vpop.f32.mrf.mxu0
      %v847 = vadd.f32 0.0, %v846
      %v848 = vpop.f32.mrf.mxu0
      %v849 = vadd.f32 0.0, %v848
      %850 = vmatmul.bf16.gmra.mxu0 %v634
      %v851 = vpop.f32.mrf.mxu0
      %v852 = vadd.f32 0.0, %v851
      %v853 = vpop.f32.mrf.mxu0
      %v854 = vadd.f32 0.0, %v853
      %855 = vmatmul.bf16.gmra.mxu0 %v635
      %v856 = vpop.f32.mrf.mxu0
      %v857 = vadd.f32 0.0, %v856
      %v858 = vpop.f32.mrf.mxu0
      %v859 = vadd.f32 0.0, %v858
      %860 = vmatmul.bf16.gmra.mxu0 %v636
      %v861 = vpop.f32.mrf.mxu0
      %v862 = vadd.f32 0.0, %v861
      %v863 = vpop.f32.mrf.mxu0
      %v864 = vadd.f32 0.0, %v863
      %865 = vmatmul.bf16.gmra.mxu0 %v637
      %v866 = vpop.f32.mrf.mxu0
      %v867 = vadd.f32 0.0, %v866
      %v868 = vpop.f32.mrf.mxu0
      %v869 = vadd.f32 0.0, %v868
      %870 = vmatmul.bf16.gmra.mxu0 %v638
      %v871 = vpop.f32.mrf.mxu0
      %v872 = vadd.f32 0.0, %v871
      %v873 = vpop.f32.mrf.mxu0
      %v874 = vadd.f32 0.0, %v873
      %875 = vmatmul.bf16.gmra.mxu0 %v639
      %v876 = vpop.f32.mrf.mxu0
      %v877 = vadd.f32 0.0, %v876
      %v878 = vpop.f32.mrf.mxu0
      %v879 = vadd.f32 0.0, %v878
      %880 = vmatmul.bf16.gmra.mxu0 %v640
      %v881 = vpop.f32.mrf.mxu0
      %v882 = vadd.f32 0.0, %v881
      %v883 = vpop.f32.mrf.mxu0
      %v884 = vadd.f32 0.0, %v883
      %885 = vmatmul.bf16.gmra.mxu0 %v641
      %v886 = vpop.f32.mrf.mxu0
      %v887 = vadd.f32 0.0, %v886
      %v888 = vpop.f32.mrf.mxu0
      %v889 = vadd.f32 0.0, %v888
      %890 = vmatmul.bf16.gmra.mxu0 %v642
      %v891 = vpop.f32.mrf.mxu0
      %v892 = vadd.f32 0.0, %v891
      %v893 = vpop.f32.mrf.mxu0
      %v894 = vadd.f32 0.0, %v893
      %895 = vmatmul.bf16.gmra.mxu0 %v643
      %v896 = vpop.f32.mrf.mxu0
      %v897 = vadd.f32 0.0, %v896
      %v898 = vpop.f32.mrf.mxu0
      %v899 = vadd.f32 0.0, %v898
      %900 = vmatmul.bf16.gmra.mxu0 %v644
      %v901 = vpop.f32.mrf.mxu0
      %v902 = vadd.f32 0.0, %v901
      %v903 = vpop.f32.mrf.mxu0
      %v904 = vadd.f32 0.0, %v903
      %905 = vmatmul.bf16.gmra.mxu0 %v645
      %v906 = vpop.f32.mrf.mxu0
      %v907 = vadd.f32 0.0, %v906
      %v908 = vpop.f32.mrf.mxu0
      %v909 = vadd.f32 0.0, %v908
      %910 = vmatmul.bf16.gmra.mxu0 %v646
      %v911 = vpop.f32.mrf.mxu0
      %v912 = vadd.f32 0.0, %v911
      %v913 = vpop.f32.mrf.mxu0
      %v914 = vadd.f32 0.0, %v913
      %915 = vmatmul.bf16.gmra.mxu0 %v647
      %v916 = vpop.f32.mrf.mxu0
      %v917 = vadd.f32 0.0, %v916
      %v918 = vpop.f32.mrf.mxu0
      %v919 = vadd.f32 0.0, %v918
      %920 = vmatmul.bf16.gmra.mxu0 %v648
      %v921 = vpop.f32.mrf.mxu0
      %v922 = vadd.f32 0.0, %v921
      %v923 = vpop.f32.mrf.mxu0
      %v924 = vadd.f32 0.0, %v923
      %925 = vmatmul.bf16.gmra.mxu0 %v649
      %v926 = vpop.f32.mrf.mxu0
      %v927 = vadd.f32 0.0, %v926
      %v928 = vpop.f32.mrf.mxu0
      %v929 = vadd.f32 0.0, %v928
      %930 = vmatmul.bf16.gmra.mxu0 %v650
      %v931 = vpop.f32.mrf.mxu0
      %v932 = vadd.f32 0.0, %v931
      %v933 = vpop.f32.mrf.mxu0
      %v934 = vadd.f32 0.0, %v933
      %935 = vmatmul.bf16.gmra.mxu0 %v651
      %v936 = vpop.f32.mrf.mxu0
      %v937 = vadd.f32 0.0, %v936
      %v938 = vpop.f32.mrf.mxu0
      %v939 = vadd.f32 0.0, %v938
      %940 = vmatmul.bf16.gmra.mxu0 %v652
      %v941 = vpop.f32.mrf.mxu0
      %v942 = vadd.f32 0.0, %v941
      %v943 = vpop.f32.mrf.mxu0
      %v944 = vadd.f32 0.0, %v943
      %945 = vmatmul.bf16.gmra.mxu0 %v653
      %v946 = vpop.f32.mrf.mxu0
      %v947 = vadd.f32 0.0, %v946
      %v948 = vpop.f32.mrf.mxu0
      %v949 = vadd.f32 0.0, %v948
      %950 = vmatmul.bf16.gmra.mxu0 %v654
      %v951 = vpop.f32.mrf.mxu0
      %v952 = vadd.f32 0.0, %v951
      %v953 = vpop.f32.mrf.mxu0
      %v954 = vadd.f32 0.0, %v953
      %955 = vmatmul.bf16.gmra.mxu0 %v655
      %v956 = vpop.f32.mrf.mxu0
      %v957 = vadd.f32 0.0, %v956
      %v958 = vpop.f32.mrf.mxu0
      %v959 = vadd.f32 0.0, %v958
      %960 = vmatmul.bf16.gmra.mxu0 %v656
      %v961 = vpop.f32.mrf.mxu0
      %v962 = vadd.f32 0.0, %v961
      %v963 = vpop.f32.mrf.mxu0
      %v964 = vadd.f32 0.0, %v963
      %965 = vmatmul.bf16.gmra.mxu0 %v657
      %v966 = vpop.f32.mrf.mxu0
      %v967 = vadd.f32 0.0, %v966
      %v968 = vpop.f32.mrf.mxu0
      %v969 = vadd.f32 0.0, %v968
      %970 = vmatmul.bf16.gmra.mxu0 %v658
      %v971 = vpop.f32.mrf.mxu0
      %v972 = vadd.f32 0.0, %v971
      %v973 = vpop.f32.mrf.mxu0
      %v974 = vadd.f32 0.0, %v973
      %975 = vmatmul.bf16.gmra.mxu0 %v659
      %v976 = vpop.f32.mrf.mxu0
      %v977 = vadd.f32 0.0, %v976
      %v978 = vpop.f32.mrf.mxu0
      %v979 = vadd.f32 0.0, %v978
      %980 = vmatmul.bf16.gmra.mxu0 %v660
      %v981 = vpop.f32.mrf.mxu0
      %v982 = vadd.f32 0.0, %v981
      %v983 = vpop.f32.mrf.mxu0
      %v984 = vadd.f32 0.0, %v983
      %985 = vmatmul.bf16.gmra.mxu0 %v661
      %v986 = vpop.f32.mrf.mxu0
      %v987 = vadd.f32 0.0, %v986
      %v988 = vpop.f32.mrf.mxu0
      %v989 = vadd.f32 0.0, %v988
      %990 = vmatmul.bf16.gmra.mxu0 %v662
      %v991 = vpop.f32.mrf.mxu0
      %v992 = vadd.f32 0.0, %v991
      %v993 = vpop.f32.mrf.mxu0
      %v994 = vadd.f32 0.0, %v993
      %995 = vmatmul.bf16.gmra.mxu0 %v663
      %v996 = vpop.f32.mrf.mxu0
      %v997 = vadd.f32 0.0, %v996
      %v998 = vpop.f32.mrf.mxu0
      %v999 = vadd.f32 0.0, %v998
      %1000 = vmatmul.bf16.gmra.mxu0 %v664
      %v1001 = vpop.f32.mrf.mxu0
      %v1002 = vadd.f32 0.0, %v1001
      %v1003 = vpop.f32.mrf.mxu0
      %v1004 = vadd.f32 0.0, %v1003
      %1005 = vmatmul.bf16.gmra.mxu0 %v665
      %v1006 = vpop.f32.mrf.mxu0
      %v1007 = vadd.f32 0.0, %v1006
      %v1008 = vpop.f32.mrf.mxu0
      %v1009 = vadd.f32 0.0, %v1008
      %1010 = vmatmul.bf16.gmra.mxu0 %v666
      %v1011 = vpop.f32.mrf.mxu0
      %v1012 = vadd.f32 0.0, %v1011
      %v1013 = vpop.f32.mrf.mxu0
      %v1014 = vadd.f32 0.0, %v1013
      %1015 = vmatmul.bf16.gmra.mxu0 %v667
      %v1016 = vpop.f32.mrf.mxu0
      %v1017 = vadd.f32 0.0, %v1016
      %v1018 = vpop.f32.mrf.mxu0
      %v1019 = vadd.f32 0.0, %v1018
      %1020 = vmatmul.bf16.gmra.mxu0 %v668
      %v1021 = vpop.f32.mrf.mxu0
      %v1022 = vadd.f32 0.0, %v1021
      %v1023 = vpop.f32.mrf.mxu0
      %v1024 = vadd.f32 0.0, %v1023
      %1025 = vmatmul.bf16.gmra.mxu0 %v669
      %v1026 = vpop.f32.mrf.mxu0
      %v1027 = vadd.f32 0.0, %v1026
      %v1028 = vpop.f32.mrf.mxu0
      %v1029 = vadd.f32 0.0, %v1028
      %1030 = vmatmul.bf16.gmra.mxu0 %v670
      %v1031 = vpop.f32.mrf.mxu0
      %v1032 = vadd.f32 0.0, %v1031
      %v1033 = vpop.f32.mrf.mxu0
      %v1034 = vadd.f32 0.0, %v1033
      %1035 = vmatmul.bf16.gmra.mxu0 %v671
      %v1036 = vpop.f32.mrf.mxu0
      %v1037 = vadd.f32 0.0, %v1036
      %v1038 = vpop.f32.mrf.mxu0
      %v1039 = vadd.f32 0.0, %v1038
      %1040 = vmatmul.bf16.gmra.mxu0 %v672
      %v1041 = vpop.f32.mrf.mxu0
      %v1042 = vadd.f32 0.0, %v1041
      %v1043 = vpop.f32.mrf.mxu0
      %v1044 = vadd.f32 0.0, %v1043
      %1045 = vmatmul.bf16.gmra.mxu0 %v673
      %v1046 = vpop.f32.mrf.mxu0
      %v1047 = vadd.f32 0.0, %v1046
      %v1048 = vpop.f32.mrf.mxu0
      %v1049 = vadd.f32 0.0, %v1048
      %1050 = vmatmul.bf16.gmra.mxu0 %v674
      %v1051 = vpop.f32.mrf.mxu0
      %v1052 = vadd.f32 0.0, %v1051
      %v1053 = vpop.f32.mrf.mxu0
      %v1054 = vadd.f32 0.0, %v1053
      %1055 = vmatmul.bf16.gmra.mxu0 %v675
      %v1056 = vpop.f32.mrf.mxu0
      %v1057 = vadd.f32 0.0, %v1056
      %v1058 = vpop.f32.mrf.mxu0
      %v1059 = vadd.f32 0.0, %v1058
      %1060 = vmatmul.bf16.gmra.mxu0 %v676
      %v1061 = vpop.f32.mrf.mxu0
      %v1062 = vadd.f32 0.0, %v1061
      %v1063 = vpop.f32.mrf.mxu0
      %v1064 = vadd.f32 0.0, %v1063
      %1065 = vmatmul.bf16.gmra.mxu0 %v677
      %v1066 = vpop.f32.mrf.mxu0
      %v1067 = vadd.f32 0.0, %v1066
      %v1068 = vpop.f32.mrf.mxu0
      %v1069 = vadd.f32 0.0, %v1068
      %1070 = vmatmul.bf16.gmra.mxu0 %v678
      %v1071 = vpop.f32.mrf.mxu0
      %v1072 = vadd.f32 0.0, %v1071
      %v1073 = vpop.f32.mrf.mxu0
      %v1074 = vadd.f32 0.0, %v1073
      %1075 = vmatmul.bf16.gmra.mxu0 %v679
      %v1076 = vpop.f32.mrf.mxu0
      %v1077 = vadd.f32 0.0, %v1076
      %v1078 = vpop.f32.mrf.mxu0
      %v1079 = vadd.f32 0.0, %v1078
      %1080 = vmatmul.bf16.gmra.mxu0 %v680
      %v1081 = vpop.f32.mrf.mxu0
      %v1082 = vadd.f32 0.0, %v1081
      %v1083 = vpop.f32.mrf.mxu0
      %v1084 = vadd.f32 0.0, %v1083
      %1085 = vmatmul.bf16.gmra.mxu0 %v681
      %v1086 = vpop.f32.mrf.mxu0
      %v1087 = vadd.f32 0.0, %v1086
      %v1088 = vpop.f32.mrf.mxu0
      %v1089 = vadd.f32 0.0, %v1088
      %1090 = vmatmul.bf16.gmra.mxu0 %v682
      %v1091 = vpop.f32.mrf.mxu0
      %v1092 = vadd.f32 0.0, %v1091
      %v1093 = vpop.f32.mrf.mxu0
      %v1094 = vadd.f32 0.0, %v1093
      %1095 = vmatmul.bf16.gmra.mxu0 %v683
      %v1096 = vpop.f32.mrf.mxu0
      %v1097 = vadd.f32 0.0, %v1096
      %v1098 = vpop.f32.mrf.mxu0
      %v1099 = vadd.f32 0.0, %v1098
      %1100 = vmatmul.bf16.gmra.mxu0 %v684
      %v1101 = vpop.f32.mrf.mxu0
      %v1102 = vadd.f32 0.0, %v1101
      %v1103 = vpop.f32.mrf.mxu0
      %v1104 = vadd.f32 0.0, %v1103
      %1105 = vmatmul.bf16.gmra.mxu0 %v685
      %v1106 = vpop.f32.mrf.mxu0
      %v1107 = vadd.f32 0.0, %v1106
      %v1108 = vpop.f32.mrf.mxu0
      %v1109 = vadd.f32 0.0, %v1108
      %1110 = vmatmul.bf16.gmra.mxu0 %v686
      %v1111 = vpop.f32.mrf.mxu0
      %v1112 = vadd.f32 0.0, %v1111
      %v1113 = vpop.f32.mrf.mxu0
      %v1114 = vadd.f32 0.0, %v1113
      %1115 = vmatmul.bf16.gmra.mxu0 %v687
      %v1116 = vpop.f32.mrf.mxu0
      %v1117 = vadd.f32 0.0, %v1116
      %v1118 = vpop.f32.mrf.mxu0
      %v1119 = vadd.f32 0.0, %v1118
      %1120 = vmatmul.bf16.gmra.mxu0 %v688
      %v1121 = vpop.f32.mrf.mxu0
      %v1122 = vadd.f32 0.0, %v1121
      %v1123 = vpop.f32.mrf.mxu0
      %v1124 = vadd.f32 0.0, %v1123
      %1125 = vmatmul.bf16.gmra.mxu0 %v689
      %v1126 = vpop.f32.mrf.mxu0
      %v1127 = vadd.f32 0.0, %v1126
      %v1128 = vpop.f32.mrf.mxu0
      %v1129 = vadd.f32 0.0, %v1128
      %1130 = vdwg.mxu0
      %v1131 = vmax.f32 %v812, %v822
      %v1132 = vmax.f32 %v814, %v824
      %v1133 = vmax.f32 %v817, %v827
      %v1134 = vmax.f32 %v819, %v829
      %v1135 = vmax.f32 %v832, %v842
      %v1136 = vmax.f32 %v834, %v844
      %v1137 = vmax.f32 %v837, %v847
      %v1138 = vmax.f32 %v839, %v849
      %v1139 = vmax.f32 %v852, %v862
      %v1140 = vmax.f32 %v854, %v864
      %v1141 = vmax.f32 %v857, %v867
      %v1142 = vmax.f32 %v859, %v869
      %v1143 = vmax.f32 %v872, %v882
      %v1144 = vmax.f32 %v874, %v884
      %v1145 = vmax.f32 %v877, %v887
      %v1146 = vmax.f32 %v879, %v889
      %v1147 = vmax.f32 %v892, %v902
      %v1148 = vmax.f32 %v894, %v904
      %v1149 = vmax.f32 %v897, %v907
      %v1150 = vmax.f32 %v899, %v909
      %v1151 = vmax.f32 %v912, %v922
      %v1152 = vmax.f32 %v914, %v924
      %v1153 = vmax.f32 %v917, %v927
      %v1154 = vmax.f32 %v919, %v929
      %v1155 = vmax.f32 %v932, %v942
      %v1156 = vmax.f32 %v934, %v944
      %v1157 = vmax.f32 %v937, %v947
      %v1158 = vmax.f32 %v939, %v949
      %v1159 = vmax.f32 %v952, %v962
      %v1160 = vmax.f32 %v954, %v964
      %v1161 = vmax.f32 %v957, %v967
      %v1162 = vmax.f32 %v959, %v969
      %v1163 = vmax.f32 %v972, %v982
      %v1164 = vmax.f32 %v974, %v984
      %v1165 = vmax.f32 %v977, %v987
      %v1166 = vmax.f32 %v979, %v989
      %v1167 = vmax.f32 %v992, %v1002
      %v1168 = vmax.f32 %v994, %v1004
      %v1169 = vmax.f32 %v997, %v1007
      %v1170 = vmax.f32 %v999, %v1009
      %v1171 = vmax.f32 %v1012, %v1022
      %v1172 = vmax.f32 %v1014, %v1024
      %v1173 = vmax.f32 %v1017, %v1027
      %v1174 = vmax.f32 %v1019, %v1029
      %v1175 = vmax.f32 %v1032, %v1042
      %v1176 = vmax.f32 %v1034, %v1044
      %v1177 = vmax.f32 %v1037, %v1047
      %v1178 = vmax.f32 %v1039, %v1049
      %v1179 = vmax.f32 %v1052, %v1062
      %v1180 = vmax.f32 %v1054, %v1064
      %v1181 = vmax.f32 %v1057, %v1067
      %v1182 = vmax.f32 %v1059, %v1069
      %v1183 = vmax.f32 %v1072, %v1082
      %v1184 = vmax.f32 %v1074, %v1084
      %v1185 = vmax.f32 %v1077, %v1087
      %v1186 = vmax.f32 %v1079, %v1089
      %v1187 = vmax.f32 %v1092, %v1102
      %v1188 = vmax.f32 %v1094, %v1104
      %v1189 = vmax.f32 %v1097, %v1107
      %v1190 = vmax.f32 %v1099, %v1109
      %v1191 = vmax.f32 %v1112, %v1122
      %v1192 = vmax.f32 %v1114, %v1124
      %v1193 = vmax.f32 %v1117, %v1127
      %v1194 = vmax.f32 %v1119, %v1129
      %1195 = vst [vmem:[#allocation4] sm:$0xff] %v1131
      %1196 = vst [vmem:[#allocation4 + $0x8] sm:$0xff] %v1132
      %1197 = vst [vmem:[#allocation4 + $0x10] sm:$0xff] %v1133
      %1198 = vst [vmem:[#allocation4 + $0x18] sm:$0xff] %v1134
      %1199 = vst [vmem:[#allocation4 + $0x20] sm:$0xff] %v1135
      %1200 = vst [vmem:[#allocation4 + $0x28] sm:$0xff] %v1136
      %1201 = vst [vmem:[#allocation4 + $0x30] sm:$0xff] %v1137
      %1202 = vst [vmem:[#allocation4 + $0x38] sm:$0xff] %v1138
      %1203 = vst [vmem:[#allocation4 + $0x40] sm:$0xff] %v1139
      %1204 = vst [vmem:[#allocation4 + $0x48] sm:$0xff] %v1140
      %1205 = vst [vmem:[#allocation4 + $0x50] sm:$0xff] %v1141
      %1206 = vst [vmem:[#allocation4 + $0x58] sm:$0xff] %v1142
      %1207 = vst [vmem:[#allocation4 + $0x60] sm:$0xff] %v1143
      %1208 = vst [vmem:[#allocation4 + $0x68] sm:$0xff] %v1144
      %1209 = vst [vmem:[#allocation4 + $0x70] sm:$0xff] %v1145
      %1210 = vst [vmem:[#allocation4 + $0x78] sm:$0xff] %v1146
      %1211 = vst [vmem:[#allocation4 + $0x80] sm:$0xff] %v1147
      %1212 = vst [vmem:[#allocation4 + $0x88] sm:$0xff] %v1148
      %1213 = vst [vmem:[#allocation4 + $0x90] sm:$0xff] %v1149
      %1214 = vst [vmem:[#allocation4 + $0x98] sm:$0xff] %v1150
      %1215 = vst [vmem:[#allocation4 + $0xa0] sm:$0xff] %v1151
      %1216 = vst [vmem:[#allocation4 + $0xa8] sm:$0xff] %v1152
      %1217 = vst [vmem:[#allocation4 + $0xb0] sm:$0xff] %v1153
      %1218 = vst [vmem:[#allocation4 + $0xb8] sm:$0xff] %v1154
      %1219 = vst [vmem:[#allocation4 + $0xc0] sm:$0xff] %v1155
      %1220 = vst [vmem:[#allocation4 + $0xc8] sm:$0xff] %v1156
      %1221 = vst [vmem:[#allocation4 + $0xd0] sm:$0xff] %v1157
      %1222 = vst [vmem:[#allocation4 + $0xd8] sm:$0xff] %v1158
      %1223 = vst [vmem:[#allocation4 + $0xe0] sm:$0xff] %v1159
      %1224 = vst [vmem:[#allocation4 + $0xe8] sm:$0xff] %v1160
      %1225 = vst [vmem:[#allocation4 + $0xf0] sm:$0xff] %v1161
      %1226 = vst [vmem:[#allocation4 + $0xf8] sm:$0xff] %v1162
      %1227 = vst [vmem:[#allocation4 + $0x100] sm:$0xff] %v1163
      %1228 = vst [vmem:[#allocation4 + $0x108] sm:$0xff] %v1164
      %1229 = vst [vmem:[#allocation4 + $0x110] sm:$0xff] %v1165
      %1230 = vst [vmem:[#allocation4 + $0x118] sm:$0xff] %v1166
      %1231 = vst [vmem:[#allocation4 + $0x120] sm:$0xff] %v1167
      %1232 = vst [vmem:[#allocation4 + $0x128] sm:$0xff] %v1168
      %1233 = vst [vmem:[#allocation4 + $0x130] sm:$0xff] %v1169
      %1234 = vst [vmem:[#allocation4 + $0x138] sm:$0xff] %v1170
      %1235 = vst [vmem:[#allocation4 + $0x140] sm:$0xff] %v1171
      %1236 = vst [vmem:[#allocation4 + $0x148] sm:$0xff] %v1172
      %1237 = vst [vmem:[#allocation4 + $0x150] sm:$0xff] %v1173
      %1238 = vst [vmem:[#allocation4 + $0x158] sm:$0xff] %v1174
      %1239 = vst [vmem:[#allocation4 + $0x160] sm:$0xff] %v1175
      %1240 = vst [vmem:[#allocation4 + $0x168] sm:$0xff] %v1176
      %1241 = vst [vmem:[#allocation4 + $0x170] sm:$0xff] %v1177
      %1242 = vst [vmem:[#allocation4 + $0x178] sm:$0xff] %v1178
      %1243 = vst [vmem:[#allocation4 + $0x180] sm:$0xff] %v1179
      %1244 = vst [vmem:[#allocation4 + $0x188] sm:$0xff] %v1180
      %1245 = vst [vmem:[#allocation4 + $0x190] sm:$0xff] %v1181
      %1246 = vst [vmem:[#allocation4 + $0x198] sm:$0xff] %v1182
      %1247 = vst [vmem:[#allocation4 + $0x1a0] sm:$0xff] %v1183
      %1248 = vst [vmem:[#allocation4 + $0x1a8] sm:$0xff] %v1184
      %1249 = vst [vmem:[#allocation4 + $0x1b0] sm:$0xff] %v1185
      %1250 = vst [vmem:[#allocation4 + $0x1b8] sm:$0xff] %v1186
      %1251 = vst [vmem:[#allocation4 + $0x1c0] sm:$0xff] %v1187
      %1252 = vst [vmem:[#allocation4 + $0x1c8] sm:$0xff] %v1188
      %1253 = vst [vmem:[#allocation4 + $0x1d0] sm:$0xff] %v1189
      %1254 = vst [vmem:[#allocation4 + $0x1d8] sm:$0xff] %v1190
      %1255 = vst [vmem:[#allocation4 + $0x1e0] sm:$0xff] %v1191
      %1256 = vst [vmem:[#allocation4 + $0x1e8] sm:$0xff] %v1192
      %1257 = vst [vmem:[#allocation4 + $0x1f0] sm:$0xff] %v1193
      %1258 = vst [vmem:[#allocation4 + $0x1f8] sm:$0xff] %v1194
      %v1259 = vld [vmem:[#allocation4] ss:$2 sm:$0xff]
      %s1260 = scalar_lea.vmem [#allocation4], 16
      %v1261 = vld [vmem:[%s1260] ss:$2 sm:$0xff]
      %s1262 = scalar_lea.vmem [#allocation4], 32
      %v1263 = vld [vmem:[%s1262] ss:$2 sm:$0xff]
      %s1264 = scalar_lea.vmem [#allocation4], 48
      %v1265 = vld [vmem:[%s1264] ss:$2 sm:$0xff]
      %s1266 = scalar_lea.vmem [#allocation4], 64
      %v1267 = vld [vmem:[%s1266] ss:$2 sm:$0xff]
      %s1268 = scalar_lea.vmem [#allocation4], 80
      %v1269 = vld [vmem:[%s1268] ss:$2 sm:$0xff]
      %s1270 = scalar_lea.vmem [#allocation4], 96
      %v1271 = vld [vmem:[%s1270] ss:$2 sm:$0xff]
      %s1272 = scalar_lea.vmem [#allocation4], 112
      %v1273 = vld [vmem:[%s1272] ss:$2 sm:$0xff]
      %s1274 = scalar_lea.vmem [#allocation4], 128
      %v1275 = vld [vmem:[%s1274] ss:$2 sm:$0xff]
      %s1276 = scalar_lea.vmem [#allocation4], 144
      %v1277 = vld [vmem:[%s1276] ss:$2 sm:$0xff]
      %s1278 = scalar_lea.vmem [#allocation4], 160
      %v1279 = vld [vmem:[%s1278] ss:$2 sm:$0xff]
      %s1280 = scalar_lea.vmem [#allocation4], 176
      %v1281 = vld [vmem:[%s1280] ss:$2 sm:$0xff]
      %s1282 = scalar_lea.vmem [#allocation4], 192
      %v1283 = vld [vmem:[%s1282] ss:$2 sm:$0xff]
      %s1284 = scalar_lea.vmem [#allocation4], 208
      %v1285 = vld [vmem:[%s1284] ss:$2 sm:$0xff]
      %s1286 = scalar_lea.vmem [#allocation4], 224
      %v1287 = vld [vmem:[%s1286] ss:$2 sm:$0xff]
      %s1288 = scalar_lea.vmem [#allocation4], 240
      %v1289 = vld [vmem:[%s1288] ss:$2 sm:$0xff]
      %s1290 = scalar_lea.vmem [#allocation4], 256
      %v1291 = vld [vmem:[%s1290] ss:$2 sm:$0xff]
      %s1292 = scalar_lea.vmem [#allocation4], 272
      %v1293 = vld [vmem:[%s1292] ss:$2 sm:$0xff]
      %s1294 = scalar_lea.vmem [#allocation4], 288
      %v1295 = vld [vmem:[%s1294] ss:$2 sm:$0xff]
      %s1296 = scalar_lea.vmem [#allocation4], 304
      %v1297 = vld [vmem:[%s1296] ss:$2 sm:$0xff]
      %s1298 = scalar_lea.vmem [#allocation4], 320
      %v1299 = vld [vmem:[%s1298] ss:$2 sm:$0xff]
      %s1300 = scalar_lea.vmem [#allocation4], 336
      %v1301 = vld [vmem:[%s1300] ss:$2 sm:$0xff]
      %s1302 = scalar_lea.vmem [#allocation4], 352
      %v1303 = vld [vmem:[%s1302] ss:$2 sm:$0xff]
      %s1304 = scalar_lea.vmem [#allocation4], 368
      %v1305 = vld [vmem:[%s1304] ss:$2 sm:$0xff]
      %s1306 = scalar_lea.vmem [#allocation4], 384
      %v1307 = vld [vmem:[%s1306] ss:$2 sm:$0xff]
      %s1308 = scalar_lea.vmem [#allocation4], 400
      %v1309 = vld [vmem:[%s1308] ss:$2 sm:$0xff]
      %s1310 = scalar_lea.vmem [#allocation4], 416
      %v1311 = vld [vmem:[%s1310] ss:$2 sm:$0xff]
      %s1312 = scalar_lea.vmem [#allocation4], 432
      %v1313 = vld [vmem:[%s1312] ss:$2 sm:$0xff]
      %s1314 = scalar_lea.vmem [#allocation4], 448
      %v1315 = vld [vmem:[%s1314] ss:$2 sm:$0xff]
      %s1316 = scalar_lea.vmem [#allocation4], 464
      %v1317 = vld [vmem:[%s1316] ss:$2 sm:$0xff]
      %s1318 = scalar_lea.vmem [#allocation4], 480
      %v1319 = vld [vmem:[%s1318] ss:$2 sm:$0xff]
      %s1320 = scalar_lea.vmem [#allocation4], 496
      %v1321 = vld [vmem:[%s1320] ss:$2 sm:$0xff]
      %s1322 = scalar_lea.vmem [#allocation4], 1
      %v1323 = vld [vmem:[%s1322] ss:$2 sm:$0xff]
      %s1324 = scalar_lea.vmem [#allocation4], 17
      %v1325 = vld [vmem:[%s1324] ss:$2 sm:$0xff]
      %s1326 = scalar_lea.vmem [#allocation4], 33
      %v1327 = vld [vmem:[%s1326] ss:$2 sm:$0xff]
      %s1328 = scalar_lea.vmem [#allocation4], 49
      %v1329 = vld [vmem:[%s1328] ss:$2 sm:$0xff]
      %s1330 = scalar_lea.vmem [#allocation4], 65
      %v1331 = vld [vmem:[%s1330] ss:$2 sm:$0xff]
      %s1332 = scalar_lea.vmem [#allocation4], 81
      %v1333 = vld [vmem:[%s1332] ss:$2 sm:$0xff]
      %s1334 = scalar_lea.vmem [#allocation4], 97
      %v1335 = vld [vmem:[%s1334] ss:$2 sm:$0xff]
      %s1336 = scalar_lea.vmem [#allocation4], 113
      %v1337 = vld [vmem:[%s1336] ss:$2 sm:$0xff]
      %s1338 = scalar_lea.vmem [#allocation4], 129
      %v1339 = vld [vmem:[%s1338] ss:$2 sm:$0xff]
      %s1340 = scalar_lea.vmem [#allocation4], 145
      %v1341 = vld [vmem:[%s1340] ss:$2 sm:$0xff]
      %s1342 = scalar_lea.vmem [#allocation4], 161
      %v1343 = vld [vmem:[%s1342] ss:$2 sm:$0xff]
      %s1344 = scalar_lea.vmem [#allocation4], 177
      %v1345 = vld [vmem:[%s1344] ss:$2 sm:$0xff]
      %s1346 = scalar_lea.vmem [#allocation4], 193
      %v1347 = vld [vmem:[%s1346] ss:$2 sm:$0xff]
      %s1348 = scalar_lea.vmem [#allocation4], 209
      %v1349 = vld [vmem:[%s1348] ss:$2 sm:$0xff]
      %s1350 = scalar_lea.vmem [#allocation4], 225
      %v1351 = vld [vmem:[%s1350] ss:$2 sm:$0xff]
      %s1352 = scalar_lea.vmem [#allocation4], 241
      %v1353 = vld [vmem:[%s1352] ss:$2 sm:$0xff]
      %s1354 = scalar_lea.vmem [#allocation4], 257
      %v1355 = vld [vmem:[%s1354] ss:$2 sm:$0xff]
      %s1356 = scalar_lea.vmem [#allocation4], 273
      %v1357 = vld [vmem:[%s1356] ss:$2 sm:$0xff]
      %s1358 = scalar_lea.vmem [#allocation4], 289
      %v1359 = vld [vmem:[%s1358] ss:$2 sm:$0xff]
      %s1360 = scalar_lea.vmem [#allocation4], 305
      %v1361 = vld [vmem:[%s1360] ss:$2 sm:$0xff]
      %s1362 = scalar_lea.vmem [#allocation4], 321
      %v1363 = vld [vmem:[%s1362] ss:$2 sm:$0xff]
      %s1364 = scalar_lea.vmem [#allocation4], 337
      %v1365 = vld [vmem:[%s1364] ss:$2 sm:$0xff]
      %s1366 = scalar_lea.vmem [#allocation4], 353
      %v1367 = vld [vmem:[%s1366] ss:$2 sm:$0xff]
      %s1368 = scalar_lea.vmem [#allocation4], 369
      %v1369 = vld [vmem:[%s1368] ss:$2 sm:$0xff]
      %s1370 = scalar_lea.vmem [#allocation4], 385
      %v1371 = vld [vmem:[%s1370] ss:$2 sm:$0xff]
      %s1372 = scalar_lea.vmem [#allocation4], 401
      %v1373 = vld [vmem:[%s1372] ss:$2 sm:$0xff]
      %s1374 = scalar_lea.vmem [#allocation4], 417
      %v1375 = vld [vmem:[%s1374] ss:$2 sm:$0xff]
      %s1376 = scalar_lea.vmem [#allocation4], 433
      %v1377 = vld [vmem:[%s1376] ss:$2 sm:$0xff]
      %s1378 = scalar_lea.vmem [#allocation4], 449
      %v1379 = vld [vmem:[%s1378] ss:$2 sm:$0xff]
      %s1380 = scalar_lea.vmem [#allocation4], 465
      %v1381 = vld [vmem:[%s1380] ss:$2 sm:$0xff]
      %s1382 = scalar_lea.vmem [#allocation4], 481
      %v1383 = vld [vmem:[%s1382] ss:$2 sm:$0xff]
      %s1384 = scalar_lea.vmem [#allocation4], 497
      %v1385 = vld [vmem:[%s1384] ss:$2 sm:$0xff]
      %v1386 = vmax.f32 %v1259, %v1323
      %v1387 = vmax.f32 %v1261, %v1325
      %v1388 = vmax.f32 %v1263, %v1327
      %v1389 = vmax.f32 %v1265, %v1329
      %v1390 = vmax.f32 %v1267, %v1331
      %v1391 = vmax.f32 %v1269, %v1333
      %v1392 = vmax.f32 %v1271, %v1335
      %v1393 = vmax.f32 %v1273, %v1337
      %v1394 = vmax.f32 %v1275, %v1339
      %v1395 = vmax.f32 %v1277, %v1341
      %v1396 = vmax.f32 %v1279, %v1343
      %v1397 = vmax.f32 %v1281, %v1345
      %v1398 = vmax.f32 %v1283, %v1347
      %v1399 = vmax.f32 %v1285, %v1349
      %v1400 = vmax.f32 %v1287, %v1351
      %v1401 = vmax.f32 %v1289, %v1353
      %v1402 = vmax.f32 %v1291, %v1355
      %v1403 = vmax.f32 %v1293, %v1357
      %v1404 = vmax.f32 %v1295, %v1359
      %v1405 = vmax.f32 %v1297, %v1361
      %v1406 = vmax.f32 %v1299, %v1363
      %v1407 = vmax.f32 %v1301, %v1365
      %v1408 = vmax.f32 %v1303, %v1367
      %v1409 = vmax.f32 %v1305, %v1369
      %v1410 = vmax.f32 %v1307, %v1371
      %v1411 = vmax.f32 %v1309, %v1373
      %v1412 = vmax.f32 %v1311, %v1375
      %v1413 = vmax.f32 %v1313, %v1377
      %v1414 = vmax.f32 %v1315, %v1379
      %v1415 = vmax.f32 %v1317, %v1381
      %v1416 = vmax.f32 %v1319, %v1383
      %v1417 = vmax.f32 %v1321, %v1385
      %v1418 = vld [vmem:[%s2] sm:$0x1]
      %v1420 = vperm.slane %v1418, 0
      %v1422 = vadd.f32 %v1386, %v1420
      %v1423 = vadd.f32 %v1387, %v1420
      %v1424 = vadd.f32 %v1388, %v1420
      %v1425 = vadd.f32 %v1389, %v1420
      %v1426 = vadd.f32 %v1390, %v1420
      %v1427 = vadd.f32 %v1391, %v1420
      %v1428 = vadd.f32 %v1392, %v1420
      %v1429 = vadd.f32 %v1393, %v1420
      %v1430 = vadd.f32 %v1394, %v1420
      %v1431 = vadd.f32 %v1395, %v1420
      %v1432 = vadd.f32 %v1396, %v1420
      %v1433 = vadd.f32 %v1397, %v1420
      %v1434 = vadd.f32 %v1398, %v1420
      %v1435 = vadd.f32 %v1399, %v1420
      %v1436 = vadd.f32 %v1400, %v1420
      %v1437 = vadd.f32 %v1401, %v1420
      %v1438 = vadd.f32 %v1402, %v1420
      %v1439 = vadd.f32 %v1403, %v1420
      %v1440 = vadd.f32 %v1404, %v1420
      %v1441 = vadd.f32 %v1405, %v1420
      %v1442 = vadd.f32 %v1406, %v1420
      %v1443 = vadd.f32 %v1407, %v1420
      %v1444 = vadd.f32 %v1408, %v1420
      %v1445 = vadd.f32 %v1409, %v1420
      %v1446 = vadd.f32 %v1410, %v1420
      %v1447 = vadd.f32 %v1411, %v1420
      %v1448 = vadd.f32 %v1412, %v1420
      %v1449 = vadd.f32 %v1413, %v1420
      %v1450 = vadd.f32 %v1414, %v1420
      %v1451 = vadd.f32 %v1415, %v1420
      %v1452 = vadd.f32 %v1416, %v1420
      %v1453 = vadd.f32 %v1417, %v1420
      %v1454 = vmax.f32 %v1422, 0.0
      %v1455 = vmax.f32 %v1423, 0.0
      %v1456 = vmax.f32 %v1424, 0.0
      %v1457 = vmax.f32 %v1425, 0.0
      %v1458 = vmax.f32 %v1426, 0.0
      %v1459 = vmax.f32 %v1427, 0.0
      %v1460 = vmax.f32 %v1428, 0.0
      %v1461 = vmax.f32 %v1429, 0.0
      %v1462 = vmax.f32 %v1430, 0.0
      %v1463 = vmax.f32 %v1431, 0.0
      %v1464 = vmax.f32 %v1432, 0.0
      %v1465 = vmax.f32 %v1433, 0.0
      %v1466 = vmax.f32 %v1434, 0.0
      %v1467 = vmax.f32 %v1435, 0.0
      %v1468 = vmax.f32 %v1436, 0.0
      %v1469 = vmax.f32 %v1437, 0.0
      %v1470 = vmax.f32 %v1438, 0.0
      %v1471 = vmax.f32 %v1439, 0.0
      %v1472 = vmax.f32 %v1440, 0.0
      %v1473 = vmax.f32 %v1441, 0.0
      %v1474 = vmax.f32 %v1442, 0.0
      %v1475 = vmax.f32 %v1443, 0.0
      %v1476 = vmax.f32 %v1444, 0.0
      %v1477 = vmax.f32 %v1445, 0.0
      %v1478 = vmax.f32 %v1446, 0.0
      %v1479 = vmax.f32 %v1447, 0.0
      %v1480 = vmax.f32 %v1448, 0.0
      %v1481 = vmax.f32 %v1449, 0.0
      %v1482 = vmax.f32 %v1450, 0.0
      %v1483 = vmax.f32 %v1451, 0.0
      %v1484 = vmax.f32 %v1452, 0.0
      %v1485 = vmax.f32 %v1453, 0.0
      %v1486 = vpack.c.bf16 %v1454, %v1454
      %v1487 = vpack.c.bf16 %v1455, %v1455
      %v1488 = vpack.c.bf16 %v1456, %v1456
      %v1489 = vpack.c.bf16 %v1457, %v1457
      %v1490 = vpack.c.bf16 %v1458, %v1458
      %v1491 = vpack.c.bf16 %v1459, %v1459
      %v1492 = vpack.c.bf16 %v1460, %v1460
      %v1493 = vpack.c.bf16 %v1461, %v1461
      %v1494 = vpack.c.bf16 %v1462, %v1462
      %v1495 = vpack.c.bf16 %v1463, %v1463
      %v1496 = vpack.c.bf16 %v1464, %v1464
      %v1497 = vpack.c.bf16 %v1465, %v1465
      %v1498 = vpack.c.bf16 %v1466, %v1466
      %v1499 = vpack.c.bf16 %v1467, %v1467
      %v1500 = vpack.c.bf16 %v1468, %v1468
      %v1501 = vpack.c.bf16 %v1469, %v1469
      %v1502 = vpack.c.bf16 %v1470, %v1470
      %v1503 = vpack.c.bf16 %v1471, %v1471
      %v1504 = vpack.c.bf16 %v1472, %v1472
      %v1505 = vpack.c.bf16 %v1473, %v1473
      %v1506 = vpack.c.bf16 %v1474, %v1474
      %v1507 = vpack.c.bf16 %v1475, %v1475
      %v1508 = vpack.c.bf16 %v1476, %v1476
      %v1509 = vpack.c.bf16 %v1477, %v1477
      %v1510 = vpack.c.bf16 %v1478, %v1478
      %v1511 = vpack.c.bf16 %v1479, %v1479
      %v1512 = vpack.c.bf16 %v1480, %v1480
      %v1513 = vpack.c.bf16 %v1481, %v1481
      %v1514 = vpack.c.bf16 %v1482, %v1482
      %v1515 = vpack.c.bf16 %v1483, %v1483
      %v1516 = vpack.c.bf16 %v1484, %v1484
      %v1517 = vpack.c.bf16 %v1485, %v1485
      %1518 = vst [vmem:[#allocation2] sm:$0xf] 0
      %1519 = vst [vmem:[#allocation2 + $0x4] sm:$0xf] 0
      %1520 = vst [vmem:[#allocation2 + $0x8] sm:$0xf] 0
      %1521 = vst [vmem:[#allocation2 + $0xc] sm:$0xf] 0
      %1522 = vst [vmem:[#allocation2 + $0x10] sm:$0xf] 0
      %1523 = vst [vmem:[#allocation2 + $0x14] sm:$0xf] 0
      %1524 = vst [vmem:[#allocation2 + $0x18] sm:$0xf] 0
      %1525 = vst [vmem:[#allocation2 + $0x1c] sm:$0xf] 0
      %1526 = vst [vmem:[#allocation2 + $0x20] sm:$0xf] 0
      %1527 = vst [vmem:[#allocation2 + $0x24] sm:$0xf] 0
      %1528 = vst [vmem:[#allocation2 + $0x28] sm:$0xf] 0
      %1529 = vst [vmem:[#allocation2 + $0x2c] sm:$0xf] 0
      %1530 = vst [vmem:[#allocation2 + $0x30] sm:$0xf] 0
      %1531 = vst [vmem:[#allocation2 + $0x34] sm:$0xf] 0
      %1532 = vst [vmem:[#allocation2 + $0x38] sm:$0xf] 0
      %1533 = vst [vmem:[#allocation2 + $0x3c] sm:$0xf] 0
      %1534 = vst [vmem:[#allocation2 + $0x40] sm:$0xf] 0
      %1535 = vst [vmem:[#allocation2 + $0x44] sm:$0xf] 0
      %1536 = vst [vmem:[#allocation2 + $0x48] sm:$0xf] 0
      %1537 = vst [vmem:[#allocation2 + $0x4c] sm:$0xf] 0
      %1538 = vst [vmem:[#allocation2 + $0x50] sm:$0xf] 0
      %1539 = vst [vmem:[#allocation2 + $0x54] sm:$0xf] 0
      %1540 = vst [vmem:[#allocation2 + $0x58] sm:$0xf] 0
      %1541 = vst [vmem:[#allocation2 + $0x5c] sm:$0xf] 0
      %1542 = vst [vmem:[#allocation2 + $0x60] sm:$0xf] 0
      %1543 = vst [vmem:[#allocation2 + $0x64] sm:$0xf] 0
      %1544 = vst [vmem:[#allocation2 + $0x68] sm:$0xf] 0
      %1545 = vst [vmem:[#allocation2 + $0x6c] sm:$0xf] 0
      %1546 = vst [vmem:[#allocation2 + $0x70] sm:$0xf] 0
      %1547 = vst [vmem:[#allocation2 + $0x74] sm:$0xf] 0
      %1548 = vst [vmem:[#allocation2 + $0x78] sm:$0xf] 0
      %1549 = vst [vmem:[#allocation2 + $0x7c] sm:$0xf] 0
      %1550 = vst [vmem:[#allocation2 + $0x80] sm:$0xf] 0
      %1551 = vst [vmem:[#allocation2 + $0x84] sm:$0xf] 0
      %1552 = vst [vmem:[#allocation2 + $0x88] sm:$0xf] 0
      %1553 = vst [vmem:[#allocation2 + $0x8c] sm:$0xf] 0
      %1554 = vst [vmem:[#allocation2 + $0x90] sm:$0xf] 0
      %1555 = vst [vmem:[#allocation2 + $0x94] sm:$0xf] 0
      %1556 = vst [vmem:[#allocation2 + $0x98] sm:$0xf] 0
      %1557 = vst [vmem:[#allocation2 + $0x9c] sm:$0xf] 0
      %1558 = vst [vmem:[#allocation2 + $0xa0] sm:$0xf] 0
      %1559 = vst [vmem:[#allocation2 + $0xa4] sm:$0xf] 0
      %1560 = vst [vmem:[#allocation2 + $0xa8] sm:$0xf] 0
      %1561 = vst [vmem:[#allocation2 + $0xac] sm:$0xf] 0
      %1562 = vst [vmem:[#allocation2 + $0xb0] sm:$0xf] 0
      %1563 = vst [vmem:[#allocation2 + $0xb4] sm:$0xf] 0
      %1564 = vst [vmem:[#allocation2 + $0xb8] sm:$0xf] 0
      %1565 = vst [vmem:[#allocation2 + $0xbc] sm:$0xf] 0
      %1566 = vst [vmem:[#allocation2 + $0xc0] sm:$0xf] 0
      %1567 = vst [vmem:[#allocation2 + $0xc4] sm:$0xf] 0
      %1568 = vst [vmem:[#allocation2 + $0xc8] sm:$0xf] 0
      %1569 = vst [vmem:[#allocation2 + $0xcc] sm:$0xf] 0
      %1570 = vst [vmem:[#allocation2 + $0xd0] sm:$0xf] 0
      %1571 = vst [vmem:[#allocation2 + $0xd4] sm:$0xf] 0
      %1572 = vst [vmem:[#allocation2 + $0xd8] sm:$0xf] 0
      %1573 = vst [vmem:[#allocation2 + $0xdc] sm:$0xf] 0
      %1574 = vst [vmem:[#allocation2 + $0xe0] sm:$0xf] 0
      %1575 = vst [vmem:[#allocation2 + $0xe4] sm:$0xf] 0
      %1576 = vst [vmem:[#allocation2 + $0xe8] sm:$0xf] 0
      %1577 = vst [vmem:[#allocation2 + $0xec] sm:$0xf] 0
      %1578 = vst [vmem:[#allocation2 + $0xf0] sm:$0xf] 0
      %1579 = vst [vmem:[#allocation2 + $0xf4] sm:$0xf] 0
      %1580 = vst [vmem:[#allocation2 + $0xf8] sm:$0xf] 0
      %1581 = vst [vmem:[#allocation2 + $0xfc] sm:$0xf] 0
      %1582 = vst [vmem:[#allocation2 + $0x100] sm:$0xf] 0
      %1583 = vst [vmem:[#allocation2 + $0x104] sm:$0xf] 0
      %1584 = vst [vmem:[#allocation2 + $0x108] sm:$0xf] 0
      %1585 = vst [vmem:[#allocation2 + $0x10c] sm:$0xf] 0
      %1586 = vst [vmem:[#allocation2 + $0x110] sm:$0xf] 0
      %1587 = vst [vmem:[#allocation2 + $0x114] sm:$0xf] 0
      %1588 = vst [vmem:[#allocation2 + $0x118] sm:$0xf] 0
      %1589 = vst [vmem:[#allocation2 + $0x11c] sm:$0xf] 0
      %s1590 = scalar_lea.vmem [#allocation2], 16
      %1591 = vst [vmem:[%s1590 + $0x4] sm:$0xf] %v1486
      %1592 = vst [vmem:[%s1590 + $0x8] sm:$0xf] %v1487
      %1593 = vst [vmem:[%s1590 + $0x14] sm:$0xf] %v1488
      %1594 = vst [vmem:[%s1590 + $0x18] sm:$0xf] %v1489
      %1595 = vst [vmem:[%s1590 + $0x24] sm:$0xf] %v1490
      %1596 = vst [vmem:[%s1590 + $0x28] sm:$0xf] %v1491
      %1597 = vst [vmem:[%s1590 + $0x34] sm:$0xf] %v1492
      %1598 = vst [vmem:[%s1590 + $0x38] sm:$0xf] %v1493
      %1599 = vst [vmem:[%s1590 + $0x44] sm:$0xf] %v1494
      %1600 = vst [vmem:[%s1590 + $0x48] sm:$0xf] %v1495
      %1601 = vst [vmem:[%s1590 + $0x54] sm:$0xf] %v1496
      %1602 = vst [vmem:[%s1590 + $0x58] sm:$0xf] %v1497
      %1603 = vst [vmem:[%s1590 + $0x64] sm:$0xf] %v1498
      %1604 = vst [vmem:[%s1590 + $0x68] sm:$0xf] %v1499
      %1605 = vst [vmem:[%s1590 + $0x74] sm:$0xf] %v1500
      %1606 = vst [vmem:[%s1590 + $0x78] sm:$0xf] %v1501
      %1607 = vst [vmem:[%s1590 + $0x84] sm:$0xf] %v1502
      %1608 = vst [vmem:[%s1590 + $0x88] sm:$0xf] %v1503
      %1609 = vst [vmem:[%s1590 + $0x94] sm:$0xf] %v1504
      %1610 = vst [vmem:[%s1590 + $0x98] sm:$0xf] %v1505
      %1611 = vst [vmem:[%s1590 + $0xa4] sm:$0xf] %v1506
      %1612 = vst [vmem:[%s1590 + $0xa8] sm:$0xf] %v1507
      %1613 = vst [vmem:[%s1590 + $0xb4] sm:$0xf] %v1508
      %1614 = vst [vmem:[%s1590 + $0xb8] sm:$0xf] %v1509
      %1615 = vst [vmem:[%s1590 + $0xc4] sm:$0xf] %v1510
      %1616 = vst [vmem:[%s1590 + $0xc8] sm:$0xf] %v1511
      %1617 = vst [vmem:[%s1590 + $0xd4] sm:$0xf] %v1512
      %1618 = vst [vmem:[%s1590 + $0xd8] sm:$0xf] %v1513
      %1619 = vst [vmem:[%s1590 + $0xe4] sm:$0xf] %v1514
      %1620 = vst [vmem:[%s1590 + $0xe8] sm:$0xf] %v1515
      %1621 = vst [vmem:[%s1590 + $0xf4] sm:$0xf] %v1516
      %1622 = vst [vmem:[%s1590 + $0xf8] sm:$0xf] %v1517
      %v1623 = vld [vmem:[#allocation2] sm:$0x8]
      %v1624 = vld [vmem:[#allocation2 + $0x4] sm:$0xf]
      %v1625 = vld [vmem:[#allocation2 + $0x8] sm:$0xf]
      %v1626 = vld [vmem:[#allocation2 + $0x10] sm:$0x8]
      %v1627 = vld [vmem:[#allocation2 + $0x14] sm:$0xf]
      %v1628 = vld [vmem:[#allocation2 + $0x18] sm:$0xf]
      %v1629 = vld [vmem:[#allocation2 + $0x20] sm:$0x8]
      %v1630 = vld [vmem:[#allocation2 + $0x24] sm:$0xf]
      %v1631 = vld [vmem:[#allocation2 + $0x28] sm:$0xf]
      %v1632 = vld [vmem:[#allocation2 + $0x30] sm:$0x8]
      %v1633 = vld [vmem:[#allocation2 + $0x34] sm:$0xf]
      %v1634 = vld [vmem:[#allocation2 + $0x38] sm:$0xf]
      %v1635 = vld [vmem:[#allocation2 + $0x40] sm:$0x8]
      %v1636 = vld [vmem:[#allocation2 + $0x44] sm:$0xf]
      %v1637 = vld [vmem:[#allocation2 + $0x48] sm:$0xf]
      %v1638 = vld [vmem:[#allocation2 + $0x50] sm:$0x8]
      %v1639 = vld [vmem:[#allocation2 + $0x54] sm:$0xf]
      %v1640 = vld [vmem:[#allocation2 + $0x58] sm:$0xf]
      %v1641 = vld [vmem:[#allocation2 + $0x60] sm:$0x8]
      %v1642 = vld [vmem:[#allocation2 + $0x64] sm:$0xf]
      %v1643 = vld [vmem:[#allocation2 + $0x68] sm:$0xf]
      %v1644 = vld [vmem:[#allocation2 + $0x70] sm:$0x8]
      %v1645 = vld [vmem:[#allocation2 + $0x74] sm:$0xf]
      %v1646 = vld [vmem:[#allocation2 + $0x78] sm:$0xf]
      %v1647 = vld [vmem:[#allocation2 + $0x80] sm:$0x8]
      %v1648 = vld [vmem:[#allocation2 + $0x84] sm:$0xf]
      %v1649 = vld [vmem:[#allocation2 + $0x88] sm:$0xf]
      %v1650 = vld [vmem:[#allocation2 + $0x90] sm:$0x8]
      %v1651 = vld [vmem:[#allocation2 + $0x94] sm:$0xf]
      %v1652 = vld [vmem:[#allocation2 + $0x98] sm:$0xf]
      %v1653 = vld [vmem:[#allocation2 + $0xa0] sm:$0x8]
      %v1654 = vld [vmem:[#allocation2 + $0xa4] sm:$0xf]
      %v1655 = vld [vmem:[#allocation2 + $0xa8] sm:$0xf]
      %v1656 = vld [vmem:[#allocation2 + $0xb0] sm:$0x8]
      %v1657 = vld [vmem:[#allocation2 + $0xb4] sm:$0xf]
      %v1658 = vld [vmem:[#allocation2 + $0xb8] sm:$0xf]
      %v1659 = vld [vmem:[#allocation2 + $0xc0] sm:$0x8]
      %v1660 = vld [vmem:[#allocation2 + $0xc4] sm:$0xf]
      %v1661 = vld [vmem:[#allocation2 + $0xc8] sm:$0xf]
      %v1662 = vld [vmem:[#allocation2 + $0xd0] sm:$0x8]
      %v1663 = vld [vmem:[#allocation2 + $0xd4] sm:$0xf]
      %v1664 = vld [vmem:[#allocation2 + $0xd8] sm:$0xf]
      %v1665 = vld [vmem:[#allocation2 + $0xe0] sm:$0x8]
      %v1666 = vld [vmem:[#allocation2 + $0xe4] sm:$0xf]
      %v1667 = vld [vmem:[#allocation2 + $0xe8] sm:$0xf]
      %v1668 = vld [vmem:[#allocation2 + $0xf0] sm:$0x8]
      %v1669 = vld [vmem:[#allocation2 + $0xf4] sm:$0xf]
      %v1670 = vld [vmem:[#allocation2 + $0xf8] sm:$0xf]
      %vm1671 = vsmask.f32 256
      %vm1672 = vsmask.f32 4368
      %vm1673 = vmor %vm1671, %vm1672
      %v1675 = vshrl.u32 %v1623, 16
      %v1677 = vrot.slane %v1675, 7
      %v1678 = vrot.slane %v1677, 4
      %v1680 = vshrl.u32 %v1624, 16
      %v1682 = vrot.slane %v1680, 7
      %v1683 = vshll.u32 %v1624, 16
      %v1685 = vor.u32 %v1682, %v1683
      %v1686 = vsel %vm1673, %v1678, %v1685
      %v1687 = vrot.slane %v1682, 4
      %v1689 = vshrl.u32 %v1625, 16
      %v1691 = vrot.slane %v1689, 7
      %v1692 = vshll.u32 %v1625, 16
      %v1694 = vor.u32 %v1691, %v1692
      %v1695 = vsel %vm1673, %v1687, %v1694
      %v1697 = vshrl.u32 %v1626, 16
      %v1699 = vrot.slane %v1697, 7
      %v1700 = vrot.slane %v1699, 4
      %v1702 = vshrl.u32 %v1627, 16
      %v1704 = vrot.slane %v1702, 7
      %v1705 = vshll.u32 %v1627, 16
      %v1707 = vor.u32 %v1704, %v1705
      %v1708 = vsel %vm1673, %v1700, %v1707
      %v1709 = vrot.slane %v1704, 4
      %v1711 = vshrl.u32 %v1628, 16
      %v1713 = vrot.slane %v1711, 7
      %v1714 = vshll.u32 %v1628, 16
      %v1716 = vor.u32 %v1713, %v1714
      %v1717 = vsel %vm1673, %v1709, %v1716
      %v1719 = vshrl.u32 %v1629, 16
      %v1721 = vrot.slane %v1719, 7
      %v1722 = vrot.slane %v1721, 4
      %v1724 = vshrl.u32 %v1630, 16
      %v1726 = vrot.slane %v1724, 7
      %v1727 = vshll.u32 %v1630, 16
      %v1729 = vor.u32 %v1726, %v1727
      %v1730 = vsel %vm1673, %v1722, %v1729
      %v1731 = vrot.slane %v1726, 4
      %v1733 = vshrl.u32 %v1631, 16
      %v1735 = vrot.slane %v1733, 7
      %v1736 = vshll.u32 %v1631, 16
      %v1738 = vor.u32 %v1735, %v1736
      %v1739 = vsel %vm1673, %v1731, %v1738
      %v1741 = vshrl.u32 %v1632, 16
      %v1743 = vrot.slane %v1741, 7
      %v1744 = vrot.slane %v1743, 4
      %v1746 = vshrl.u32 %v1633, 16
      %v1748 = vrot.slane %v1746, 7
      %v1749 = vshll.u32 %v1633, 16
      %v1751 = vor.u32 %v1748, %v1749
      %v1752 = vsel %vm1673, %v1744, %v1751
      %v1753 = vrot.slane %v1748, 4
      %v1755 = vshrl.u32 %v1634, 16
      %v1757 = vrot.slane %v1755, 7
      %v1758 = vshll.u32 %v1634, 16
      %v1760 = vor.u32 %v1757, %v1758
      %v1761 = vsel %vm1673, %v1753, %v1760
      %v1763 = vshrl.u32 %v1635, 16
      %v1765 = vrot.slane %v1763, 7
      %v1766 = vrot.slane %v1765, 4
      %v1768 = vshrl.u32 %v1636, 16
      %v1770 = vrot.slane %v1768, 7
      %v1771 = vshll.u32 %v1636, 16
      %v1773 = vor.u32 %v1770, %v1771
      %v1774 = vsel %vm1673, %v1766, %v1773
      %v1775 = vrot.slane %v1770, 4
      %v1777 = vshrl.u32 %v1637, 16
      %v1779 = vrot.slane %v1777, 7
      %v1780 = vshll.u32 %v1637, 16
      %v1782 = vor.u32 %v1779, %v1780
      %v1783 = vsel %vm1673, %v1775, %v1782
      %v1785 = vshrl.u32 %v1638, 16
      %v1787 = vrot.slane %v1785, 7
      %v1788 = vrot.slane %v1787, 4
      %v1790 = vshrl.u32 %v1639, 16
      %v1792 = vrot.slane %v1790, 7
      %v1793 = vshll.u32 %v1639, 16
      %v1795 = vor.u32 %v1792, %v1793
      %v1796 = vsel %vm1673, %v1788, %v1795
      %v1797 = vrot.slane %v1792, 4
      %v1799 = vshrl.u32 %v1640, 16
      %v1801 = vrot.slane %v1799, 7
      %v1802 = vshll.u32 %v1640, 16
      %v1804 = vor.u32 %v1801, %v1802
      %v1805 = vsel %vm1673, %v1797, %v1804
      %v1807 = vshrl.u32 %v1641, 16
      %v1809 = vrot.slane %v1807, 7
      %v1810 = vrot.slane %v1809, 4
      %v1812 = vshrl.u32 %v1642, 16
      %v1814 = vrot.slane %v1812, 7
      %v1815 = vshll.u32 %v1642, 16
      %v1817 = vor.u32 %v1814, %v1815
      %v1818 = vsel %vm1673, %v1810, %v1817
      %v1819 = vrot.slane %v1814, 4
      %v1821 = vshrl.u32 %v1643, 16
      %v1823 = vrot.slane %v1821, 7
      %v1824 = vshll.u32 %v1643, 16
      %v1826 = vor.u32 %v1823, %v1824
      %v1827 = vsel %vm1673, %v1819, %v1826
      %v1829 = vshrl.u32 %v1644, 16
      %v1831 = vrot.slane %v1829, 7
      %v1832 = vrot.slane %v1831, 4
      %v1834 = vshrl.u32 %v1645, 16
      %v1836 = vrot.slane %v1834, 7
      %v1837 = vshll.u32 %v1645, 16
      %v1839 = vor.u32 %v1836, %v1837
      %v1840 = vsel %vm1673, %v1832, %v1839
      %v1841 = vrot.slane %v1836, 4
      %v1843 = vshrl.u32 %v1646, 16
      %v1845 = vrot.slane %v1843, 7
      %v1846 = vshll.u32 %v1646, 16
      %v1848 = vor.u32 %v1845, %v1846
      %v1849 = vsel %vm1673, %v1841, %v1848
      %v1851 = vshrl.u32 %v1647, 16
      %v1853 = vrot.slane %v1851, 7
      %v1854 = vrot.slane %v1853, 4
      %v1856 = vshrl.u32 %v1648, 16
      %v1858 = vrot.slane %v1856, 7
      %v1859 = vshll.u32 %v1648, 16
      %v1861 = vor.u32 %v1858, %v1859
      %v1862 = vsel %vm1673, %v1854, %v1861
      %v1863 = vrot.slane %v1858, 4
      %v1865 = vshrl.u32 %v1649, 16
      %v1867 = vrot.slane %v1865, 7
      %v1868 = vshll.u32 %v1649, 16
      %v1870 = vor.u32 %v1867, %v1868
      %v1871 = vsel %vm1673, %v1863, %v1870
      %v1873 = vshrl.u32 %v1650, 16
      %v1875 = vrot.slane %v1873, 7
      %v1876 = vrot.slane %v1875, 4
      %v1878 = vshrl.u32 %v1651, 16
      %v1880 = vrot.slane %v1878, 7
      %v1881 = vshll.u32 %v1651, 16
      %v1883 = vor.u32 %v1880, %v1881
      %v1884 = vsel %vm1673, %v1876, %v1883
      %v1885 = vrot.slane %v1880, 4
      %v1887 = vshrl.u32 %v1652, 16
      %v1889 = vrot.slane %v1887, 7
      %v1890 = vshll.u32 %v1652, 16
      %v1892 = vor.u32 %v1889, %v1890
      %v1893 = vsel %vm1673, %v1885, %v1892
      %v1895 = vshrl.u32 %v1653, 16
      %v1897 = vrot.slane %v1895, 7
      %v1898 = vrot.slane %v1897, 4
      %v1900 = vshrl.u32 %v1654, 16
      %v1902 = vrot.slane %v1900, 7
      %v1903 = vshll.u32 %v1654, 16
      %v1905 = vor.u32 %v1902, %v1903
      %v1906 = vsel %vm1673, %v1898, %v1905
      %v1907 = vrot.slane %v1902, 4
      %v1909 = vshrl.u32 %v1655, 16
      %v1911 = vrot.slane %v1909, 7
      %v1912 = vshll.u32 %v1655, 16
      %v1914 = vor.u32 %v1911, %v1912
      %v1915 = vsel %vm1673, %v1907, %v1914
      %v1917 = vshrl.u32 %v1656, 16
      %v1919 = vrot.slane %v1917, 7
      %v1920 = vrot.slane %v1919, 4
      %v1922 = vshrl.u32 %v1657, 16
      %v1924 = vrot.slane %v1922, 7
      %v1925 = vshll.u32 %v1657, 16
      %v1927 = vor.u32 %v1924, %v1925
      %v1928 = vsel %vm1673, %v1920, %v1927
      %v1929 = vrot.slane %v1924, 4
      %v1931 = vshrl.u32 %v1658, 16
      %v1933 = vrot.slane %v1931, 7
      %v1934 = vshll.u32 %v1658, 16
      %v1936 = vor.u32 %v1933, %v1934
      %v1937 = vsel %vm1673, %v1929, %v1936
      %v1939 = vshrl.u32 %v1659, 16
      %v1941 = vrot.slane %v1939, 7
      %v1942 = vrot.slane %v1941, 4
      %v1944 = vshrl.u32 %v1660, 16
      %v1946 = vrot.slane %v1944, 7
      %v1947 = vshll.u32 %v1660, 16
      %v1949 = vor.u32 %v1946, %v1947
      %v1950 = vsel %vm1673, %v1942, %v1949
      %v1951 = vrot.slane %v1946, 4
      %v1953 = vshrl.u32 %v1661, 16
      %v1955 = vrot.slane %v1953, 7
      %v1956 = vshll.u32 %v1661, 16
      %v1958 = vor.u32 %v1955, %v1956
      %v1959 = vsel %vm1673, %v1951, %v1958
      %v1961 = vshrl.u32 %v1662, 16
      %v1963 = vrot.slane %v1961, 7
      %v1964 = vrot.slane %v1963, 4
      %v1966 = vshrl.u32 %v1663, 16
      %v1968 = vrot.slane %v1966, 7
      %v1969 = vshll.u32 %v1663, 16
      %v1971 = vor.u32 %v1968, %v1969
      %v1972 = vsel %vm1673, %v1964, %v1971
      %v1973 = vrot.slane %v1968, 4
      %v1975 = vshrl.u32 %v1664, 16
      %v1977 = vrot.slane %v1975, 7
      %v1978 = vshll.u32 %v1664, 16
      %v1980 = vor.u32 %v1977, %v1978
      %v1981 = vsel %vm1673, %v1973, %v1980
      %v1983 = vshrl.u32 %v1665, 16
      %v1985 = vrot.slane %v1983, 7
      %v1986 = vrot.slane %v1985, 4
      %v1988 = vshrl.u32 %v1666, 16
      %v1990 = vrot.slane %v1988, 7
      %v1991 = vshll.u32 %v1666, 16
      %v1993 = vor.u32 %v1990, %v1991
      %v1994 = vsel %vm1673, %v1986, %v1993
      %v1995 = vrot.slane %v1990, 4
      %v1997 = vshrl.u32 %v1667, 16
      %v1999 = vrot.slane %v1997, 7
      %v2000 = vshll.u32 %v1667, 16
      %v2002 = vor.u32 %v1999, %v2000
      %v2003 = vsel %vm1673, %v1995, %v2002
      %v2005 = vshrl.u32 %v1668, 16
      %v2007 = vrot.slane %v2005, 7
      %v2008 = vrot.slane %v2007, 4
      %v2010 = vshrl.u32 %v1669, 16
      %v2012 = vrot.slane %v2010, 7
      %v2013 = vshll.u32 %v1669, 16
      %v2015 = vor.u32 %v2012, %v2013
      %v2016 = vsel %vm1673, %v2008, %v2015
      %v2017 = vrot.slane %v2012, 4
      %v2019 = vshrl.u32 %v1670, 16
      %v2021 = vrot.slane %v2019, 7
      %v2022 = vshll.u32 %v1670, 16
      %v2024 = vor.u32 %v2021, %v2022
      %v2025 = vsel %vm1673, %v2017, %v2024
      %2058 = vst [vmem:[#allocation3] sm:$0xf] %v1686
      %2059 = vst [vmem:[#allocation3 + $0x24] sm:$0xf] %v1695
      %2060 = vst [vmem:[#allocation3 + $0x48] sm:$0xf] %v1708
      %2061 = vst [vmem:[#allocation3 + $0x6c] sm:$0xf] %v1717
      %2062 = vst [vmem:[#allocation3 + $0x90] sm:$0xf] %v1730
      %2063 = vst [vmem:[#allocation3 + $0xb4] sm:$0xf] %v1739
      %2064 = vst [vmem:[#allocation3 + $0xd8] sm:$0xf] %v1752
      %2065 = vst [vmem:[#allocation3 + $0xfc] sm:$0xf] %v1761
      %2066 = vst [vmem:[#allocation3 + $0x120] sm:$0xf] %v1774
      %2067 = vst [vmem:[#allocation3 + $0x144] sm:$0xf] %v1783
      %2068 = vst [vmem:[#allocation3 + $0x168] sm:$0xf] %v1796
      %2069 = vst [vmem:[#allocation3 + $0x18c] sm:$0xf] %v1805
      %2070 = vst [vmem:[#allocation3 + $0x1b0] sm:$0xf] %v1818
      %2071 = vst [vmem:[#allocation3 + $0x1d4] sm:$0xf] %v1827
      %2072 = vst [vmem:[#allocation3 + $0x1f8] sm:$0xf] %v1840
      %2073 = vst [vmem:[#allocation3 + $0x21c] sm:$0xf] %v1849
      %2074 = vst [vmem:[#allocation3 + $0x240] sm:$0xf] %v1862
      %2075 = vst [vmem:[#allocation3 + $0x264] sm:$0xf] %v1871
      %2076 = vst [vmem:[#allocation3 + $0x288] sm:$0xf] %v1884
      %2077 = vst [vmem:[#allocation3 + $0x2ac] sm:$0xf] %v1893
      %2078 = vst [vmem:[#allocation3 + $0x2d0] sm:$0xf] %v1906
      %2079 = vst [vmem:[#allocation3 + $0x2f4] sm:$0xf] %v1915
      %2080 = vst [vmem:[#allocation3 + $0x318] sm:$0xf] %v1928
      %2081 = vst [vmem:[#allocation3 + $0x33c] sm:$0xf] %v1937
      %2082 = vst [vmem:[#allocation3 + $0x360] sm:$0xf] %v1950
      %2083 = vst [vmem:[#allocation3 + $0x384] sm:$0xf] %v1959
      %2084 = vst [vmem:[#allocation3 + $0x3a8] sm:$0xf] %v1972
      %2085 = vst [vmem:[#allocation3 + $0x3cc] sm:$0xf] %v1981
      %2086 = vst [vmem:[#allocation3 + $0x3f0] sm:$0xf] %v1994
      %2087 = vst [vmem:[#allocation3 + $0x414] sm:$0xf] %v2003
      %2088 = vst [vmem:[#allocation3 + $0x438] sm:$0xf] %v2016
      %2089 = vst [vmem:[#allocation3 + $0x45c] sm:$0xf] %v2025
      %v2090 = vld [vmem:[#allocation2 + $0x4] sm:$0xf]
      %v2091 = vld [vmem:[#allocation2 + $0x8] sm:$0xf]
      %v2092 = vld [vmem:[#allocation2 + $0x14] sm:$0xf]
      %v2093 = vld [vmem:[#allocation2 + $0x18] sm:$0xf]
      %v2094 = vld [vmem:[#allocation2 + $0x24] sm:$0xf]
      %v2095 = vld [vmem:[#allocation2 + $0x28] sm:$0xf]
      %v2096 = vld [vmem:[#allocation2 + $0x34] sm:$0xf]
      %v2097 = vld [vmem:[#allocation2 + $0x38] sm:$0xf]
      %v2098 = vld [vmem:[#allocation2 + $0x44] sm:$0xf]
      %v2099 = vld [vmem:[#allocation2 + $0x48] sm:$0xf]
      %v2100 = vld [vmem:[#allocation2 + $0x54] sm:$0xf]
      %v2101 = vld [vmem:[#allocation2 + $0x58] sm:$0xf]
      %v2102 = vld [vmem:[#allocation2 + $0x64] sm:$0xf]
      %v2103 = vld [vmem:[#allocation2 + $0x68] sm:$0xf]
      %v2104 = vld [vmem:[#allocation2 + $0x74] sm:$0xf]
      %v2105 = vld [vmem:[#allocation2 + $0x78] sm:$0xf]
      %v2106 = vld [vmem:[#allocation2 + $0x84] sm:$0xf]
      %v2107 = vld [vmem:[#allocation2 + $0x88] sm:$0xf]
      %v2108 = vld [vmem:[#allocation2 + $0x94] sm:$0xf]
      %v2109 = vld [vmem:[#allocation2 + $0x98] sm:$0xf]
      %v2110 = vld [vmem:[#allocation2 + $0xa4] sm:$0xf]
      %v2111 = vld [vmem:[#allocation2 + $0xa8] sm:$0xf]
      %v2112 = vld [vmem:[#allocation2 + $0xb4] sm:$0xf]
      %v2113 = vld [vmem:[#allocation2 + $0xb8] sm:$0xf]
      %v2114 = vld [vmem:[#allocation2 + $0xc4] sm:$0xf]
      %v2115 = vld [vmem:[#allocation2 + $0xc8] sm:$0xf]
      %v2116 = vld [vmem:[#allocation2 + $0xd4] sm:$0xf]
      %v2117 = vld [vmem:[#allocation2 + $0xd8] sm:$0xf]
      %v2118 = vld [vmem:[#allocation2 + $0xe4] sm:$0xf]
      %v2119 = vld [vmem:[#allocation2 + $0xe8] sm:$0xf]
      %v2120 = vld [vmem:[#allocation2 + $0xf4] sm:$0xf]
      %v2121 = vld [vmem:[#allocation2 + $0xf8] sm:$0xf]
      %2122 = vst [vmem:[#allocation3 + $0x4] sm:$0xf] %v2090
      %2123 = vst [vmem:[#allocation3 + $0x28] sm:$0xf] %v2091
      %2124 = vst [vmem:[#allocation3 + $0x4c] sm:$0xf] %v2092
      %2125 = vst [vmem:[#allocation3 + $0x70] sm:$0xf] %v2093
      %2126 = vst [vmem:[#allocation3 + $0x94] sm:$0xf] %v2094
      %2127 = vst [vmem:[#allocation3 + $0xb8] sm:$0xf] %v2095
      %2128 = vst [vmem:[#allocation3 + $0xdc] sm:$0xf] %v2096
      %2129 = vst [vmem:[#allocation3 + $0x100] sm:$0xf] %v2097
      %2130 = vst [vmem:[#allocation3 + $0x124] sm:$0xf] %v2098
      %2131 = vst [vmem:[#allocation3 + $0x148] sm:$0xf] %v2099
      %2132 = vst [vmem:[#allocation3 + $0x16c] sm:$0xf] %v2100
      %2133 = vst [vmem:[#allocation3 + $0x190] sm:$0xf] %v2101
      %2134 = vst [vmem:[#allocation3 + $0x1b4] sm:$0xf] %v2102
      %2135 = vst [vmem:[#allocation3 + $0x1d8] sm:$0xf] %v2103
      %2136 = vst [vmem:[#allocation3 + $0x1fc] sm:$0xf] %v2104
      %2137 = vst [vmem:[#allocation3 + $0x220] sm:$0xf] %v2105
      %2138 = vst [vmem:[#allocation3 + $0x244] sm:$0xf] %v2106
      %2139 = vst [vmem:[#allocation3 + $0x268] sm:$0xf] %v2107
      %2140 = vst [vmem:[#allocation3 + $0x28c] sm:$0xf] %v2108
      %2141 = vst [vmem:[#allocation3 + $0x2b0] sm:$0xf] %v2109
      %2142 = vst [vmem:[#allocation3 + $0x2d4] sm:$0xf] %v2110
      %2143 = vst [vmem:[#allocation3 + $0x2f8] sm:$0xf] %v2111
      %2144 = vst [vmem:[#allocation3 + $0x31c] sm:$0xf] %v2112
      %2145 = vst [vmem:[#allocation3 + $0x340] sm:$0xf] %v2113
      %2146 = vst [vmem:[#allocation3 + $0x364] sm:$0xf] %v2114
      %2147 = vst [vmem:[#allocation3 + $0x388] sm:$0xf] %v2115
      %2148 = vst [vmem:[#allocation3 + $0x3ac] sm:$0xf] %v2116
      %2149 = vst [vmem:[#allocation3 + $0x3d0] sm:$0xf] %v2117
      %2150 = vst [vmem:[#allocation3 + $0x3f4] sm:$0xf] %v2118
      %2151 = vst [vmem:[#allocation3 + $0x418] sm:$0xf] %v2119
      %2152 = vst [vmem:[#allocation3 + $0x43c] sm:$0xf] %v2120
      %2153 = vst [vmem:[#allocation3 + $0x460] sm:$0xf] %v2121
      %v2154 = vld [vmem:[#allocation2 + $0x4] sm:$0xf]
      %v2155 = vld [vmem:[#allocation2 + $0x8] sm:$0xf]
      %v2156 = vld [vmem:[#allocation2 + $0xc] sm:$0x1]
      %v2157 = vld [vmem:[#allocation2 + $0x14] sm:$0xf]
      %v2158 = vld [vmem:[#allocation2 + $0x18] sm:$0xf]
      %v2159 = vld [vmem:[#allocation2 + $0x1c] sm:$0x1]
      %v2160 = vld [vmem:[#allocation2 + $0x24] sm:$0xf]
      %v2161 = vld [vmem:[#allocation2 + $0x28] sm:$0xf]
      %v2162 = vld [vmem:[#allocation2 + $0x2c] sm:$0x1]
      %v2163 = vld [vmem:[#allocation2 + $0x34] sm:$0xf]
      %v2164 = vld [vmem:[#allocation2 + $0x38] sm:$0xf]
      %v2165 = vld [vmem:[#allocation2 + $0x3c] sm:$0x1]
      %v2166 = vld [vmem:[#allocation2 + $0x44] sm:$0xf]
      %v2167 = vld [vmem:[#allocation2 + $0x48] sm:$0xf]
      %v2168 = vld [vmem:[#allocation2 + $0x4c] sm:$0x1]
      %v2169 = vld [vmem:[#allocation2 + $0x54] sm:$0xf]
      %v2170 = vld [vmem:[#allocation2 + $0x58] sm:$0xf]
      %v2171 = vld [vmem:[#allocation2 + $0x5c] sm:$0x1]
      %v2172 = vld [vmem:[#allocation2 + $0x64] sm:$0xf]
      %v2173 = vld [vmem:[#allocation2 + $0x68] sm:$0xf]
      %v2174 = vld [vmem:[#allocation2 + $0x6c] sm:$0x1]
      %v2175 = vld [vmem:[#allocation2 + $0x74] sm:$0xf]
      %v2176 = vld [vmem:[#allocation2 + $0x78] sm:$0xf]
      %v2177 = vld [vmem:[#allocation2 + $0x7c] sm:$0x1]
      %v2178 = vld [vmem:[#allocation2 + $0x84] sm:$0xf]
      %v2179 = vld [vmem:[#allocation2 + $0x88] sm:$0xf]
      %v2180 = vld [vmem:[#allocation2 + $0x8c] sm:$0x1]
      %v2181 = vld [vmem:[#allocation2 + $0x94] sm:$0xf]
      %v2182 = vld [vmem:[#allocation2 + $0x98] sm:$0xf]
      %v2183 = vld [vmem:[#allocation2 + $0x9c] sm:$0x1]
      %v2184 = vld [vmem:[#allocation2 + $0xa4] sm:$0xf]
      %v2185 = vld [vmem:[#allocation2 + $0xa8] sm:$0xf]
      %v2186 = vld [vmem:[#allocation2 + $0xac] sm:$0x1]
      %v2187 = vld [vmem:[#allocation2 + $0xb4] sm:$0xf]
      %v2188 = vld [vmem:[#allocation2 + $0xb8] sm:$0xf]
      %v2189 = vld [vmem:[#allocation2 + $0xbc] sm:$0x1]
      %v2190 = vld [vmem:[#allocation2 + $0xc4] sm:$0xf]
      %v2191 = vld [vmem:[#allocation2 + $0xc8] sm:$0xf]
      %v2192 = vld [vmem:[#allocation2 + $0xcc] sm:$0x1]
      %v2193 = vld [vmem:[#allocation2 + $0xd4] sm:$0xf]
      %v2194 = vld [vmem:[#allocation2 + $0xd8] sm:$0xf]
      %v2195 = vld [vmem:[#allocation2 + $0xdc] sm:$0x1]
      %v2196 = vld [vmem:[#allocation2 + $0xe4] sm:$0xf]
      %v2197 = vld [vmem:[#allocation2 + $0xe8] sm:$0xf]
      %v2198 = vld [vmem:[#allocation2 + $0xec] sm:$0x1]
      %v2199 = vld [vmem:[#allocation2 + $0xf4] sm:$0xf]
      %v2200 = vld [vmem:[#allocation2 + $0xf8] sm:$0xf]
      %v2201 = vld [vmem:[#allocation2 + $0xfc] sm:$0x1]
      %vm2202 = vsmask.f32 3328
      %vm2203 = vsmask.f32 7440
      %vm2204 = vmor %vm2202, %vm2203
      %v2206 = vshrl.u32 %v2154, 16
      %v2208 = vrot.slane %v2206, 4
      %v2209 = vshll.u32 %v2154, 16
      %v2211 = vrot.slane %v2209, 5
      %v2212 = vor.u32 %v2208, %v2211
      %v2213 = vrot.slane %v2212, 4
      %v2215 = vshll.u32 %v2155, 16
      %v2217 = vrot.slane %v2215, 5
      %v2218 = vsel %vm2204, %v2213, %v2217
      %v2219 = vshrl.u32 %v2155, 16
      %v2221 = vrot.slane %v2219, 4
      %v2222 = vor.u32 %v2221, %v2217
      %v2223 = vrot.slane %v2222, 4
      %v2225 = vshll.u32 %v2156, 16
      %v2227 = vrot.slane %v2225, 5
      %v2228 = vsel %vm2204, %v2223, %v2227
      %v2230 = vshrl.u32 %v2157, 16
      %v2232 = vrot.slane %v2230, 4
      %v2233 = vshll.u32 %v2157, 16
      %v2235 = vrot.slane %v2233, 5
      %v2236 = vor.u32 %v2232, %v2235
      %v2237 = vrot.slane %v2236, 4
      %v2239 = vshll.u32 %v2158, 16
      %v2241 = vrot.slane %v2239, 5
      %v2242 = vsel %vm2204, %v2237, %v2241
      %v2243 = vshrl.u32 %v2158, 16
      %v2245 = vrot.slane %v2243, 4
      %v2246 = vor.u32 %v2245, %v2241
      %v2247 = vrot.slane %v2246, 4
      %v2249 = vshll.u32 %v2159, 16
      %v2251 = vrot.slane %v2249, 5
      %v2252 = vsel %vm2204, %v2247, %v2251
      %v2254 = vshrl.u32 %v2160, 16
      %v2256 = vrot.slane %v2254, 4
      %v2257 = vshll.u32 %v2160, 16
      %v2259 = vrot.slane %v2257, 5
      %v2260 = vor.u32 %v2256, %v2259
      %v2261 = vrot.slane %v2260, 4
      %v2263 = vshll.u32 %v2161, 16
      %v2265 = vrot.slane %v2263, 5
      %v2266 = vsel %vm2204, %v2261, %v2265
      %v2267 = vshrl.u32 %v2161, 16
      %v2269 = vrot.slane %v2267, 4
      %v2270 = vor.u32 %v2269, %v2265
      %v2271 = vrot.slane %v2270, 4
      %v2273 = vshll.u32 %v2162, 16
      %v2275 = vrot.slane %v2273, 5
      %v2276 = vsel %vm2204, %v2271, %v2275
      %v2278 = vshrl.u32 %v2163, 16
      %v2280 = vrot.slane %v2278, 4
      %v2281 = vshll.u32 %v2163, 16
      %v2283 = vrot.slane %v2281, 5
      %v2284 = vor.u32 %v2280, %v2283
      %v2285 = vrot.slane %v2284, 4
      %v2287 = vshll.u32 %v2164, 16
      %v2289 = vrot.slane %v2287, 5
      %v2290 = vsel %vm2204, %v2285, %v2289
      %v2291 = vshrl.u32 %v2164, 16
      %v2293 = vrot.slane %v2291, 4
      %v2294 = vor.u32 %v2293, %v2289
      %v2295 = vrot.slane %v2294, 4
      %v2297 = vshll.u32 %v2165, 16
      %v2299 = vrot.slane %v2297, 5
      %v2300 = vsel %vm2204, %v2295, %v2299
      %v2302 = vshrl.u32 %v2166, 16
      %v2304 = vrot.slane %v2302, 4
      %v2305 = vshll.u32 %v2166, 16
      %v2307 = vrot.slane %v2305, 5
      %v2308 = vor.u32 %v2304, %v2307
      %v2309 = vrot.slane %v2308, 4
      %v2311 = vshll.u32 %v2167, 16
      %v2313 = vrot.slane %v2311, 5
      %v2314 = vsel %vm2204, %v2309, %v2313
      %v2315 = vshrl.u32 %v2167, 16
      %v2317 = vrot.slane %v2315, 4
      %v2318 = vor.u32 %v2317, %v2313
      %v2319 = vrot.slane %v2318, 4
      %v2321 = vshll.u32 %v2168, 16
      %v2323 = vrot.slane %v2321, 5
      %v2324 = vsel %vm2204, %v2319, %v2323
      %v2326 = vshrl.u32 %v2169, 16
      %v2328 = vrot.slane %v2326, 4
      %v2329 = vshll.u32 %v2169, 16
      %v2331 = vrot.slane %v2329, 5
      %v2332 = vor.u32 %v2328, %v2331
      %v2333 = vrot.slane %v2332, 4
      %v2335 = vshll.u32 %v2170, 16
      %v2337 = vrot.slane %v2335, 5
      %v2338 = vsel %vm2204, %v2333, %v2337
      %v2339 = vshrl.u32 %v2170, 16
      %v2341 = vrot.slane %v2339, 4
      %v2342 = vor.u32 %v2341, %v2337
      %v2343 = vrot.slane %v2342, 4
      %v2345 = vshll.u32 %v2171, 16
      %v2347 = vrot.slane %v2345, 5
      %v2348 = vsel %vm2204, %v2343, %v2347
      %v2350 = vshrl.u32 %v2172, 16
      %v2352 = vrot.slane %v2350, 4
      %v2353 = vshll.u32 %v2172, 16
      %v2355 = vrot.slane %v2353, 5
      %v2356 = vor.u32 %v2352, %v2355
      %v2357 = vrot.slane %v2356, 4
      %v2359 = vshll.u32 %v2173, 16
      %v2361 = vrot.slane %v2359, 5
      %v2362 = vsel %vm2204, %v2357, %v2361
      %v2363 = vshrl.u32 %v2173, 16
      %v2365 = vrot.slane %v2363, 4
      %v2366 = vor.u32 %v2365, %v2361
      %v2367 = vrot.slane %v2366, 4
      %v2369 = vshll.u32 %v2174, 16
      %v2371 = vrot.slane %v2369, 5
      %v2372 = vsel %vm2204, %v2367, %v2371
      %v2374 = vshrl.u32 %v2175, 16
      %v2376 = vrot.slane %v2374, 4
      %v2377 = vshll.u32 %v2175, 16
      %v2379 = vrot.slane %v2377, 5
      %v2380 = vor.u32 %v2376, %v2379
      %v2381 = vrot.slane %v2380, 4
      %v2383 = vshll.u32 %v2176, 16
      %v2385 = vrot.slane %v2383, 5
      %v2386 = vsel %vm2204, %v2381, %v2385
      %v2387 = vshrl.u32 %v2176, 16
      %v2389 = vrot.slane %v2387, 4
      %v2390 = vor.u32 %v2389, %v2385
      %v2391 = vrot.slane %v2390, 4
      %v2393 = vshll.u32 %v2177, 16
      %v2395 = vrot.slane %v2393, 5
      %v2396 = vsel %vm2204, %v2391, %v2395
      %v2398 = vshrl.u32 %v2178, 16
      %v2400 = vrot.slane %v2398, 4
      %v2401 = vshll.u32 %v2178, 16
      %v2403 = vrot.slane %v2401, 5
      %v2404 = vor.u32 %v2400, %v2403
      %v2405 = vrot.slane %v2404, 4
      %v2407 = vshll.u32 %v2179, 16
      %v2409 = vrot.slane %v2407, 5
      %v2410 = vsel %vm2204, %v2405, %v2409
      %v2411 = vshrl.u32 %v2179, 16
      %v2413 = vrot.slane %v2411, 4
      %v2414 = vor.u32 %v2413, %v2409
      %v2415 = vrot.slane %v2414, 4
      %v2417 = vshll.u32 %v2180, 16
      %v2419 = vrot.slane %v2417, 5
      %v2420 = vsel %vm2204, %v2415, %v2419
      %v2422 = vshrl.u32 %v2181, 16
      %v2424 = vrot.slane %v2422, 4
      %v2425 = vshll.u32 %v2181, 16
      %v2427 = vrot.slane %v2425, 5
      %v2428 = vor.u32 %v2424, %v2427
      %v2429 = vrot.slane %v2428, 4
      %v2431 = vshll.u32 %v2182, 16
      %v2433 = vrot.slane %v2431, 5
      %v2434 = vsel %vm2204, %v2429, %v2433
      %v2435 = vshrl.u32 %v2182, 16
      %v2437 = vrot.slane %v2435, 4
      %v2438 = vor.u32 %v2437, %v2433
      %v2439 = vrot.slane %v2438, 4
      %v2441 = vshll.u32 %v2183, 16
      %v2443 = vrot.slane %v2441, 5
      %v2444 = vsel %vm2204, %v2439, %v2443
      %v2446 = vshrl.u32 %v2184, 16
      %v2448 = vrot.slane %v2446, 4
      %v2449 = vshll.u32 %v2184, 16
      %v2451 = vrot.slane %v2449, 5
      %v2452 = vor.u32 %v2448, %v2451
      %v2453 = vrot.slane %v2452, 4
      %v2455 = vshll.u32 %v2185, 16
      %v2457 = vrot.slane %v2455, 5
      %v2458 = vsel %vm2204, %v2453, %v2457
      %v2459 = vshrl.u32 %v2185, 16
      %v2461 = vrot.slane %v2459, 4
      %v2462 = vor.u32 %v2461, %v2457
      %v2463 = vrot.slane %v2462, 4
      %v2465 = vshll.u32 %v2186, 16
      %v2467 = vrot.slane %v2465, 5
      %v2468 = vsel %vm2204, %v2463, %v2467
      %v2470 = vshrl.u32 %v2187, 16
      %v2472 = vrot.slane %v2470, 4
      %v2473 = vshll.u32 %v2187, 16
      %v2475 = vrot.slane %v2473, 5
      %v2476 = vor.u32 %v2472, %v2475
      %v2477 = vrot.slane %v2476, 4
      %v2479 = vshll.u32 %v2188, 16
      %v2481 = vrot.slane %v2479, 5
      %v2482 = vsel %vm2204, %v2477, %v2481
      %v2483 = vshrl.u32 %v2188, 16
      %v2485 = vrot.slane %v2483, 4
      %v2486 = vor.u32 %v2485, %v2481
      %v2487 = vrot.slane %v2486, 4
      %v2489 = vshll.u32 %v2189, 16
      %v2491 = vrot.slane %v2489, 5
      %v2492 = vsel %vm2204, %v2487, %v2491
      %v2494 = vshrl.u32 %v2190, 16
      %v2496 = vrot.slane %v2494, 4
      %v2497 = vshll.u32 %v2190, 16
      %v2499 = vrot.slane %v2497, 5
      %v2500 = vor.u32 %v2496, %v2499
      %v2501 = vrot.slane %v2500, 4
      %v2503 = vshll.u32 %v2191, 16
      %v2505 = vrot.slane %v2503, 5
      %v2506 = vsel %vm2204, %v2501, %v2505
      %v2507 = vshrl.u32 %v2191, 16
      %v2509 = vrot.slane %v2507, 4
      %v2510 = vor.u32 %v2509, %v2505
      %v2511 = vrot.slane %v2510, 4
      %v2513 = vshll.u32 %v2192, 16
      %v2515 = vrot.slane %v2513, 5
      %v2516 = vsel %vm2204, %v2511, %v2515
      %v2518 = vshrl.u32 %v2193, 16
      %v2520 = vrot.slane %v2518, 4
      %v2521 = vshll.u32 %v2193, 16
      %v2523 = vrot.slane %v2521, 5
      %v2524 = vor.u32 %v2520, %v2523
      %v2525 = vrot.slane %v2524, 4
      %v2527 = vshll.u32 %v2194, 16
      %v2529 = vrot.slane %v2527, 5
      %v2530 = vsel %vm2204, %v2525, %v2529
      %v2531 = vshrl.u32 %v2194, 16
      %v2533 = vrot.slane %v2531, 4
      %v2534 = vor.u32 %v2533, %v2529
      %v2535 = vrot.slane %v2534, 4
      %v2537 = vshll.u32 %v2195, 16
      %v2539 = vrot.slane %v2537, 5
      %v2540 = vsel %vm2204, %v2535, %v2539
      %v2542 = vshrl.u32 %v2196, 16
      %v2544 = vrot.slane %v2542, 4
      %v2545 = vshll.u32 %v2196, 16
      %v2547 = vrot.slane %v2545, 5
      %v2548 = vor.u32 %v2544, %v2547
      %v2549 = vrot.slane %v2548, 4
      %v2551 = vshll.u32 %v2197, 16
      %v2553 = vrot.slane %v2551, 5
      %v2554 = vsel %vm2204, %v2549, %v2553
      %v2555 = vshrl.u32 %v2197, 16
      %v2557 = vrot.slane %v2555, 4
      %v2558 = vor.u32 %v2557, %v2553
      %v2559 = vrot.slane %v2558, 4
      %v2561 = vshll.u32 %v2198, 16
      %v2563 = vrot.slane %v2561, 5
      %v2564 = vsel %vm2204, %v2559, %v2563
      %v2566 = vshrl.u32 %v2199, 16
      %v2568 = vrot.slane %v2566, 4
      %v2569 = vshll.u32 %v2199, 16
      %v2571 = vrot.slane %v2569, 5
      %v2572 = vor.u32 %v2568, %v2571
      %v2573 = vrot.slane %v2572, 4
      %v2575 = vshll.u32 %v2200, 16
      %v2577 = vrot.slane %v2575, 5
      %v2578 = vsel %vm2204, %v2573, %v2577
      %v2579 = vshrl.u32 %v2200, 16
      %v2581 = vrot.slane %v2579, 4
      %v2582 = vor.u32 %v2581, %v2577
      %v2583 = vrot.slane %v2582, 4
      %v2585 = vshll.u32 %v2201, 16
      %v2587 = vrot.slane %v2585, 5
      %v2588 = vsel %vm2204, %v2583, %v2587
      %2621 = vst [vmem:[#allocation3 + $0x8] sm:$0xf] %v2218
      %2622 = vst [vmem:[#allocation3 + $0x2c] sm:$0xf] %v2228
      %2623 = vst [vmem:[#allocation3 + $0x50] sm:$0xf] %v2242
      %2624 = vst [vmem:[#allocation3 + $0x74] sm:$0xf] %v2252
      %2625 = vst [vmem:[#allocation3 + $0x98] sm:$0xf] %v2266
      %2626 = vst [vmem:[#allocation3 + $0xbc] sm:$0xf] %v2276
      %2627 = vst [vmem:[#allocation3 + $0xe0] sm:$0xf] %v2290
      %2628 = vst [vmem:[#allocation3 + $0x104] sm:$0xf] %v2300
      %2629 = vst [vmem:[#allocation3 + $0x128] sm:$0xf] %v2314
      %2630 = vst [vmem:[#allocation3 + $0x14c] sm:$0xf] %v2324
      %2631 = vst [vmem:[#allocation3 + $0x170] sm:$0xf] %v2338
      %2632 = vst [vmem:[#allocation3 + $0x194] sm:$0xf] %v2348
      %2633 = vst [vmem:[#allocation3 + $0x1b8] sm:$0xf] %v2362
      %2634 = vst [vmem:[#allocation3 + $0x1dc] sm:$0xf] %v2372
      %2635 = vst [vmem:[#allocation3 + $0x200] sm:$0xf] %v2386
      %2636 = vst [vmem:[#allocation3 + $0x224] sm:$0xf] %v2396
      %2637 = vst [vmem:[#allocation3 + $0x248] sm:$0xf] %v2410
      %2638 = vst [vmem:[#allocation3 + $0x26c] sm:$0xf] %v2420
      %2639 = vst [vmem:[#allocation3 + $0x290] sm:$0xf] %v2434
      %2640 = vst [vmem:[#allocation3 + $0x2b4] sm:$0xf] %v2444
      %2641 = vst [vmem:[#allocation3 + $0x2d8] sm:$0xf] %v2458
      %2642 = vst [vmem:[#allocation3 + $0x2fc] sm:$0xf] %v2468
      %2643 = vst [vmem:[#allocation3 + $0x320] sm:$0xf] %v2482
      %2644 = vst [vmem:[#allocation3 + $0x344] sm:$0xf] %v2492
      %2645 = vst [vmem:[#allocation3 + $0x368] sm:$0xf] %v2506
      %2646 = vst [vmem:[#allocation3 + $0x38c] sm:$0xf] %v2516
      %2647 = vst [vmem:[#allocation3 + $0x3b0] sm:$0xf] %v2530
      %2648 = vst [vmem:[#allocation3 + $0x3d4] sm:$0xf] %v2540
      %2649 = vst [vmem:[#allocation3 + $0x3f8] sm:$0xf] %v2554
      %2650 = vst [vmem:[#allocation3 + $0x41c] sm:$0xf] %v2564
      %2651 = vst [vmem:[#allocation3 + $0x440] sm:$0xf] %v2578
      %2652 = vst [vmem:[#allocation3 + $0x464] sm:$0xf] %v2588
      %v2653 = vld [vmem:[%s1590] sm:$0x8]
      %v2654 = vld [vmem:[%s1590 + $0x4] sm:$0xf]
      %v2655 = vld [vmem:[%s1590 + $0x8] sm:$0xf]
      %v2656 = vld [vmem:[%s1590 + $0x10] sm:$0x8]
      %v2657 = vld [vmem:[%s1590 + $0x14] sm:$0xf]
      %v2658 = vld [vmem:[%s1590 + $0x18] sm:$0xf]
      %v2659 = vld [vmem:[%s1590 + $0x20] sm:$0x8]
      %v2660 = vld [vmem:[%s1590 + $0x24] sm:$0xf]
      %v2661 = vld [vmem:[%s1590 + $0x28] sm:$0xf]
      %v2662 = vld [vmem:[%s1590 + $0x30] sm:$0x8]
      %v2663 = vld [vmem:[%s1590 + $0x34] sm:$0xf]
      %v2664 = vld [vmem:[%s1590 + $0x38] sm:$0xf]
      %v2665 = vld [vmem:[%s1590 + $0x40] sm:$0x8]
      %v2666 = vld [vmem:[%s1590 + $0x44] sm:$0xf]
      %v2667 = vld [vmem:[%s1590 + $0x48] sm:$0xf]
      %v2668 = vld [vmem:[%s1590 + $0x50] sm:$0x8]
      %v2669 = vld [vmem:[%s1590 + $0x54] sm:$0xf]
      %v2670 = vld [vmem:[%s1590 + $0x58] sm:$0xf]
      %v2671 = vld [vmem:[%s1590 + $0x60] sm:$0x8]
      %v2672 = vld [vmem:[%s1590 + $0x64] sm:$0xf]
      %v2673 = vld [vmem:[%s1590 + $0x68] sm:$0xf]
      %v2674 = vld [vmem:[%s1590 + $0x70] sm:$0x8]
      %v2675 = vld [vmem:[%s1590 + $0x74] sm:$0xf]
      %v2676 = vld [vmem:[%s1590 + $0x78] sm:$0xf]
      %v2677 = vld [vmem:[%s1590 + $0x80] sm:$0x8]
      %v2678 = vld [vmem:[%s1590 + $0x84] sm:$0xf]
      %v2679 = vld [vmem:[%s1590 + $0x88] sm:$0xf]
      %v2680 = vld [vmem:[%s1590 + $0x90] sm:$0x8]
      %v2681 = vld [vmem:[%s1590 + $0x94] sm:$0xf]
      %v2682 = vld [vmem:[%s1590 + $0x98] sm:$0xf]
      %v2683 = vld [vmem:[%s1590 + $0xa0] sm:$0x8]
      %v2684 = vld [vmem:[%s1590 + $0xa4] sm:$0xf]
      %v2685 = vld [vmem:[%s1590 + $0xa8] sm:$0xf]
      %v2686 = vld [vmem:[%s1590 + $0xb0] sm:$0x8]
      %v2687 = vld [vmem:[%s1590 + $0xb4] sm:$0xf]
      %v2688 = vld [vmem:[%s1590 + $0xb8] sm:$0xf]
      %v2689 = vld [vmem:[%s1590 + $0xc0] sm:$0x8]
      %v2690 = vld [vmem:[%s1590 + $0xc4] sm:$0xf]
      %v2691 = vld [vmem:[%s1590 + $0xc8] sm:$0xf]
      %v2692 = vld [vmem:[%s1590 + $0xd0] sm:$0x8]
      %v2693 = vld [vmem:[%s1590 + $0xd4] sm:$0xf]
      %v2694 = vld [vmem:[%s1590 + $0xd8] sm:$0xf]
      %v2695 = vld [vmem:[%s1590 + $0xe0] sm:$0x8]
      %v2696 = vld [vmem:[%s1590 + $0xe4] sm:$0xf]
      %v2697 = vld [vmem:[%s1590 + $0xe8] sm:$0xf]
      %v2698 = vld [vmem:[%s1590 + $0xf0] sm:$0x8]
      %v2699 = vld [vmem:[%s1590 + $0xf4] sm:$0xf]
      %v2700 = vld [vmem:[%s1590 + $0xf8] sm:$0xf]
      %v2702 = vshrl.u32 %v2653, 16
      %v2704 = vrot.slane %v2702, 7
      %v2705 = vrot.slane %v2704, 4
      %v2707 = vshrl.u32 %v2654, 16
      %v2709 = vrot.slane %v2707, 7
      %v2710 = vshll.u32 %v2654, 16
      %v2712 = vor.u32 %v2709, %v2710
      %v2713 = vsel %vm1673, %v2705, %v2712
      %v2714 = vrot.slane %v2709, 4
      %v2716 = vshrl.u32 %v2655, 16
      %v2718 = vrot.slane %v2716, 7
      %v2719 = vshll.u32 %v2655, 16
      %v2721 = vor.u32 %v2718, %v2719
      %v2722 = vsel %vm1673, %v2714, %v2721
      %v2724 = vshrl.u32 %v2656, 16
      %v2726 = vrot.slane %v2724, 7
      %v2727 = vrot.slane %v2726, 4
      %v2729 = vshrl.u32 %v2657, 16
      %v2731 = vrot.slane %v2729, 7
      %v2732 = vshll.u32 %v2657, 16
      %v2734 = vor.u32 %v2731, %v2732
      %v2735 = vsel %vm1673, %v2727, %v2734
      %v2736 = vrot.slane %v2731, 4
      %v2738 = vshrl.u32 %v2658, 16
      %v2740 = vrot.slane %v2738, 7
      %v2741 = vshll.u32 %v2658, 16
      %v2743 = vor.u32 %v2740, %v2741
      %v2744 = vsel %vm1673, %v2736, %v2743
      %v2746 = vshrl.u32 %v2659, 16
      %v2748 = vrot.slane %v2746, 7
      %v2749 = vrot.slane %v2748, 4
      %v2751 = vshrl.u32 %v2660, 16
      %v2753 = vrot.slane %v2751, 7
      %v2754 = vshll.u32 %v2660, 16
      %v2756 = vor.u32 %v2753, %v2754
      %v2757 = vsel %vm1673, %v2749, %v2756
      %v2758 = vrot.slane %v2753, 4
      %v2760 = vshrl.u32 %v2661, 16
      %v2762 = vrot.slane %v2760, 7
      %v2763 = vshll.u32 %v2661, 16
      %v2765 = vor.u32 %v2762, %v2763
      %v2766 = vsel %vm1673, %v2758, %v2765
      %v2768 = vshrl.u32 %v2662, 16
      %v2770 = vrot.slane %v2768, 7
      %v2771 = vrot.slane %v2770, 4
      %v2773 = vshrl.u32 %v2663, 16
      %v2775 = vrot.slane %v2773, 7
      %v2776 = vshll.u32 %v2663, 16
      %v2778 = vor.u32 %v2775, %v2776
      %v2779 = vsel %vm1673, %v2771, %v2778
      %v2780 = vrot.slane %v2775, 4
      %v2782 = vshrl.u32 %v2664, 16
      %v2784 = vrot.slane %v2782, 7
      %v2785 = vshll.u32 %v2664, 16
      %v2787 = vor.u32 %v2784, %v2785
      %v2788 = vsel %vm1673, %v2780, %v2787
      %v2790 = vshrl.u32 %v2665, 16
      %v2792 = vrot.slane %v2790, 7
      %v2793 = vrot.slane %v2792, 4
      %v2795 = vshrl.u32 %v2666, 16
      %v2797 = vrot.slane %v2795, 7
      %v2798 = vshll.u32 %v2666, 16
      %v2800 = vor.u32 %v2797, %v2798
      %v2801 = vsel %vm1673, %v2793, %v2800
      %v2802 = vrot.slane %v2797, 4
      %v2804 = vshrl.u32 %v2667, 16
      %v2806 = vrot.slane %v2804, 7
      %v2807 = vshll.u32 %v2667, 16
      %v2809 = vor.u32 %v2806, %v2807
      %v2810 = vsel %vm1673, %v2802, %v2809
      %v2812 = vshrl.u32 %v2668, 16
      %v2814 = vrot.slane %v2812, 7
      %v2815 = vrot.slane %v2814, 4
      %v2817 = vshrl.u32 %v2669, 16
      %v2819 = vrot.slane %v2817, 7
      %v2820 = vshll.u32 %v2669, 16
      %v2822 = vor.u32 %v2819, %v2820
      %v2823 = vsel %vm1673, %v2815, %v2822
      %v2824 = vrot.slane %v2819, 4
      %v2826 = vshrl.u32 %v2670, 16
      %v2828 = vrot.slane %v2826, 7
      %v2829 = vshll.u32 %v2670, 16
      %v2831 = vor.u32 %v2828, %v2829
      %v2832 = vsel %vm1673, %v2824, %v2831
      %v2834 = vshrl.u32 %v2671, 16
      %v2836 = vrot.slane %v2834, 7
      %v2837 = vrot.slane %v2836, 4
      %v2839 = vshrl.u32 %v2672, 16
      %v2841 = vrot.slane %v2839, 7
      %v2842 = vshll.u32 %v2672, 16
      %v2844 = vor.u32 %v2841, %v2842
      %v2845 = vsel %vm1673, %v2837, %v2844
      %v2846 = vrot.slane %v2841, 4
      %v2848 = vshrl.u32 %v2673, 16
      %v2850 = vrot.slane %v2848, 7
      %v2851 = vshll.u32 %v2673, 16
      %v2853 = vor.u32 %v2850, %v2851
      %v2854 = vsel %vm1673, %v2846, %v2853
      %v2856 = vshrl.u32 %v2674, 16
      %v2858 = vrot.slane %v2856, 7
      %v2859 = vrot.slane %v2858, 4
      %v2861 = vshrl.u32 %v2675, 16
      %v2863 = vrot.slane %v2861, 7
      %v2864 = vshll.u32 %v2675, 16
      %v2866 = vor.u32 %v2863, %v2864
      %v2867 = vsel %vm1673, %v2859, %v2866
      %v2868 = vrot.slane %v2863, 4
      %v2870 = vshrl.u32 %v2676, 16
      %v2872 = vrot.slane %v2870, 7
      %v2873 = vshll.u32 %v2676, 16
      %v2875 = vor.u32 %v2872, %v2873
      %v2876 = vsel %vm1673, %v2868, %v2875
      %v2878 = vshrl.u32 %v2677, 16
      %v2880 = vrot.slane %v2878, 7
      %v2881 = vrot.slane %v2880, 4
      %v2883 = vshrl.u32 %v2678, 16
      %v2885 = vrot.slane %v2883, 7
      %v2886 = vshll.u32 %v2678, 16
      %v2888 = vor.u32 %v2885, %v2886
      %v2889 = vsel %vm1673, %v2881, %v2888
      %v2890 = vrot.slane %v2885, 4
      %v2892 = vshrl.u32 %v2679, 16
      %v2894 = vrot.slane %v2892, 7
      %v2895 = vshll.u32 %v2679, 16
      %v2897 = vor.u32 %v2894, %v2895
      %v2898 = vsel %vm1673, %v2890, %v2897
      %v2900 = vshrl.u32 %v2680, 16
      %v2902 = vrot.slane %v2900, 7
      %v2903 = vrot.slane %v2902, 4
      %v2905 = vshrl.u32 %v2681, 16
      %v2907 = vrot.slane %v2905, 7
      %v2908 = vshll.u32 %v2681, 16
      %v2910 = vor.u32 %v2907, %v2908
      %v2911 = vsel %vm1673, %v2903, %v2910
      %v2912 = vrot.slane %v2907, 4
      %v2914 = vshrl.u32 %v2682, 16
      %v2916 = vrot.slane %v2914, 7
      %v2917 = vshll.u32 %v2682, 16
      %v2919 = vor.u32 %v2916, %v2917
      %v2920 = vsel %vm1673, %v2912, %v2919
      %v2922 = vshrl.u32 %v2683, 16
      %v2924 = vrot.slane %v2922, 7
      %v2925 = vrot.slane %v2924, 4
      %v2927 = vshrl.u32 %v2684, 16
      %v2929 = vrot.slane %v2927, 7
      %v2930 = vshll.u32 %v2684, 16
      %v2932 = vor.u32 %v2929, %v2930
      %v2933 = vsel %vm1673, %v2925, %v2932
      %v2934 = vrot.slane %v2929, 4
      %v2936 = vshrl.u32 %v2685, 16
      %v2938 = vrot.slane %v2936, 7
      %v2939 = vshll.u32 %v2685, 16
      %v2941 = vor.u32 %v2938, %v2939
      %v2942 = vsel %vm1673, %v2934, %v2941
      %v2944 = vshrl.u32 %v2686, 16
      %v2946 = vrot.slane %v2944, 7
      %v2947 = vrot.slane %v2946, 4
      %v2949 = vshrl.u32 %v2687, 16
      %v2951 = vrot.slane %v2949, 7
      %v2952 = vshll.u32 %v2687, 16
      %v2954 = vor.u32 %v2951, %v2952
      %v2955 = vsel %vm1673, %v2947, %v2954
      %v2956 = vrot.slane %v2951, 4
      %v2958 = vshrl.u32 %v2688, 16
      %v2960 = vrot.slane %v2958, 7
      %v2961 = vshll.u32 %v2688, 16
      %v2963 = vor.u32 %v2960, %v2961
      %v2964 = vsel %vm1673, %v2956, %v2963
      %v2966 = vshrl.u32 %v2689, 16
      %v2968 = vrot.slane %v2966, 7
      %v2969 = vrot.slane %v2968, 4
      %v2971 = vshrl.u32 %v2690, 16
      %v2973 = vrot.slane %v2971, 7
      %v2974 = vshll.u32 %v2690, 16
      %v2976 = vor.u32 %v2973, %v2974
      %v2977 = vsel %vm1673, %v2969, %v2976
      %v2978 = vrot.slane %v2973, 4
      %v2980 = vshrl.u32 %v2691, 16
      %v2982 = vrot.slane %v2980, 7
      %v2983 = vshll.u32 %v2691, 16
      %v2985 = vor.u32 %v2982, %v2983
      %v2986 = vsel %vm1673, %v2978, %v2985
      %v2988 = vshrl.u32 %v2692, 16
      %v2990 = vrot.slane %v2988, 7
      %v2991 = vrot.slane %v2990, 4
      %v2993 = vshrl.u32 %v2693, 16
      %v2995 = vrot.slane %v2993, 7
      %v2996 = vshll.u32 %v2693, 16
      %v2998 = vor.u32 %v2995, %v2996
      %v2999 = vsel %vm1673, %v2991, %v2998
      %v3000 = vrot.slane %v2995, 4
      %v3002 = vshrl.u32 %v2694, 16
      %v3004 = vrot.slane %v3002, 7
      %v3005 = vshll.u32 %v2694, 16
      %v3007 = vor.u32 %v3004, %v3005
      %v3008 = vsel %vm1673, %v3000, %v3007
      %v3010 = vshrl.u32 %v2695, 16
      %v3012 = vrot.slane %v3010, 7
      %v3013 = vrot.slane %v3012, 4
      %v3015 = vshrl.u32 %v2696, 16
      %v3017 = vrot.slane %v3015, 7
      %v3018 = vshll.u32 %v2696, 16
      %v3020 = vor.u32 %v3017, %v3018
      %v3021 = vsel %vm1673, %v3013, %v3020
      %v3022 = vrot.slane %v3017, 4
      %v3024 = vshrl.u32 %v2697, 16
      %v3026 = vrot.slane %v3024, 7
      %v3027 = vshll.u32 %v2697, 16
      %v3029 = vor.u32 %v3026, %v3027
      %v3030 = vsel %vm1673, %v3022, %v3029
      %v3032 = vshrl.u32 %v2698, 16
      %v3034 = vrot.slane %v3032, 7
      %v3035 = vrot.slane %v3034, 4
      %v3037 = vshrl.u32 %v2699, 16
      %v3039 = vrot.slane %v3037, 7
      %v3040 = vshll.u32 %v2699, 16
      %v3042 = vor.u32 %v3039, %v3040
      %v3043 = vsel %vm1673, %v3035, %v3042
      %v3044 = vrot.slane %v3039, 4
      %v3046 = vshrl.u32 %v2700, 16
      %v3048 = vrot.slane %v3046, 7
      %v3049 = vshll.u32 %v2700, 16
      %v3051 = vor.u32 %v3048, %v3049
      %v3052 = vsel %vm1673, %v3044, %v3051
      %3085 = vst [vmem:[#allocation3 + $0xc] sm:$0xf] %v2713
      %3086 = vst [vmem:[#allocation3 + $0x30] sm:$0xf] %v2722
      %3087 = vst [vmem:[#allocation3 + $0x54] sm:$0xf] %v2735
      %3088 = vst [vmem:[#allocation3 + $0x78] sm:$0xf] %v2744
      %3089 = vst [vmem:[#allocation3 + $0x9c] sm:$0xf] %v2757
      %3090 = vst [vmem:[#allocation3 + $0xc0] sm:$0xf] %v2766
      %3091 = vst [vmem:[#allocation3 + $0xe4] sm:$0xf] %v2779
      %3092 = vst [vmem:[#allocation3 + $0x108] sm:$0xf] %v2788
      %3093 = vst [vmem:[#allocation3 + $0x12c] sm:$0xf] %v2801
      %3094 = vst [vmem:[#allocation3 + $0x150] sm:$0xf] %v2810
      %3095 = vst [vmem:[#allocation3 + $0x174] sm:$0xf] %v2823
      %3096 = vst [vmem:[#allocation3 + $0x198] sm:$0xf] %v2832
      %3097 = vst [vmem:[#allocation3 + $0x1bc] sm:$0xf] %v2845
      %3098 = vst [vmem:[#allocation3 + $0x1e0] sm:$0xf] %v2854
      %3099 = vst [vmem:[#allocation3 + $0x204] sm:$0xf] %v2867
      %3100 = vst [vmem:[#allocation3 + $0x228] sm:$0xf] %v2876
      %3101 = vst [vmem:[#allocation3 + $0x24c] sm:$0xf] %v2889
      %3102 = vst [vmem:[#allocation3 + $0x270] sm:$0xf] %v2898
      %3103 = vst [vmem:[#allocation3 + $0x294] sm:$0xf] %v2911
      %3104 = vst [vmem:[#allocation3 + $0x2b8] sm:$0xf] %v2920
      %3105 = vst [vmem:[#allocation3 + $0x2dc] sm:$0xf] %v2933
      %3106 = vst [vmem:[#allocation3 + $0x300] sm:$0xf] %v2942
      %3107 = vst [vmem:[#allocation3 + $0x324] sm:$0xf] %v2955
      %3108 = vst [vmem:[#allocation3 + $0x348] sm:$0xf] %v2964
      %3109 = vst [vmem:[#allocation3 + $0x36c] sm:$0xf] %v2977
      %3110 = vst [vmem:[#allocation3 + $0x390] sm:$0xf] %v2986
      %3111 = vst [vmem:[#allocation3 + $0x3b4] sm:$0xf] %v2999
      %3112 = vst [vmem:[#allocation3 + $0x3d8] sm:$0xf] %v3008
      %3113 = vst [vmem:[#allocation3 + $0x3fc] sm:$0xf] %v3021
      %3114 = vst [vmem:[#allocation3 + $0x420] sm:$0xf] %v3030
      %3115 = vst [vmem:[#allocation3 + $0x444] sm:$0xf] %v3043
      %3116 = vst [vmem:[#allocation3 + $0x468] sm:$0xf] %v3052
      %v3117 = vld [vmem:[%s1590 + $0x4] sm:$0xf]
      %v3118 = vld [vmem:[%s1590 + $0x8] sm:$0xf]
      %v3119 = vld [vmem:[%s1590 + $0x14] sm:$0xf]
      %v3120 = vld [vmem:[%s1590 + $0x18] sm:$0xf]
      %v3121 = vld [vmem:[%s1590 + $0x24] sm:$0xf]
      %v3122 = vld [vmem:[%s1590 + $0x28] sm:$0xf]
      %v3123 = vld [vmem:[%s1590 + $0x34] sm:$0xf]
      %v3124 = vld [vmem:[%s1590 + $0x38] sm:$0xf]
      %v3125 = vld [vmem:[%s1590 + $0x44] sm:$0xf]
      %v3126 = vld [vmem:[%s1590 + $0x48] sm:$0xf]
      %v3127 = vld [vmem:[%s1590 + $0x54] sm:$0xf]
      %v3128 = vld [vmem:[%s1590 + $0x58] sm:$0xf]
      %v3129 = vld [vmem:[%s1590 + $0x64] sm:$0xf]
      %v3130 = vld [vmem:[%s1590 + $0x68] sm:$0xf]
      %v3131 = vld [vmem:[%s1590 + $0x74] sm:$0xf]
      %v3132 = vld [vmem:[%s1590 + $0x78] sm:$0xf]
      %v3133 = vld [vmem:[%s1590 + $0x84] sm:$0xf]
      %v3134 = vld [vmem:[%s1590 + $0x88] sm:$0xf]
      %v3135 = vld [vmem:[%s1590 + $0x94] sm:$0xf]
      %v3136 = vld [vmem:[%s1590 + $0x98] sm:$0xf]
      %v3137 = vld [vmem:[%s1590 + $0xa4] sm:$0xf]
      %v3138 = vld [vmem:[%s1590 + $0xa8] sm:$0xf]
      %v3139 = vld [vmem:[%s1590 + $0xb4] sm:$0xf]
      %v3140 = vld [vmem:[%s1590 + $0xb8] sm:$0xf]
      %v3141 = vld [vmem:[%s1590 + $0xc4] sm:$0xf]
      %v3142 = vld [vmem:[%s1590 + $0xc8] sm:$0xf]
      %v3143 = vld [vmem:[%s1590 + $0xd4] sm:$0xf]
      %v3144 = vld [vmem:[%s1590 + $0xd8] sm:$0xf]
      %v3145 = vld [vmem:[%s1590 + $0xe4] sm:$0xf]
      %v3146 = vld [vmem:[%s1590 + $0xe8] sm:$0xf]
      %v3147 = vld [vmem:[%s1590 + $0xf4] sm:$0xf]
      %v3148 = vld [vmem:[%s1590 + $0xf8] sm:$0xf]
      %3149 = vst [vmem:[#allocation3 + $0x10] sm:$0xf] %v3117
      %3150 = vst [vmem:[#allocation3 + $0x34] sm:$0xf] %v3118
      %3151 = vst [vmem:[#allocation3 + $0x58] sm:$0xf] %v3119
      %3152 = vst [vmem:[#allocation3 + $0x7c] sm:$0xf] %v3120
      %3153 = vst [vmem:[#allocation3 + $0xa0] sm:$0xf] %v3121
      %3154 = vst [vmem:[#allocation3 + $0xc4] sm:$0xf] %v3122
      %3155 = vst [vmem:[#allocation3 + $0xe8] sm:$0xf] %v3123
      %3156 = vst [vmem:[#allocation3 + $0x10c] sm:$0xf] %v3124
      %3157 = vst [vmem:[#allocation3 + $0x130] sm:$0xf] %v3125
      %3158 = vst [vmem:[#allocation3 + $0x154] sm:$0xf] %v3126
      %3159 = vst [vmem:[#allocation3 + $0x178] sm:$0xf] %v3127
      %3160 = vst [vmem:[#allocation3 + $0x19c] sm:$0xf] %v3128
      %3161 = vst [vmem:[#allocation3 + $0x1c0] sm:$0xf] %v3129
      %3162 = vst [vmem:[#allocation3 + $0x1e4] sm:$0xf] %v3130
      %3163 = vst [vmem:[#allocation3 + $0x208] sm:$0xf] %v3131
      %3164 = vst [vmem:[#allocation3 + $0x22c] sm:$0xf] %v3132
      %3165 = vst [vmem:[#allocation3 + $0x250] sm:$0xf] %v3133
      %3166 = vst [vmem:[#allocation3 + $0x274] sm:$0xf] %v3134
      %3167 = vst [vmem:[#allocation3 + $0x298] sm:$0xf] %v3135
      %3168 = vst [vmem:[#allocation3 + $0x2bc] sm:$0xf] %v3136
      %3169 = vst [vmem:[#allocation3 + $0x2e0] sm:$0xf] %v3137
      %3170 = vst [vmem:[#allocation3 + $0x304] sm:$0xf] %v3138
      %3171 = vst [vmem:[#allocation3 + $0x328] sm:$0xf] %v3139
      %3172 = vst [vmem:[#allocation3 + $0x34c] sm:$0xf] %v3140
      %3173 = vst [vmem:[#allocation3 + $0x370] sm:$0xf] %v3141
      %3174 = vst [vmem:[#allocation3 + $0x394] sm:$0xf] %v3142
      %3175 = vst [vmem:[#allocation3 + $0x3b8] sm:$0xf] %v3143
      %3176 = vst [vmem:[#allocation3 + $0x3dc] sm:$0xf] %v3144
      %3177 = vst [vmem:[#allocation3 + $0x400] sm:$0xf] %v3145
      %3178 = vst [vmem:[#allocation3 + $0x424] sm:$0xf] %v3146
      %3179 = vst [vmem:[#allocation3 + $0x448] sm:$0xf] %v3147
      %3180 = vst [vmem:[#allocation3 + $0x46c] sm:$0xf] %v3148
      %v3181 = vld [vmem:[%s1590 + $0x4] sm:$0xf]
      %v3182 = vld [vmem:[%s1590 + $0x8] sm:$0xf]
      %v3183 = vld [vmem:[%s1590 + $0xc] sm:$0x1]
      %v3184 = vld [vmem:[%s1590 + $0x14] sm:$0xf]
      %v3185 = vld [vmem:[%s1590 + $0x18] sm:$0xf]
      %v3186 = vld [vmem:[%s1590 + $0x1c] sm:$0x1]
      %v3187 = vld [vmem:[%s1590 + $0x24] sm:$0xf]
      %v3188 = vld [vmem:[%s1590 + $0x28] sm:$0xf]
      %v3189 = vld [vmem:[%s1590 + $0x2c] sm:$0x1]
      %v3190 = vld [vmem:[%s1590 + $0x34] sm:$0xf]
      %v3191 = vld [vmem:[%s1590 + $0x38] sm:$0xf]
      %v3192 = vld [vmem:[%s1590 + $0x3c] sm:$0x1]
      %v3193 = vld [vmem:[%s1590 + $0x44] sm:$0xf]
      %v3194 = vld [vmem:[%s1590 + $0x48] sm:$0xf]
      %v3195 = vld [vmem:[%s1590 + $0x4c] sm:$0x1]
      %v3196 = vld [vmem:[%s1590 + $0x54] sm:$0xf]
      %v3197 = vld [vmem:[%s1590 + $0x58] sm:$0xf]
      %v3198 = vld [vmem:[%s1590 + $0x5c] sm:$0x1]
      %v3199 = vld [vmem:[%s1590 + $0x64] sm:$0xf]
      %v3200 = vld [vmem:[%s1590 + $0x68] sm:$0xf]
      %v3201 = vld [vmem:[%s1590 + $0x6c] sm:$0x1]
      %v3202 = vld [vmem:[%s1590 + $0x74] sm:$0xf]
      %v3203 = vld [vmem:[%s1590 + $0x78] sm:$0xf]
      %v3204 = vld [vmem:[%s1590 + $0x7c] sm:$0x1]
      %v3205 = vld [vmem:[%s1590 + $0x84] sm:$0xf]
      %v3206 = vld [vmem:[%s1590 + $0x88] sm:$0xf]
      %v3207 = vld [vmem:[%s1590 + $0x8c] sm:$0x1]
      %v3208 = vld [vmem:[%s1590 + $0x94] sm:$0xf]
      %v3209 = vld [vmem:[%s1590 + $0x98] sm:$0xf]
      %v3210 = vld [vmem:[%s1590 + $0x9c] sm:$0x1]
      %v3211 = vld [vmem:[%s1590 + $0xa4] sm:$0xf]
      %v3212 = vld [vmem:[%s1590 + $0xa8] sm:$0xf]
      %v3213 = vld [vmem:[%s1590 + $0xac] sm:$0x1]
      %v3214 = vld [vmem:[%s1590 + $0xb4] sm:$0xf]
      %v3215 = vld [vmem:[%s1590 + $0xb8] sm:$0xf]
      %v3216 = vld [vmem:[%s1590 + $0xbc] sm:$0x1]
      %v3217 = vld [vmem:[%s1590 + $0xc4] sm:$0xf]
      %v3218 = vld [vmem:[%s1590 + $0xc8] sm:$0xf]
      %v3219 = vld [vmem:[%s1590 + $0xcc] sm:$0x1]
      %v3220 = vld [vmem:[%s1590 + $0xd4] sm:$0xf]
      %v3221 = vld [vmem:[%s1590 + $0xd8] sm:$0xf]
      %v3222 = vld [vmem:[%s1590 + $0xdc] sm:$0x1]
      %v3223 = vld [vmem:[%s1590 + $0xe4] sm:$0xf]
      %v3224 = vld [vmem:[%s1590 + $0xe8] sm:$0xf]
      %v3225 = vld [vmem:[%s1590 + $0xec] sm:$0x1]
      %v3226 = vld [vmem:[%s1590 + $0xf4] sm:$0xf]
      %v3227 = vld [vmem:[%s1590 + $0xf8] sm:$0xf]
      %v3228 = vld [vmem:[%s1590 + $0xfc] sm:$0x1]
      %v3230 = vshrl.u32 %v3181, 16
      %v3232 = vrot.slane %v3230, 4
      %v3233 = vshll.u32 %v3181, 16
      %v3235 = vrot.slane %v3233, 5
      %v3236 = vor.u32 %v3232, %v3235
      %v3237 = vrot.slane %v3236, 4
      %v3239 = vshll.u32 %v3182, 16
      %v3241 = vrot.slane %v3239, 5
      %v3242 = vsel %vm2204, %v3237, %v3241
      %v3243 = vshrl.u32 %v3182, 16
      %v3245 = vrot.slane %v3243, 4
      %v3246 = vor.u32 %v3245, %v3241
      %v3247 = vrot.slane %v3246, 4
      %v3249 = vshll.u32 %v3183, 16
      %v3251 = vrot.slane %v3249, 5
      %v3252 = vsel %vm2204, %v3247, %v3251
      %v3254 = vshrl.u32 %v3184, 16
      %v3256 = vrot.slane %v3254, 4
      %v3257 = vshll.u32 %v3184, 16
      %v3259 = vrot.slane %v3257, 5
      %v3260 = vor.u32 %v3256, %v3259
      %v3261 = vrot.slane %v3260, 4
      %v3263 = vshll.u32 %v3185, 16
      %v3265 = vrot.slane %v3263, 5
      %v3266 = vsel %vm2204, %v3261, %v3265
      %v3267 = vshrl.u32 %v3185, 16
      %v3269 = vrot.slane %v3267, 4
      %v3270 = vor.u32 %v3269, %v3265
      %v3271 = vrot.slane %v3270, 4
      %v3273 = vshll.u32 %v3186, 16
      %v3275 = vrot.slane %v3273, 5
      %v3276 = vsel %vm2204, %v3271, %v3275
      %v3278 = vshrl.u32 %v3187, 16
      %v3280 = vrot.slane %v3278, 4
      %v3281 = vshll.u32 %v3187, 16
      %v3283 = vrot.slane %v3281, 5
      %v3284 = vor.u32 %v3280, %v3283
      %v3285 = vrot.slane %v3284, 4
      %v3287 = vshll.u32 %v3188, 16
      %v3289 = vrot.slane %v3287, 5
      %v3290 = vsel %vm2204, %v3285, %v3289
      %v3291 = vshrl.u32 %v3188, 16
      %v3293 = vrot.slane %v3291, 4
      %v3294 = vor.u32 %v3293, %v3289
      %v3295 = vrot.slane %v3294, 4
      %v3297 = vshll.u32 %v3189, 16
      %v3299 = vrot.slane %v3297, 5
      %v3300 = vsel %vm2204, %v3295, %v3299
      %v3302 = vshrl.u32 %v3190, 16
      %v3304 = vrot.slane %v3302, 4
      %v3305 = vshll.u32 %v3190, 16
      %v3307 = vrot.slane %v3305, 5
      %v3308 = vor.u32 %v3304, %v3307
      %v3309 = vrot.slane %v3308, 4
      %v3311 = vshll.u32 %v3191, 16
      %v3313 = vrot.slane %v3311, 5
      %v3314 = vsel %vm2204, %v3309, %v3313
      %v3315 = vshrl.u32 %v3191, 16
      %v3317 = vrot.slane %v3315, 4
      %v3318 = vor.u32 %v3317, %v3313
      %v3319 = vrot.slane %v3318, 4
      %v3321 = vshll.u32 %v3192, 16
      %v3323 = vrot.slane %v3321, 5
      %v3324 = vsel %vm2204, %v3319, %v3323
      %v3326 = vshrl.u32 %v3193, 16
      %v3328 = vrot.slane %v3326, 4
      %v3329 = vshll.u32 %v3193, 16
      %v3331 = vrot.slane %v3329, 5
      %v3332 = vor.u32 %v3328, %v3331
      %v3333 = vrot.slane %v3332, 4
      %v3335 = vshll.u32 %v3194, 16
      %v3337 = vrot.slane %v3335, 5
      %v3338 = vsel %vm2204, %v3333, %v3337
      %v3339 = vshrl.u32 %v3194, 16
      %v3341 = vrot.slane %v3339, 4
      %v3342 = vor.u32 %v3341, %v3337
      %v3343 = vrot.slane %v3342, 4
      %v3345 = vshll.u32 %v3195, 16
      %v3347 = vrot.slane %v3345, 5
      %v3348 = vsel %vm2204, %v3343, %v3347
      %v3350 = vshrl.u32 %v3196, 16
      %v3352 = vrot.slane %v3350, 4
      %v3353 = vshll.u32 %v3196, 16
      %v3355 = vrot.slane %v3353, 5
      %v3356 = vor.u32 %v3352, %v3355
      %v3357 = vrot.slane %v3356, 4
      %v3359 = vshll.u32 %v3197, 16
      %v3361 = vrot.slane %v3359, 5
      %v3362 = vsel %vm2204, %v3357, %v3361
      %v3363 = vshrl.u32 %v3197, 16
      %v3365 = vrot.slane %v3363, 4
      %v3366 = vor.u32 %v3365, %v3361
      %v3367 = vrot.slane %v3366, 4
      %v3369 = vshll.u32 %v3198, 16
      %v3371 = vrot.slane %v3369, 5
      %v3372 = vsel %vm2204, %v3367, %v3371
      %v3374 = vshrl.u32 %v3199, 16
      %v3376 = vrot.slane %v3374, 4
      %v3377 = vshll.u32 %v3199, 16
      %v3379 = vrot.slane %v3377, 5
      %v3380 = vor.u32 %v3376, %v3379
      %v3381 = vrot.slane %v3380, 4
      %v3383 = vshll.u32 %v3200, 16
      %v3385 = vrot.slane %v3383, 5
      %v3386 = vsel %vm2204, %v3381, %v3385
      %v3387 = vshrl.u32 %v3200, 16
      %v3389 = vrot.slane %v3387, 4
      %v3390 = vor.u32 %v3389, %v3385
      %v3391 = vrot.slane %v3390, 4
      %v3393 = vshll.u32 %v3201, 16
      %v3395 = vrot.slane %v3393, 5
      %v3396 = vsel %vm2204, %v3391, %v3395
      %v3398 = vshrl.u32 %v3202, 16
      %v3400 = vrot.slane %v3398, 4
      %v3401 = vshll.u32 %v3202, 16
      %v3403 = vrot.slane %v3401, 5
      %v3404 = vor.u32 %v3400, %v3403
      %v3405 = vrot.slane %v3404, 4
      %v3407 = vshll.u32 %v3203, 16
      %v3409 = vrot.slane %v3407, 5
      %v3410 = vsel %vm2204, %v3405, %v3409
      %v3411 = vshrl.u32 %v3203, 16
      %v3413 = vrot.slane %v3411, 4
      %v3414 = vor.u32 %v3413, %v3409
      %v3415 = vrot.slane %v3414, 4
      %v3417 = vshll.u32 %v3204, 16
      %v3419 = vrot.slane %v3417, 5
      %v3420 = vsel %vm2204, %v3415, %v3419
      %v3422 = vshrl.u32 %v3205, 16
      %v3424 = vrot.slane %v3422, 4
      %v3425 = vshll.u32 %v3205, 16
      %v3427 = vrot.slane %v3425, 5
      %v3428 = vor.u32 %v3424, %v3427
      %v3429 = vrot.slane %v3428, 4
      %v3431 = vshll.u32 %v3206, 16
      %v3433 = vrot.slane %v3431, 5
      %v3434 = vsel %vm2204, %v3429, %v3433
      %v3435 = vshrl.u32 %v3206, 16
      %v3437 = vrot.slane %v3435, 4
      %v3438 = vor.u32 %v3437, %v3433
      %v3439 = vrot.slane %v3438, 4
      %v3441 = vshll.u32 %v3207, 16
      %v3443 = vrot.slane %v3441, 5
      %v3444 = vsel %vm2204, %v3439, %v3443
      %v3446 = vshrl.u32 %v3208, 16
      %v3448 = vrot.slane %v3446, 4
      %v3449 = vshll.u32 %v3208, 16
      %v3451 = vrot.slane %v3449, 5
      %v3452 = vor.u32 %v3448, %v3451
      %v3453 = vrot.slane %v3452, 4
      %v3455 = vshll.u32 %v3209, 16
      %v3457 = vrot.slane %v3455, 5
      %v3458 = vsel %vm2204, %v3453, %v3457
      %v3459 = vshrl.u32 %v3209, 16
      %v3461 = vrot.slane %v3459, 4
      %v3462 = vor.u32 %v3461, %v3457
      %v3463 = vrot.slane %v3462, 4
      %v3465 = vshll.u32 %v3210, 16
      %v3467 = vrot.slane %v3465, 5
      %v3468 = vsel %vm2204, %v3463, %v3467
      %v3470 = vshrl.u32 %v3211, 16
      %v3472 = vrot.slane %v3470, 4
      %v3473 = vshll.u32 %v3211, 16
      %v3475 = vrot.slane %v3473, 5
      %v3476 = vor.u32 %v3472, %v3475
      %v3477 = vrot.slane %v3476, 4
      %v3479 = vshll.u32 %v3212, 16
      %v3481 = vrot.slane %v3479, 5
      %v3482 = vsel %vm2204, %v3477, %v3481
      %v3483 = vshrl.u32 %v3212, 16
      %v3485 = vrot.slane %v3483, 4
      %v3486 = vor.u32 %v3485, %v3481
      %v3487 = vrot.slane %v3486, 4
      %v3489 = vshll.u32 %v3213, 16
      %v3491 = vrot.slane %v3489, 5
      %v3492 = vsel %vm2204, %v3487, %v3491
      %v3494 = vshrl.u32 %v3214, 16
      %v3496 = vrot.slane %v3494, 4
      %v3497 = vshll.u32 %v3214, 16
      %v3499 = vrot.slane %v3497, 5
      %v3500 = vor.u32 %v3496, %v3499
      %v3501 = vrot.slane %v3500, 4
      %v3503 = vshll.u32 %v3215, 16
      %v3505 = vrot.slane %v3503, 5
      %v3506 = vsel %vm2204, %v3501, %v3505
      %v3507 = vshrl.u32 %v3215, 16
      %v3509 = vrot.slane %v3507, 4
      %v3510 = vor.u32 %v3509, %v3505
      %v3511 = vrot.slane %v3510, 4
      %v3513 = vshll.u32 %v3216, 16
      %v3515 = vrot.slane %v3513, 5
      %v3516 = vsel %vm2204, %v3511, %v3515
      %v3518 = vshrl.u32 %v3217, 16
      %v3520 = vrot.slane %v3518, 4
      %v3521 = vshll.u32 %v3217, 16
      %v3523 = vrot.slane %v3521, 5
      %v3524 = vor.u32 %v3520, %v3523
      %v3525 = vrot.slane %v3524, 4
      %v3527 = vshll.u32 %v3218, 16
      %v3529 = vrot.slane %v3527, 5
      %v3530 = vsel %vm2204, %v3525, %v3529
      %v3531 = vshrl.u32 %v3218, 16
      %v3533 = vrot.slane %v3531, 4
      %v3534 = vor.u32 %v3533, %v3529
      %v3535 = vrot.slane %v3534, 4
      %v3537 = vshll.u32 %v3219, 16
      %v3539 = vrot.slane %v3537, 5
      %v3540 = vsel %vm2204, %v3535, %v3539
      %v3542 = vshrl.u32 %v3220, 16
      %v3544 = vrot.slane %v3542, 4
      %v3545 = vshll.u32 %v3220, 16
      %v3547 = vrot.slane %v3545, 5
      %v3548 = vor.u32 %v3544, %v3547
      %v3549 = vrot.slane %v3548, 4
      %v3551 = vshll.u32 %v3221, 16
      %v3553 = vrot.slane %v3551, 5
      %v3554 = vsel %vm2204, %v3549, %v3553
      %v3555 = vshrl.u32 %v3221, 16
      %v3557 = vrot.slane %v3555, 4
      %v3558 = vor.u32 %v3557, %v3553
      %v3559 = vrot.slane %v3558, 4
      %v3561 = vshll.u32 %v3222, 16
      %v3563 = vrot.slane %v3561, 5
      %v3564 = vsel %vm2204, %v3559, %v3563
      %v3566 = vshrl.u32 %v3223, 16
      %v3568 = vrot.slane %v3566, 4
      %v3569 = vshll.u32 %v3223, 16
      %v3571 = vrot.slane %v3569, 5
      %v3572 = vor.u32 %v3568, %v3571
      %v3573 = vrot.slane %v3572, 4
      %v3575 = vshll.u32 %v3224, 16
      %v3577 = vrot.slane %v3575, 5
      %v3578 = vsel %vm2204, %v3573, %v3577
      %v3579 = vshrl.u32 %v3224, 16
      %v3581 = vrot.slane %v3579, 4
      %v3582 = vor.u32 %v3581, %v3577
      %v3583 = vrot.slane %v3582, 4
      %v3585 = vshll.u32 %v3225, 16
      %v3587 = vrot.slane %v3585, 5
      %v3588 = vsel %vm2204, %v3583, %v3587
      %v3590 = vshrl.u32 %v3226, 16
      %v3592 = vrot.slane %v3590, 4
      %v3593 = vshll.u32 %v3226, 16
      %v3595 = vrot.slane %v3593, 5
      %v3596 = vor.u32 %v3592, %v3595
      %v3597 = vrot.slane %v3596, 4
      %v3599 = vshll.u32 %v3227, 16
      %v3601 = vrot.slane %v3599, 5
      %v3602 = vsel %vm2204, %v3597, %v3601
      %v3603 = vshrl.u32 %v3227, 16
      %v3605 = vrot.slane %v3603, 4
      %v3606 = vor.u32 %v3605, %v3601
      %v3607 = vrot.slane %v3606, 4
      %v3609 = vshll.u32 %v3228, 16
      %v3611 = vrot.slane %v3609, 5
      %v3612 = vsel %vm2204, %v3607, %v3611
      %3645 = vst [vmem:[#allocation3 + $0x14] sm:$0xf] %v3242
      %3646 = vst [vmem:[#allocation3 + $0x38] sm:$0xf] %v3252
      %3647 = vst [vmem:[#allocation3 + $0x5c] sm:$0xf] %v3266
      %3648 = vst [vmem:[#allocation3 + $0x80] sm:$0xf] %v3276
      %3649 = vst [vmem:[#allocation3 + $0xa4] sm:$0xf] %v3290
      %3650 = vst [vmem:[#allocation3 + $0xc8] sm:$0xf] %v3300
      %3651 = vst [vmem:[#allocation3 + $0xec] sm:$0xf] %v3314
      %3652 = vst [vmem:[#allocation3 + $0x110] sm:$0xf] %v3324
      %3653 = vst [vmem:[#allocation3 + $0x134] sm:$0xf] %v3338
      %3654 = vst [vmem:[#allocation3 + $0x158] sm:$0xf] %v3348
      %3655 = vst [vmem:[#allocation3 + $0x17c] sm:$0xf] %v3362
      %3656 = vst [vmem:[#allocation3 + $0x1a0] sm:$0xf] %v3372
      %3657 = vst [vmem:[#allocation3 + $0x1c4] sm:$0xf] %v3386
      %3658 = vst [vmem:[#allocation3 + $0x1e8] sm:$0xf] %v3396
      %3659 = vst [vmem:[#allocation3 + $0x20c] sm:$0xf] %v3410
      %3660 = vst [vmem:[#allocation3 + $0x230] sm:$0xf] %v3420
      %3661 = vst [vmem:[#allocation3 + $0x254] sm:$0xf] %v3434
      %3662 = vst [vmem:[#allocation3 + $0x278] sm:$0xf] %v3444
      %3663 = vst [vmem:[#allocation3 + $0x29c] sm:$0xf] %v3458
      %3664 = vst [vmem:[#allocation3 + $0x2c0] sm:$0xf] %v3468
      %3665 = vst [vmem:[#allocation3 + $0x2e4] sm:$0xf] %v3482
      %3666 = vst [vmem:[#allocation3 + $0x308] sm:$0xf] %v3492
      %3667 = vst [vmem:[#allocation3 + $0x32c] sm:$0xf] %v3506
      %3668 = vst [vmem:[#allocation3 + $0x350] sm:$0xf] %v3516
      %3669 = vst [vmem:[#allocation3 + $0x374] sm:$0xf] %v3530
      %3670 = vst [vmem:[#allocation3 + $0x398] sm:$0xf] %v3540
      %3671 = vst [vmem:[#allocation3 + $0x3bc] sm:$0xf] %v3554
      %3672 = vst [vmem:[#allocation3 + $0x3e0] sm:$0xf] %v3564
      %3673 = vst [vmem:[#allocation3 + $0x404] sm:$0xf] %v3578
      %3674 = vst [vmem:[#allocation3 + $0x428] sm:$0xf] %v3588
      %3675 = vst [vmem:[#allocation3 + $0x44c] sm:$0xf] %v3602
      %3676 = vst [vmem:[#allocation3 + $0x470] sm:$0xf] %v3612
      %s3677 = scalar_lea.vmem [#allocation2], 32
      %v3678 = vld [vmem:[%s3677] sm:$0x8]
      %v3679 = vld [vmem:[%s3677 + $0x4] sm:$0xf]
      %v3680 = vld [vmem:[%s3677 + $0x8] sm:$0xf]
      %v3681 = vld [vmem:[%s3677 + $0x10] sm:$0x8]
      %v3682 = vld [vmem:[%s3677 + $0x14] sm:$0xf]
      %v3683 = vld [vmem:[%s3677 + $0x18] sm:$0xf]
      %v3684 = vld [vmem:[%s3677 + $0x20] sm:$0x8]
      %v3685 = vld [vmem:[%s3677 + $0x24] sm:$0xf]
      %v3686 = vld [vmem:[%s3677 + $0x28] sm:$0xf]
      %v3687 = vld [vmem:[%s3677 + $0x30] sm:$0x8]
      %v3688 = vld [vmem:[%s3677 + $0x34] sm:$0xf]
      %v3689 = vld [vmem:[%s3677 + $0x38] sm:$0xf]
      %v3690 = vld [vmem:[%s3677 + $0x40] sm:$0x8]
      %v3691 = vld [vmem:[%s3677 + $0x44] sm:$0xf]
      %v3692 = vld [vmem:[%s3677 + $0x48] sm:$0xf]
      %v3693 = vld [vmem:[%s3677 + $0x50] sm:$0x8]
      %v3694 = vld [vmem:[%s3677 + $0x54] sm:$0xf]
      %v3695 = vld [vmem:[%s3677 + $0x58] sm:$0xf]
      %v3696 = vld [vmem:[%s3677 + $0x60] sm:$0x8]
      %v3697 = vld [vmem:[%s3677 + $0x64] sm:$0xf]
      %v3698 = vld [vmem:[%s3677 + $0x68] sm:$0xf]
      %v3699 = vld [vmem:[%s3677 + $0x70] sm:$0x8]
      %v3700 = vld [vmem:[%s3677 + $0x74] sm:$0xf]
      %v3701 = vld [vmem:[%s3677 + $0x78] sm:$0xf]
      %v3702 = vld [vmem:[%s3677 + $0x80] sm:$0x8]
      %v3703 = vld [vmem:[%s3677 + $0x84] sm:$0xf]
      %v3704 = vld [vmem:[%s3677 + $0x88] sm:$0xf]
      %v3705 = vld [vmem:[%s3677 + $0x90] sm:$0x8]
      %v3706 = vld [vmem:[%s3677 + $0x94] sm:$0xf]
      %v3707 = vld [vmem:[%s3677 + $0x98] sm:$0xf]
      %v3708 = vld [vmem:[%s3677 + $0xa0] sm:$0x8]
      %v3709 = vld [vmem:[%s3677 + $0xa4] sm:$0xf]
      %v3710 = vld [vmem:[%s3677 + $0xa8] sm:$0xf]
      %v3711 = vld [vmem:[%s3677 + $0xb0] sm:$0x8]
      %v3712 = vld [vmem:[%s3677 + $0xb4] sm:$0xf]
      %v3713 = vld [vmem:[%s3677 + $0xb8] sm:$0xf]
      %v3714 = vld [vmem:[%s3677 + $0xc0] sm:$0x8]
      %v3715 = vld [vmem:[%s3677 + $0xc4] sm:$0xf]
      %v3716 = vld [vmem:[%s3677 + $0xc8] sm:$0xf]
      %v3717 = vld [vmem:[%s3677 + $0xd0] sm:$0x8]
      %v3718 = vld [vmem:[%s3677 + $0xd4] sm:$0xf]
      %v3719 = vld [vmem:[%s3677 + $0xd8] sm:$0xf]
      %v3720 = vld [vmem:[%s3677 + $0xe0] sm:$0x8]
      %v3721 = vld [vmem:[%s3677 + $0xe4] sm:$0xf]
      %v3722 = vld [vmem:[%s3677 + $0xe8] sm:$0xf]
      %v3723 = vld [vmem:[%s3677 + $0xf0] sm:$0x8]
      %v3724 = vld [vmem:[%s3677 + $0xf4] sm:$0xf]
      %v3725 = vld [vmem:[%s3677 + $0xf8] sm:$0xf]
      %v3727 = vshrl.u32 %v3678, 16
      %v3729 = vrot.slane %v3727, 7
      %v3730 = vrot.slane %v3729, 4
      %v3732 = vshrl.u32 %v3679, 16
      %v3734 = vrot.slane %v3732, 7
      %v3735 = vshll.u32 %v3679, 16
      %v3737 = vor.u32 %v3734, %v3735
      %v3738 = vsel %vm1673, %v3730, %v3737
      %v3739 = vrot.slane %v3734, 4
      %v3741 = vshrl.u32 %v3680, 16
      %v3743 = vrot.slane %v3741, 7
      %v3744 = vshll.u32 %v3680, 16
      %v3746 = vor.u32 %v3743, %v3744
      %v3747 = vsel %vm1673, %v3739, %v3746
      %v3749 = vshrl.u32 %v3681, 16
      %v3751 = vrot.slane %v3749, 7
      %v3752 = vrot.slane %v3751, 4
      %v3754 = vshrl.u32 %v3682, 16
      %v3756 = vrot.slane %v3754, 7
      %v3757 = vshll.u32 %v3682, 16
      %v3759 = vor.u32 %v3756, %v3757
      %v3760 = vsel %vm1673, %v3752, %v3759
      %v3761 = vrot.slane %v3756, 4
      %v3763 = vshrl.u32 %v3683, 16
      %v3765 = vrot.slane %v3763, 7
      %v3766 = vshll.u32 %v3683, 16
      %v3768 = vor.u32 %v3765, %v3766
      %v3769 = vsel %vm1673, %v3761, %v3768
      %v3771 = vshrl.u32 %v3684, 16
      %v3773 = vrot.slane %v3771, 7
      %v3774 = vrot.slane %v3773, 4
      %v3776 = vshrl.u32 %v3685, 16
      %v3778 = vrot.slane %v3776, 7
      %v3779 = vshll.u32 %v3685, 16
      %v3781 = vor.u32 %v3778, %v3779
      %v3782 = vsel %vm1673, %v3774, %v3781
      %v3783 = vrot.slane %v3778, 4
      %v3785 = vshrl.u32 %v3686, 16
      %v3787 = vrot.slane %v3785, 7
      %v3788 = vshll.u32 %v3686, 16
      %v3790 = vor.u32 %v3787, %v3788
      %v3791 = vsel %vm1673, %v3783, %v3790
      %v3793 = vshrl.u32 %v3687, 16
      %v3795 = vrot.slane %v3793, 7
      %v3796 = vrot.slane %v3795, 4
      %v3798 = vshrl.u32 %v3688, 16
      %v3800 = vrot.slane %v3798, 7
      %v3801 = vshll.u32 %v3688, 16
      %v3803 = vor.u32 %v3800, %v3801
      %v3804 = vsel %vm1673, %v3796, %v3803
      %v3805 = vrot.slane %v3800, 4
      %v3807 = vshrl.u32 %v3689, 16
      %v3809 = vrot.slane %v3807, 7
      %v3810 = vshll.u32 %v3689, 16
      %v3812 = vor.u32 %v3809, %v3810
      %v3813 = vsel %vm1673, %v3805, %v3812
      %v3815 = vshrl.u32 %v3690, 16
      %v3817 = vrot.slane %v3815, 7
      %v3818 = vrot.slane %v3817, 4
      %v3820 = vshrl.u32 %v3691, 16
      %v3822 = vrot.slane %v3820, 7
      %v3823 = vshll.u32 %v3691, 16
      %v3825 = vor.u32 %v3822, %v3823
      %v3826 = vsel %vm1673, %v3818, %v3825
      %v3827 = vrot.slane %v3822, 4
      %v3829 = vshrl.u32 %v3692, 16
      %v3831 = vrot.slane %v3829, 7
      %v3832 = vshll.u32 %v3692, 16
      %v3834 = vor.u32 %v3831, %v3832
      %v3835 = vsel %vm1673, %v3827, %v3834
      %v3837 = vshrl.u32 %v3693, 16
      %v3839 = vrot.slane %v3837, 7
      %v3840 = vrot.slane %v3839, 4
      %v3842 = vshrl.u32 %v3694, 16
      %v3844 = vrot.slane %v3842, 7
      %v3845 = vshll.u32 %v3694, 16
      %v3847 = vor.u32 %v3844, %v3845
      %v3848 = vsel %vm1673, %v3840, %v3847
      %v3849 = vrot.slane %v3844, 4
      %v3851 = vshrl.u32 %v3695, 16
      %v3853 = vrot.slane %v3851, 7
      %v3854 = vshll.u32 %v3695, 16
      %v3856 = vor.u32 %v3853, %v3854
      %v3857 = vsel %vm1673, %v3849, %v3856
      %v3859 = vshrl.u32 %v3696, 16
      %v3861 = vrot.slane %v3859, 7
      %v3862 = vrot.slane %v3861, 4
      %v3864 = vshrl.u32 %v3697, 16
      %v3866 = vrot.slane %v3864, 7
      %v3867 = vshll.u32 %v3697, 16
      %v3869 = vor.u32 %v3866, %v3867
      %v3870 = vsel %vm1673, %v3862, %v3869
      %v3871 = vrot.slane %v3866, 4
      %v3873 = vshrl.u32 %v3698, 16
      %v3875 = vrot.slane %v3873, 7
      %v3876 = vshll.u32 %v3698, 16
      %v3878 = vor.u32 %v3875, %v3876
      %v3879 = vsel %vm1673, %v3871, %v3878
      %v3881 = vshrl.u32 %v3699, 16
      %v3883 = vrot.slane %v3881, 7
      %v3884 = vrot.slane %v3883, 4
      %v3886 = vshrl.u32 %v3700, 16
      %v3888 = vrot.slane %v3886, 7
      %v3889 = vshll.u32 %v3700, 16
      %v3891 = vor.u32 %v3888, %v3889
      %v3892 = vsel %vm1673, %v3884, %v3891
      %v3893 = vrot.slane %v3888, 4
      %v3895 = vshrl.u32 %v3701, 16
      %v3897 = vrot.slane %v3895, 7
      %v3898 = vshll.u32 %v3701, 16
      %v3900 = vor.u32 %v3897, %v3898
      %v3901 = vsel %vm1673, %v3893, %v3900
      %v3903 = vshrl.u32 %v3702, 16
      %v3905 = vrot.slane %v3903, 7
      %v3906 = vrot.slane %v3905, 4
      %v3908 = vshrl.u32 %v3703, 16
      %v3910 = vrot.slane %v3908, 7
      %v3911 = vshll.u32 %v3703, 16
      %v3913 = vor.u32 %v3910, %v3911
      %v3914 = vsel %vm1673, %v3906, %v3913
      %v3915 = vrot.slane %v3910, 4
      %v3917 = vshrl.u32 %v3704, 16
      %v3919 = vrot.slane %v3917, 7
      %v3920 = vshll.u32 %v3704, 16
      %v3922 = vor.u32 %v3919, %v3920
      %v3923 = vsel %vm1673, %v3915, %v3922
      %v3925 = vshrl.u32 %v3705, 16
      %v3927 = vrot.slane %v3925, 7
      %v3928 = vrot.slane %v3927, 4
      %v3930 = vshrl.u32 %v3706, 16
      %v3932 = vrot.slane %v3930, 7
      %v3933 = vshll.u32 %v3706, 16
      %v3935 = vor.u32 %v3932, %v3933
      %v3936 = vsel %vm1673, %v3928, %v3935
      %v3937 = vrot.slane %v3932, 4
      %v3939 = vshrl.u32 %v3707, 16
      %v3941 = vrot.slane %v3939, 7
      %v3942 = vshll.u32 %v3707, 16
      %v3944 = vor.u32 %v3941, %v3942
      %v3945 = vsel %vm1673, %v3937, %v3944
      %v3947 = vshrl.u32 %v3708, 16
      %v3949 = vrot.slane %v3947, 7
      %v3950 = vrot.slane %v3949, 4
      %v3952 = vshrl.u32 %v3709, 16
      %v3954 = vrot.slane %v3952, 7
      %v3955 = vshll.u32 %v3709, 16
      %v3957 = vor.u32 %v3954, %v3955
      %v3958 = vsel %vm1673, %v3950, %v3957
      %v3959 = vrot.slane %v3954, 4
      %v3961 = vshrl.u32 %v3710, 16
      %v3963 = vrot.slane %v3961, 7
      %v3964 = vshll.u32 %v3710, 16
      %v3966 = vor.u32 %v3963, %v3964
      %v3967 = vsel %vm1673, %v3959, %v3966
      %v3969 = vshrl.u32 %v3711, 16
      %v3971 = vrot.slane %v3969, 7
      %v3972 = vrot.slane %v3971, 4
      %v3974 = vshrl.u32 %v3712, 16
      %v3976 = vrot.slane %v3974, 7
      %v3977 = vshll.u32 %v3712, 16
      %v3979 = vor.u32 %v3976, %v3977
      %v3980 = vsel %vm1673, %v3972, %v3979
      %v3981 = vrot.slane %v3976, 4
      %v3983 = vshrl.u32 %v3713, 16
      %v3985 = vrot.slane %v3983, 7
      %v3986 = vshll.u32 %v3713, 16
      %v3988 = vor.u32 %v3985, %v3986
      %v3989 = vsel %vm1673, %v3981, %v3988
      %v3991 = vshrl.u32 %v3714, 16
      %v3993 = vrot.slane %v3991, 7
      %v3994 = vrot.slane %v3993, 4
      %v3996 = vshrl.u32 %v3715, 16
      %v3998 = vrot.slane %v3996, 7
      %v3999 = vshll.u32 %v3715, 16
      %v4001 = vor.u32 %v3998, %v3999
      %v4002 = vsel %vm1673, %v3994, %v4001
      %v4003 = vrot.slane %v3998, 4
      %v4005 = vshrl.u32 %v3716, 16
      %v4007 = vrot.slane %v4005, 7
      %v4008 = vshll.u32 %v3716, 16
      %v4010 = vor.u32 %v4007, %v4008
      %v4011 = vsel %vm1673, %v4003, %v4010
      %v4013 = vshrl.u32 %v3717, 16
      %v4015 = vrot.slane %v4013, 7
      %v4016 = vrot.slane %v4015, 4
      %v4018 = vshrl.u32 %v3718, 16
      %v4020 = vrot.slane %v4018, 7
      %v4021 = vshll.u32 %v3718, 16
      %v4023 = vor.u32 %v4020, %v4021
      %v4024 = vsel %vm1673, %v4016, %v4023
      %v4025 = vrot.slane %v4020, 4
      %v4027 = vshrl.u32 %v3719, 16
      %v4029 = vrot.slane %v4027, 7
      %v4030 = vshll.u32 %v3719, 16
      %v4032 = vor.u32 %v4029, %v4030
      %v4033 = vsel %vm1673, %v4025, %v4032
      %v4035 = vshrl.u32 %v3720, 16
      %v4037 = vrot.slane %v4035, 7
      %v4038 = vrot.slane %v4037, 4
      %v4040 = vshrl.u32 %v3721, 16
      %v4042 = vrot.slane %v4040, 7
      %v4043 = vshll.u32 %v3721, 16
      %v4045 = vor.u32 %v4042, %v4043
      %v4046 = vsel %vm1673, %v4038, %v4045
      %v4047 = vrot.slane %v4042, 4
      %v4049 = vshrl.u32 %v3722, 16
      %v4051 = vrot.slane %v4049, 7
      %v4052 = vshll.u32 %v3722, 16
      %v4054 = vor.u32 %v4051, %v4052
      %v4055 = vsel %vm1673, %v4047, %v4054
      %v4057 = vshrl.u32 %v3723, 16
      %v4059 = vrot.slane %v4057, 7
      %v4060 = vrot.slane %v4059, 4
      %v4062 = vshrl.u32 %v3724, 16
      %v4064 = vrot.slane %v4062, 7
      %v4065 = vshll.u32 %v3724, 16
      %v4067 = vor.u32 %v4064, %v4065
      %v4068 = vsel %vm1673, %v4060, %v4067
      %v4069 = vrot.slane %v4064, 4
      %v4071 = vshrl.u32 %v3725, 16
      %v4073 = vrot.slane %v4071, 7
      %v4074 = vshll.u32 %v3725, 16
      %v4076 = vor.u32 %v4073, %v4074
      %v4077 = vsel %vm1673, %v4069, %v4076
      %4110 = vst [vmem:[#allocation3 + $0x18] sm:$0xf] %v3738
      %4111 = vst [vmem:[#allocation3 + $0x3c] sm:$0xf] %v3747
      %4112 = vst [vmem:[#allocation3 + $0x60] sm:$0xf] %v3760
      %4113 = vst [vmem:[#allocation3 + $0x84] sm:$0xf] %v3769
      %4114 = vst [vmem:[#allocation3 + $0xa8] sm:$0xf] %v3782
      %4115 = vst [vmem:[#allocation3 + $0xcc] sm:$0xf] %v3791
      %4116 = vst [vmem:[#allocation3 + $0xf0] sm:$0xf] %v3804
      %4117 = vst [vmem:[#allocation3 + $0x114] sm:$0xf] %v3813
      %4118 = vst [vmem:[#allocation3 + $0x138] sm:$0xf] %v3826
      %4119 = vst [vmem:[#allocation3 + $0x15c] sm:$0xf] %v3835
      %4120 = vst [vmem:[#allocation3 + $0x180] sm:$0xf] %v3848
      %4121 = vst [vmem:[#allocation3 + $0x1a4] sm:$0xf] %v3857
      %4122 = vst [vmem:[#allocation3 + $0x1c8] sm:$0xf] %v3870
      %4123 = vst [vmem:[#allocation3 + $0x1ec] sm:$0xf] %v3879
      %4124 = vst [vmem:[#allocation3 + $0x210] sm:$0xf] %v3892
      %4125 = vst [vmem:[#allocation3 + $0x234] sm:$0xf] %v3901
      %4126 = vst [vmem:[#allocation3 + $0x258] sm:$0xf] %v3914
      %4127 = vst [vmem:[#allocation3 + $0x27c] sm:$0xf] %v3923
      %4128 = vst [vmem:[#allocation3 + $0x2a0] sm:$0xf] %v3936
      %4129 = vst [vmem:[#allocation3 + $0x2c4] sm:$0xf] %v3945
      %4130 = vst [vmem:[#allocation3 + $0x2e8] sm:$0xf] %v3958
      %4131 = vst [vmem:[#allocation3 + $0x30c] sm:$0xf] %v3967
      %4132 = vst [vmem:[#allocation3 + $0x330] sm:$0xf] %v3980
      %4133 = vst [vmem:[#allocation3 + $0x354] sm:$0xf] %v3989
      %4134 = vst [vmem:[#allocation3 + $0x378] sm:$0xf] %v4002
      %4135 = vst [vmem:[#allocation3 + $0x39c] sm:$0xf] %v4011
      %4136 = vst [vmem:[#allocation3 + $0x3c0] sm:$0xf] %v4024
      %4137 = vst [vmem:[#allocation3 + $0x3e4] sm:$0xf] %v4033
      %4138 = vst [vmem:[#allocation3 + $0x408] sm:$0xf] %v4046
      %4139 = vst [vmem:[#allocation3 + $0x42c] sm:$0xf] %v4055
      %4140 = vst [vmem:[#allocation3 + $0x450] sm:$0xf] %v4068
      %4141 = vst [vmem:[#allocation3 + $0x474] sm:$0xf] %v4077
      %v4142 = vld [vmem:[%s3677 + $0x4] sm:$0xf]
      %v4143 = vld [vmem:[%s3677 + $0x8] sm:$0xf]
      %v4144 = vld [vmem:[%s3677 + $0x14] sm:$0xf]
      %v4145 = vld [vmem:[%s3677 + $0x18] sm:$0xf]
      %v4146 = vld [vmem:[%s3677 + $0x24] sm:$0xf]
      %v4147 = vld [vmem:[%s3677 + $0x28] sm:$0xf]
      %v4148 = vld [vmem:[%s3677 + $0x34] sm:$0xf]
      %v4149 = vld [vmem:[%s3677 + $0x38] sm:$0xf]
      %v4150 = vld [vmem:[%s3677 + $0x44] sm:$0xf]
      %v4151 = vld [vmem:[%s3677 + $0x48] sm:$0xf]
      %v4152 = vld [vmem:[%s3677 + $0x54] sm:$0xf]
      %v4153 = vld [vmem:[%s3677 + $0x58] sm:$0xf]
      %v4154 = vld [vmem:[%s3677 + $0x64] sm:$0xf]
      %v4155 = vld [vmem:[%s3677 + $0x68] sm:$0xf]
      %v4156 = vld [vmem:[%s3677 + $0x74] sm:$0xf]
      %v4157 = vld [vmem:[%s3677 + $0x78] sm:$0xf]
      %v4158 = vld [vmem:[%s3677 + $0x84] sm:$0xf]
      %v4159 = vld [vmem:[%s3677 + $0x88] sm:$0xf]
      %v4160 = vld [vmem:[%s3677 + $0x94] sm:$0xf]
      %v4161 = vld [vmem:[%s3677 + $0x98] sm:$0xf]
      %v4162 = vld [vmem:[%s3677 + $0xa4] sm:$0xf]
      %v4163 = vld [vmem:[%s3677 + $0xa8] sm:$0xf]
      %v4164 = vld [vmem:[%s3677 + $0xb4] sm:$0xf]
      %v4165 = vld [vmem:[%s3677 + $0xb8] sm:$0xf]
      %v4166 = vld [vmem:[%s3677 + $0xc4] sm:$0xf]
      %v4167 = vld [vmem:[%s3677 + $0xc8] sm:$0xf]
      %v4168 = vld [vmem:[%s3677 + $0xd4] sm:$0xf]
      %v4169 = vld [vmem:[%s3677 + $0xd8] sm:$0xf]
      %v4170 = vld [vmem:[%s3677 + $0xe4] sm:$0xf]
      %v4171 = vld [vmem:[%s3677 + $0xe8] sm:$0xf]
      %v4172 = vld [vmem:[%s3677 + $0xf4] sm:$0xf]
      %v4173 = vld [vmem:[%s3677 + $0xf8] sm:$0xf]
      %4174 = vst [vmem:[#allocation3 + $0x1c] sm:$0xf] %v4142
      %4175 = vst [vmem:[#allocation3 + $0x40] sm:$0xf] %v4143
      %4176 = vst [vmem:[#allocation3 + $0x64] sm:$0xf] %v4144
      %4177 = vst [vmem:[#allocation3 + $0x88] sm:$0xf] %v4145
      %4178 = vst [vmem:[#allocation3 + $0xac] sm:$0xf] %v4146
      %4179 = vst [vmem:[#allocation3 + $0xd0] sm:$0xf] %v4147
      %4180 = vst [vmem:[#allocation3 + $0xf4] sm:$0xf] %v4148
      %4181 = vst [vmem:[#allocation3 + $0x118] sm:$0xf] %v4149
      %4182 = vst [vmem:[#allocation3 + $0x13c] sm:$0xf] %v4150
      %4183 = vst [vmem:[#allocation3 + $0x160] sm:$0xf] %v4151
      %4184 = vst [vmem:[#allocation3 + $0x184] sm:$0xf] %v4152
      %4185 = vst [vmem:[#allocation3 + $0x1a8] sm:$0xf] %v4153
      %4186 = vst [vmem:[#allocation3 + $0x1cc] sm:$0xf] %v4154
      %4187 = vst [vmem:[#allocation3 + $0x1f0] sm:$0xf] %v4155
      %4188 = vst [vmem:[#allocation3 + $0x214] sm:$0xf] %v4156
      %4189 = vst [vmem:[#allocation3 + $0x238] sm:$0xf] %v4157
      %4190 = vst [vmem:[#allocation3 + $0x25c] sm:$0xf] %v4158
      %4191 = vst [vmem:[#allocation3 + $0x280] sm:$0xf] %v4159
      %4192 = vst [vmem:[#allocation3 + $0x2a4] sm:$0xf] %v4160
      %4193 = vst [vmem:[#allocation3 + $0x2c8] sm:$0xf] %v4161
      %4194 = vst [vmem:[#allocation3 + $0x2ec] sm:$0xf] %v4162
      %4195 = vst [vmem:[#allocation3 + $0x310] sm:$0xf] %v4163
      %4196 = vst [vmem:[#allocation3 + $0x334] sm:$0xf] %v4164
      %4197 = vst [vmem:[#allocation3 + $0x358] sm:$0xf] %v4165
      %4198 = vst [vmem:[#allocation3 + $0x37c] sm:$0xf] %v4166
      %4199 = vst [vmem:[#allocation3 + $0x3a0] sm:$0xf] %v4167
      %4200 = vst [vmem:[#allocation3 + $0x3c4] sm:$0xf] %v4168
      %4201 = vst [vmem:[#allocation3 + $0x3e8] sm:$0xf] %v4169
      %4202 = vst [vmem:[#allocation3 + $0x40c] sm:$0xf] %v4170
      %4203 = vst [vmem:[#allocation3 + $0x430] sm:$0xf] %v4171
      %4204 = vst [vmem:[#allocation3 + $0x454] sm:$0xf] %v4172
      %4205 = vst [vmem:[#allocation3 + $0x478] sm:$0xf] %v4173
      %v4206 = vld [vmem:[%s3677 + $0x4] sm:$0xf]
      %v4207 = vld [vmem:[%s3677 + $0x8] sm:$0xf]
      %v4208 = vld [vmem:[%s3677 + $0xc] sm:$0x1]
      %v4209 = vld [vmem:[%s3677 + $0x14] sm:$0xf]
      %v4210 = vld [vmem:[%s3677 + $0x18] sm:$0xf]
      %v4211 = vld [vmem:[%s3677 + $0x1c] sm:$0x1]
      %v4212 = vld [vmem:[%s3677 + $0x24] sm:$0xf]
      %v4213 = vld [vmem:[%s3677 + $0x28] sm:$0xf]
      %v4214 = vld [vmem:[%s3677 + $0x2c] sm:$0x1]
      %v4215 = vld [vmem:[%s3677 + $0x34] sm:$0xf]
      %v4216 = vld [vmem:[%s3677 + $0x38] sm:$0xf]
      %v4217 = vld [vmem:[%s3677 + $0x3c] sm:$0x1]
      %v4218 = vld [vmem:[%s3677 + $0x44] sm:$0xf]
      %v4219 = vld [vmem:[%s3677 + $0x48] sm:$0xf]
      %v4220 = vld [vmem:[%s3677 + $0x4c] sm:$0x1]
      %v4221 = vld [vmem:[%s3677 + $0x54] sm:$0xf]
      %v4222 = vld [vmem:[%s3677 + $0x58] sm:$0xf]
      %v4223 = vld [vmem:[%s3677 + $0x5c] sm:$0x1]
      %v4224 = vld [vmem:[%s3677 + $0x64] sm:$0xf]
      %v4225 = vld [vmem:[%s3677 + $0x68] sm:$0xf]
      %v4226 = vld [vmem:[%s3677 + $0x6c] sm:$0x1]
      %v4227 = vld [vmem:[%s3677 + $0x74] sm:$0xf]
      %v4228 = vld [vmem:[%s3677 + $0x78] sm:$0xf]
      %v4229 = vld [vmem:[%s3677 + $0x7c] sm:$0x1]
      %v4230 = vld [vmem:[%s3677 + $0x84] sm:$0xf]
      %v4231 = vld [vmem:[%s3677 + $0x88] sm:$0xf]
      %v4232 = vld [vmem:[%s3677 + $0x8c] sm:$0x1]
      %v4233 = vld [vmem:[%s3677 + $0x94] sm:$0xf]
      %v4234 = vld [vmem:[%s3677 + $0x98] sm:$0xf]
      %v4235 = vld [vmem:[%s3677 + $0x9c] sm:$0x1]
      %v4236 = vld [vmem:[%s3677 + $0xa4] sm:$0xf]
      %v4237 = vld [vmem:[%s3677 + $0xa8] sm:$0xf]
      %v4238 = vld [vmem:[%s3677 + $0xac] sm:$0x1]
      %v4239 = vld [vmem:[%s3677 + $0xb4] sm:$0xf]
      %v4240 = vld [vmem:[%s3677 + $0xb8] sm:$0xf]
      %v4241 = vld [vmem:[%s3677 + $0xbc] sm:$0x1]
      %v4242 = vld [vmem:[%s3677 + $0xc4] sm:$0xf]
      %v4243 = vld [vmem:[%s3677 + $0xc8] sm:$0xf]
      %v4244 = vld [vmem:[%s3677 + $0xcc] sm:$0x1]
      %v4245 = vld [vmem:[%s3677 + $0xd4] sm:$0xf]
      %v4246 = vld [vmem:[%s3677 + $0xd8] sm:$0xf]
      %v4247 = vld [vmem:[%s3677 + $0xdc] sm:$0x1]
      %v4248 = vld [vmem:[%s3677 + $0xe4] sm:$0xf]
      %v4249 = vld [vmem:[%s3677 + $0xe8] sm:$0xf]
      %v4250 = vld [vmem:[%s3677 + $0xec] sm:$0x1]
      %v4251 = vld [vmem:[%s3677 + $0xf4] sm:$0xf]
      %v4252 = vld [vmem:[%s3677 + $0xf8] sm:$0xf]
      %v4253 = vld [vmem:[%s3677 + $0xfc] sm:$0x1]
      %v4255 = vshrl.u32 %v4206, 16
      %v4257 = vrot.slane %v4255, 4
      %v4258 = vshll.u32 %v4206, 16
      %v4260 = vrot.slane %v4258, 5
      %v4261 = vor.u32 %v4257, %v4260
      %v4262 = vrot.slane %v4261, 4
      %v4264 = vshll.u32 %v4207, 16
      %v4266 = vrot.slane %v4264, 5
      %v4267 = vsel %vm2204, %v4262, %v4266
      %v4268 = vshrl.u32 %v4207, 16
      %v4270 = vrot.slane %v4268, 4
      %v4271 = vor.u32 %v4270, %v4266
      %v4272 = vrot.slane %v4271, 4
      %v4274 = vshll.u32 %v4208, 16
      %v4276 = vrot.slane %v4274, 5
      %v4277 = vsel %vm2204, %v4272, %v4276
      %v4279 = vshrl.u32 %v4209, 16
      %v4281 = vrot.slane %v4279, 4
      %v4282 = vshll.u32 %v4209, 16
      %v4284 = vrot.slane %v4282, 5
      %v4285 = vor.u32 %v4281, %v4284
      %v4286 = vrot.slane %v4285, 4
      %v4288 = vshll.u32 %v4210, 16
      %v4290 = vrot.slane %v4288, 5
      %v4291 = vsel %vm2204, %v4286, %v4290
      %v4292 = vshrl.u32 %v4210, 16
      %v4294 = vrot.slane %v4292, 4
      %v4295 = vor.u32 %v4294, %v4290
      %v4296 = vrot.slane %v4295, 4
      %v4298 = vshll.u32 %v4211, 16
      %v4300 = vrot.slane %v4298, 5
      %v4301 = vsel %vm2204, %v4296, %v4300
      %v4303 = vshrl.u32 %v4212, 16
      %v4305 = vrot.slane %v4303, 4
      %v4306 = vshll.u32 %v4212, 16
      %v4308 = vrot.slane %v4306, 5
      %v4309 = vor.u32 %v4305, %v4308
      %v4310 = vrot.slane %v4309, 4
      %v4312 = vshll.u32 %v4213, 16
      %v4314 = vrot.slane %v4312, 5
      %v4315 = vsel %vm2204, %v4310, %v4314
      %v4316 = vshrl.u32 %v4213, 16
      %v4318 = vrot.slane %v4316, 4
      %v4319 = vor.u32 %v4318, %v4314
      %v4320 = vrot.slane %v4319, 4
      %v4322 = vshll.u32 %v4214, 16
      %v4324 = vrot.slane %v4322, 5
      %v4325 = vsel %vm2204, %v4320, %v4324
      %v4327 = vshrl.u32 %v4215, 16
      %v4329 = vrot.slane %v4327, 4
      %v4330 = vshll.u32 %v4215, 16
      %v4332 = vrot.slane %v4330, 5
      %v4333 = vor.u32 %v4329, %v4332
      %v4334 = vrot.slane %v4333, 4
      %v4336 = vshll.u32 %v4216, 16
      %v4338 = vrot.slane %v4336, 5
      %v4339 = vsel %vm2204, %v4334, %v4338
      %v4340 = vshrl.u32 %v4216, 16
      %v4342 = vrot.slane %v4340, 4
      %v4343 = vor.u32 %v4342, %v4338
      %v4344 = vrot.slane %v4343, 4
      %v4346 = vshll.u32 %v4217, 16
      %v4348 = vrot.slane %v4346, 5
      %v4349 = vsel %vm2204, %v4344, %v4348
      %v4351 = vshrl.u32 %v4218, 16
      %v4353 = vrot.slane %v4351, 4
      %v4354 = vshll.u32 %v4218, 16
      %v4356 = vrot.slane %v4354, 5
      %v4357 = vor.u32 %v4353, %v4356
      %v4358 = vrot.slane %v4357, 4
      %v4360 = vshll.u32 %v4219, 16
      %v4362 = vrot.slane %v4360, 5
      %v4363 = vsel %vm2204, %v4358, %v4362
      %v4364 = vshrl.u32 %v4219, 16
      %v4366 = vrot.slane %v4364, 4
      %v4367 = vor.u32 %v4366, %v4362
      %v4368 = vrot.slane %v4367, 4
      %v4370 = vshll.u32 %v4220, 16
      %v4372 = vrot.slane %v4370, 5
      %v4373 = vsel %vm2204, %v4368, %v4372
      %v4375 = vshrl.u32 %v4221, 16
      %v4377 = vrot.slane %v4375, 4
      %v4378 = vshll.u32 %v4221, 16
      %v4380 = vrot.slane %v4378, 5
      %v4381 = vor.u32 %v4377, %v4380
      %v4382 = vrot.slane %v4381, 4
      %v4384 = vshll.u32 %v4222, 16
      %v4386 = vrot.slane %v4384, 5
      %v4387 = vsel %vm2204, %v4382, %v4386
      %v4388 = vshrl.u32 %v4222, 16
      %v4390 = vrot.slane %v4388, 4
      %v4391 = vor.u32 %v4390, %v4386
      %v4392 = vrot.slane %v4391, 4
      %v4394 = vshll.u32 %v4223, 16
      %v4396 = vrot.slane %v4394, 5
      %v4397 = vsel %vm2204, %v4392, %v4396
      %v4399 = vshrl.u32 %v4224, 16
      %v4401 = vrot.slane %v4399, 4
      %v4402 = vshll.u32 %v4224, 16
      %v4404 = vrot.slane %v4402, 5
      %v4405 = vor.u32 %v4401, %v4404
      %v4406 = vrot.slane %v4405, 4
      %v4408 = vshll.u32 %v4225, 16
      %v4410 = vrot.slane %v4408, 5
      %v4411 = vsel %vm2204, %v4406, %v4410
      %v4412 = vshrl.u32 %v4225, 16
      %v4414 = vrot.slane %v4412, 4
      %v4415 = vor.u32 %v4414, %v4410
      %v4416 = vrot.slane %v4415, 4
      %v4418 = vshll.u32 %v4226, 16
      %v4420 = vrot.slane %v4418, 5
      %v4421 = vsel %vm2204, %v4416, %v4420
      %v4423 = vshrl.u32 %v4227, 16
      %v4425 = vrot.slane %v4423, 4
      %v4426 = vshll.u32 %v4227, 16
      %v4428 = vrot.slane %v4426, 5
      %v4429 = vor.u32 %v4425, %v4428
      %v4430 = vrot.slane %v4429, 4
      %v4432 = vshll.u32 %v4228, 16
      %v4434 = vrot.slane %v4432, 5
      %v4435 = vsel %vm2204, %v4430, %v4434
      %v4436 = vshrl.u32 %v4228, 16
      %v4438 = vrot.slane %v4436, 4
      %v4439 = vor.u32 %v4438, %v4434
      %v4440 = vrot.slane %v4439, 4
      %v4442 = vshll.u32 %v4229, 16
      %v4444 = vrot.slane %v4442, 5
      %v4445 = vsel %vm2204, %v4440, %v4444
      %v4447 = vshrl.u32 %v4230, 16
      %v4449 = vrot.slane %v4447, 4
      %v4450 = vshll.u32 %v4230, 16
      %v4452 = vrot.slane %v4450, 5
      %v4453 = vor.u32 %v4449, %v4452
      %v4454 = vrot.slane %v4453, 4
      %v4456 = vshll.u32 %v4231, 16
      %v4458 = vrot.slane %v4456, 5
      %v4459 = vsel %vm2204, %v4454, %v4458
      %v4460 = vshrl.u32 %v4231, 16
      %v4462 = vrot.slane %v4460, 4
      %v4463 = vor.u32 %v4462, %v4458
      %v4464 = vrot.slane %v4463, 4
      %v4466 = vshll.u32 %v4232, 16
      %v4468 = vrot.slane %v4466, 5
      %v4469 = vsel %vm2204, %v4464, %v4468
      %v4471 = vshrl.u32 %v4233, 16
      %v4473 = vrot.slane %v4471, 4
      %v4474 = vshll.u32 %v4233, 16
      %v4476 = vrot.slane %v4474, 5
      %v4477 = vor.u32 %v4473, %v4476
      %v4478 = vrot.slane %v4477, 4
      %v4480 = vshll.u32 %v4234, 16
      %v4482 = vrot.slane %v4480, 5
      %v4483 = vsel %vm2204, %v4478, %v4482
      %v4484 = vshrl.u32 %v4234, 16
      %v4486 = vrot.slane %v4484, 4
      %v4487 = vor.u32 %v4486, %v4482
      %v4488 = vrot.slane %v4487, 4
      %v4490 = vshll.u32 %v4235, 16
      %v4492 = vrot.slane %v4490, 5
      %v4493 = vsel %vm2204, %v4488, %v4492
      %v4495 = vshrl.u32 %v4236, 16
      %v4497 = vrot.slane %v4495, 4
      %v4498 = vshll.u32 %v4236, 16
      %v4500 = vrot.slane %v4498, 5
      %v4501 = vor.u32 %v4497, %v4500
      %v4502 = vrot.slane %v4501, 4
      %v4504 = vshll.u32 %v4237, 16
      %v4506 = vrot.slane %v4504, 5
      %v4507 = vsel %vm2204, %v4502, %v4506
      %v4508 = vshrl.u32 %v4237, 16
      %v4510 = vrot.slane %v4508, 4
      %v4511 = vor.u32 %v4510, %v4506
      %v4512 = vrot.slane %v4511, 4
      %v4514 = vshll.u32 %v4238, 16
      %v4516 = vrot.slane %v4514, 5
      %v4517 = vsel %vm2204, %v4512, %v4516
      %v4519 = vshrl.u32 %v4239, 16
      %v4521 = vrot.slane %v4519, 4
      %v4522 = vshll.u32 %v4239, 16
      %v4524 = vrot.slane %v4522, 5
      %v4525 = vor.u32 %v4521, %v4524
      %v4526 = vrot.slane %v4525, 4
      %v4528 = vshll.u32 %v4240, 16
      %v4530 = vrot.slane %v4528, 5
      %v4531 = vsel %vm2204, %v4526, %v4530
      %v4532 = vshrl.u32 %v4240, 16
      %v4534 = vrot.slane %v4532, 4
      %v4535 = vor.u32 %v4534, %v4530
      %v4536 = vrot.slane %v4535, 4
      %v4538 = vshll.u32 %v4241, 16
      %v4540 = vrot.slane %v4538, 5
      %v4541 = vsel %vm2204, %v4536, %v4540
      %v4543 = vshrl.u32 %v4242, 16
      %v4545 = vrot.slane %v4543, 4
      %v4546 = vshll.u32 %v4242, 16
      %v4548 = vrot.slane %v4546, 5
      %v4549 = vor.u32 %v4545, %v4548
      %v4550 = vrot.slane %v4549, 4
      %v4552 = vshll.u32 %v4243, 16
      %v4554 = vrot.slane %v4552, 5
      %v4555 = vsel %vm2204, %v4550, %v4554
      %v4556 = vshrl.u32 %v4243, 16
      %v4558 = vrot.slane %v4556, 4
      %v4559 = vor.u32 %v4558, %v4554
      %v4560 = vrot.slane %v4559, 4
      %v4562 = vshll.u32 %v4244, 16
      %v4564 = vrot.slane %v4562, 5
      %v4565 = vsel %vm2204, %v4560, %v4564
      %v4567 = vshrl.u32 %v4245, 16
      %v4569 = vrot.slane %v4567, 4
      %v4570 = vshll.u32 %v4245, 16
      %v4572 = vrot.slane %v4570, 5
      %v4573 = vor.u32 %v4569, %v4572
      %v4574 = vrot.slane %v4573, 4
      %v4576 = vshll.u32 %v4246, 16
      %v4578 = vrot.slane %v4576, 5
      %v4579 = vsel %vm2204, %v4574, %v4578
      %v4580 = vshrl.u32 %v4246, 16
      %v4582 = vrot.slane %v4580, 4
      %v4583 = vor.u32 %v4582, %v4578
      %v4584 = vrot.slane %v4583, 4
      %v4586 = vshll.u32 %v4247, 16
      %v4588 = vrot.slane %v4586, 5
      %v4589 = vsel %vm2204, %v4584, %v4588
      %v4591 = vshrl.u32 %v4248, 16
      %v4593 = vrot.slane %v4591, 4
      %v4594 = vshll.u32 %v4248, 16
      %v4596 = vrot.slane %v4594, 5
      %v4597 = vor.u32 %v4593, %v4596
      %v4598 = vrot.slane %v4597, 4
      %v4600 = vshll.u32 %v4249, 16
      %v4602 = vrot.slane %v4600, 5
      %v4603 = vsel %vm2204, %v4598, %v4602
      %v4604 = vshrl.u32 %v4249, 16
      %v4606 = vrot.slane %v4604, 4
      %v4607 = vor.u32 %v4606, %v4602
      %v4608 = vrot.slane %v4607, 4
      %v4610 = vshll.u32 %v4250, 16
      %v4612 = vrot.slane %v4610, 5
      %v4613 = vsel %vm2204, %v4608, %v4612
      %v4615 = vshrl.u32 %v4251, 16
      %v4617 = vrot.slane %v4615, 4
      %v4618 = vshll.u32 %v4251, 16
      %v4620 = vrot.slane %v4618, 5
      %v4621 = vor.u32 %v4617, %v4620
      %v4622 = vrot.slane %v4621, 4
      %v4624 = vshll.u32 %v4252, 16
      %v4626 = vrot.slane %v4624, 5
      %v4627 = vsel %vm2204, %v4622, %v4626
      %v4628 = vshrl.u32 %v4252, 16
      %v4630 = vrot.slane %v4628, 4
      %v4631 = vor.u32 %v4630, %v4626
      %v4632 = vrot.slane %v4631, 4
      %v4634 = vshll.u32 %v4253, 16
      %v4636 = vrot.slane %v4634, 5
      %v4637 = vsel %vm2204, %v4632, %v4636
      %4670 = vst [vmem:[#allocation3 + $0x20] sm:$0xf] %v4267
      %4671 = vst [vmem:[#allocation3 + $0x44] sm:$0xf] %v4277
      %4672 = vst [vmem:[#allocation3 + $0x68] sm:$0xf] %v4291
      %4673 = vst [vmem:[#allocation3 + $0x8c] sm:$0xf] %v4301
      %4674 = vst [vmem:[#allocation3 + $0xb0] sm:$0xf] %v4315
      %4675 = vst [vmem:[#allocation3 + $0xd4] sm:$0xf] %v4325
      %4676 = vst [vmem:[#allocation3 + $0xf8] sm:$0xf] %v4339
      %4677 = vst [vmem:[#allocation3 + $0x11c] sm:$0xf] %v4349
      %4678 = vst [vmem:[#allocation3 + $0x140] sm:$0xf] %v4363
      %4679 = vst [vmem:[#allocation3 + $0x164] sm:$0xf] %v4373
      %4680 = vst [vmem:[#allocation3 + $0x188] sm:$0xf] %v4387
      %4681 = vst [vmem:[#allocation3 + $0x1ac] sm:$0xf] %v4397
      %4682 = vst [vmem:[#allocation3 + $0x1d0] sm:$0xf] %v4411
      %4683 = vst [vmem:[#allocation3 + $0x1f4] sm:$0xf] %v4421
      %4684 = vst [vmem:[#allocation3 + $0x218] sm:$0xf] %v4435
      %4685 = vst [vmem:[#allocation3 + $0x23c] sm:$0xf] %v4445
      %4686 = vst [vmem:[#allocation3 + $0x260] sm:$0xf] %v4459
      %4687 = vst [vmem:[#allocation3 + $0x284] sm:$0xf] %v4469
      %4688 = vst [vmem:[#allocation3 + $0x2a8] sm:$0xf] %v4483
      %4689 = vst [vmem:[#allocation3 + $0x2cc] sm:$0xf] %v4493
      %4690 = vst [vmem:[#allocation3 + $0x2f0] sm:$0xf] %v4507
      %4691 = vst [vmem:[#allocation3 + $0x314] sm:$0xf] %v4517
      %4692 = vst [vmem:[#allocation3 + $0x338] sm:$0xf] %v4531
      %4693 = vst [vmem:[#allocation3 + $0x35c] sm:$0xf] %v4541
      %4694 = vst [vmem:[#allocation3 + $0x380] sm:$0xf] %v4555
      %4695 = vst [vmem:[#allocation3 + $0x3a4] sm:$0xf] %v4565
      %4696 = vst [vmem:[#allocation3 + $0x3c8] sm:$0xf] %v4579
      %4697 = vst [vmem:[#allocation3 + $0x3ec] sm:$0xf] %v4589
      %4698 = vst [vmem:[#allocation3 + $0x410] sm:$0xf] %v4603
      %4699 = vst [vmem:[#allocation3 + $0x434] sm:$0xf] %v4613
      %4700 = vst [vmem:[#allocation3 + $0x458] sm:$0xf] %v4627
      %4701 = vst [vmem:[#allocation3 + $0x47c] sm:$0xf] %v4637
      %v4702 = vld [vmem:[#allocation3] sm:$0xff]
      %v4703 = vld [vmem:[#allocation3 + $0x8] sm:$0xff]
      %v4704 = vld [vmem:[#allocation3 + $0x10] sm:$0xff]
      %v4705 = vld [vmem:[#allocation3 + $0x18] sm:$0xff]
      %v4706 = vld [vmem:[#allocation3 + $0x20] sm:$0xf]
      %v4707 = vld [vmem:[#allocation3 + $0x24] sm:$0xff]
      %v4708 = vld [vmem:[#allocation3 + $0x2c] sm:$0xff]
      %v4709 = vld [vmem:[#allocation3 + $0x34] sm:$0xff]
      %v4710 = vld [vmem:[#allocation3 + $0x3c] sm:$0xff]
      %v4711 = vld [vmem:[#allocation3 + $0x44] sm:$0xf]
      %v4712 = vld [vmem:[#allocation3 + $0x48] sm:$0xff]
      %v4713 = vld [vmem:[#allocation3 + $0x50] sm:$0xff]
      %v4714 = vld [vmem:[#allocation3 + $0x58] sm:$0xff]
      %v4715 = vld [vmem:[#allocation3 + $0x60] sm:$0xff]
      %v4716 = vld [vmem:[#allocation3 + $0x68] sm:$0xf]
      %v4717 = vld [vmem:[#allocation3 + $0x6c] sm:$0xff]
      %v4718 = vld [vmem:[#allocation3 + $0x74] sm:$0xff]
      %v4719 = vld [vmem:[#allocation3 + $0x7c] sm:$0xff]
      %v4720 = vld [vmem:[#allocation3 + $0x84] sm:$0xff]
      %v4721 = vld [vmem:[#allocation3 + $0x8c] sm:$0xf]
      %v4722 = vld [vmem:[#allocation3 + $0x90] sm:$0xff]
      %v4723 = vld [vmem:[#allocation3 + $0x98] sm:$0xff]
      %v4724 = vld [vmem:[#allocation3 + $0xa0] sm:$0xff]
      %v4725 = vld [vmem:[#allocation3 + $0xa8] sm:$0xff]
      %v4726 = vld [vmem:[#allocation3 + $0xb0] sm:$0xf]
      %v4727 = vld [vmem:[#allocation3 + $0xb4] sm:$0xff]
      %v4728 = vld [vmem:[#allocation3 + $0xbc] sm:$0xff]
      %v4729 = vld [vmem:[#allocation3 + $0xc4] sm:$0xff]
      %v4730 = vld [vmem:[#allocation3 + $0xcc] sm:$0xff]
      %v4731 = vld [vmem:[#allocation3 + $0xd4] sm:$0xf]
      %v4732 = vld [vmem:[#allocation3 + $0xd8] sm:$0xff]
      %v4733 = vld [vmem:[#allocation3 + $0xe0] sm:$0xff]
      %v4734 = vld [vmem:[#allocation3 + $0xe8] sm:$0xff]
      %v4735 = vld [vmem:[#allocation3 + $0xf0] sm:$0xff]
      %v4736 = vld [vmem:[#allocation3 + $0xf8] sm:$0xf]
      %v4737 = vld [vmem:[#allocation3 + $0xfc] sm:$0xff]
      %v4738 = vld [vmem:[#allocation3 + $0x104] sm:$0xff]
      %v4739 = vld [vmem:[#allocation3 + $0x10c] sm:$0xff]
      %v4740 = vld [vmem:[#allocation3 + $0x114] sm:$0xff]
      %v4741 = vld [vmem:[#allocation3 + $0x11c] sm:$0xf]
      %v4742 = vld [vmem:[#allocation3 + $0x120] sm:$0xff]
      %v4743 = vld [vmem:[#allocation3 + $0x128] sm:$0xff]
      %v4744 = vld [vmem:[#allocation3 + $0x130] sm:$0xff]
      %v4745 = vld [vmem:[#allocation3 + $0x138] sm:$0xff]
      %v4746 = vld [vmem:[#allocation3 + $0x140] sm:$0xf]
      %v4747 = vld [vmem:[#allocation3 + $0x144] sm:$0xff]
      %v4748 = vld [vmem:[#allocation3 + $0x14c] sm:$0xff]
      %v4749 = vld [vmem:[#allocation3 + $0x154] sm:$0xff]
      %v4750 = vld [vmem:[#allocation3 + $0x15c] sm:$0xff]
      %v4751 = vld [vmem:[#allocation3 + $0x164] sm:$0xf]
      %v4752 = vld [vmem:[#allocation3 + $0x168] sm:$0xff]
      %v4753 = vld [vmem:[#allocation3 + $0x170] sm:$0xff]
      %v4754 = vld [vmem:[#allocation3 + $0x178] sm:$0xff]
      %v4755 = vld [vmem:[#allocation3 + $0x180] sm:$0xff]
      %v4756 = vld [vmem:[#allocation3 + $0x188] sm:$0xf]
      %v4757 = vld [vmem:[#allocation3 + $0x18c] sm:$0xff]
      %v4758 = vld [vmem:[#allocation3 + $0x194] sm:$0xff]
      %v4759 = vld [vmem:[#allocation3 + $0x19c] sm:$0xff]
      %v4760 = vld [vmem:[#allocation3 + $0x1a4] sm:$0xff]
      %v4761 = vld [vmem:[#allocation3 + $0x1ac] sm:$0xf]
      %v4762 = vld [vmem:[#allocation3 + $0x1b0] sm:$0xff]
      %v4763 = vld [vmem:[#allocation3 + $0x1b8] sm:$0xff]
      %v4764 = vld [vmem:[#allocation3 + $0x1c0] sm:$0xff]
      %v4765 = vld [vmem:[#allocation3 + $0x1c8] sm:$0xff]
      %v4766 = vld [vmem:[#allocation3 + $0x1d0] sm:$0xf]
      %v4767 = vld [vmem:[#allocation3 + $0x1d4] sm:$0xff]
      %v4768 = vld [vmem:[#allocation3 + $0x1dc] sm:$0xff]
      %v4769 = vld [vmem:[#allocation3 + $0x1e4] sm:$0xff]
      %v4770 = vld [vmem:[#allocation3 + $0x1ec] sm:$0xff]
      %v4771 = vld [vmem:[#allocation3 + $0x1f4] sm:$0xf]
      %v4772 = vld [vmem:[#allocation3 + $0x1f8] sm:$0xff]
      %v4773 = vld [vmem:[#allocation3 + $0x200] sm:$0xff]
      %v4774 = vld [vmem:[#allocation3 + $0x208] sm:$0xff]
      %v4775 = vld [vmem:[#allocation3 + $0x210] sm:$0xff]
      %v4776 = vld [vmem:[#allocation3 + $0x218] sm:$0xf]
      %v4777 = vld [vmem:[#allocation3 + $0x21c] sm:$0xff]
      %v4778 = vld [vmem:[#allocation3 + $0x224] sm:$0xff]
      %v4779 = vld [vmem:[#allocation3 + $0x22c] sm:$0xff]
      %v4780 = vld [vmem:[#allocation3 + $0x234] sm:$0xff]
      %v4781 = vld [vmem:[#allocation3 + $0x23c] sm:$0xf]
      %v4782 = vld [vmem:[#allocation3 + $0x240] sm:$0xff]
      %v4783 = vld [vmem:[#allocation3 + $0x248] sm:$0xff]
      %v4784 = vld [vmem:[#allocation3 + $0x250] sm:$0xff]
      %v4785 = vld [vmem:[#allocation3 + $0x258] sm:$0xff]
      %v4786 = vld [vmem:[#allocation3 + $0x260] sm:$0xf]
      %v4787 = vld [vmem:[#allocation3 + $0x264] sm:$0xff]
      %v4788 = vld [vmem:[#allocation3 + $0x26c] sm:$0xff]
      %v4789 = vld [vmem:[#allocation3 + $0x274] sm:$0xff]
      %v4790 = vld [vmem:[#allocation3 + $0x27c] sm:$0xff]
      %v4791 = vld [vmem:[#allocation3 + $0x284] sm:$0xf]
      %v4792 = vld [vmem:[#allocation3 + $0x288] sm:$0xff]
      %v4793 = vld [vmem:[#allocation3 + $0x290] sm:$0xff]
      %v4794 = vld [vmem:[#allocation3 + $0x298] sm:$0xff]
      %v4795 = vld [vmem:[#allocation3 + $0x2a0] sm:$0xff]
      %v4796 = vld [vmem:[#allocation3 + $0x2a8] sm:$0xf]
      %v4797 = vld [vmem:[#allocation3 + $0x2ac] sm:$0xff]
      %v4798 = vld [vmem:[#allocation3 + $0x2b4] sm:$0xff]
      %v4799 = vld [vmem:[#allocation3 + $0x2bc] sm:$0xff]
      %v4800 = vld [vmem:[#allocation3 + $0x2c4] sm:$0xff]
      %v4801 = vld [vmem:[#allocation3 + $0x2cc] sm:$0xf]
      %v4802 = vld [vmem:[#allocation3 + $0x2d0] sm:$0xff]
      %v4803 = vld [vmem:[#allocation3 + $0x2d8] sm:$0xff]
      %v4804 = vld [vmem:[#allocation3 + $0x2e0] sm:$0xff]
      %v4805 = vld [vmem:[#allocation3 + $0x2e8] sm:$0xff]
      %v4806 = vld [vmem:[#allocation3 + $0x2f0] sm:$0xf]
      %v4807 = vld [vmem:[#allocation3 + $0x2f4] sm:$0xff]
      %v4808 = vld [vmem:[#allocation3 + $0x2fc] sm:$0xff]
      %v4809 = vld [vmem:[#allocation3 + $0x304] sm:$0xff]
      %v4810 = vld [vmem:[#allocation3 + $0x30c] sm:$0xff]
      %v4811 = vld [vmem:[#allocation3 + $0x314] sm:$0xf]
      %v4812 = vld [vmem:[#allocation3 + $0x318] sm:$0xff]
      %v4813 = vld [vmem:[#allocation3 + $0x320] sm:$0xff]
      %v4814 = vld [vmem:[#allocation3 + $0x328] sm:$0xff]
      %v4815 = vld [vmem:[#allocation3 + $0x330] sm:$0xff]
      %v4816 = vld [vmem:[#allocation3 + $0x338] sm:$0xf]
      %v4817 = vld [vmem:[#allocation3 + $0x33c] sm:$0xff]
      %v4818 = vld [vmem:[#allocation3 + $0x344] sm:$0xff]
      %v4819 = vld [vmem:[#allocation3 + $0x34c] sm:$0xff]
      %v4820 = vld [vmem:[#allocation3 + $0x354] sm:$0xff]
      %v4821 = vld [vmem:[#allocation3 + $0x35c] sm:$0xf]
      %v4822 = vld [vmem:[#allocation3 + $0x360] sm:$0xff]
      %v4823 = vld [vmem:[#allocation3 + $0x368] sm:$0xff]
      %v4824 = vld [vmem:[#allocation3 + $0x370] sm:$0xff]
      %v4825 = vld [vmem:[#allocation3 + $0x378] sm:$0xff]
      %v4826 = vld [vmem:[#allocation3 + $0x380] sm:$0xf]
      %v4827 = vld [vmem:[#allocation3 + $0x384] sm:$0xff]
      %v4828 = vld [vmem:[#allocation3 + $0x38c] sm:$0xff]
      %v4829 = vld [vmem:[#allocation3 + $0x394] sm:$0xff]
      %v4830 = vld [vmem:[#allocation3 + $0x39c] sm:$0xff]
      %v4831 = vld [vmem:[#allocation3 + $0x3a4] sm:$0xf]
      %v4832 = vld [vmem:[#allocation3 + $0x3a8] sm:$0xff]
      %v4833 = vld [vmem:[#allocation3 + $0x3b0] sm:$0xff]
      %v4834 = vld [vmem:[#allocation3 + $0x3b8] sm:$0xff]
      %v4835 = vld [vmem:[#allocation3 + $0x3c0] sm:$0xff]
      %v4836 = vld [vmem:[#allocation3 + $0x3c8] sm:$0xf]
      %v4837 = vld [vmem:[#allocation3 + $0x3cc] sm:$0xff]
      %v4838 = vld [vmem:[#allocation3 + $0x3d4] sm:$0xff]
      %v4839 = vld [vmem:[#allocation3 + $0x3dc] sm:$0xff]
      %v4840 = vld [vmem:[#allocation3 + $0x3e4] sm:$0xff]
      %v4841 = vld [vmem:[#allocation3 + $0x3ec] sm:$0xf]
      %v4842 = vld [vmem:[#allocation3 + $0x3f0] sm:$0xff]
      %v4843 = vld [vmem:[#allocation3 + $0x3f8] sm:$0xff]
      %v4844 = vld [vmem:[#allocation3 + $0x400] sm:$0xff]
      %v4845 = vld [vmem:[#allocation3 + $0x408] sm:$0xff]
      %v4846 = vld [vmem:[#allocation3 + $0x410] sm:$0xf]
      %v4847 = vld [vmem:[#allocation3 + $0x414] sm:$0xff]
      %v4848 = vld [vmem:[#allocation3 + $0x41c] sm:$0xff]
      %v4849 = vld [vmem:[#allocation3 + $0x424] sm:$0xff]
      %v4850 = vld [vmem:[#allocation3 + $0x42c] sm:$0xff]
      %v4851 = vld [vmem:[#allocation3 + $0x434] sm:$0xf]
      %v4852 = vld [vmem:[#allocation3 + $0x438] sm:$0xff]
      %v4853 = vld [vmem:[#allocation3 + $0x440] sm:$0xff]
      %v4854 = vld [vmem:[#allocation3 + $0x448] sm:$0xff]
      %v4855 = vld [vmem:[#allocation3 + $0x450] sm:$0xff]
      %v4856 = vld [vmem:[#allocation3 + $0x458] sm:$0xf]
      %v4857 = vld [vmem:[#allocation3 + $0x45c] sm:$0xff]
      %v4858 = vld [vmem:[#allocation3 + $0x464] sm:$0xff]
      %v4859 = vld [vmem:[#allocation3 + $0x46c] sm:$0xff]
      %v4860 = vld [vmem:[#allocation3 + $0x474] sm:$0xff]
      %v4861 = vld [vmem:[#allocation3 + $0x47c] sm:$0xf]
      %v4862 = vld [vmem:[%s3] sm:$0xf]
      %v4863 = vld [vmem:[%s3 + $0x4] sm:$0xf]
      %v4864 = vld [vmem:[%s3 + $0x8] sm:$0xf]
      %v4865 = vld [vmem:[%s3 + $0xc] sm:$0xf]
      %v4866 = vld [vmem:[%s3 + $0x10] sm:$0xf]
      %v4867 = vld [vmem:[%s3 + $0x14] sm:$0xf]
      %v4868 = vld [vmem:[%s3 + $0x18] sm:$0xf]
      %v4869 = vld [vmem:[%s3 + $0x1c] sm:$0xf]
      %v4870 = vld [vmem:[%s3 + $0x20] sm:$0xf]
      %v4871 = vld [vmem:[%s3 + $0x24] sm:$0xf]
      %v4872 = vld [vmem:[%s3 + $0x28] sm:$0xf]
      %v4873 = vld [vmem:[%s3 + $0x2c] sm:$0xf]
      %v4874 = vld [vmem:[%s3 + $0x30] sm:$0xf]
      %v4875 = vld [vmem:[%s3 + $0x34] sm:$0xf]
      %v4876 = vld [vmem:[%s3 + $0x38] sm:$0xf]
      %v4877 = vld [vmem:[%s3 + $0x3c] sm:$0xf]
      %v4878 = vld [vmem:[%s3 + $0x40] sm:$0xf]
      %v4879 = vld [vmem:[%s3 + $0x44] sm:$0xf]
      %v4880 = vld [vmem:[%s3 + $0x48] sm:$0xf]
      %v4881 = vld [vmem:[%s3 + $0x4c] sm:$0xf]
      %v4882 = vld [vmem:[%s3 + $0x50] sm:$0xf]
      %v4883 = vld [vmem:[%s3 + $0x54] sm:$0xf]
      %v4884 = vld [vmem:[%s3 + $0x58] sm:$0xf]
      %v4885 = vld [vmem:[%s3 + $0x5c] sm:$0xf]
      %v4886 = vld [vmem:[%s3 + $0x60] sm:$0xf]
      %v4887 = vld [vmem:[%s3 + $0x64] sm:$0xf]
      %v4888 = vld [vmem:[%s3 + $0x68] sm:$0xf]
      %v4889 = vld [vmem:[%s3 + $0x6c] sm:$0xf]
      %v4890 = vld [vmem:[%s3 + $0x70] sm:$0xf]
      %v4891 = vld [vmem:[%s3 + $0x74] sm:$0xf]
      %v4892 = vld [vmem:[%s3 + $0x78] sm:$0xf]
      %v4893 = vld [vmem:[%s3 + $0x7c] sm:$0xf]
      %v4894 = vld [vmem:[%s3 + $0x80] sm:$0xf]
      %v4895 = vld [vmem:[%s3 + $0x84] sm:$0xf]
      %v4896 = vld [vmem:[%s3 + $0x88] sm:$0xf]
      %v4897 = vld [vmem:[%s3 + $0x8c] sm:$0xf]
      %v4898 = vld [vmem:[%s3 + $0x90] sm:$0xf]
      %v4899 = vld [vmem:[%s3 + $0x94] sm:$0xf]
      %v4900 = vld [vmem:[%s3 + $0x98] sm:$0xf]
      %v4901 = vld [vmem:[%s3 + $0x9c] sm:$0xf]
      %v4902 = vld [vmem:[%s3 + $0xa0] sm:$0xf]
      %v4903 = vld [vmem:[%s3 + $0xa4] sm:$0xf]
      %v4904 = vld [vmem:[%s3 + $0xa8] sm:$0xf]
      %v4905 = vld [vmem:[%s3 + $0xac] sm:$0xf]
      %v4906 = vld [vmem:[%s3 + $0xb0] sm:$0xf]
      %v4907 = vld [vmem:[%s3 + $0xb4] sm:$0xf]
      %v4908 = vld [vmem:[%s3 + $0xb8] sm:$0xf]
      %v4909 = vld [vmem:[%s3 + $0xbc] sm:$0xf]
      %v4910 = vld [vmem:[%s3 + $0xc0] sm:$0xf]
      %v4911 = vld [vmem:[%s3 + $0xc4] sm:$0xf]
      %v4912 = vld [vmem:[%s3 + $0xc8] sm:$0xf]
      %v4913 = vld [vmem:[%s3 + $0xcc] sm:$0xf]
      %v4914 = vld [vmem:[%s3 + $0xd0] sm:$0xf]
      %v4915 = vld [vmem:[%s3 + $0xd4] sm:$0xf]
      %v4916 = vld [vmem:[%s3 + $0xd8] sm:$0xf]
      %v4917 = vld [vmem:[%s3 + $0xdc] sm:$0xf]
      %v4918 = vld [vmem:[%s3 + $0xe0] sm:$0xf]
      %v4919 = vld [vmem:[%s3 + $0xe4] sm:$0xf]
      %v4920 = vld [vmem:[%s3 + $0xe8] sm:$0xf]
      %v4921 = vld [vmem:[%s3 + $0xec] sm:$0xf]
      %v4922 = vld [vmem:[%s3 + $0xf0] sm:$0xf]
      %v4923 = vld [vmem:[%s3 + $0xf4] sm:$0xf]
      %v4924 = vld [vmem:[%s3 + $0xf8] sm:$0xf]
      %v4925 = vld [vmem:[%s3 + $0xfc] sm:$0xf]
      %v4926 = vld [vmem:[%s3 + $0x100] sm:$0xf]
      %v4927 = vld [vmem:[%s3 + $0x104] sm:$0xf]
      %v4928 = vld [vmem:[%s3 + $0x108] sm:$0xf]
      %v4929 = vld [vmem:[%s3 + $0x10c] sm:$0xf]
      %v4930 = vld [vmem:[%s3 + $0x110] sm:$0xf]
      %v4931 = vld [vmem:[%s3 + $0x114] sm:$0xf]
      %v4932 = vld [vmem:[%s3 + $0x118] sm:$0xf]
      %v4933 = vld [vmem:[%s3 + $0x11c] sm:$0xf]
      %v4934 = vld [vmem:[%s3 + $0x120] sm:$0xf]
      %v4935 = vld [vmem:[%s3 + $0x124] sm:$0xf]
      %v4936 = vld [vmem:[%s3 + $0x128] sm:$0xf]
      %v4937 = vld [vmem:[%s3 + $0x12c] sm:$0xf]
      %v4938 = vld [vmem:[%s3 + $0x130] sm:$0xf]
      %v4939 = vld [vmem:[%s3 + $0x134] sm:$0xf]
      %v4940 = vld [vmem:[%s3 + $0x138] sm:$0xf]
      %v4941 = vld [vmem:[%s3 + $0x13c] sm:$0xf]
      %v4942 = vld [vmem:[%s3 + $0x140] sm:$0xf]
      %v4943 = vld [vmem:[%s3 + $0x144] sm:$0xf]
      %v4944 = vld [vmem:[%s3 + $0x148] sm:$0xf]
      %v4945 = vld [vmem:[%s3 + $0x14c] sm:$0xf]
      %v4946 = vld [vmem:[%s3 + $0x150] sm:$0xf]
      %v4947 = vld [vmem:[%s3 + $0x154] sm:$0xf]
      %v4948 = vld [vmem:[%s3 + $0x158] sm:$0xf]
      %v4949 = vld [vmem:[%s3 + $0x15c] sm:$0xf]
      %v4950 = vld [vmem:[%s3 + $0x160] sm:$0xf]
      %v4951 = vld [vmem:[%s3 + $0x164] sm:$0xf]
      %v4952 = vld [vmem:[%s3 + $0x168] sm:$0xf]
      %v4953 = vld [vmem:[%s3 + $0x16c] sm:$0xf]
      %v4954 = vld [vmem:[%s3 + $0x170] sm:$0xf]
      %v4955 = vld [vmem:[%s3 + $0x174] sm:$0xf]
      %v4956 = vld [vmem:[%s3 + $0x178] sm:$0xf]
      %v4957 = vld [vmem:[%s3 + $0x17c] sm:$0xf]
      %v4958 = vld [vmem:[%s3 + $0x180] sm:$0xf]
      %v4959 = vld [vmem:[%s3 + $0x184] sm:$0xf]
      %v4960 = vld [vmem:[%s3 + $0x188] sm:$0xf]
      %v4961 = vld [vmem:[%s3 + $0x18c] sm:$0xf]
      %v4962 = vld [vmem:[%s3 + $0x190] sm:$0xf]
      %v4963 = vld [vmem:[%s3 + $0x194] sm:$0xf]
      %v4964 = vld [vmem:[%s3 + $0x198] sm:$0xf]
      %v4965 = vld [vmem:[%s3 + $0x19c] sm:$0xf]
      %v4966 = vld [vmem:[%s3 + $0x1a0] sm:$0xf]
      %v4967 = vld [vmem:[%s3 + $0x1a4] sm:$0xf]
      %v4968 = vld [vmem:[%s3 + $0x1a8] sm:$0xf]
      %v4969 = vld [vmem:[%s3 + $0x1ac] sm:$0xf]
      %v4970 = vld [vmem:[%s3 + $0x1b0] sm:$0xf]
      %v4971 = vld [vmem:[%s3 + $0x1b4] sm:$0xf]
      %v4972 = vld [vmem:[%s3 + $0x1b8] sm:$0xf]
      %v4973 = vld [vmem:[%s3 + $0x1bc] sm:$0xf]
      %v4974 = vld [vmem:[%s3 + $0x1c0] sm:$0xf]
      %v4975 = vld [vmem:[%s3 + $0x1c4] sm:$0xf]
      %v4976 = vld [vmem:[%s3 + $0x1c8] sm:$0xf]
      %v4977 = vld [vmem:[%s3 + $0x1cc] sm:$0xf]
      %v4978 = vld [vmem:[%s3 + $0x1d0] sm:$0xf]
      %v4979 = vld [vmem:[%s3 + $0x1d4] sm:$0xf]
      %v4980 = vld [vmem:[%s3 + $0x1d8] sm:$0xf]
      %v4981 = vld [vmem:[%s3 + $0x1dc] sm:$0xf]
      %v4982 = vld [vmem:[%s3 + $0x1e0] sm:$0xf]
      %v4983 = vld [vmem:[%s3 + $0x1e4] sm:$0xf]
      %v4984 = vld [vmem:[%s3 + $0x1e8] sm:$0xf]
      %v4985 = vld [vmem:[%s3 + $0x1ec] sm:$0xf]
      %v4986 = vld [vmem:[%s3 + $0x1f0] sm:$0xf]
      %v4987 = vld [vmem:[%s3 + $0x1f4] sm:$0xf]
      %v4988 = vld [vmem:[%s3 + $0x1f8] sm:$0xf]
      %v4989 = vld [vmem:[%s3 + $0x1fc] sm:$0xf]
      %v4990 = vld [vmem:[%s3 + $0x200] sm:$0xf]
      %v4991 = vld [vmem:[%s3 + $0x204] sm:$0xf]
      %v4992 = vld [vmem:[%s3 + $0x208] sm:$0xf]
      %v4993 = vld [vmem:[%s3 + $0x20c] sm:$0xf]
      %v4994 = vld [vmem:[%s3 + $0x210] sm:$0xf]
      %v4995 = vld [vmem:[%s3 + $0x214] sm:$0xf]
      %v4996 = vld [vmem:[%s3 + $0x218] sm:$0xf]
      %v4997 = vld [vmem:[%s3 + $0x21c] sm:$0xf]
      %v4998 = vld [vmem:[%s3 + $0x220] sm:$0xf]
      %v4999 = vld [vmem:[%s3 + $0x224] sm:$0xf]
      %v5000 = vld [vmem:[%s3 + $0x228] sm:$0xf]
      %v5001 = vld [vmem:[%s3 + $0x22c] sm:$0xf]
      %v5002 = vld [vmem:[%s3 + $0x230] sm:$0xf]
      %v5003 = vld [vmem:[%s3 + $0x234] sm:$0xf]
      %v5004 = vld [vmem:[%s3 + $0x238] sm:$0xf]
      %v5005 = vld [vmem:[%s3 + $0x23c] sm:$0xf]
      %v5166 = vunpack.c.l.b16 %v4702
      %v5167 = vunpack.c.h.b16 %v4702
      %v5168 = vunpack.c.l.b16 %v4703
      %v5169 = vunpack.c.h.b16 %v4703
      %v5170 = vunpack.c.l.b16 %v4704
      %v5171 = vunpack.c.h.b16 %v4704
      %v5172 = vunpack.c.l.b16 %v4705
      %v5173 = vunpack.c.h.b16 %v4705
      %v5174 = vunpack.c.l.b16 %v4706
      %v5175 = vunpack.c.l.b16 %v4707
      %v5176 = vunpack.c.h.b16 %v4707
      %v5177 = vunpack.c.l.b16 %v4708
      %v5178 = vunpack.c.h.b16 %v4708
      %v5179 = vunpack.c.l.b16 %v4709
      %v5180 = vunpack.c.h.b16 %v4709
      %v5181 = vunpack.c.l.b16 %v4710
      %v5182 = vunpack.c.h.b16 %v4710
      %v5183 = vunpack.c.l.b16 %v4711
      %v5184 = vunpack.c.l.b16 %v4712
      %v5185 = vunpack.c.h.b16 %v4712
      %v5186 = vunpack.c.l.b16 %v4713
      %v5187 = vunpack.c.h.b16 %v4713
      %v5188 = vunpack.c.l.b16 %v4714
      %v5189 = vunpack.c.h.b16 %v4714
      %v5190 = vunpack.c.l.b16 %v4715
      %v5191 = vunpack.c.h.b16 %v4715
      %v5192 = vunpack.c.l.b16 %v4716
      %v5193 = vunpack.c.l.b16 %v4717
      %v5194 = vunpack.c.h.b16 %v4717
      %v5195 = vunpack.c.l.b16 %v4718
      %v5196 = vunpack.c.h.b16 %v4718
      %v5197 = vunpack.c.l.b16 %v4719
      %v5198 = vunpack.c.h.b16 %v4719
      %v5199 = vunpack.c.l.b16 %v4720
      %v5200 = vunpack.c.h.b16 %v4720
      %v5201 = vunpack.c.l.b16 %v4721
      %v5202 = vunpack.c.l.b16 %v4722
      %v5203 = vunpack.c.h.b16 %v4722
      %v5204 = vunpack.c.l.b16 %v4723
      %v5205 = vunpack.c.h.b16 %v4723
      %v5206 = vunpack.c.l.b16 %v4724
      %v5207 = vunpack.c.h.b16 %v4724
      %v5208 = vunpack.c.l.b16 %v4725
      %v5209 = vunpack.c.h.b16 %v4725
      %v5210 = vunpack.c.l.b16 %v4726
      %v5211 = vunpack.c.l.b16 %v4727
      %v5212 = vunpack.c.h.b16 %v4727
      %v5213 = vunpack.c.l.b16 %v4728
      %v5214 = vunpack.c.h.b16 %v4728
      %v5215 = vunpack.c.l.b16 %v4729
      %v5216 = vunpack.c.h.b16 %v4729
      %v5217 = vunpack.c.l.b16 %v4730
      %v5218 = vunpack.c.h.b16 %v4730
      %v5219 = vunpack.c.l.b16 %v4731
      %v5220 = vunpack.c.l.b16 %v4732
      %v5221 = vunpack.c.h.b16 %v4732
      %v5222 = vunpack.c.l.b16 %v4733
      %v5223 = vunpack.c.h.b16 %v4733
      %v5224 = vunpack.c.l.b16 %v4734
      %v5225 = vunpack.c.h.b16 %v4734
      %v5226 = vunpack.c.l.b16 %v4735
      %v5227 = vunpack.c.h.b16 %v4735
      %v5228 = vunpack.c.l.b16 %v4736
      %v5229 = vunpack.c.l.b16 %v4737
      %v5230 = vunpack.c.h.b16 %v4737
      %v5231 = vunpack.c.l.b16 %v4738
      %v5232 = vunpack.c.h.b16 %v4738
      %v5233 = vunpack.c.l.b16 %v4739
      %v5234 = vunpack.c.h.b16 %v4739
      %v5235 = vunpack.c.l.b16 %v4740
      %v5236 = vunpack.c.h.b16 %v4740
      %v5237 = vunpack.c.l.b16 %v4741
      %v5238 = vunpack.c.l.b16 %v4742
      %v5239 = vunpack.c.h.b16 %v4742
      %v5240 = vunpack.c.l.b16 %v4743
      %v5241 = vunpack.c.h.b16 %v4743
      %v5242 = vunpack.c.l.b16 %v4744
      %v5243 = vunpack.c.h.b16 %v4744
      %v5244 = vunpack.c.l.b16 %v4745
      %v5245 = vunpack.c.h.b16 %v4745
      %v5246 = vunpack.c.l.b16 %v4746
      %v5247 = vunpack.c.l.b16 %v4747
      %v5248 = vunpack.c.h.b16 %v4747
      %v5249 = vunpack.c.l.b16 %v4748
      %v5250 = vunpack.c.h.b16 %v4748
      %v5251 = vunpack.c.l.b16 %v4749
      %v5252 = vunpack.c.h.b16 %v4749
      %v5253 = vunpack.c.l.b16 %v4750
      %v5254 = vunpack.c.h.b16 %v4750
      %v5255 = vunpack.c.l.b16 %v4751
      %v5256 = vunpack.c.l.b16 %v4752
      %v5257 = vunpack.c.h.b16 %v4752
      %v5258 = vunpack.c.l.b16 %v4753
      %v5259 = vunpack.c.h.b16 %v4753
      %v5260 = vunpack.c.l.b16 %v4754
      %v5261 = vunpack.c.h.b16 %v4754
      %v5262 = vunpack.c.l.b16 %v4755
      %v5263 = vunpack.c.h.b16 %v4755
      %v5264 = vunpack.c.l.b16 %v4756
      %v5265 = vunpack.c.l.b16 %v4757
      %v5266 = vunpack.c.h.b16 %v4757
      %v5267 = vunpack.c.l.b16 %v4758
      %v5268 = vunpack.c.h.b16 %v4758
      %v5269 = vunpack.c.l.b16 %v4759
      %v5270 = vunpack.c.h.b16 %v4759
      %v5271 = vunpack.c.l.b16 %v4760
      %v5272 = vunpack.c.h.b16 %v4760
      %v5273 = vunpack.c.l.b16 %v4761
      %v5274 = vunpack.c.l.b16 %v4762
      %v5275 = vunpack.c.h.b16 %v4762
      %v5276 = vunpack.c.l.b16 %v4763
      %v5277 = vunpack.c.h.b16 %v4763
      %v5278 = vunpack.c.l.b16 %v4764
      %v5279 = vunpack.c.h.b16 %v4764
      %v5280 = vunpack.c.l.b16 %v4765
      %v5281 = vunpack.c.h.b16 %v4765
      %v5282 = vunpack.c.l.b16 %v4766
      %v5283 = vunpack.c.l.b16 %v4767
      %v5284 = vunpack.c.h.b16 %v4767
      %v5285 = vunpack.c.l.b16 %v4768
      %v5286 = vunpack.c.h.b16 %v4768
      %v5287 = vunpack.c.l.b16 %v4769
      %v5288 = vunpack.c.h.b16 %v4769
      %v5289 = vunpack.c.l.b16 %v4770
      %v5290 = vunpack.c.h.b16 %v4770
      %v5291 = vunpack.c.l.b16 %v4771
      %v5292 = vunpack.c.l.b16 %v4772
      %v5293 = vunpack.c.h.b16 %v4772
      %v5294 = vunpack.c.l.b16 %v4773
      %v5295 = vunpack.c.h.b16 %v4773
      %v5296 = vunpack.c.l.b16 %v4774
      %v5297 = vunpack.c.h.b16 %v4774
      %v5298 = vunpack.c.l.b16 %v4775
      %v5299 = vunpack.c.h.b16 %v4775
      %v5300 = vunpack.c.l.b16 %v4776
      %v5301 = vunpack.c.l.b16 %v4777
      %v5302 = vunpack.c.h.b16 %v4777
      %v5303 = vunpack.c.l.b16 %v4778
      %v5304 = vunpack.c.h.b16 %v4778
      %v5305 = vunpack.c.l.b16 %v4779
      %v5306 = vunpack.c.h.b16 %v4779
      %v5307 = vunpack.c.l.b16 %v4780
      %v5308 = vunpack.c.h.b16 %v4780
      %v5309 = vunpack.c.l.b16 %v4781
      %v5310 = vunpack.c.l.b16 %v4782
      %v5311 = vunpack.c.h.b16 %v4782
      %v5312 = vunpack.c.l.b16 %v4783
      %v5313 = vunpack.c.h.b16 %v4783
      %v5314 = vunpack.c.l.b16 %v4784
      %v5315 = vunpack.c.h.b16 %v4784
      %v5316 = vunpack.c.l.b16 %v4785
      %v5317 = vunpack.c.h.b16 %v4785
      %v5318 = vunpack.c.l.b16 %v4786
      %v5319 = vunpack.c.l.b16 %v4787
      %v5320 = vunpack.c.h.b16 %v4787
      %v5321 = vunpack.c.l.b16 %v4788
      %v5322 = vunpack.c.h.b16 %v4788
      %v5323 = vunpack.c.l.b16 %v4789
      %v5324 = vunpack.c.h.b16 %v4789
      %v5325 = vunpack.c.l.b16 %v4790
      %v5326 = vunpack.c.h.b16 %v4790
      %v5327 = vunpack.c.l.b16 %v4791
      %v5328 = vunpack.c.l.b16 %v4792
      %v5329 = vunpack.c.h.b16 %v4792
      %v5330 = vunpack.c.l.b16 %v4793
      %v5331 = vunpack.c.h.b16 %v4793
      %v5332 = vunpack.c.l.b16 %v4794
      %v5333 = vunpack.c.h.b16 %v4794
      %v5334 = vunpack.c.l.b16 %v4795
      %v5335 = vunpack.c.h.b16 %v4795
      %v5336 = vunpack.c.l.b16 %v4796
      %v5337 = vunpack.c.l.b16 %v4797
      %v5338 = vunpack.c.h.b16 %v4797
      %v5339 = vunpack.c.l.b16 %v4798
      %v5340 = vunpack.c.h.b16 %v4798
      %v5341 = vunpack.c.l.b16 %v4799
      %v5342 = vunpack.c.h.b16 %v4799
      %v5343 = vunpack.c.l.b16 %v4800
      %v5344 = vunpack.c.h.b16 %v4800
      %v5345 = vunpack.c.l.b16 %v4801
      %v5346 = vunpack.c.l.b16 %v4802
      %v5347 = vunpack.c.h.b16 %v4802
      %v5348 = vunpack.c.l.b16 %v4803
      %v5349 = vunpack.c.h.b16 %v4803
      %v5350 = vunpack.c.l.b16 %v4804
      %v5351 = vunpack.c.h.b16 %v4804
      %v5352 = vunpack.c.l.b16 %v4805
      %v5353 = vunpack.c.h.b16 %v4805
      %v5354 = vunpack.c.l.b16 %v4806
      %v5355 = vunpack.c.l.b16 %v4807
      %v5356 = vunpack.c.h.b16 %v4807
      %v5357 = vunpack.c.l.b16 %v4808
      %v5358 = vunpack.c.h.b16 %v4808
      %v5359 = vunpack.c.l.b16 %v4809
      %v5360 = vunpack.c.h.b16 %v4809
      %v5361 = vunpack.c.l.b16 %v4810
      %v5362 = vunpack.c.h.b16 %v4810
      %v5363 = vunpack.c.l.b16 %v4811
      %v5364 = vunpack.c.l.b16 %v4812
      %v5365 = vunpack.c.h.b16 %v4812
      %v5366 = vunpack.c.l.b16 %v4813
      %v5367 = vunpack.c.h.b16 %v4813
      %v5368 = vunpack.c.l.b16 %v4814
      %v5369 = vunpack.c.h.b16 %v4814
      %v5370 = vunpack.c.l.b16 %v4815
      %v5371 = vunpack.c.h.b16 %v4815
      %v5372 = vunpack.c.l.b16 %v4816
      %v5373 = vunpack.c.l.b16 %v4817
      %v5374 = vunpack.c.h.b16 %v4817
      %v5375 = vunpack.c.l.b16 %v4818
      %v5376 = vunpack.c.h.b16 %v4818
      %v5377 = vunpack.c.l.b16 %v4819
      %v5378 = vunpack.c.h.b16 %v4819
      %v5379 = vunpack.c.l.b16 %v4820
      %v5380 = vunpack.c.h.b16 %v4820
      %v5381 = vunpack.c.l.b16 %v4821
      %v5382 = vunpack.c.l.b16 %v4822
      %v5383 = vunpack.c.h.b16 %v4822
      %v5384 = vunpack.c.l.b16 %v4823
      %v5385 = vunpack.c.h.b16 %v4823
      %v5386 = vunpack.c.l.b16 %v4824
      %v5387 = vunpack.c.h.b16 %v4824
      %v5388 = vunpack.c.l.b16 %v4825
      %v5389 = vunpack.c.h.b16 %v4825
      %v5390 = vunpack.c.l.b16 %v4826
      %v5391 = vunpack.c.l.b16 %v4827
      %v5392 = vunpack.c.h.b16 %v4827
      %v5393 = vunpack.c.l.b16 %v4828
      %v5394 = vunpack.c.h.b16 %v4828
      %v5395 = vunpack.c.l.b16 %v4829
      %v5396 = vunpack.c.h.b16 %v4829
      %v5397 = vunpack.c.l.b16 %v4830
      %v5398 = vunpack.c.h.b16 %v4830
      %v5399 = vunpack.c.l.b16 %v4831
      %v5400 = vunpack.c.l.b16 %v4832
      %v5401 = vunpack.c.h.b16 %v4832
      %v5402 = vunpack.c.l.b16 %v4833
      %v5403 = vunpack.c.h.b16 %v4833
      %v5404 = vunpack.c.l.b16 %v4834
      %v5405 = vunpack.c.h.b16 %v4834
      %v5406 = vunpack.c.l.b16 %v4835
      %v5407 = vunpack.c.h.b16 %v4835
      %v5408 = vunpack.c.l.b16 %v4836
      %v5409 = vunpack.c.l.b16 %v4837
      %v5410 = vunpack.c.h.b16 %v4837
      %v5411 = vunpack.c.l.b16 %v4838
      %v5412 = vunpack.c.h.b16 %v4838
      %v5413 = vunpack.c.l.b16 %v4839
      %v5414 = vunpack.c.h.b16 %v4839
      %v5415 = vunpack.c.l.b16 %v4840
      %v5416 = vunpack.c.h.b16 %v4840
      %v5417 = vunpack.c.l.b16 %v4841
      %v5418 = vunpack.c.l.b16 %v4842
      %v5419 = vunpack.c.h.b16 %v4842
      %v5420 = vunpack.c.l.b16 %v4843
      %v5421 = vunpack.c.h.b16 %v4843
      %v5422 = vunpack.c.l.b16 %v4844
      %v5423 = vunpack.c.h.b16 %v4844
      %v5424 = vunpack.c.l.b16 %v4845
      %v5425 = vunpack.c.h.b16 %v4845
      %v5426 = vunpack.c.l.b16 %v4846
      %v5427 = vunpack.c.l.b16 %v4847
      %v5428 = vunpack.c.h.b16 %v4847
      %v5429 = vunpack.c.l.b16 %v4848
      %v5430 = vunpack.c.h.b16 %v4848
      %v5431 = vunpack.c.l.b16 %v4849
      %v5432 = vunpack.c.h.b16 %v4849
      %v5433 = vunpack.c.l.b16 %v4850
      %v5434 = vunpack.c.h.b16 %v4850
      %v5435 = vunpack.c.l.b16 %v4851
      %v5436 = vunpack.c.l.b16 %v4852
      %v5437 = vunpack.c.h.b16 %v4852
      %v5438 = vunpack.c.l.b16 %v4853
      %v5439 = vunpack.c.h.b16 %v4853
      %v5440 = vunpack.c.l.b16 %v4854
      %v5441 = vunpack.c.h.b16 %v4854
      %v5442 = vunpack.c.l.b16 %v4855
      %v5443 = vunpack.c.h.b16 %v4855
      %v5444 = vunpack.c.l.b16 %v4856
      %v5445 = vunpack.c.l.b16 %v4857
      %v5446 = vunpack.c.h.b16 %v4857
      %v5447 = vunpack.c.l.b16 %v4858
      %v5448 = vunpack.c.h.b16 %v4858
      %v5449 = vunpack.c.l.b16 %v4859
      %v5450 = vunpack.c.h.b16 %v4859
      %v5451 = vunpack.c.l.b16 %v4860
      %v5452 = vunpack.c.h.b16 %v4860
      %v5453 = vunpack.c.l.b16 %v4861
      %v5454 = vpack.c.b16 %v5175, %v5166
      %v5455 = vpack.c.b16 %v5176, %v5167
      %v5456 = vpack.c.b16 %v5177, %v5168
      %v5457 = vpack.c.b16 %v5178, %v5169
      %v5458 = vpack.c.b16 %v5179, %v5170
      %v5459 = vpack.c.b16 %v5180, %v5171
      %v5460 = vpack.c.b16 %v5181, %v5172
      %v5461 = vpack.c.b16 %v5182, %v5173
      %v5462 = vpack.c.b16 %v5183, %v5174
      %v5463 = vpack.c.b16 %v5193, %v5184
      %v5464 = vpack.c.b16 %v5194, %v5185
      %v5465 = vpack.c.b16 %v5195, %v5186
      %v5466 = vpack.c.b16 %v5196, %v5187
      %v5467 = vpack.c.b16 %v5197, %v5188
      %v5468 = vpack.c.b16 %v5198, %v5189
      %v5469 = vpack.c.b16 %v5199, %v5190
      %v5470 = vpack.c.b16 %v5200, %v5191
      %v5471 = vpack.c.b16 %v5201, %v5192
      %v5472 = vpack.c.b16 %v5211, %v5202
      %v5473 = vpack.c.b16 %v5212, %v5203
      %v5474 = vpack.c.b16 %v5213, %v5204
      %v5475 = vpack.c.b16 %v5214, %v5205
      %v5476 = vpack.c.b16 %v5215, %v5206
      %v5477 = vpack.c.b16 %v5216, %v5207
      %v5478 = vpack.c.b16 %v5217, %v5208
      %v5479 = vpack.c.b16 %v5218, %v5209
      %v5480 = vpack.c.b16 %v5219, %v5210
      %v5481 = vpack.c.b16 %v5229, %v5220
      %v5482 = vpack.c.b16 %v5230, %v5221
      %v5483 = vpack.c.b16 %v5231, %v5222
      %v5484 = vpack.c.b16 %v5232, %v5223
      %v5485 = vpack.c.b16 %v5233, %v5224
      %v5486 = vpack.c.b16 %v5234, %v5225
      %v5487 = vpack.c.b16 %v5235, %v5226
      %v5488 = vpack.c.b16 %v5236, %v5227
      %v5489 = vpack.c.b16 %v5237, %v5228
      %v5490 = vpack.c.b16 %v5247, %v5238
      %v5491 = vpack.c.b16 %v5248, %v5239
      %v5492 = vpack.c.b16 %v5249, %v5240
      %v5493 = vpack.c.b16 %v5250, %v5241
      %v5494 = vpack.c.b16 %v5251, %v5242
      %v5495 = vpack.c.b16 %v5252, %v5243
      %v5496 = vpack.c.b16 %v5253, %v5244
      %v5497 = vpack.c.b16 %v5254, %v5245
      %v5498 = vpack.c.b16 %v5255, %v5246
      %v5499 = vpack.c.b16 %v5265, %v5256
      %v5500 = vpack.c.b16 %v5266, %v5257
      %v5501 = vpack.c.b16 %v5267, %v5258
      %v5502 = vpack.c.b16 %v5268, %v5259
      %v5503 = vpack.c.b16 %v5269, %v5260
      %v5504 = vpack.c.b16 %v5270, %v5261
      %v5505 = vpack.c.b16 %v5271, %v5262
      %v5506 = vpack.c.b16 %v5272, %v5263
      %v5507 = vpack.c.b16 %v5273, %v5264
      %v5508 = vpack.c.b16 %v5283, %v5274
      %v5509 = vpack.c.b16 %v5284, %v5275
      %v5510 = vpack.c.b16 %v5285, %v5276
      %v5511 = vpack.c.b16 %v5286, %v5277
      %v5512 = vpack.c.b16 %v5287, %v5278
      %v5513 = vpack.c.b16 %v5288, %v5279
      %v5514 = vpack.c.b16 %v5289, %v5280
      %v5515 = vpack.c.b16 %v5290, %v5281
      %v5516 = vpack.c.b16 %v5291, %v5282
      %v5517 = vpack.c.b16 %v5301, %v5292
      %v5518 = vpack.c.b16 %v5302, %v5293
      %v5519 = vpack.c.b16 %v5303, %v5294
      %v5520 = vpack.c.b16 %v5304, %v5295
      %v5521 = vpack.c.b16 %v5305, %v5296
      %v5522 = vpack.c.b16 %v5306, %v5297
      %v5523 = vpack.c.b16 %v5307, %v5298
      %v5524 = vpack.c.b16 %v5308, %v5299
      %v5525 = vpack.c.b16 %v5309, %v5300
      %v5526 = vpack.c.b16 %v5319, %v5310
      %v5527 = vpack.c.b16 %v5320, %v5311
      %v5528 = vpack.c.b16 %v5321, %v5312
      %v5529 = vpack.c.b16 %v5322, %v5313
      %v5530 = vpack.c.b16 %v5323, %v5314
      %v5531 = vpack.c.b16 %v5324, %v5315
      %v5532 = vpack.c.b16 %v5325, %v5316
      %v5533 = vpack.c.b16 %v5326, %v5317
      %v5534 = vpack.c.b16 %v5327, %v5318
      %v5535 = vpack.c.b16 %v5337, %v5328
      %v5536 = vpack.c.b16 %v5338, %v5329
      %v5537 = vpack.c.b16 %v5339, %v5330
      %v5538 = vpack.c.b16 %v5340, %v5331
      %v5539 = vpack.c.b16 %v5341, %v5332
      %v5540 = vpack.c.b16 %v5342, %v5333
      %v5541 = vpack.c.b16 %v5343, %v5334
      %v5542 = vpack.c.b16 %v5344, %v5335
      %v5543 = vpack.c.b16 %v5345, %v5336
      %v5544 = vpack.c.b16 %v5355, %v5346
      %v5545 = vpack.c.b16 %v5356, %v5347
      %v5546 = vpack.c.b16 %v5357, %v5348
      %v5547 = vpack.c.b16 %v5358, %v5349
      %v5548 = vpack.c.b16 %v5359, %v5350
      %v5549 = vpack.c.b16 %v5360, %v5351
      %v5550 = vpack.c.b16 %v5361, %v5352
      %v5551 = vpack.c.b16 %v5362, %v5353
      %v5552 = vpack.c.b16 %v5363, %v5354
      %v5553 = vpack.c.b16 %v5373, %v5364
      %v5554 = vpack.c.b16 %v5374, %v5365
      %v5555 = vpack.c.b16 %v5375, %v5366
      %v5556 = vpack.c.b16 %v5376, %v5367
      %v5557 = vpack.c.b16 %v5377, %v5368
      %v5558 = vpack.c.b16 %v5378, %v5369
      %v5559 = vpack.c.b16 %v5379, %v5370
      %v5560 = vpack.c.b16 %v5380, %v5371
      %v5561 = vpack.c.b16 %v5381, %v5372
      %v5562 = vpack.c.b16 %v5391, %v5382
      %v5563 = vpack.c.b16 %v5392, %v5383
      %v5564 = vpack.c.b16 %v5393, %v5384
      %v5565 = vpack.c.b16 %v5394, %v5385
      %v5566 = vpack.c.b16 %v5395, %v5386
      %v5567 = vpack.c.b16 %v5396, %v5387
      %v5568 = vpack.c.b16 %v5397, %v5388
      %v5569 = vpack.c.b16 %v5398, %v5389
      %v5570 = vpack.c.b16 %v5399, %v5390
      %v5571 = vpack.c.b16 %v5409, %v5400
      %v5572 = vpack.c.b16 %v5410, %v5401
      %v5573 = vpack.c.b16 %v5411, %v5402
      %v5574 = vpack.c.b16 %v5412, %v5403
      %v5575 = vpack.c.b16 %v5413, %v5404
      %v5576 = vpack.c.b16 %v5414, %v5405
      %v5577 = vpack.c.b16 %v5415, %v5406
      %v5578 = vpack.c.b16 %v5416, %v5407
      %v5579 = vpack.c.b16 %v5417, %v5408
      %v5580 = vpack.c.b16 %v5427, %v5418
      %v5581 = vpack.c.b16 %v5428, %v5419
      %v5582 = vpack.c.b16 %v5429, %v5420
      %v5583 = vpack.c.b16 %v5430, %v5421
      %v5584 = vpack.c.b16 %v5431, %v5422
      %v5585 = vpack.c.b16 %v5432, %v5423
      %v5586 = vpack.c.b16 %v5433, %v5424
      %v5587 = vpack.c.b16 %v5434, %v5425
      %v5588 = vpack.c.b16 %v5435, %v5426
      %v5589 = vpack.c.b16 %v5445, %v5436
      %v5590 = vpack.c.b16 %v5446, %v5437
      %v5591 = vpack.c.b16 %v5447, %v5438
      %v5592 = vpack.c.b16 %v5448, %v5439
      %v5593 = vpack.c.b16 %v5449, %v5440
      %v5594 = vpack.c.b16 %v5450, %v5441
      %v5595 = vpack.c.b16 %v5451, %v5442
      %v5596 = vpack.c.b16 %v5452, %v5443
      %v5597 = vpack.c.b16 %v5453, %v5444
      %v5886 = vunpack.c.l.b16 %v4862
      %v5887 = vunpack.c.l.b16 %v4863
      %v5888 = vunpack.c.l.b16 %v4864
      %v5889 = vunpack.c.l.b16 %v4865
      %v5890 = vunpack.c.l.b16 %v4866
      %v5891 = vunpack.c.l.b16 %v4867
      %v5892 = vunpack.c.l.b16 %v4868
      %v5893 = vunpack.c.l.b16 %v4869
      %v5894 = vunpack.c.l.b16 %v4870
      %v5895 = vunpack.c.l.b16 %v4871
      %v5896 = vunpack.c.l.b16 %v4872
      %v5897 = vunpack.c.l.b16 %v4873
      %v5898 = vunpack.c.l.b16 %v4874
      %v5899 = vunpack.c.l.b16 %v4875
      %v5900 = vunpack.c.l.b16 %v4876
      %v5901 = vunpack.c.l.b16 %v4877
      %v5902 = vunpack.c.l.b16 %v4878
      %v5903 = vunpack.c.l.b16 %v4879
      %v5904 = vunpack.c.l.b16 %v4880
      %v5905 = vunpack.c.l.b16 %v4881
      %v5906 = vunpack.c.l.b16 %v4882
      %v5907 = vunpack.c.l.b16 %v4883
      %v5908 = vunpack.c.l.b16 %v4884
      %v5909 = vunpack.c.l.b16 %v4885
      %v5910 = vunpack.c.l.b16 %v4886
      %v5911 = vunpack.c.l.b16 %v4887
      %v5912 = vunpack.c.l.b16 %v4888
      %v5913 = vunpack.c.l.b16 %v4889
      %v5914 = vunpack.c.l.b16 %v4890
      %v5915 = vunpack.c.l.b16 %v4891
      %v5916 = vunpack.c.l.b16 %v4892
      %v5917 = vunpack.c.l.b16 %v4893
      %v5918 = vunpack.c.l.b16 %v4894
      %v5919 = vunpack.c.l.b16 %v4895
      %v5920 = vunpack.c.l.b16 %v4896
      %v5921 = vunpack.c.l.b16 %v4897
      %v5922 = vunpack.c.l.b16 %v4898
      %v5923 = vunpack.c.l.b16 %v4899
      %v5924 = vunpack.c.l.b16 %v4900
      %v5925 = vunpack.c.l.b16 %v4901
      %v5926 = vunpack.c.l.b16 %v4902
      %v5927 = vunpack.c.l.b16 %v4903
      %v5928 = vunpack.c.l.b16 %v4904
      %v5929 = vunpack.c.l.b16 %v4905
      %v5930 = vunpack.c.l.b16 %v4906
      %v5931 = vunpack.c.l.b16 %v4907
      %v5932 = vunpack.c.l.b16 %v4908
      %v5933 = vunpack.c.l.b16 %v4909
      %v5934 = vunpack.c.l.b16 %v4910
      %v5935 = vunpack.c.l.b16 %v4911
      %v5936 = vunpack.c.l.b16 %v4912
      %v5937 = vunpack.c.l.b16 %v4913
      %v5938 = vunpack.c.l.b16 %v4914
      %v5939 = vunpack.c.l.b16 %v4915
      %v5940 = vunpack.c.l.b16 %v4916
      %v5941 = vunpack.c.l.b16 %v4917
      %v5942 = vunpack.c.l.b16 %v4918
      %v5943 = vunpack.c.l.b16 %v4919
      %v5944 = vunpack.c.l.b16 %v4920
      %v5945 = vunpack.c.l.b16 %v4921
      %v5946 = vunpack.c.l.b16 %v4922
      %v5947 = vunpack.c.l.b16 %v4923
      %v5948 = vunpack.c.l.b16 %v4924
      %v5949 = vunpack.c.l.b16 %v4925
      %v5950 = vunpack.c.l.b16 %v4926
      %v5951 = vunpack.c.l.b16 %v4927
      %v5952 = vunpack.c.l.b16 %v4928
      %v5953 = vunpack.c.l.b16 %v4929
      %v5954 = vunpack.c.l.b16 %v4930
      %v5955 = vunpack.c.l.b16 %v4931
      %v5956 = vunpack.c.l.b16 %v4932
      %v5957 = vunpack.c.l.b16 %v4933
      %v5958 = vunpack.c.l.b16 %v4934
      %v5959 = vunpack.c.l.b16 %v4935
      %v5960 = vunpack.c.l.b16 %v4936
      %v5961 = vunpack.c.l.b16 %v4937
      %v5962 = vunpack.c.l.b16 %v4938
      %v5963 = vunpack.c.l.b16 %v4939
      %v5964 = vunpack.c.l.b16 %v4940
      %v5965 = vunpack.c.l.b16 %v4941
      %v5966 = vunpack.c.l.b16 %v4942
      %v5967 = vunpack.c.l.b16 %v4943
      %v5968 = vunpack.c.l.b16 %v4944
      %v5969 = vunpack.c.l.b16 %v4945
      %v5970 = vunpack.c.l.b16 %v4946
      %v5971 = vunpack.c.l.b16 %v4947
      %v5972 = vunpack.c.l.b16 %v4948
      %v5973 = vunpack.c.l.b16 %v4949
      %v5974 = vunpack.c.l.b16 %v4950
      %v5975 = vunpack.c.l.b16 %v4951
      %v5976 = vunpack.c.l.b16 %v4952
      %v5977 = vunpack.c.l.b16 %v4953
      %v5978 = vunpack.c.l.b16 %v4954
      %v5979 = vunpack.c.l.b16 %v4955
      %v5980 = vunpack.c.l.b16 %v4956
      %v5981 = vunpack.c.l.b16 %v4957
      %v5982 = vunpack.c.l.b16 %v4958
      %v5983 = vunpack.c.l.b16 %v4959
      %v5984 = vunpack.c.l.b16 %v4960
      %v5985 = vunpack.c.l.b16 %v4961
      %v5986 = vunpack.c.l.b16 %v4962
      %v5987 = vunpack.c.l.b16 %v4963
      %v5988 = vunpack.c.l.b16 %v4964
      %v5989 = vunpack.c.l.b16 %v4965
      %v5990 = vunpack.c.l.b16 %v4966
      %v5991 = vunpack.c.l.b16 %v4967
      %v5992 = vunpack.c.l.b16 %v4968
      %v5993 = vunpack.c.l.b16 %v4969
      %v5994 = vunpack.c.l.b16 %v4970
      %v5995 = vunpack.c.l.b16 %v4971
      %v5996 = vunpack.c.l.b16 %v4972
      %v5997 = vunpack.c.l.b16 %v4973
      %v5998 = vunpack.c.l.b16 %v4974
      %v5999 = vunpack.c.l.b16 %v4975
      %v6000 = vunpack.c.l.b16 %v4976
      %v6001 = vunpack.c.l.b16 %v4977
      %v6002 = vunpack.c.l.b16 %v4978
      %v6003 = vunpack.c.l.b16 %v4979
      %v6004 = vunpack.c.l.b16 %v4980
      %v6005 = vunpack.c.l.b16 %v4981
      %v6006 = vunpack.c.l.b16 %v4982
      %v6007 = vunpack.c.l.b16 %v4983
      %v6008 = vunpack.c.l.b16 %v4984
      %v6009 = vunpack.c.l.b16 %v4985
      %v6010 = vunpack.c.l.b16 %v4986
      %v6011 = vunpack.c.l.b16 %v4987
      %v6012 = vunpack.c.l.b16 %v4988
      %v6013 = vunpack.c.l.b16 %v4989
      %v6014 = vunpack.c.l.b16 %v4990
      %v6015 = vunpack.c.l.b16 %v4991
      %v6016 = vunpack.c.l.b16 %v4992
      %v6017 = vunpack.c.l.b16 %v4993
      %v6018 = vunpack.c.l.b16 %v4994
      %v6019 = vunpack.c.l.b16 %v4995
      %v6020 = vunpack.c.l.b16 %v4996
      %v6021 = vunpack.c.l.b16 %v4997
      %v6022 = vunpack.c.l.b16 %v4998
      %v6023 = vunpack.c.l.b16 %v4999
      %v6024 = vunpack.c.l.b16 %v5000
      %v6025 = vunpack.c.l.b16 %v5001
      %v6026 = vunpack.c.l.b16 %v5002
      %v6027 = vunpack.c.l.b16 %v5003
      %v6028 = vunpack.c.l.b16 %v5004
      %v6029 = vunpack.c.l.b16 %v5005
      %v6030 = vpack.c.b16 %v5887, %v5886
      %v6031 = vpack.c.b16 %v5889, %v5888
      %v6032 = vpack.c.b16 %v5891, %v5890
      %v6033 = vpack.c.b16 %v5893, %v5892
      %v6034 = vpack.c.b16 %v5895, %v5894
      %v6035 = vpack.c.b16 %v5897, %v5896
      %v6036 = vpack.c.b16 %v5899, %v5898
      %v6037 = vpack.c.b16 %v5901, %v5900
      %v6038 = vpack.c.b16 %v5903, %v5902
      %v6039 = vpack.c.b16 %v5905, %v5904
      %v6040 = vpack.c.b16 %v5907, %v5906
      %v6041 = vpack.c.b16 %v5909, %v5908
      %v6042 = vpack.c.b16 %v5911, %v5910
      %v6043 = vpack.c.b16 %v5913, %v5912
      %v6044 = vpack.c.b16 %v5915, %v5914
      %v6045 = vpack.c.b16 %v5917, %v5916
      %v6046 = vpack.c.b16 %v5919, %v5918
      %v6047 = vpack.c.b16 %v5921, %v5920
      %v6048 = vpack.c.b16 %v5923, %v5922
      %v6049 = vpack.c.b16 %v5925, %v5924
      %v6050 = vpack.c.b16 %v5927, %v5926
      %v6051 = vpack.c.b16 %v5929, %v5928
      %v6052 = vpack.c.b16 %v5931, %v5930
      %v6053 = vpack.c.b16 %v5933, %v5932
      %v6054 = vpack.c.b16 %v5935, %v5934
      %v6055 = vpack.c.b16 %v5937, %v5936
      %v6056 = vpack.c.b16 %v5939, %v5938
      %v6057 = vpack.c.b16 %v5941, %v5940
      %v6058 = vpack.c.b16 %v5943, %v5942
      %v6059 = vpack.c.b16 %v5945, %v5944
      %v6060 = vpack.c.b16 %v5947, %v5946
      %v6061 = vpack.c.b16 %v5949, %v5948
      %v6062 = vpack.c.b16 %v5951, %v5950
      %v6063 = vpack.c.b16 %v5953, %v5952
      %v6064 = vpack.c.b16 %v5955, %v5954
      %v6065 = vpack.c.b16 %v5957, %v5956
      %v6066 = vpack.c.b16 %v5959, %v5958
      %v6067 = vpack.c.b16 %v5961, %v5960
      %v6068 = vpack.c.b16 %v5963, %v5962
      %v6069 = vpack.c.b16 %v5965, %v5964
      %v6070 = vpack.c.b16 %v5967, %v5966
      %v6071 = vpack.c.b16 %v5969, %v5968
      %v6072 = vpack.c.b16 %v5971, %v5970
      %v6073 = vpack.c.b16 %v5973, %v5972
      %v6074 = vpack.c.b16 %v5975, %v5974
      %v6075 = vpack.c.b16 %v5977, %v5976
      %v6076 = vpack.c.b16 %v5979, %v5978
      %v6077 = vpack.c.b16 %v5981, %v5980
      %v6078 = vpack.c.b16 %v5983, %v5982
      %v6079 = vpack.c.b16 %v5985, %v5984
      %v6080 = vpack.c.b16 %v5987, %v5986
      %v6081 = vpack.c.b16 %v5989, %v5988
      %v6082 = vpack.c.b16 %v5991, %v5990
      %v6083 = vpack.c.b16 %v5993, %v5992
      %v6084 = vpack.c.b16 %v5995, %v5994
      %v6085 = vpack.c.b16 %v5997, %v5996
      %v6086 = vpack.c.b16 %v5999, %v5998
      %v6087 = vpack.c.b16 %v6001, %v6000
      %v6088 = vpack.c.b16 %v6003, %v6002
      %v6089 = vpack.c.b16 %v6005, %v6004
      %v6090 = vpack.c.b16 %v6007, %v6006
      %v6091 = vpack.c.b16 %v6009, %v6008
      %v6092 = vpack.c.b16 %v6011, %v6010
      %v6093 = vpack.c.b16 %v6013, %v6012
      %v6094 = vpack.c.b16 %v6015, %v6014
      %v6095 = vpack.c.b16 %v6017, %v6016
      %v6096 = vpack.c.b16 %v6019, %v6018
      %v6097 = vpack.c.b16 %v6021, %v6020
      %v6098 = vpack.c.b16 %v6023, %v6022
      %v6099 = vpack.c.b16 %v6025, %v6024
      %v6100 = vpack.c.b16 %v6027, %v6026
      %v6101 = vpack.c.b16 %v6029, %v6028
      %6174 = vmatpush.bf16.msra.mxu0 %v6037
      %6175 = vmatpush.bf16.msra.mxu0 %v6036
      %6176 = vmatpush.bf16.msra.mxu0 %v6035
      %6177 = vmatpush.bf16.msra.mxu0 %v6034
      %6178 = vmatpush.bf16.msra.mxu0 %v6033
      %6179 = vmatpush.bf16.msra.mxu0 %v6032
      %6180 = vmatpush.bf16.msra.mxu0 %v6031
      %6181 = vmatpush.bf16.msra.mxu0 %v6030
      %6182 = vmatmul.bf16.gmra.mxu0 %v5454
      %v6183 = vpop.f32.mrf.mxu0
      %v6184 = vadd.f32 0.0, %v6183
      %v6185 = vpop.f32.mrf.mxu0
      %v6186 = vadd.f32 0.0, %v6185
      %6187 = vmatmul.bf16.gmra.mxu0 %v5463
      %v6188 = vpop.f32.mrf.mxu0
      %v6189 = vadd.f32 0.0, %v6188
      %v6190 = vpop.f32.mrf.mxu0
      %v6191 = vadd.f32 0.0, %v6190
      %6192 = vmatmul.bf16.gmra.mxu0 %v5472
      %v6193 = vpop.f32.mrf.mxu0
      %v6194 = vadd.f32 0.0, %v6193
      %v6195 = vpop.f32.mrf.mxu0
      %v6196 = vadd.f32 0.0, %v6195
      %6197 = vmatmul.bf16.gmra.mxu0 %v5481
      %v6198 = vpop.f32.mrf.mxu0
      %v6199 = vadd.f32 0.0, %v6198
      %v6200 = vpop.f32.mrf.mxu0
      %v6201 = vadd.f32 0.0, %v6200
      %6202 = vmatmul.bf16.gmra.mxu0 %v5490
      %v6203 = vpop.f32.mrf.mxu0
      %v6204 = vadd.f32 0.0, %v6203
      %v6205 = vpop.f32.mrf.mxu0
      %v6206 = vadd.f32 0.0, %v6205
      %6207 = vmatmul.bf16.gmra.mxu0 %v5499
      %v6208 = vpop.f32.mrf.mxu0
      %v6209 = vadd.f32 0.0, %v6208
      %v6210 = vpop.f32.mrf.mxu0
      %v6211 = vadd.f32 0.0, %v6210
      %6212 = vmatmul.bf16.gmra.mxu0 %v5508
      %v6213 = vpop.f32.mrf.mxu0
      %v6214 = vadd.f32 0.0, %v6213
      %v6215 = vpop.f32.mrf.mxu0
      %v6216 = vadd.f32 0.0, %v6215
      %6217 = vmatmul.bf16.gmra.mxu0 %v5517
      %v6218 = vpop.f32.mrf.mxu0
      %v6219 = vadd.f32 0.0, %v6218
      %v6220 = vpop.f32.mrf.mxu0
      %v6221 = vadd.f32 0.0, %v6220
      %6222 = vmatmul.bf16.gmra.mxu0 %v5526
      %v6223 = vpop.f32.mrf.mxu0
      %v6224 = vadd.f32 0.0, %v6223
      %v6225 = vpop.f32.mrf.mxu0
      %v6226 = vadd.f32 0.0, %v6225
      %6227 = vmatmul.bf16.gmra.mxu0 %v5535
      %v6228 = vpop.f32.mrf.mxu0
      %v6229 = vadd.f32 0.0, %v6228
      %v6230 = vpop.f32.mrf.mxu0
      %v6231 = vadd.f32 0.0, %v6230
      %6232 = vmatmul.bf16.gmra.mxu0 %v5544
      %v6233 = vpop.f32.mrf.mxu0
      %v6234 = vadd.f32 0.0, %v6233
      %v6235 = vpop.f32.mrf.mxu0
      %v6236 = vadd.f32 0.0, %v6235
      %6237 = vmatmul.bf16.gmra.mxu0 %v5553
      %v6238 = vpop.f32.mrf.mxu0
      %v6239 = vadd.f32 0.0, %v6238
      %v6240 = vpop.f32.mrf.mxu0
      %v6241 = vadd.f32 0.0, %v6240
      %6242 = vmatmul.bf16.gmra.mxu0 %v5562
      %v6243 = vpop.f32.mrf.mxu0
      %v6244 = vadd.f32 0.0, %v6243
      %v6245 = vpop.f32.mrf.mxu0
      %v6246 = vadd.f32 0.0, %v6245
      %6247 = vmatmul.bf16.gmra.mxu0 %v5571
      %v6248 = vpop.f32.mrf.mxu0
      %v6249 = vadd.f32 0.0, %v6248
      %v6250 = vpop.f32.mrf.mxu0
      %v6251 = vadd.f32 0.0, %v6250
      %6252 = vmatmul.bf16.gmra.mxu0 %v5580
      %v6253 = vpop.f32.mrf.mxu0
      %v6254 = vadd.f32 0.0, %v6253
      %v6255 = vpop.f32.mrf.mxu0
      %v6256 = vadd.f32 0.0, %v6255
      %6257 = vmatmul.bf16.gmra.mxu0 %v5589
      %v6258 = vpop.f32.mrf.mxu0
      %v6259 = vadd.f32 0.0, %v6258
      %v6260 = vpop.f32.mrf.mxu0
      %v6261 = vadd.f32 0.0, %v6260
      %6262 = vdwg.mxu0
      %6263 = vmatpush.bf16.msra.mxu0 %v6045
      %6264 = vmatpush.bf16.msra.mxu0 %v6044
      %6265 = vmatpush.bf16.msra.mxu0 %v6043
      %6266 = vmatpush.bf16.msra.mxu0 %v6042
      %6267 = vmatpush.bf16.msra.mxu0 %v6041
      %6268 = vmatpush.bf16.msra.mxu0 %v6040
      %6269 = vmatpush.bf16.msra.mxu0 %v6039
      %6270 = vmatpush.bf16.msra.mxu0 %v6038
      %6271 = vmatmul.bf16.gmra.mxu0 %v5455
      %v6272 = vpop.f32.mrf.mxu0
      %v6273 = vadd.f32 %v6184, %v6272
      %v6274 = vpop.f32.mrf.mxu0
      %v6275 = vadd.f32 %v6186, %v6274
      %6276 = vmatmul.bf16.gmra.mxu0 %v5464
      %v6277 = vpop.f32.mrf.mxu0
      %v6278 = vadd.f32 %v6189, %v6277
      %v6279 = vpop.f32.mrf.mxu0
      %v6280 = vadd.f32 %v6191, %v6279
      %6281 = vmatmul.bf16.gmra.mxu0 %v5473
      %v6282 = vpop.f32.mrf.mxu0
      %v6283 = vadd.f32 %v6194, %v6282
      %v6284 = vpop.f32.mrf.mxu0
      %v6285 = vadd.f32 %v6196, %v6284
      %6286 = vmatmul.bf16.gmra.mxu0 %v5482
      %v6287 = vpop.f32.mrf.mxu0
      %v6288 = vadd.f32 %v6199, %v6287
      %v6289 = vpop.f32.mrf.mxu0
      %v6290 = vadd.f32 %v6201, %v6289
      %6291 = vmatmul.bf16.gmra.mxu0 %v5491
      %v6292 = vpop.f32.mrf.mxu0
      %v6293 = vadd.f32 %v6204, %v6292
      %v6294 = vpop.f32.mrf.mxu0
      %v6295 = vadd.f32 %v6206, %v6294
      %6296 = vmatmul.bf16.gmra.mxu0 %v5500
      %v6297 = vpop.f32.mrf.mxu0
      %v6298 = vadd.f32 %v6209, %v6297
      %v6299 = vpop.f32.mrf.mxu0
      %v6300 = vadd.f32 %v6211, %v6299
      %6301 = vmatmul.bf16.gmra.mxu0 %v5509
      %v6302 = vpop.f32.mrf.mxu0
      %v6303 = vadd.f32 %v6214, %v6302
      %v6304 = vpop.f32.mrf.mxu0
      %v6305 = vadd.f32 %v6216, %v6304
      %6306 = vmatmul.bf16.gmra.mxu0 %v5518
      %v6307 = vpop.f32.mrf.mxu0
      %v6308 = vadd.f32 %v6219, %v6307
      %v6309 = vpop.f32.mrf.mxu0
      %v6310 = vadd.f32 %v6221, %v6309
      %6311 = vmatmul.bf16.gmra.mxu0 %v5527
      %v6312 = vpop.f32.mrf.mxu0
      %v6313 = vadd.f32 %v6224, %v6312
      %v6314 = vpop.f32.mrf.mxu0
      %v6315 = vadd.f32 %v6226, %v6314
      %6316 = vmatmul.bf16.gmra.mxu0 %v5536
      %v6317 = vpop.f32.mrf.mxu0
      %v6318 = vadd.f32 %v6229, %v6317
      %v6319 = vpop.f32.mrf.mxu0
      %v6320 = vadd.f32 %v6231, %v6319
      %6321 = vmatmul.bf16.gmra.mxu0 %v5545
      %v6322 = vpop.f32.mrf.mxu0
      %v6323 = vadd.f32 %v6234, %v6322
      %v6324 = vpop.f32.mrf.mxu0
      %v6325 = vadd.f32 %v6236, %v6324
      %6326 = vmatmul.bf16.gmra.mxu0 %v5554
      %v6327 = vpop.f32.mrf.mxu0
      %v6328 = vadd.f32 %v6239, %v6327
      %v6329 = vpop.f32.mrf.mxu0
      %v6330 = vadd.f32 %v6241, %v6329
      %6331 = vmatmul.bf16.gmra.mxu0 %v5563
      %v6332 = vpop.f32.mrf.mxu0
      %v6333 = vadd.f32 %v6244, %v6332
      %v6334 = vpop.f32.mrf.mxu0
      %v6335 = vadd.f32 %v6246, %v6334
      %6336 = vmatmul.bf16.gmra.mxu0 %v5572
      %v6337 = vpop.f32.mrf.mxu0
      %v6338 = vadd.f32 %v6249, %v6337
      %v6339 = vpop.f32.mrf.mxu0
      %v6340 = vadd.f32 %v6251, %v6339
      %6341 = vmatmul.bf16.gmra.mxu0 %v5581
      %v6342 = vpop.f32.mrf.mxu0
      %v6343 = vadd.f32 %v6254, %v6342
      %v6344 = vpop.f32.mrf.mxu0
      %v6345 = vadd.f32 %v6256, %v6344
      %6346 = vmatmul.bf16.gmra.mxu0 %v5590
      %v6347 = vpop.f32.mrf.mxu0
      %v6348 = vadd.f32 %v6259, %v6347
      %v6349 = vpop.f32.mrf.mxu0
      %v6350 = vadd.f32 %v6261, %v6349
      %6351 = vdwg.mxu0
      %6352 = vmatpush.bf16.msra.mxu0 %v6053
      %6353 = vmatpush.bf16.msra.mxu0 %v6052
      %6354 = vmatpush.bf16.msra.mxu0 %v6051
      %6355 = vmatpush.bf16.msra.mxu0 %v6050
      %6356 = vmatpush.bf16.msra.mxu0 %v6049
      %6357 = vmatpush.bf16.msra.mxu0 %v6048
      %6358 = vmatpush.bf16.msra.mxu0 %v6047
      %6359 = vmatpush.bf16.msra.mxu0 %v6046
      %6360 = vmatmul.bf16.gmra.mxu0 %v5456
      %v6361 = vpop.f32.mrf.mxu0
      %v6362 = vadd.f32 %v6273, %v6361
      %v6363 = vpop.f32.mrf.mxu0
      %v6364 = vadd.f32 %v6275, %v6363
      %6365 = vmatmul.bf16.gmra.mxu0 %v5465
      %v6366 = vpop.f32.mrf.mxu0
      %v6367 = vadd.f32 %v6278, %v6366
      %v6368 = vpop.f32.mrf.mxu0
      %v6369 = vadd.f32 %v6280, %v6368
      %6370 = vmatmul.bf16.gmra.mxu0 %v5474
      %v6371 = vpop.f32.mrf.mxu0
      %v6372 = vadd.f32 %v6283, %v6371
      %v6373 = vpop.f32.mrf.mxu0
      %v6374 = vadd.f32 %v6285, %v6373
      %6375 = vmatmul.bf16.gmra.mxu0 %v5483
      %v6376 = vpop.f32.mrf.mxu0
      %v6377 = vadd.f32 %v6288, %v6376
      %v6378 = vpop.f32.mrf.mxu0
      %v6379 = vadd.f32 %v6290, %v6378
      %6380 = vmatmul.bf16.gmra.mxu0 %v5492
      %v6381 = vpop.f32.mrf.mxu0
      %v6382 = vadd.f32 %v6293, %v6381
      %v6383 = vpop.f32.mrf.mxu0
      %v6384 = vadd.f32 %v6295, %v6383
      %6385 = vmatmul.bf16.gmra.mxu0 %v5501
      %v6386 = vpop.f32.mrf.mxu0
      %v6387 = vadd.f32 %v6298, %v6386
      %v6388 = vpop.f32.mrf.mxu0
      %v6389 = vadd.f32 %v6300, %v6388
      %6390 = vmatmul.bf16.gmra.mxu0 %v5510
      %v6391 = vpop.f32.mrf.mxu0
      %v6392 = vadd.f32 %v6303, %v6391
      %v6393 = vpop.f32.mrf.mxu0
      %v6394 = vadd.f32 %v6305, %v6393
      %6395 = vmatmul.bf16.gmra.mxu0 %v5519
      %v6396 = vpop.f32.mrf.mxu0
      %v6397 = vadd.f32 %v6308, %v6396
      %v6398 = vpop.f32.mrf.mxu0
      %v6399 = vadd.f32 %v6310, %v6398
      %6400 = vmatmul.bf16.gmra.mxu0 %v5528
      %v6401 = vpop.f32.mrf.mxu0
      %v6402 = vadd.f32 %v6313, %v6401
      %v6403 = vpop.f32.mrf.mxu0
      %v6404 = vadd.f32 %v6315, %v6403
      %6405 = vmatmul.bf16.gmra.mxu0 %v5537
      %v6406 = vpop.f32.mrf.mxu0
      %v6407 = vadd.f32 %v6318, %v6406
      %v6408 = vpop.f32.mrf.mxu0
      %v6409 = vadd.f32 %v6320, %v6408
      %6410 = vmatmul.bf16.gmra.mxu0 %v5546
      %v6411 = vpop.f32.mrf.mxu0
      %v6412 = vadd.f32 %v6323, %v6411
      %v6413 = vpop.f32.mrf.mxu0
      %v6414 = vadd.f32 %v6325, %v6413
      %6415 = vmatmul.bf16.gmra.mxu0 %v5555
      %v6416 = vpop.f32.mrf.mxu0
      %v6417 = vadd.f32 %v6328, %v6416
      %v6418 = vpop.f32.mrf.mxu0
      %v6419 = vadd.f32 %v6330, %v6418
      %6420 = vmatmul.bf16.gmra.mxu0 %v5564
      %v6421 = vpop.f32.mrf.mxu0
      %v6422 = vadd.f32 %v6333, %v6421
      %v6423 = vpop.f32.mrf.mxu0
      %v6424 = vadd.f32 %v6335, %v6423
      %6425 = vmatmul.bf16.gmra.mxu0 %v5573
      %v6426 = vpop.f32.mrf.mxu0
      %v6427 = vadd.f32 %v6338, %v6426
      %v6428 = vpop.f32.mrf.mxu0
      %v6429 = vadd.f32 %v6340, %v6428
      %6430 = vmatmul.bf16.gmra.mxu0 %v5582
      %v6431 = vpop.f32.mrf.mxu0
      %v6432 = vadd.f32 %v6343, %v6431
      %v6433 = vpop.f32.mrf.mxu0
      %v6434 = vadd.f32 %v6345, %v6433
      %6435 = vmatmul.bf16.gmra.mxu0 %v5591
      %v6436 = vpop.f32.mrf.mxu0
      %v6437 = vadd.f32 %v6348, %v6436
      %v6438 = vpop.f32.mrf.mxu0
      %v6439 = vadd.f32 %v6350, %v6438
      %6440 = vdwg.mxu0
      %6441 = vmatpush.bf16.msra.mxu0 %v6061
      %6442 = vmatpush.bf16.msra.mxu0 %v6060
      %6443 = vmatpush.bf16.msra.mxu0 %v6059
      %6444 = vmatpush.bf16.msra.mxu0 %v6058
      %6445 = vmatpush.bf16.msra.mxu0 %v6057
      %6446 = vmatpush.bf16.msra.mxu0 %v6056
      %6447 = vmatpush.bf16.msra.mxu0 %v6055
      %6448 = vmatpush.bf16.msra.mxu0 %v6054
      %6449 = vmatmul.bf16.gmra.mxu0 %v5457
      %v6450 = vpop.f32.mrf.mxu0
      %v6451 = vadd.f32 %v6362, %v6450
      %v6452 = vpop.f32.mrf.mxu0
      %v6453 = vadd.f32 %v6364, %v6452
      %6454 = vmatmul.bf16.gmra.mxu0 %v5466
      %v6455 = vpop.f32.mrf.mxu0
      %v6456 = vadd.f32 %v6367, %v6455
      %v6457 = vpop.f32.mrf.mxu0
      %v6458 = vadd.f32 %v6369, %v6457
      %6459 = vmatmul.bf16.gmra.mxu0 %v5475
      %v6460 = vpop.f32.mrf.mxu0
      %v6461 = vadd.f32 %v6372, %v6460
      %v6462 = vpop.f32.mrf.mxu0
      %v6463 = vadd.f32 %v6374, %v6462
      %6464 = vmatmul.bf16.gmra.mxu0 %v5484
      %v6465 = vpop.f32.mrf.mxu0
      %v6466 = vadd.f32 %v6377, %v6465
      %v6467 = vpop.f32.mrf.mxu0
      %v6468 = vadd.f32 %v6379, %v6467
      %6469 = vmatmul.bf16.gmra.mxu0 %v5493
      %v6470 = vpop.f32.mrf.mxu0
      %v6471 = vadd.f32 %v6382, %v6470
      %v6472 = vpop.f32.mrf.mxu0
      %v6473 = vadd.f32 %v6384, %v6472
      %6474 = vmatmul.bf16.gmra.mxu0 %v5502
      %v6475 = vpop.f32.mrf.mxu0
      %v6476 = vadd.f32 %v6387, %v6475
      %v6477 = vpop.f32.mrf.mxu0
      %v6478 = vadd.f32 %v6389, %v6477
      %6479 = vmatmul.bf16.gmra.mxu0 %v5511
      %v6480 = vpop.f32.mrf.mxu0
      %v6481 = vadd.f32 %v6392, %v6480
      %v6482 = vpop.f32.mrf.mxu0
      %v6483 = vadd.f32 %v6394, %v6482
      %6484 = vmatmul.bf16.gmra.mxu0 %v5520
      %v6485 = vpop.f32.mrf.mxu0
      %v6486 = vadd.f32 %v6397, %v6485
      %v6487 = vpop.f32.mrf.mxu0
      %v6488 = vadd.f32 %v6399, %v6487
      %6489 = vmatmul.bf16.gmra.mxu0 %v5529
      %v6490 = vpop.f32.mrf.mxu0
      %v6491 = vadd.f32 %v6402, %v6490
      %v6492 = vpop.f32.mrf.mxu0
      %v6493 = vadd.f32 %v6404, %v6492
      %6494 = vmatmul.bf16.gmra.mxu0 %v5538
      %v6495 = vpop.f32.mrf.mxu0
      %v6496 = vadd.f32 %v6407, %v6495
      %v6497 = vpop.f32.mrf.mxu0
      %v6498 = vadd.f32 %v6409, %v6497
      %6499 = vmatmul.bf16.gmra.mxu0 %v5547
      %v6500 = vpop.f32.mrf.mxu0
      %v6501 = vadd.f32 %v6412, %v6500
      %v6502 = vpop.f32.mrf.mxu0
      %v6503 = vadd.f32 %v6414, %v6502
      %6504 = vmatmul.bf16.gmra.mxu0 %v5556
      %v6505 = vpop.f32.mrf.mxu0
      %v6506 = vadd.f32 %v6417, %v6505
      %v6507 = vpop.f32.mrf.mxu0
      %v6508 = vadd.f32 %v6419, %v6507
      %6509 = vmatmul.bf16.gmra.mxu0 %v5565
      %v6510 = vpop.f32.mrf.mxu0
      %v6511 = vadd.f32 %v6422, %v6510
      %v6512 = vpop.f32.mrf.mxu0
      %v6513 = vadd.f32 %v6424, %v6512
      %6514 = vmatmul.bf16.gmra.mxu0 %v5574
      %v6515 = vpop.f32.mrf.mxu0
      %v6516 = vadd.f32 %v6427, %v6515
      %v6517 = vpop.f32.mrf.mxu0
      %v6518 = vadd.f32 %v6429, %v6517
      %6519 = vmatmul.bf16.gmra.mxu0 %v5583
      %v6520 = vpop.f32.mrf.mxu0
      %v6521 = vadd.f32 %v6432, %v6520
      %v6522 = vpop.f32.mrf.mxu0
      %v6523 = vadd.f32 %v6434, %v6522
      %6524 = vmatmul.bf16.gmra.mxu0 %v5592
      %v6525 = vpop.f32.mrf.mxu0
      %v6526 = vadd.f32 %v6437, %v6525
      %v6527 = vpop.f32.mrf.mxu0
      %v6528 = vadd.f32 %v6439, %v6527
      %6529 = vdwg.mxu0
      %6530 = vmatpush.bf16.msra.mxu0 %v6069
      %6531 = vmatpush.bf16.msra.mxu0 %v6068
      %6532 = vmatpush.bf16.msra.mxu0 %v6067
      %6533 = vmatpush.bf16.msra.mxu0 %v6066
      %6534 = vmatpush.bf16.msra.mxu0 %v6065
      %6535 = vmatpush.bf16.msra.mxu0 %v6064
      %6536 = vmatpush.bf16.msra.mxu0 %v6063
      %6537 = vmatpush.bf16.msra.mxu0 %v6062
      %6538 = vmatmul.bf16.gmra.mxu0 %v5458
      %v6539 = vpop.f32.mrf.mxu0
      %v6540 = vadd.f32 %v6451, %v6539
      %v6541 = vpop.f32.mrf.mxu0
      %v6542 = vadd.f32 %v6453, %v6541
      %6543 = vmatmul.bf16.gmra.mxu0 %v5467
      %v6544 = vpop.f32.mrf.mxu0
      %v6545 = vadd.f32 %v6456, %v6544
      %v6546 = vpop.f32.mrf.mxu0
      %v6547 = vadd.f32 %v6458, %v6546
      %6548 = vmatmul.bf16.gmra.mxu0 %v5476
      %v6549 = vpop.f32.mrf.mxu0
      %v6550 = vadd.f32 %v6461, %v6549
      %v6551 = vpop.f32.mrf.mxu0
      %v6552 = vadd.f32 %v6463, %v6551
      %6553 = vmatmul.bf16.gmra.mxu0 %v5485
      %v6554 = vpop.f32.mrf.mxu0
      %v6555 = vadd.f32 %v6466, %v6554
      %v6556 = vpop.f32.mrf.mxu0
      %v6557 = vadd.f32 %v6468, %v6556
      %6558 = vmatmul.bf16.gmra.mxu0 %v5494
      %v6559 = vpop.f32.mrf.mxu0
      %v6560 = vadd.f32 %v6471, %v6559
      %v6561 = vpop.f32.mrf.mxu0
      %v6562 = vadd.f32 %v6473, %v6561
      %6563 = vmatmul.bf16.gmra.mxu0 %v5503
      %v6564 = vpop.f32.mrf.mxu0
      %v6565 = vadd.f32 %v6476, %v6564
      %v6566 = vpop.f32.mrf.mxu0
      %v6567 = vadd.f32 %v6478, %v6566
      %6568 = vmatmul.bf16.gmra.mxu0 %v5512
      %v6569 = vpop.f32.mrf.mxu0
      %v6570 = vadd.f32 %v6481, %v6569
      %v6571 = vpop.f32.mrf.mxu0
      %v6572 = vadd.f32 %v6483, %v6571
      %6573 = vmatmul.bf16.gmra.mxu0 %v5521
      %v6574 = vpop.f32.mrf.mxu0
      %v6575 = vadd.f32 %v6486, %v6574
      %v6576 = vpop.f32.mrf.mxu0
      %v6577 = vadd.f32 %v6488, %v6576
      %6578 = vmatmul.bf16.gmra.mxu0 %v5530
      %v6579 = vpop.f32.mrf.mxu0
      %v6580 = vadd.f32 %v6491, %v6579
      %v6581 = vpop.f32.mrf.mxu0
      %v6582 = vadd.f32 %v6493, %v6581
      %6583 = vmatmul.bf16.gmra.mxu0 %v5539
      %v6584 = vpop.f32.mrf.mxu0
      %v6585 = vadd.f32 %v6496, %v6584
      %v6586 = vpop.f32.mrf.mxu0
      %v6587 = vadd.f32 %v6498, %v6586
      %6588 = vmatmul.bf16.gmra.mxu0 %v5548
      %v6589 = vpop.f32.mrf.mxu0
      %v6590 = vadd.f32 %v6501, %v6589
      %v6591 = vpop.f32.mrf.mxu0
      %v6592 = vadd.f32 %v6503, %v6591
      %6593 = vmatmul.bf16.gmra.mxu0 %v5557
      %v6594 = vpop.f32.mrf.mxu0
      %v6595 = vadd.f32 %v6506, %v6594
      %v6596 = vpop.f32.mrf.mxu0
      %v6597 = vadd.f32 %v6508, %v6596
      %6598 = vmatmul.bf16.gmra.mxu0 %v5566
      %v6599 = vpop.f32.mrf.mxu0
      %v6600 = vadd.f32 %v6511, %v6599
      %v6601 = vpop.f32.mrf.mxu0
      %v6602 = vadd.f32 %v6513, %v6601
      %6603 = vmatmul.bf16.gmra.mxu0 %v5575
      %v6604 = vpop.f32.mrf.mxu0
      %v6605 = vadd.f32 %v6516, %v6604
      %v6606 = vpop.f32.mrf.mxu0
      %v6607 = vadd.f32 %v6518, %v6606
      %6608 = vmatmul.bf16.gmra.mxu0 %v5584
      %v6609 = vpop.f32.mrf.mxu0
      %v6610 = vadd.f32 %v6521, %v6609
      %v6611 = vpop.f32.mrf.mxu0
      %v6612 = vadd.f32 %v6523, %v6611
      %6613 = vmatmul.bf16.gmra.mxu0 %v5593
      %v6614 = vpop.f32.mrf.mxu0
      %v6615 = vadd.f32 %v6526, %v6614
      %v6616 = vpop.f32.mrf.mxu0
      %v6617 = vadd.f32 %v6528, %v6616
      %6618 = vdwg.mxu0
      %6619 = vmatpush.bf16.msra.mxu0 %v6077
      %6620 = vmatpush.bf16.msra.mxu0 %v6076
      %6621 = vmatpush.bf16.msra.mxu0 %v6075
      %6622 = vmatpush.bf16.msra.mxu0 %v6074
      %6623 = vmatpush.bf16.msra.mxu0 %v6073
      %6624 = vmatpush.bf16.msra.mxu0 %v6072
      %6625 = vmatpush.bf16.msra.mxu0 %v6071
      %6626 = vmatpush.bf16.msra.mxu0 %v6070
      %6627 = vmatmul.bf16.gmra.mxu0 %v5459
      %v6628 = vpop.f32.mrf.mxu0
      %v6629 = vadd.f32 %v6540, %v6628
      %v6630 = vpop.f32.mrf.mxu0
      %v6631 = vadd.f32 %v6542, %v6630
      %6632 = vmatmul.bf16.gmra.mxu0 %v5468
      %v6633 = vpop.f32.mrf.mxu0
      %v6634 = vadd.f32 %v6545, %v6633
      %v6635 = vpop.f32.mrf.mxu0
      %v6636 = vadd.f32 %v6547, %v6635
      %6637 = vmatmul.bf16.gmra.mxu0 %v5477
      %v6638 = vpop.f32.mrf.mxu0
      %v6639 = vadd.f32 %v6550, %v6638
      %v6640 = vpop.f32.mrf.mxu0
      %v6641 = vadd.f32 %v6552, %v6640
      %6642 = vmatmul.bf16.gmra.mxu0 %v5486
      %v6643 = vpop.f32.mrf.mxu0
      %v6644 = vadd.f32 %v6555, %v6643
      %v6645 = vpop.f32.mrf.mxu0
      %v6646 = vadd.f32 %v6557, %v6645
      %6647 = vmatmul.bf16.gmra.mxu0 %v5495
      %v6648 = vpop.f32.mrf.mxu0
      %v6649 = vadd.f32 %v6560, %v6648
      %v6650 = vpop.f32.mrf.mxu0
      %v6651 = vadd.f32 %v6562, %v6650
      %6652 = vmatmul.bf16.gmra.mxu0 %v5504
      %v6653 = vpop.f32.mrf.mxu0
      %v6654 = vadd.f32 %v6565, %v6653
      %v6655 = vpop.f32.mrf.mxu0
      %v6656 = vadd.f32 %v6567, %v6655
      %6657 = vmatmul.bf16.gmra.mxu0 %v5513
      %v6658 = vpop.f32.mrf.mxu0
      %v6659 = vadd.f32 %v6570, %v6658
      %v6660 = vpop.f32.mrf.mxu0
      %v6661 = vadd.f32 %v6572, %v6660
      %6662 = vmatmul.bf16.gmra.mxu0 %v5522
      %v6663 = vpop.f32.mrf.mxu0
      %v6664 = vadd.f32 %v6575, %v6663
      %v6665 = vpop.f32.mrf.mxu0
      %v6666 = vadd.f32 %v6577, %v6665
      %6667 = vmatmul.bf16.gmra.mxu0 %v5531
      %v6668 = vpop.f32.mrf.mxu0
      %v6669 = vadd.f32 %v6580, %v6668
      %v6670 = vpop.f32.mrf.mxu0
      %v6671 = vadd.f32 %v6582, %v6670
      %6672 = vmatmul.bf16.gmra.mxu0 %v5540
      %v6673 = vpop.f32.mrf.mxu0
      %v6674 = vadd.f32 %v6585, %v6673
      %v6675 = vpop.f32.mrf.mxu0
      %v6676 = vadd.f32 %v6587, %v6675
      %6677 = vmatmul.bf16.gmra.mxu0 %v5549
      %v6678 = vpop.f32.mrf.mxu0
      %v6679 = vadd.f32 %v6590, %v6678
      %v6680 = vpop.f32.mrf.mxu0
      %v6681 = vadd.f32 %v6592, %v6680
      %6682 = vmatmul.bf16.gmra.mxu0 %v5558
      %v6683 = vpop.f32.mrf.mxu0
      %v6684 = vadd.f32 %v6595, %v6683
      %v6685 = vpop.f32.mrf.mxu0
      %v6686 = vadd.f32 %v6597, %v6685
      %6687 = vmatmul.bf16.gmra.mxu0 %v5567
      %v6688 = vpop.f32.mrf.mxu0
      %v6689 = vadd.f32 %v6600, %v6688
      %v6690 = vpop.f32.mrf.mxu0
      %v6691 = vadd.f32 %v6602, %v6690
      %6692 = vmatmul.bf16.gmra.mxu0 %v5576
      %v6693 = vpop.f32.mrf.mxu0
      %v6694 = vadd.f32 %v6605, %v6693
      %v6695 = vpop.f32.mrf.mxu0
      %v6696 = vadd.f32 %v6607, %v6695
      %6697 = vmatmul.bf16.gmra.mxu0 %v5585
      %v6698 = vpop.f32.mrf.mxu0
      %v6699 = vadd.f32 %v6610, %v6698
      %v6700 = vpop.f32.mrf.mxu0
      %v6701 = vadd.f32 %v6612, %v6700
      %6702 = vmatmul.bf16.gmra.mxu0 %v5594
      %v6703 = vpop.f32.mrf.mxu0
      %v6704 = vadd.f32 %v6615, %v6703
      %v6705 = vpop.f32.mrf.mxu0
      %v6706 = vadd.f32 %v6617, %v6705
      %6707 = vdwg.mxu0
      %6708 = vmatpush.bf16.msra.mxu0 %v6085
      %6709 = vmatpush.bf16.msra.mxu0 %v6084
      %6710 = vmatpush.bf16.msra.mxu0 %v6083
      %6711 = vmatpush.bf16.msra.mxu0 %v6082
      %6712 = vmatpush.bf16.msra.mxu0 %v6081
      %6713 = vmatpush.bf16.msra.mxu0 %v6080
      %6714 = vmatpush.bf16.msra.mxu0 %v6079
      %6715 = vmatpush.bf16.msra.mxu0 %v6078
      %6716 = vmatmul.bf16.gmra.mxu0 %v5460
      %v6717 = vpop.f32.mrf.mxu0
      %v6718 = vadd.f32 %v6629, %v6717
      %v6719 = vpop.f32.mrf.mxu0
      %v6720 = vadd.f32 %v6631, %v6719
      %6721 = vmatmul.bf16.gmra.mxu0 %v5469
      %v6722 = vpop.f32.mrf.mxu0
      %v6723 = vadd.f32 %v6634, %v6722
      %v6724 = vpop.f32.mrf.mxu0
      %v6725 = vadd.f32 %v6636, %v6724
      %6726 = vmatmul.bf16.gmra.mxu0 %v5478
      %v6727 = vpop.f32.mrf.mxu0
      %v6728 = vadd.f32 %v6639, %v6727
      %v6729 = vpop.f32.mrf.mxu0
      %v6730 = vadd.f32 %v6641, %v6729
      %6731 = vmatmul.bf16.gmra.mxu0 %v5487
      %v6732 = vpop.f32.mrf.mxu0
      %v6733 = vadd.f32 %v6644, %v6732
      %v6734 = vpop.f32.mrf.mxu0
      %v6735 = vadd.f32 %v6646, %v6734
      %6736 = vmatmul.bf16.gmra.mxu0 %v5496
      %v6737 = vpop.f32.mrf.mxu0
      %v6738 = vadd.f32 %v6649, %v6737
      %v6739 = vpop.f32.mrf.mxu0
      %v6740 = vadd.f32 %v6651, %v6739
      %6741 = vmatmul.bf16.gmra.mxu0 %v5505
      %v6742 = vpop.f32.mrf.mxu0
      %v6743 = vadd.f32 %v6654, %v6742
      %v6744 = vpop.f32.mrf.mxu0
      %v6745 = vadd.f32 %v6656, %v6744
      %6746 = vmatmul.bf16.gmra.mxu0 %v5514
      %v6747 = vpop.f32.mrf.mxu0
      %v6748 = vadd.f32 %v6659, %v6747
      %v6749 = vpop.f32.mrf.mxu0
      %v6750 = vadd.f32 %v6661, %v6749
      %6751 = vmatmul.bf16.gmra.mxu0 %v5523
      %v6752 = vpop.f32.mrf.mxu0
      %v6753 = vadd.f32 %v6664, %v6752
      %v6754 = vpop.f32.mrf.mxu0
      %v6755 = vadd.f32 %v6666, %v6754
      %6756 = vmatmul.bf16.gmra.mxu0 %v5532
      %v6757 = vpop.f32.mrf.mxu0
      %v6758 = vadd.f32 %v6669, %v6757
      %v6759 = vpop.f32.mrf.mxu0
      %v6760 = vadd.f32 %v6671, %v6759
      %6761 = vmatmul.bf16.gmra.mxu0 %v5541
      %v6762 = vpop.f32.mrf.mxu0
      %v6763 = vadd.f32 %v6674, %v6762
      %v6764 = vpop.f32.mrf.mxu0
      %v6765 = vadd.f32 %v6676, %v6764
      %6766 = vmatmul.bf16.gmra.mxu0 %v5550
      %v6767 = vpop.f32.mrf.mxu0
      %v6768 = vadd.f32 %v6679, %v6767
      %v6769 = vpop.f32.mrf.mxu0
      %v6770 = vadd.f32 %v6681, %v6769
      %6771 = vmatmul.bf16.gmra.mxu0 %v5559
      %v6772 = vpop.f32.mrf.mxu0
      %v6773 = vadd.f32 %v6684, %v6772
      %v6774 = vpop.f32.mrf.mxu0
      %v6775 = vadd.f32 %v6686, %v6774
      %6776 = vmatmul.bf16.gmra.mxu0 %v5568
      %v6777 = vpop.f32.mrf.mxu0
      %v6778 = vadd.f32 %v6689, %v6777
      %v6779 = vpop.f32.mrf.mxu0
      %v6780 = vadd.f32 %v6691, %v6779
      %6781 = vmatmul.bf16.gmra.mxu0 %v5577
      %v6782 = vpop.f32.mrf.mxu0
      %v6783 = vadd.f32 %v6694, %v6782
      %v6784 = vpop.f32.mrf.mxu0
      %v6785 = vadd.f32 %v6696, %v6784
      %6786 = vmatmul.bf16.gmra.mxu0 %v5586
      %v6787 = vpop.f32.mrf.mxu0
      %v6788 = vadd.f32 %v6699, %v6787
      %v6789 = vpop.f32.mrf.mxu0
      %v6790 = vadd.f32 %v6701, %v6789
      %6791 = vmatmul.bf16.gmra.mxu0 %v5595
      %v6792 = vpop.f32.mrf.mxu0
      %v6793 = vadd.f32 %v6704, %v6792
      %v6794 = vpop.f32.mrf.mxu0
      %v6795 = vadd.f32 %v6706, %v6794
      %6796 = vdwg.mxu0
      %6797 = vmatpush.bf16.msra.mxu0 %v6093
      %6798 = vmatpush.bf16.msra.mxu0 %v6092
      %6799 = vmatpush.bf16.msra.mxu0 %v6091
      %6800 = vmatpush.bf16.msra.mxu0 %v6090
      %6801 = vmatpush.bf16.msra.mxu0 %v6089
      %6802 = vmatpush.bf16.msra.mxu0 %v6088
      %6803 = vmatpush.bf16.msra.mxu0 %v6087
      %6804 = vmatpush.bf16.msra.mxu0 %v6086
      %6805 = vmatmul.bf16.gmra.mxu0 %v5461
      %v6806 = vpop.f32.mrf.mxu0
      %v6807 = vadd.f32 %v6718, %v6806
      %v6808 = vpop.f32.mrf.mxu0
      %v6809 = vadd.f32 %v6720, %v6808
      %6810 = vmatmul.bf16.gmra.mxu0 %v5470
      %v6811 = vpop.f32.mrf.mxu0
      %v6812 = vadd.f32 %v6723, %v6811
      %v6813 = vpop.f32.mrf.mxu0
      %v6814 = vadd.f32 %v6725, %v6813
      %6815 = vmatmul.bf16.gmra.mxu0 %v5479
      %v6816 = vpop.f32.mrf.mxu0
      %v6817 = vadd.f32 %v6728, %v6816
      %v6818 = vpop.f32.mrf.mxu0
      %v6819 = vadd.f32 %v6730, %v6818
      %6820 = vmatmul.bf16.gmra.mxu0 %v5488
      %v6821 = vpop.f32.mrf.mxu0
      %v6822 = vadd.f32 %v6733, %v6821
      %v6823 = vpop.f32.mrf.mxu0
      %v6824 = vadd.f32 %v6735, %v6823
      %6825 = vmatmul.bf16.gmra.mxu0 %v5497
      %v6826 = vpop.f32.mrf.mxu0
      %v6827 = vadd.f32 %v6738, %v6826
      %v6828 = vpop.f32.mrf.mxu0
      %v6829 = vadd.f32 %v6740, %v6828
      %6830 = vmatmul.bf16.gmra.mxu0 %v5506
      %v6831 = vpop.f32.mrf.mxu0
      %v6832 = vadd.f32 %v6743, %v6831
      %v6833 = vpop.f32.mrf.mxu0
      %v6834 = vadd.f32 %v6745, %v6833
      %6835 = vmatmul.bf16.gmra.mxu0 %v5515
      %v6836 = vpop.f32.mrf.mxu0
      %v6837 = vadd.f32 %v6748, %v6836
      %v6838 = vpop.f32.mrf.mxu0
      %v6839 = vadd.f32 %v6750, %v6838
      %6840 = vmatmul.bf16.gmra.mxu0 %v5524
      %v6841 = vpop.f32.mrf.mxu0
      %v6842 = vadd.f32 %v6753, %v6841
      %v6843 = vpop.f32.mrf.mxu0
      %v6844 = vadd.f32 %v6755, %v6843
      %6845 = vmatmul.bf16.gmra.mxu0 %v5533
      %v6846 = vpop.f32.mrf.mxu0
      %v6847 = vadd.f32 %v6758, %v6846
      %v6848 = vpop.f32.mrf.mxu0
      %v6849 = vadd.f32 %v6760, %v6848
      %6850 = vmatmul.bf16.gmra.mxu0 %v5542
      %v6851 = vpop.f32.mrf.mxu0
      %v6852 = vadd.f32 %v6763, %v6851
      %v6853 = vpop.f32.mrf.mxu0
      %v6854 = vadd.f32 %v6765, %v6853
      %6855 = vmatmul.bf16.gmra.mxu0 %v5551
      %v6856 = vpop.f32.mrf.mxu0
      %v6857 = vadd.f32 %v6768, %v6856
      %v6858 = vpop.f32.mrf.mxu0
      %v6859 = vadd.f32 %v6770, %v6858
      %6860 = vmatmul.bf16.gmra.mxu0 %v5560
      %v6861 = vpop.f32.mrf.mxu0
      %v6862 = vadd.f32 %v6773, %v6861
      %v6863 = vpop.f32.mrf.mxu0
      %v6864 = vadd.f32 %v6775, %v6863
      %6865 = vmatmul.bf16.gmra.mxu0 %v5569
      %v6866 = vpop.f32.mrf.mxu0
      %v6867 = vadd.f32 %v6778, %v6866
      %v6868 = vpop.f32.mrf.mxu0
      %v6869 = vadd.f32 %v6780, %v6868
      %6870 = vmatmul.bf16.gmra.mxu0 %v5578
      %v6871 = vpop.f32.mrf.mxu0
      %v6872 = vadd.f32 %v6783, %v6871
      %v6873 = vpop.f32.mrf.mxu0
      %v6874 = vadd.f32 %v6785, %v6873
      %6875 = vmatmul.bf16.gmra.mxu0 %v5587
      %v6876 = vpop.f32.mrf.mxu0
      %v6877 = vadd.f32 %v6788, %v6876
      %v6878 = vpop.f32.mrf.mxu0
      %v6879 = vadd.f32 %v6790, %v6878
      %6880 = vmatmul.bf16.gmra.mxu0 %v5596
      %v6881 = vpop.f32.mrf.mxu0
      %v6882 = vadd.f32 %v6793, %v6881
      %v6883 = vpop.f32.mrf.mxu0
      %v6884 = vadd.f32 %v6795, %v6883
      %6885 = vdwg.mxu0
      %6886 = vmatpush.bf16.msra.mxu0 %v6101
      %6887 = vmatpush.bf16.msra.mxu0 %v6100
      %6888 = vmatpush.bf16.msra.mxu0 %v6099
      %6889 = vmatpush.bf16.msra.mxu0 %v6098
      %6890 = vmatpush.bf16.msra.mxu0 %v6097
      %6891 = vmatpush.bf16.msra.mxu0 %v6096
      %6892 = vmatpush.bf16.msra.mxu0 %v6095
      %6893 = vmatpush.bf16.msra.mxu0 %v6094
      %6894 = vmatmul.bf16.gmra.mxu0 %v5462
      %v6895 = vpop.f32.mrf.mxu0
      %v6896 = vadd.f32 %v6807, %v6895
      %v6897 = vpop.f32.mrf.mxu0
      %v6898 = vadd.f32 %v6809, %v6897
      %6899 = vmatmul.bf16.gmra.mxu0 %v5471
      %v6900 = vpop.f32.mrf.mxu0
      %v6901 = vadd.f32 %v6812, %v6900
      %v6902 = vpop.f32.mrf.mxu0
      %v6903 = vadd.f32 %v6814, %v6902
      %6904 = vmatmul.bf16.gmra.mxu0 %v5480
      %v6905 = vpop.f32.mrf.mxu0
      %v6906 = vadd.f32 %v6817, %v6905
      %v6907 = vpop.f32.mrf.mxu0
      %v6908 = vadd.f32 %v6819, %v6907
      %6909 = vmatmul.bf16.gmra.mxu0 %v5489
      %v6910 = vpop.f32.mrf.mxu0
      %v6911 = vadd.f32 %v6822, %v6910
      %v6912 = vpop.f32.mrf.mxu0
      %v6913 = vadd.f32 %v6824, %v6912
      %6914 = vmatmul.bf16.gmra.mxu0 %v5498
      %v6915 = vpop.f32.mrf.mxu0
      %v6916 = vadd.f32 %v6827, %v6915
      %v6917 = vpop.f32.mrf.mxu0
      %v6918 = vadd.f32 %v6829, %v6917
      %6919 = vmatmul.bf16.gmra.mxu0 %v5507
      %v6920 = vpop.f32.mrf.mxu0
      %v6921 = vadd.f32 %v6832, %v6920
      %v6922 = vpop.f32.mrf.mxu0
      %v6923 = vadd.f32 %v6834, %v6922
      %6924 = vmatmul.bf16.gmra.mxu0 %v5516
      %v6925 = vpop.f32.mrf.mxu0
      %v6926 = vadd.f32 %v6837, %v6925
      %v6927 = vpop.f32.mrf.mxu0
      %v6928 = vadd.f32 %v6839, %v6927
      %6929 = vmatmul.bf16.gmra.mxu0 %v5525
      %v6930 = vpop.f32.mrf.mxu0
      %v6931 = vadd.f32 %v6842, %v6930
      %v6932 = vpop.f32.mrf.mxu0
      %v6933 = vadd.f32 %v6844, %v6932
      %6934 = vmatmul.bf16.gmra.mxu0 %v5534
      %v6935 = vpop.f32.mrf.mxu0
      %v6936 = vadd.f32 %v6847, %v6935
      %v6937 = vpop.f32.mrf.mxu0
      %v6938 = vadd.f32 %v6849, %v6937
      %6939 = vmatmul.bf16.gmra.mxu0 %v5543
      %v6940 = vpop.f32.mrf.mxu0
      %v6941 = vadd.f32 %v6852, %v6940
      %v6942 = vpop.f32.mrf.mxu0
      %v6943 = vadd.f32 %v6854, %v6942
      %6944 = vmatmul.bf16.gmra.mxu0 %v5552
      %v6945 = vpop.f32.mrf.mxu0
      %v6946 = vadd.f32 %v6857, %v6945
      %v6947 = vpop.f32.mrf.mxu0
      %v6948 = vadd.f32 %v6859, %v6947
      %6949 = vmatmul.bf16.gmra.mxu0 %v5561
      %v6950 = vpop.f32.mrf.mxu0
      %v6951 = vadd.f32 %v6862, %v6950
      %v6952 = vpop.f32.mrf.mxu0
      %v6953 = vadd.f32 %v6864, %v6952
      %6954 = vmatmul.bf16.gmra.mxu0 %v5570
      %v6955 = vpop.f32.mrf.mxu0
      %v6956 = vadd.f32 %v6867, %v6955
      %v6957 = vpop.f32.mrf.mxu0
      %v6958 = vadd.f32 %v6869, %v6957
      %6959 = vmatmul.bf16.gmra.mxu0 %v5579
      %v6960 = vpop.f32.mrf.mxu0
      %v6961 = vadd.f32 %v6872, %v6960
      %v6962 = vpop.f32.mrf.mxu0
      %v6963 = vadd.f32 %v6874, %v6962
      %6964 = vmatmul.bf16.gmra.mxu0 %v5588
      %v6965 = vpop.f32.mrf.mxu0
      %v6966 = vadd.f32 %v6877, %v6965
      %v6967 = vpop.f32.mrf.mxu0
      %v6968 = vadd.f32 %v6879, %v6967
      %6969 = vmatmul.bf16.gmra.mxu0 %v5597
      %v6970 = vpop.f32.mrf.mxu0
      %v6971 = vadd.f32 %v6882, %v6970
      %v6972 = vpop.f32.mrf.mxu0
      %v6973 = vadd.f32 %v6884, %v6972
      %6974 = vdwg.mxu0
      %v6975 = vmax.f32 %v6896, %v6901
      %v6976 = vmax.f32 %v6898, %v6903
      %v6977 = vmax.f32 %v6906, %v6911
      %v6978 = vmax.f32 %v6908, %v6913
      %v6979 = vmax.f32 %v6916, %v6921
      %v6980 = vmax.f32 %v6918, %v6923
      %v6981 = vmax.f32 %v6926, %v6931
      %v6982 = vmax.f32 %v6928, %v6933
      %v6983 = vmax.f32 %v6936, %v6941
      %v6984 = vmax.f32 %v6938, %v6943
      %v6985 = vmax.f32 %v6946, %v6951
      %v6986 = vmax.f32 %v6948, %v6953
      %v6987 = vmax.f32 %v6956, %v6961
      %v6988 = vmax.f32 %v6958, %v6963
      %v6989 = vmax.f32 %v6966, %v6971
      %v6990 = vmax.f32 %v6968, %v6973
      %6991 = vst [vmem:[#allocation4] sm:$0xff] %v6975
      %6992 = vst [vmem:[#allocation4 + $0x8] sm:$0xff] %v6976
      %6993 = vst [vmem:[#allocation4 + $0x10] sm:$0xff] %v6977
      %6994 = vst [vmem:[#allocation4 + $0x18] sm:$0xff] %v6978
      %6995 = vst [vmem:[#allocation4 + $0x20] sm:$0xff] %v6979
      %6996 = vst [vmem:[#allocation4 + $0x28] sm:$0xff] %v6980
      %6997 = vst [vmem:[#allocation4 + $0x30] sm:$0xff] %v6981
      %6998 = vst [vmem:[#allocation4 + $0x38] sm:$0xff] %v6982
      %6999 = vst [vmem:[#allocation4 + $0x40] sm:$0xff] %v6983
      %7000 = vst [vmem:[#allocation4 + $0x48] sm:$0xff] %v6984
      %7001 = vst [vmem:[#allocation4 + $0x50] sm:$0xff] %v6985
      %7002 = vst [vmem:[#allocation4 + $0x58] sm:$0xff] %v6986
      %7003 = vst [vmem:[#allocation4 + $0x60] sm:$0xff] %v6987
      %7004 = vst [vmem:[#allocation4 + $0x68] sm:$0xff] %v6988
      %7005 = vst [vmem:[#allocation4 + $0x70] sm:$0xff] %v6989
      %7006 = vst [vmem:[#allocation4 + $0x78] sm:$0xff] %v6990
      %v7007 = vld [vmem:[#allocation4] ss:$2 sm:$0xff]
      %s7008 = scalar_lea.vmem [#allocation4], 16
      %v7009 = vld [vmem:[%s7008] ss:$2 sm:$0xff]
      %s7010 = scalar_lea.vmem [#allocation4], 32
      %v7011 = vld [vmem:[%s7010] ss:$2 sm:$0xff]
      %s7012 = scalar_lea.vmem [#allocation4], 48
      %v7013 = vld [vmem:[%s7012] ss:$2 sm:$0xff]
      %s7014 = scalar_lea.vmem [#allocation4], 64
      %v7015 = vld [vmem:[%s7014] ss:$2 sm:$0xff]
      %s7016 = scalar_lea.vmem [#allocation4], 80
      %v7017 = vld [vmem:[%s7016] ss:$2 sm:$0xff]
      %s7018 = scalar_lea.vmem [#allocation4], 96
      %v7019 = vld [vmem:[%s7018] ss:$2 sm:$0xff]
      %s7020 = scalar_lea.vmem [#allocation4], 112
      %v7021 = vld [vmem:[%s7020] ss:$2 sm:$0xff]
      %v7022 = vld [vmem:[%s1322] ss:$2 sm:$0xff]
      %v7023 = vld [vmem:[%s1324] ss:$2 sm:$0xff]
      %v7024 = vld [vmem:[%s1326] ss:$2 sm:$0xff]
      %v7025 = vld [vmem:[%s1328] ss:$2 sm:$0xff]
      %v7026 = vld [vmem:[%s1330] ss:$2 sm:$0xff]
      %v7027 = vld [vmem:[%s1332] ss:$2 sm:$0xff]
      %v7028 = vld [vmem:[%s1334] ss:$2 sm:$0xff]
      %v7029 = vld [vmem:[%s1336] ss:$2 sm:$0xff]
      %v7030 = vmax.f32 %v7007, %v7022
      %v7031 = vmax.f32 %v7009, %v7023
      %v7032 = vmax.f32 %v7011, %v7024
      %v7033 = vmax.f32 %v7013, %v7025
      %v7034 = vmax.f32 %v7015, %v7026
      %v7035 = vmax.f32 %v7017, %v7027
      %v7036 = vmax.f32 %v7019, %v7028
      %v7037 = vmax.f32 %v7021, %v7029
      %v7038 = vld [vmem:[%s4] sm:$0x1]
      %v7040 = vperm.slane %v7038, 0
      %v7042 = vadd.f32 %v7030, %v7040
      %v7043 = vadd.f32 %v7031, %v7040
      %v7044 = vadd.f32 %v7032, %v7040
      %v7045 = vadd.f32 %v7033, %v7040
      %v7046 = vadd.f32 %v7034, %v7040
      %v7047 = vadd.f32 %v7035, %v7040
      %v7048 = vadd.f32 %v7036, %v7040
      %v7049 = vadd.f32 %v7037, %v7040
      %v7050 = vmax.f32 %v7042, 0.0
      %v7051 = vmax.f32 %v7043, 0.0
      %v7052 = vmax.f32 %v7044, 0.0
      %v7053 = vmax.f32 %v7045, 0.0
      %v7054 = vmax.f32 %v7046, 0.0
      %v7055 = vmax.f32 %v7047, 0.0
      %v7056 = vmax.f32 %v7048, 0.0
      %v7057 = vmax.f32 %v7049, 0.0
      %v7058 = vpack.c.bf16 %v7050, %v7050
      %v7059 = vpack.c.bf16 %v7051, %v7051
      %v7060 = vpack.c.bf16 %v7052, %v7052
      %v7061 = vpack.c.bf16 %v7053, %v7053
      %v7062 = vpack.c.bf16 %v7054, %v7054
      %v7063 = vpack.c.bf16 %v7055, %v7055
      %v7064 = vpack.c.bf16 %v7056, %v7056
      %v7065 = vpack.c.bf16 %v7057, %v7057
      %7066 = vst [vmem:[%s224] sm:$0xf] %v7058
      %7067 = vst [vmem:[%s224 + $0x4] sm:$0xf] %v7059
      %7068 = vst [vmem:[%s224 + $0x8] sm:$0xf] %v7060
      %7069 = vst [vmem:[%s224 + $0xc] sm:$0xf] %v7061
      %7070 = vst [vmem:[%s224 + $0x10] sm:$0xf] %v7062
      %7071 = vst [vmem:[%s224 + $0x14] sm:$0xf] %v7063
      %7072 = vst [vmem:[%s224 + $0x18] sm:$0xf] %v7064
      %7073 = vst [vmem:[%s224 + $0x1c] sm:$0xf] %v7065
      %p7074 = scmp.lt.s32.totalorder %s16, 1
      %s7075 = scalar_select %p7074, %s16, 1
      %s7076 = smul.addr %s7075, 8
      %s7077 = smul.addr %s7076, 4
      %s7078 = scalar_lea.vmem %s5, %s7077
      // Predicated region
      $region41: #{cnn_baseline_forward.2} parent=39 // pred_check
        %p7079 = pneg %p144
      $region42: #{cnn_baseline_forward.2} parent=39 // pred_check_branch
        %7081 = sbr.rel (%p7079) target = $region44
      $region43: #{cnn_baseline_forward.2} parent=39 // pred_region
        _
      $region44: #{cnn_baseline_forward.2} parent=39 // pred_fallthru
        _
    $region40: #{cnn_baseline_forward.2} parent=5 // pred_fallthru
      _
    %p7082 = scmp.le.s32.totalorder 2, %s11
    // Predicated region
    $region45: #{cnn_baseline_forward.2} parent=5 // pred_check
      %p7083 = pneg %p7082
    $region46: #{cnn_baseline_forward.2} parent=5 // pred_check_branch
      %7085 = sbr.rel (%p7083) target = $region48
    $region47: #{cnn_baseline_forward.2} parent=5 // pred_region
      %s7086 = ssub.s32 %s11, 2
      // Predicated region
      $region49: #{cnn_baseline_forward.2} parent=47 // pred_check
        %p7087 = pneg %p150
      $region50: #{cnn_baseline_forward.2} parent=47 // pred_check_branch
        %7089 = sbr.rel (%p7087) target = $region52
      $region51: #{cnn_baseline_forward.2} parent=47 // pred_region
        %p7090 = scmp.lt.s32.totalorder %s17, 1
        %s7091 = scalar_select %p7090, %s17, 1
        %s7092 = smul.addr %s7091, 8
        %s7093 = smul.addr %s7092, 4
        %s7094 = scalar_lea.vmem %s5, %s7093
      $region52: #{cnn_baseline_forward.2} parent=47 // pred_fallthru
        _
    $region48: #{cnn_baseline_forward.2} parent=5 // pred_fallthru
      _
  $region6: #{cnn_baseline_forward.2} parent=0 // loop_footer
    %s15 = sadd.s32 1, %s11
  $region7: #{cnn_baseline_forward.2} parent=0 // loop_footer_branch
    %10 = sbr.rel target = $region3
  $region8: #{cnn_baseline_forward.2} parent=0 // loop_exit
    _

</llo_original>
